<compile_context>
chip_gen: v5e
topology: v5e:2x2
jax: 0.10.0
libtpu: 0.0.40
codegen_flags: <defaults>
</compile_context>

<pallas_src>
import functools

import numpy as np
import jax
import jax.numpy as jnp
from jax.experimental import pallas as pl
from jax.experimental.pallas import tpu as pltpu

_BF16 = jnp.bfloat16
_F32 = jnp.float32
_ROW_PAD = 128                       # node dim padded to a multiple of this
_VMEM_LIMIT = 32 * 1024 * 1024       # plenty for these tiles; safe on v5e/v6e/v7x


def _bf(v):
    return v.astype(_BF16)


def _pick_tiles(n_pad):
    """Row tile (tm) / A-reduction tile (tk) for a padded node count.

    Larger tiles -> closer to the HBM roofline on the A-streaming kernels; keep
    at least 2 row tiles so dimension_semantics=("parallel", ...) can shard the
    row axis across v7x's two TensorCores.
    """
    tm = 256 if (n_pad % 256 == 0 and n_pad >= 512) else 128
    if n_pad % 512 == 0 and n_pad >= 1024:
        tk = 512
    elif n_pad % 256 == 0:
        tk = 256
    else:
        tk = 128
    return tm, tk


# ----------------------------------------------------------------------------
# kernels
# ----------------------------------------------------------------------------
def _pre_kernel(z_dim, n_layers,
                x_ref, h_ref, diff_ref,
                wpx_ref, bpx_ref,
                wp1_ref, wp2_ref, bp_ref, wph_ref, bph_ref,
                ew1_ref, ew2_ref, wx10_ref, whall_ref,
                prior_ref, menc_ref, xw0p_ref, *mh_refs):
    """Row-parallel node-local transforms, hoisted out of every A k-loop.

    prior_ref : [prior_mean | softplus(prior_std)]              (f32, 2z)
    menc_ref  : bf16(phiX @ enc_w1 + h_last @ enc_w2)           (bf16, h)
    xw0p_ref  : bf16(phiX @ Wx1[layer0])                        (bf16, 3h)
    mh_refs[l]: bf16(h[l] @ [Whz|Whr][l])                       (bf16, 2h)
    """
    hl_b = _bf(h_ref[n_layers - 1])
    phix = jnp.maximum(
        jnp.dot(_bf(x_ref[...]), wpx_ref[...], preferred_element_type=_F32)
        + bpx_ref[...], 0.0)
    phix_b = _bf(phix)

    # prior heads (no graph conv): prior_x = relu([h_last | diff] @ W + b)
    px = jnp.maximum(
        jnp.dot(hl_b, wp1_ref[...], preferred_element_type=_F32)
        + diff_ref[...] * wp2_ref[...] + bp_ref[...], 0.0)
    ph = jnp.dot(_bf(px), wph_ref[...], preferred_element_type=_F32) + bph_ref[...]
    prior_ref[:, :z_dim] = ph[:, :z_dim]
    prior_ref[:, z_dim:] = jax.nn.softplus(ph[:, z_dim:])

    menc_ref[...] = _bf(
        jnp.dot(phix_b, ew1_ref[...], preferred_element_type=_F32)
        + jnp.dot(hl_b, ew2_ref[...], preferred_element_type=_F32))
    xw0p_ref[...] = _bf(jnp.dot(phix_b, wx10_ref[...], preferred_element_type=_F32))
    for l in range(n_layers):
        mh_refs[l][...] = _bf(jnp.dot(_bf(h_ref[l]), whall_ref[l],
                                      preferred_element_type=_F32))


def _enc_kernel(a_ref, m_ref, b_ref, wh_ref, o_ref, acc_ref):
    """enc_x = relu(A @ M_enc + b); emits bf16(enc_x @ [Wmean|Wstd]) only."""
    k = pl.program_id(1)

    @pl.when(k == 0)
    def _():
        acc_ref[...] = jnp.zeros_like(acc_ref)

    acc_ref[...] += jnp.dot(a_ref[...], m_ref[...], preferred_element_type=_F32)

    @pl.when(k == pl.num_programs(1) - 1)
    def _():
        enc_x = jnp.maximum(acc_ref[...] + b_ref[...], 0.0)
        o_ref[...] = _bf(jnp.dot(_bf(enc_x), wh_ref[...],
                                 preferred_element_type=_F32))


def _enc_heads_kernel(z_dim, h_dim,
                      a_ref, m_ref, bh_ref, eps_ref, wpz_ref, bpz_ref,
                      wx2_ref, xw0p_ref, mh0_ref,
                      heads_ref, z_ref, mg0_ref, acc_ref):
    """[enc_mean|enc_std] = A @ M_heads + b, fused with z = eps*std + mean,
    phiZ = relu(z @ Wpz + b) and the packed layer-0 GRU operand
    M_g0 = [phiX@Wx1 + phiZ@Wx2 | h0@Wh0]."""
    k = pl.program_id(1)

    @pl.when(k == 0)
    def _():
        acc_ref[...] = jnp.zeros_like(acc_ref)

    acc_ref[...] += jnp.dot(a_ref[...], m_ref[...], preferred_element_type=_F32)

    @pl.when(k == pl.num_programs(1) - 1)
    def _():
        y = acc_ref[...] + bh_ref[...]
        mean = y[:, :z_dim]
        std = jax.nn.softplus(y[:, z_dim:])
        heads_ref[:, :z_dim] = mean
        heads_ref[:, z_dim:] = std
        zz = eps_ref[...] * std + mean
        z_ref[...] = zz
        phiz = jnp.maximum(
            jnp.dot(_bf(zz), wpz_ref[...], preferred_element_type=_F32)
            + bpz_ref[...], 0.0)
        xw0 = xw0p_ref[...].astype(_F32) + jnp.dot(
            _bf(phiz), wx2_ref[...], preferred_element_type=_F32)
        mg0_ref[:, :3 * h_dim] = _bf(xw0)
        mg0_ref[:, 3 * h_dim:] = mh0_ref[...]


def _gru1_kernel(h_dim,
                 a_ref, mg_ref, bx_ref, bh_ref, hl_ref, whh_ref,
                 gzxh_ref, mrh_ref, acc_ref):
    """GRU stage 1: ONE dot per A tile against the packed [XW|HW] (5h) slab.

    Epilogue: gates, and the hoisted bf16((r*h) @ Whh) operand for stage 2."""
    k = pl.program_id(1)

    @pl.when(k == 0)
    def _():
        acc_ref[...] = jnp.zeros_like(acc_ref)

    acc_ref[...] += jnp.dot(a_ref[...], mg_ref[...], preferred_element_type=_F32)

    @pl.when(k == pl.num_programs(1) - 1)
    def _():
        acc = acc_ref[...]
        px = acc[:, :3 * h_dim] + bx_ref[...]
        ph = acc[:, 3 * h_dim:] + bh_ref[...]
        z_g = jax.nn.sigmoid(px[:, :h_dim] + ph[:, :h_dim])
        r_g = jax.nn.sigmoid(px[:, h_dim:2 * h_dim] + ph[:, h_dim:])
        gzxh_ref[:, :h_dim] = z_g
        gzxh_ref[:, h_dim:] = px[:, 2 * h_dim:]
        rh = r_g * hl_ref[...]
        mrh_ref[...] = _bf(jnp.dot(_bf(rh), whh_ref[...],
                                   preferred_element_type=_F32))


def _gru2_kernel(h_dim, has_next, *refs):
    """GRU stage 2: h_tilde = tanh(xh + A@M_rh + b); out = z*h + (1-z)*h_tilde.

    If another layer follows, the epilogue also emits its packed operand
    M_g_next = [out@Wx1_next | h_next@Wh_next]."""
    if has_next:
        (a_ref, mrh_ref, bhh_ref, gzxh_ref, hl_ref,
         wx1n_ref, mhn_ref, hout_ref, mgn_ref, acc_ref) = refs
    else:
        (a_ref, mrh_ref, bhh_ref, gzxh_ref, hl_ref,
         hout_ref, acc_ref) = refs
    k = pl.program_id(1)

    @pl.when(k == 0)
    def _():
        acc_ref[...] = jnp.zeros_like(acc_ref)

    acc_ref[...] += jnp.dot(a_ref[...], mrh_ref[...], preferred_element_type=_F32)

    @pl.when(k == pl.num_programs(1) - 1)
    def _():
        z_g = gzxh_ref[:, :h_dim]
        xh = gzxh_ref[:, h_dim:]
        h_tilde = jnp.tanh(xh + acc_ref[...] + bhh_ref[...])
        out = z_g * hl_ref[...] + (1.0 - z_g) * h_tilde
        hout_ref[...] = out
        if has_next:
            mgn_ref[:, :3 * h_dim] = _bf(jnp.dot(_bf(out), wx1n_ref[...],
                                                 preferred_element_type=_F32))
            mgn_ref[:, 3 * h_dim:] = mhn_ref[...]


# ----------------------------------------------------------------------------
# pallas_call builders (cached per static shape; the whole step is one jax.jit)
# ----------------------------------------------------------------------------
def _cp(sem):
    return pltpu.CompilerParams(dimension_semantics=sem,
                                vmem_limit_bytes=_VMEM_LIMIT)


@functools.lru_cache(maxsize=None)
def _pre_call(np_, x_dim, h_dim, z_dim, n_layers, tm):
    row = lambda shp: pl.BlockSpec(shp, lambda i: (i, 0))
    whole = lambda shp: pl.BlockSpec(shp, lambda i, _s=None, shp=shp: (0,) * len(shp))
    in_specs = [
        row((tm, x_dim)),
        pl.BlockSpec((n_layers, tm, h_dim), lambda i: (0, i, 0)),
        row((tm, 1)),
        whole((x_dim, h_dim)), whole((1, h_dim)),
        whole((h_dim, h_dim)), whole((1, h_dim)), whole((1, h_dim)),
        whole((h_dim, 2 * z_dim)), whole((1, 2 * z_dim)),
        whole((h_dim, h_dim)), whole((h_dim, h_dim)),
        whole((h_dim, 3 * h_dim)),
        whole((n_layers, h_dim, 2 * h_dim)),
    ]
    out_specs = ([row((tm, 2 * z_dim)), row((tm, h_dim)), row((tm, 3 * h_dim))]
                 + [row((tm, 2 * h_dim)) for _ in range(n_layers)])
    out_shape = ([jax.ShapeDtypeStruct((np_, 2 * z_dim), _F32),
                  jax.ShapeDtypeStruct((np_, h_dim), _BF16),
                  jax.ShapeDtypeStruct((np_, 3 * h_dim), _BF16)]
                 + [jax.ShapeDtypeStruct((np_, 2 * h_dim), _BF16)
                    for _ in range(n_layers)])
    return pl.pallas_call(
        functools.partial(_pre_kernel, z_dim, n_layers),
        grid=(np_ // tm,),
        in_specs=in_specs, out_specs=out_specs, out_shape=out_shape,
        compiler_params=_cp(("parallel",)))


@functools.lru_cache(maxsize=None)
def _enc_call(np_, h_dim, z_dim, tm, tk):
    whole = lambda shp: pl.BlockSpec(shp, lambda i, k: (0, 0))
    return pl.pallas_call(
        _enc_kernel,
        grid=(np_ // tm, np_ // tk),
        in_specs=[pl.BlockSpec((tm, tk), lambda i, k: (i, k)),
                  pl.BlockSpec((tk, h_dim), lambda i, k: (k, 0)),
                  whole((1, h_dim)), whole((h_dim, 2 * z_dim))],
        out_specs=pl.BlockSpec((tm, 2 * z_dim), lambda i, k: (i, 0)),
        out_shape=jax.ShapeDtypeStruct((np_, 2 * z_dim), _BF16),
        scratch_shapes=[pltpu.VMEM((tm, h_dim), _F32)],
        compiler_params=_cp(("parallel", "arbitrary")))


@functools.lru_cache(maxsize=None)
def _enc_heads_call(np_, h_dim, z_dim, tm, tk):
    row = lambda d: pl.BlockSpec((tm, d), lambda i, k: (i, 0))
    whole = lambda shp: pl.BlockSpec(shp, lambda i, k: (0, 0))
    return pl.pallas_call(
        functools.partial(_enc_heads_kernel, z_dim, h_dim),
        grid=(np_ // tm, np_ // tk),
        in_specs=[pl.BlockSpec((tm, tk), lambda i, k: (i, k)),
                  pl.BlockSpec((tk, 2 * z_dim), lambda i, k: (k, 0)),
                  whole((1, 2 * z_dim)), row(z_dim),
                  whole((z_dim, h_dim)), whole((1, h_dim)),
                  whole((h_dim, 3 * h_dim)), row(3 * h_dim), row(2 * h_dim)],
        out_specs=[row(2 * z_dim), row(z_dim), row(5 * h_dim)],
        out_shape=[jax.ShapeDtypeStruct((np_, 2 * z_dim), _F32),
                   jax.ShapeDtypeStruct((np_, z_dim), _F32),
                   jax.ShapeDtypeStruct((np_, 5 * h_dim), _BF16)],
        scratch_shapes=[pltpu.VMEM((tm, 2 * z_dim), _F32)],
        compiler_params=_cp(("parallel", "arbitrary")))


@functools.lru_cache(maxsize=None)
def _gru1_call(np_, h_dim, tm, tk):
    row = lambda d: pl.BlockSpec((tm, d), lambda i, k: (i, 0))
    whole = lambda shp: pl.BlockSpec(shp, lambda i, k: (0, 0))
    return pl.pallas_call(
        functools.partial(_gru1_kernel, h_dim),
        grid=(np_ // tm, np_ // tk),
        in_specs=[pl.BlockSpec((tm, tk), lambda i, k: (i, k)),
                  pl.BlockSpec((tk, 5 * h_dim), lambda i, k: (k, 0)),
                  whole((1, 3 * h_dim)), whole((1, 2 * h_dim)),
                  row(h_dim), whole((h_dim, h_dim))],
        out_specs=[row(2 * h_dim), row(h_dim)],
        out_shape=[jax.ShapeDtypeStruct((np_, 2 * h_dim), _F32),
                   jax.ShapeDtypeStruct((np_, h_dim), _BF16)],
        scratch_shapes=[pltpu.VMEM((tm, 5 * h_dim), _F32)],
        compiler_params=_cp(("parallel", "arbitrary")))


@functools.lru_cache(maxsize=None)
def _gru2_call(np_, h_dim, tm, tk, has_next):
    row = lambda d: pl.BlockSpec((tm, d), lambda i, k: (i, 0))
    whole = lambda shp: pl.BlockSpec(shp, lambda i, k: (0, 0))
    in_specs = [pl.BlockSpec((tm, tk), lambda i, k: (i, k)),
                pl.BlockSpec((tk, h_dim), lambda i, k: (k, 0)),
                whole((1, h_dim)), row(2 * h_dim), row(h_dim)]
    out_specs = row(h_dim)
    out_shape = jax.ShapeDtypeStruct((np_, h_dim), _F32)
    if has_next:
        in_specs += [whole((h_dim, 3 * h_dim)), row(2 * h_dim)]
        out_specs = [out_specs, row(5 * h_dim)]
        out_shape = [out_shape, jax.ShapeDtypeStruct((np_, 5 * h_dim), _BF16)]
    return pl.pallas_call(
        functools.partial(_gru2_kernel, h_dim, has_next),
        grid=(np_ // tm, np_ // tk),
        in_specs=in_specs, out_specs=out_specs, out_shape=out_shape,
        scratch_shapes=[pltpu.VMEM((tm, h_dim), _F32)],
        compiler_params=_cp(("parallel", "arbitrary")))


# ----------------------------------------------------------------------------
# one fully-jitted forward step (all pallas_calls + glue in a single dispatch)
# ----------------------------------------------------------------------------
@jax.jit
def generative_step(params, A, x, h, diff, eps):
    np_, x_dim = x.shape
    n_layers, _, h_dim = h.shape
    z_dim = eps.shape[1]
    tm, tk = _pick_tiles(np_)

    w = lambda a: a.astype(_BF16)
    gru = params["gru"]
    wh_all = jnp.stack([g["w_h"] for g in gru], 0).astype(_BF16)

    pre = _pre_call(np_, x_dim, h_dim, z_dim, n_layers, tm)(
        x, h, diff,
        w(params["phi_x_w"]), params["phi_x_b"],
        w(params["prior_w1"]), params["prior_w2"], params["prior_b"],
        w(params["prior_heads_w"]), params["prior_heads_b"],
        w(params["enc_w1"]), w(params["enc_w2"]),
        w(gru[0]["w_x1"]), wh_all)
    prior_out, m_enc, xw0p = pre[0], pre[1], pre[2]
    m_h = pre[3:]

    m_heads = _enc_call(np_, h_dim, z_dim, tm, tk)(
        A, m_enc, params["enc_b"], w(params["enc_heads_w"]))

    heads, z, m_g = _enc_heads_call(np_, h_dim, z_dim, tm, tk)(
        A, m_heads, params["enc_heads_b"], eps,
        w(params["phi_z_w"]), params["phi_z_b"],
        w(gru[0]["w_x2"]), xw0p, m_h[0])

    h_out = []
    for l in range(n_layers):
        gl = gru[l]
        gzxh, m_rh = _gru1_call(np_, h_dim, tm, tk)(
            A, m_g, gl["b_x"], gl["b_h"], h[l], w(gl["w_hh"]))
        if l + 1 < n_layers:
            out, m_g = _gru2_call(np_, h_dim, tm, tk, True)(
                A, m_rh, gl["b_hh"], gzxh, h[l],
                w(gru[l + 1]["w_x1"]), m_h[l + 1])
        else:
            out = _gru2_call(np_, h_dim, tm, tk, False)(
                A, m_rh, gl["b_hh"], gzxh, h[l])
        h_out.append(out)

    prior_mean, prior_std = prior_out[:, :z_dim], prior_out[:, z_dim:]
    enc_mean, enc_std = heads[:, :z_dim], heads[:, z_dim:]
    return (prior_mean, prior_std), (enc_mean, enc_std), z, jnp.stack(h_out, 0)


# ----------------------------------------------------------------------------
# glue: adjacency, padding, params
# ----------------------------------------------------------------------------
_ADJ_CACHE = {}


def build_norm_adj(edge_index, n):
    A = np.zeros((n, n), np.float32)
    A[edge_index[0], edge_index[1]] = 1.0
    A = A + np.eye(n, dtype=np.float32)          # GCNConv self-loops
    d = A.sum(1)
    dinv = 1.0 / np.sqrt(np.maximum(d, 1e-12))
    return (dinv[:, None] * A * dinv[None, :]).astype(np.float32)


def _padded_norm_adj(edge_index, n):
    """Build + pad the normalized dense adjacency; cached across timesteps
    for static graphs so the O(N^2) host build / H2D transfer happens once."""
    ei = np.asarray(edge_index)
    key = (n, ei.shape, ei.tobytes())
    hit = _ADJ_CACHE.get(key)
    if hit is not None:
        return hit
    np_ = ((n + _ROW_PAD - 1) // _ROW_PAD) * _ROW_PAD
    A = build_norm_adj(ei, n)
    A_pad = np.zeros((np_, np_), np.float32)
    A_pad[:n, :n] = A
    # TODO(synk): fp8 (v7x) / int8 (v5e-v6e) adjacency with per-row scales, and
    # block-sparse tile skipping via PrefetchScalarGridSpec, would further cut
    # the dominant A HBM stream.
    entry = (jnp.asarray(A_pad, _BF16), A, np_)
    _ADJ_CACHE[key] = entry
    return entry


def generative_forward(params, x, h, diff, edge_index, key):
    """Mirrors Generative.forward(x, h, diff, edge_index) (eval mode)."""
    n = x.shape[0]
    A_bf, A_f32, np_ = _padded_norm_adj(edge_index, n)
    pad = np_ - n
    xp = jnp.pad(x, ((0, pad), (0, 0))) if pad else x
    dp = jnp.pad(diff, ((0, pad), (0, 0))) if pad else diff
    hp = jnp.pad(h, ((0, 0), (0, pad), (0, 0))) if pad else h

    z_dim = params["enc_heads_w"].shape[1] // 2
    eps = jax.random.normal(key, (np_, z_dim), _F32)

    (pm, ps), (em, es), z, h_out = generative_step(params, A_bf, xp, hp, dp, eps)
    return ((pm[:n], ps[:n]), (em[:n], es[:n]), z[:n], h_out[:, :n], eps[:n],
            jnp.asarray(A_f32, _F32))


def init_params(key, x_dim, h_dim, z_dim, layer_num):
    keys = iter(jax.random.split(key, 64))

    def w(shape, scale=0.1):
        return scale * jax.random.normal(next(keys), shape, dtype=_F32)

    p = {
        "phi_x_w": w((x_dim, h_dim)), "phi_x_b": w((1, h_dim)),
        "phi_z_w": w((z_dim, h_dim)), "phi_z_b": w((1, h_dim)),
        # enc GCN weight split along K (phiX rows | h_last rows)
        "enc_w1": w((h_dim, h_dim)), "enc_w2": w((h_dim, h_dim)), "enc_b": w((1, h_dim)),
        # enc_mean / enc_std heads packed column-wise: (h, 2z)
        "enc_heads_w": w((h_dim, 2 * z_dim)), "enc_heads_b": w((1, 2 * z_dim)),
        # prior weight split along K (h_last rows | diff row)
        "prior_w1": w((h_dim, h_dim)), "prior_w2": w((1, h_dim)), "prior_b": w((1, h_dim)),
        "prior_heads_w": w((h_dim, 2 * z_dim)), "prior_heads_b": w((1, 2 * z_dim)),
    }
    gru = []
    for l in range(layer_num):
        layer = {
            "w_x1": w((h_dim, 3 * h_dim)),       # [Wxz|Wxr|Wxh] packed
            "w_h": w((h_dim, 2 * h_dim)),        # [Whz|Whr] packed
            "b_x": w((1, 3 * h_dim)),
            "b_h": w((1, 2 * h_dim)),
            "w_hh": w((h_dim, h_dim)),
            "b_hh": w((1, h_dim)),
        }
        if l == 0:                               # layer-0 input is cat(phiX, phiZ)
            layer["w_x2"] = w((h_dim, 3 * h_dim))
        gru.append(layer)
    p["gru"] = gru
    return p


# ----------------------------------------------------------------------------
# pure-JAX f32 reference (semantics of the PyTorch module) for a sanity check
# ----------------------------------------------------------------------------
def reference_forward(params, A, x, h, diff, eps):
    relu = lambda v: jnp.maximum(v, 0.0)
    hd = params["phi_x_w"].shape[1]
    phiX = relu(x @ params["phi_x_w"] + params["phi_x_b"])
    enc_x = relu(A @ (phiX @ params["enc_w1"] + h[-1] @ params["enc_w2"])
                 + params["enc_b"])
    heads = A @ (enc_x @ params["enc_heads_w"]) + params["enc_heads_b"]
    z_dim = heads.shape[1] // 2
    enc_mean, enc_std = heads[:, :z_dim], jax.nn.softplus(heads[:, z_dim:])
    prior_x = relu(h[-1] @ params["prior_w1"] + diff * params["prior_w2"]
                   + params["prior_b"])
    ph = prior_x @ params["prior_heads_w"] + params["prior_heads_b"]
    prior_mean, prior_std = ph[:, :z_dim], jax.nn.softplus(ph[:, z_dim:])
    z = eps * enc_std + enc_mean
    phiZ = relu(z @ params["phi_z_w"] + params["phi_z_b"])
    outs, cur1, cur2 = [], phiX, phiZ
    for gl in params["gru"]:
        xw = cur1 @ gl["w_x1"]
        if "w_x2" in gl:
            xw = xw + cur2 @ gl["w_x2"]
        px = A @ xw + gl["b_x"]
        phh = A @ (h[len(outs)] @ gl["w_h"]) + gl["b_h"]
        z_g = jax.nn.sigmoid(px[:, :hd] + phh[:, :hd])
        r_g = jax.nn.sigmoid(px[:, hd:2 * hd] + phh[:, hd:])
        hh = A @ ((r_g * h[len(outs)]) @ gl["w_hh"]) + gl["b_hh"]
        h_tilde = jnp.tanh(px[:, 2 * hd:] + hh)
        out = z_g * h[len(outs)] + (1.0 - z_g) * h_tilde
        outs.append(out)
        cur1, cur2 = out, None
    return (prior_mean, prior_std), (enc_mean, enc_std), z, jnp.stack(outs, 0)


# ----------------------------------------------------------------------------
# driver
# ----------------------------------------------------------------------------
def make_edge_index(n):
    src = list(range(n))
    dst = [(i + 1) % n for i in range(n)]
    for i in range(0, n, 3):
        src.append(i)
        dst.append((i + 7) % n)
    src, dst = np.asarray(src), np.asarray(dst)
    ei = np.concatenate([np.stack([src, dst]), np.stack([dst, src])], axis=1)
    return ei.astype(np.int64)


if __name__ == "__main__":
    N, X_DIM, H_DIM, Z_DIM, LAYERS = 200, 16, 32, 32, 2
    key = jax.random.PRNGKey(0)
    pkey, xkey, hkey, dkey, ekey = jax.random.split(key, 5)

    params = init_params(pkey, X_DIM, H_DIM, Z_DIM, LAYERS)
    edge_index = make_edge_index(N)
    x = jax.random.normal(xkey, (N, X_DIM), _F32)
    h = 0.1 * jax.random.normal(hkey, (LAYERS, N, H_DIM), _F32)
    diff = jnp.abs(jax.random.normal(dkey, (N, 1), _F32))

    ((pm, ps), (em, es), z, h_out, eps_used, A_f32) = generative_forward(
        params, x, h, diff, edge_index, ekey)
    jax.block_until_ready((pm, ps, em, es, z, h_out))

    # sanity check against a pure-JAX f32 reference (bf16 MXU tolerance)
    (rpm, rps), (rem, res), rz, rh = reference_forward(
        params, A_f32, x, h, diff, eps_used)
    checks = [("prior_mean", pm, rpm), ("prior_std", ps, rps),
              ("enc_mean", em, rem), ("enc_std", es, res),
              ("z", z, rz), ("h_out", h_out, rh)]
    for name, got, want in checks:
        err = float(jnp.max(jnp.abs(got - want)))
        assert np.isfinite(err) and err < 0.1, f"{name} mismatch: max|diff|={err}"

    assert pm.shape == (N, Z_DIM) and h_out.shape == (LAYERS, N, H_DIM)
    print("KERNEL_OK")
</pallas_src>

<mosaic_0001>
module attributes {stable_mosaic.version = 11 : i64} {
  func.func @_enc_kernel(%arg0: i32, %arg1: i32, %arg2: memref<128x256xbf16, #tpu.memory_space<vmem>>, %arg3: memref<256x32xbf16, #tpu.memory_space<vmem>>, %arg4: memref<1x32xf32, #tpu.memory_space<vmem>>, %arg5: memref<32x64xbf16, #tpu.memory_space<vmem>>, %arg6: memref<128x64xbf16, #tpu.memory_space<vmem>>, %arg7: memref<128x32xf32, #tpu.memory_space<vmem>>) attributes {dimension_semantics = [#tpu.dimension_semantics<parallel>, #tpu.dimension_semantics<arbitrary>], iteration_bounds = array<i64: 2, 1>, scalar_prefetch = 0 : i64, scratch_operands = 1 : i64, tpu.core_type = #tpu.core_type<tc>, window_params = [{transform_indices = @transform_0, window_bounds = array<i64: 128, 256>}, {transform_indices = @transform_1, window_bounds = array<i64: 256, 32>}, {pipeline_mode = #tpu.pipeline_mode<synchronous>, transform_indices = @transform_2, window_bounds = array<i64: 1, 32>}, {pipeline_mode = #tpu.pipeline_mode<synchronous>, transform_indices = @transform_3, window_bounds = array<i64: 32, 64>}, {transform_indices = @transform_4, window_bounds = array<i64: 128, 64>}]} {
    %c0_i32 = arith.constant 0 : i32
    %0 = arith.cmpi eq, %arg1, %c0_i32 : i32
    %1 = arith.extui %0 : i1 to i32
    %c0_i32_0 = arith.constant 0 : i32
    %2 = arith.cmpi ne, %1, %c0_i32_0 : i32
    scf.if %2 {
      %cst_10 = arith.constant 0.000000e+00 : f32
      %12 = vector.broadcast %cst_10 : f32 to vector<128x32xf32>
      %c0_11 = arith.constant 0 : index
      %c0_12 = arith.constant 0 : index
      %13 = vector.load %arg7[%c0_11, %c0_12] : memref<128x32xf32, #tpu.memory_space<vmem>>, vector<128x32xf32>
      tpu.vector_store %arg7[%c0_11, %c0_12], %12 {strides = array<i32>} : memref<128x32xf32, #tpu.memory_space<vmem>>, vector<128x32xf32>,
    } else {
    }
    %c0 = arith.constant 0 : index
    %c0_1 = arith.constant 0 : index
    %3 = vector.load %arg7[%c0, %c0_1] : memref<128x32xf32, #tpu.memory_space<vmem>>, vector<128x32xf32>
    %c0_2 = arith.constant 0 : index
    %c0_3 = arith.constant 0 : index
    %4 = vector.load %arg2[%c0_2, %c0_3] : memref<128x256xbf16, #tpu.memory_space<vmem>>, vector<128x256xbf16>
    %c0_4 = arith.constant 0 : index
    %c0_5 = arith.constant 0 : index
    %5 = vector.load %arg3[%c0_4, %c0_5] : memref<256x32xbf16, #tpu.memory_space<vmem>>, vector<256x32xbf16>
    %cst = arith.constant dense<0.000000e+00> : vector<128x32xf32>
    %6 = tpu.matmul %4, %5, %cst {dimension_numbers = #tpu.dot_dimension_numbers<[1], [0], [0], [1], [0, 0, 1, 1], [], []>} : vector<128x256xbf16>, vector<256x32xbf16>, vector<128x32xf32> -> vector<128x32xf32>
    %7 = arith.addf %3, %6 : vector<128x32xf32>
    %c0_6 = arith.constant 0 : index
    %c0_7 = arith.constant 0 : index
    %8 = vector.load %arg7[%c0_6, %c0_7] : memref<128x32xf32, #tpu.memory_space<vmem>>, vector<128x32xf32>
    tpu.vector_store %arg7[%c0_6, %c0_7], %7 {strides = array<i32>} : memref<128x32xf32, #tpu.memory_space<vmem>>, vector<128x32xf32>,
    %c0_i32_8 = arith.constant 0 : i32
    %9 = arith.cmpi eq, %arg1, %c0_i32_8 : i32
    %10 = arith.extui %9 : i1 to i32
    %c0_i32_9 = arith.constant 0 : i32
    %11 = arith.cmpi ne, %10, %c0_i32_9 : i32
    scf.if %11 {
      %c0_10 = arith.constant 0 : index
      %c0_11 = arith.constant 0 : index
      %12 = vector.load %arg7[%c0_10, %c0_11] : memref<128x32xf32, #tpu.memory_space<vmem>>, vector<128x32xf32>
      %c0_12 = arith.constant 0 : index
      %c0_13 = arith.constant 0 : index
      %13 = vector.load %arg4[%c0_12, %c0_13] : memref<1x32xf32, #tpu.memory_space<vmem>>, vector<1x32xf32>
      %14 = vector.broadcast %13 : vector<1x32xf32> to vector<128x32xf32>
      %15 = arith.addf %12, %14 : vector<128x32xf32>
      %cst_14 = arith.constant 0.000000e+00 : f32
      %16 = vector.broadcast %cst_14 : f32 to vector<128x32xf32>
      %17 = arith.maximumf %15, %16 : vector<128x32xf32>
      %18 = arith.truncf %17 : vector<128x32xf32> to vector<128x32xbf16>
      %c0_15 = arith.constant 0 : index
      %c0_16 = arith.constant 0 : index
      %19 = vector.load %arg5[%c0_15, %c0_16] : memref<32x64xbf16, #tpu.memory_space<vmem>>, vector<32x64xbf16>
      %cst_17 = arith.constant dense<0.000000e+00> : vector<128x64xf32>
      %20 = tpu.matmul %18, %19, %cst_17 {dimension_numbers = #tpu.dot_dimension_numbers<[1], [0], [0], [1], [0, 0, 1, 1], [], []>} : vector<128x32xbf16>, vector<32x64xbf16>, vector<128x64xf32> -> vector<128x64xf32>
      %21 = arith.truncf %20 : vector<128x64xf32> to vector<128x64xbf16>
      %c0_18 = arith.constant 0 : index
      %c0_19 = arith.constant 0 : index
      %22 = vector.load %arg6[%c0_18, %c0_19] : memref<128x64xbf16, #tpu.memory_space<vmem>>, vector<128x64xbf16>
      tpu.vector_store %arg6[%c0_18, %c0_19], %21 {strides = array<i32>} : memref<128x64xbf16, #tpu.memory_space<vmem>>, vector<128x64xbf16>,
    } else {
    }
    return
  }
  func.func @transform_0(%arg0: i32, %arg1: i32) -> (i32, i32) {
    %c0_i32 = arith.constant 0 : i32
    return %arg0, %arg1 : i32, i32
  }
  func.func @transform_1(%arg0: i32, %arg1: i32) -> (i32, i32) {
    %c0_i32 = arith.constant 0 : i32
    %c0_i32_0 = arith.constant 0 : i32
    return %arg1, %c0_i32 : i32, i32
  }
  func.func @transform_2(%arg0: i32, %arg1: i32) -> (i32, i32) {
    %c0_i32 = arith.constant 0 : i32
    %c0_i32_0 = arith.constant 0 : i32
    %c0_i32_1 = arith.constant 0 : i32
    return %c0_i32, %c0_i32_0 : i32, i32
  }
  func.func @transform_3(%arg0: i32, %arg1: i32) -> (i32, i32) {
    %c0_i32 = arith.constant 0 : i32
    %c0_i32_0 = arith.constant 0 : i32
    %c0_i32_1 = arith.constant 0 : i32
    return %c0_i32, %c0_i32_0 : i32, i32
  }
  func.func @transform_4(%arg0: i32, %arg1: i32) -> (i32, i32) {
    %c0_i32 = arith.constant 0 : i32
    %c0_i32_0 = arith.constant 0 : i32
    return %arg0, %c0_i32 : i32, i32
  }
}

module attributes {stable_mosaic.version = 11 : i64} {
  func.func @_pre_kernel(%arg0: i32, %arg1: memref<128x16xf32, #tpu.memory_space<vmem>>, %arg2: memref<2x128x32xf32, #tpu.memory_space<vmem>>, %arg3: memref<128x1xf32, #tpu.memory_space<vmem>>, %arg4: memref<16x32xbf16, #tpu.memory_space<vmem>>, %arg5: memref<1x32xf32, #tpu.memory_space<vmem>>, %arg6: memref<32x32xbf16, #tpu.memory_space<vmem>>, %arg7: memref<1x32xf32, #tpu.memory_space<vmem>>, %arg8: memref<1x32xf32, #tpu.memory_space<vmem>>, %arg9: memref<32x64xbf16, #tpu.memory_space<vmem>>, %arg10: memref<1x64xf32, #tpu.memory_space<vmem>>, %arg11: memref<32x32xbf16, #tpu.memory_space<vmem>>, %arg12: memref<32x32xbf16, #tpu.memory_space<vmem>>, %arg13: memref<32x96xbf16, #tpu.memory_space<vmem>>, %arg14: memref<2x32x64xbf16, #tpu.memory_space<vmem>>, %arg15: memref<128x64xf32, #tpu.memory_space<vmem>>, %arg16: memref<128x32xbf16, #tpu.memory_space<vmem>>, %arg17: memref<128x96xbf16, #tpu.memory_space<vmem>>, %arg18: memref<128x64xbf16, #tpu.memory_space<vmem>>, %arg19: memref<128x64xbf16, #tpu.memory_space<vmem>>) attributes {dimension_semantics = [#tpu.dimension_semantics<parallel>], iteration_bounds = array<i64: 2>, scalar_prefetch = 0 : i64, scratch_operands = 0 : i64, tpu.core_type = #tpu.core_type<tc>, window_params = [{transform_indices = @transform_0, window_bounds = array<i64: 128, 16>}, {transform_indices = @transform_1, window_bounds = array<i64: 2, 128, 32>}, {transform_indices = @transform_2, window_bounds = array<i64: 128, 1>}, {pipeline_mode = #tpu.pipeline_mode<synchronous>, transform_indices = @transform_3, window_bounds = array<i64: 16, 32>}, {pipeline_mode = #tpu.pipeline_mode<synchronous>, transform_indices = @transform_4, window_bounds = array<i64: 1, 32>}, {pipeline_mode = #tpu.pipeline_mode<synchronous>, transform_indices = @transform_5, window_bounds = array<i64: 32, 32>}, {pipeline_mode = #tpu.pipeline_mode<synchronous>, transform_indices = @transform_6, window_bounds = array<i64: 1, 32>}, {pipeline_mode = #tpu.pipeline_mode<synchronous>, transform_indices = @transform_7, window_bounds = array<i64: 1, 32>}, {pipeline_mode = #tpu.pipeline_mode<synchronous>, transform_indices = @transform_8, window_bounds = array<i64: 32, 64>}, {pipeline_mode = #tpu.pipeline_mode<synchronous>, transform_indices = @transform_9, window_bounds = array<i64: 1, 64>}, {pipeline_mode = #tpu.pipeline_mode<synchronous>, transform_indices = @transform_10, window_bounds = array<i64: 32, 32>}, {pipeline_mode = #tpu.pipeline_mode<synchronous>, transform_indices = @transform_11, window_bounds = array<i64: 32, 32>}, {pipeline_mode = #tpu.pipeline_mode<synchronous>, transform_indices = @transform_12, window_bounds = array<i64: 32, 96>}, {pipeline_mode = #tpu.pipeline_mode<synchronous>, transform_indices = @transform_13, window_bounds = array<i64: 2, 32, 64>}, {transform_indices = @transform_14, window_bounds = array<i64: 128, 64>}, {transform_indices = @transform_15, window_bounds = array<i64: 128, 32>}, {transform_indices = @transform_16, window_bounds = array<i64: 128, 96>}, {transform_indices = @transform_17, window_bounds = array<i64: 128, 64>}, {transform_indices = @transform_18, window_bounds = array<i64: 128, 64>}]} {
    %c1 = arith.constant 1 : index
    %c0 = arith.constant 0 : index
    %c0_0 = arith.constant 0 : index
    %0 = vector.load %arg2[%c1, %c0, %c0_0] : memref<2x128x32xf32, #tpu.memory_space<vmem>>, vector<1x128x32xf32>
    %1 = vector.shape_cast %0 : vector<1x128x32xf32> to vector<128x32xf32>
    %2 = arith.truncf %1 : vector<128x32xf32> to vector<128x32xbf16>
    %c0_1 = arith.constant 0 : index
    %c0_2 = arith.constant 0 : index
    %3 = vector.load %arg1[%c0_1, %c0_2] : memref<128x16xf32, #tpu.memory_space<vmem>>, vector<128x16xf32>
    %4 = arith.truncf %3 : vector<128x16xf32> to vector<128x16xbf16>
    %c0_3 = arith.constant 0 : index
    %c0_4 = arith.constant 0 : index
    %5 = vector.load %arg4[%c0_3, %c0_4] : memref<16x32xbf16, #tpu.memory_space<vmem>>, vector<16x32xbf16>
    %cst = arith.constant dense<0.000000e+00> : vector<128x32xf32>
    %6 = tpu.matmul %4, %5, %cst {dimension_numbers = #tpu.dot_dimension_numbers<[1], [0], [0], [1], [0, 0, 1, 1], [], []>} : vector<128x16xbf16>, vector<16x32xbf16>, vector<128x32xf32> -> vector<128x32xf32>
    %c0_5 = arith.constant 0 : index
    %c0_6 = arith.constant 0 : index
    %7 = vector.load %arg5[%c0_5, %c0_6] : memref<1x32xf32, #tpu.memory_space<vmem>>, vector<1x32xf32>
    %8 = vector.broadcast %7 : vector<1x32xf32> to vector<128x32xf32>
    %9 = arith.addf %6, %8 : vector<128x32xf32>
    %cst_7 = arith.constant 0.000000e+00 : f32
    %10 = vector.broadcast %cst_7 : f32 to vector<128x32xf32>
    %11 = arith.maximumf %9, %10 : vector<128x32xf32>
    %12 = arith.truncf %11 : vector<128x32xf32> to vector<128x32xbf16>
    %c0_8 = arith.constant 0 : index
    %c0_9 = arith.constant 0 : index
    %13 = vector.load %arg6[%c0_8, %c0_9] : memref<32x32xbf16, #tpu.memory_space<vmem>>, vector<32x32xbf16>
    %cst_10 = arith.constant dense<0.000000e+00> : vector<128x32xf32>
    %14 = tpu.matmul %2, %13, %cst_10 {dimension_numbers = #tpu.dot_dimension_numbers<[1], [0], [0], [1], [0, 0, 1, 1], [], []>} : vector<128x32xbf16>, vector<32x32xbf16>, vector<128x32xf32> -> vector<128x32xf32>
    %c0_11 = arith.constant 0 : index
    %c0_12 = arith.constant 0 : index
    %15 = vector.load %arg3[%c0_11, %c0_12] : memref<128x1xf32, #tpu.memory_space<vmem>>, vector<128x1xf32>
    %c0_13 = arith.constant 0 : index
    %c0_14 = arith.constant 0 : index
    %16 = vector.load %arg7[%c0_13, %c0_14] : memref<1x32xf32, #tpu.memory_space<vmem>>, vector<1x32xf32>
    %17 = vector.broadcast %15 : vector<128x1xf32> to vector<128x32xf32>
    %18 = vector.broadcast %16 : vector<1x32xf32> to vector<128x32xf32>
    %19 = arith.mulf %17, %18 : vector<128x32xf32>
    %20 = arith.addf %14, %19 : vector<128x32xf32>
    %c0_15 = arith.constant 0 : index
    %c0_16 = arith.constant 0 : index
    %21 = vector.load %arg8[%c0_15, %c0_16] : memref<1x32xf32, #tpu.memory_space<vmem>>, vector<1x32xf32>
    %22 = vector.broadcast %21 : vector<1x32xf32> to vector<128x32xf32>
    %23 = arith.addf %20, %22 : vector<128x32xf32>
    %cst_17 = arith.constant 0.000000e+00 : f32
    %24 = vector.broadcast %cst_17 : f32 to vector<128x32xf32>
    %25 = arith.maximumf %23, %24 : vector<128x32xf32>
    %26 = arith.truncf %25 : vector<128x32xf32> to vector<128x32xbf16>
    %c0_18 = arith.constant 0 : index
    %c0_19 = arith.constant 0 : index
    %27 = vector.load %arg9[%c0_18, %c0_19] : memref<32x64xbf16, #tpu.memory_space<vmem>>, vector<32x64xbf16>
    %cst_20 = arith.constant dense<0.000000e+00> : vector<128x64xf32>
    %28 = tpu.matmul %26, %27, %cst_20 {dimension_numbers = #tpu.dot_dimension_numbers<[1], [0], [0], [1], [0, 0, 1, 1], [], []>} : vector<128x32xbf16>, vector<32x64xbf16>, vector<128x64xf32> -> vector<128x64xf32>
    %c0_21 = arith.constant 0 : index
    %c0_22 = arith.constant 0 : index
    %29 = vector.load %arg10[%c0_21, %c0_22] : memref<1x64xf32, #tpu.memory_space<vmem>>, vector<1x64xf32>
    %30 = vector.broadcast %29 : vector<1x64xf32> to vector<128x64xf32>
    %31 = arith.addf %28, %30 : vector<128x64xf32>
    %32 = vector.extract_strided_slice %31 {offsets = [0, 0], sizes = [128, 32], strides = [1, 1]} : vector<128x64xf32> to vector<128x32xf32>
    %c0_23 = arith.constant 0 : index
    %c0_24 = arith.constant 0 : index
    %33 = vector.load %arg15[%c0_23, %c0_24] : memref<128x64xf32, #tpu.memory_space<vmem>>, vector<128x32xf32>
    tpu.vector_store %arg15[%c0_23, %c0_24], %32 {strides = array<i32>} : memref<128x64xf32, #tpu.memory_space<vmem>>, vector<128x32xf32>,
    %34 = vector.extract_strided_slice %31 {offsets = [0, 32], sizes = [128, 32], strides = [1, 1]} : vector<128x64xf32> to vector<128x32xf32>
    %cst_25 = arith.constant 0.000000e+00 : f32
    %35 = vector.broadcast %cst_25 : f32 to vector<128x32xf32>
    %36 = arith.maximumf %34, %35 : vector<128x32xf32>
    %37 = vector.broadcast %cst_25 : f32 to vector<128x32xf32>
    %38 = arith.subf %34, %37 : vector<128x32xf32>
    %39 = arith.cmpf one, %38, %38 : vector<128x32xf32>
    %40 = vector.broadcast %cst_25 : f32 to vector<128x32xf32>
    %41 = arith.addf %34, %40 : vector<128x32xf32>
    %42 = math.absf %38 : vector<128x32xf32>
    %cst_26 = arith.constant 0.000000e+00 : f32
    %43 = vector.broadcast %cst_26 : f32 to vector<128x32xf32>
    %44 = arith.subf %43, %42 : vector<128x32xf32>
    %45 = math.exp %44 : vector<128x32xf32>
    %46 = math.log1p %45 : vector<128x32xf32>
    %47 = arith.addf %36, %46 : vector<128x32xf32>
    %48 = arith.select %39, %41, %47 : vector<128x32xi1>, vector<128x32xf32>
    %c0_27 = arith.constant 0 : index
    %c32 = arith.constant 32 : index
    %49 = vector.load %arg15[%c0_27, %c32] : memref<128x64xf32, #tpu.memory_space<vmem>>, vector<128x32xf32>
    tpu.vector_store %arg15[%c0_27, %c32], %48 {strides = array<i32>} : memref<128x64xf32, #tpu.memory_space<vmem>>, vector<128x32xf32>,
    %c0_28 = arith.constant 0 : index
    %c0_29 = arith.constant 0 : index
    %50 = vector.load %arg11[%c0_28, %c0_29] : memref<32x32xbf16, #tpu.memory_space<vmem>>, vector<32x32xbf16>
    %cst_30 = arith.constant dense<0.000000e+00> : vector<128x32xf32>
    %51 = tpu.matmul %12, %50, %cst_30 {dimension_numbers = #tpu.dot_dimension_numbers<[1], [0], [0], [1], [0, 0, 1, 1], [], []>} : vector<128x32xbf16>, vector<32x32xbf16>, vector<128x32xf32> -> vector<128x32xf32>
    %c0_31 = arith.constant 0 : index
    %c0_32 = arith.constant 0 : index
    %52 = vector.load %arg12[%c0_31, %c0_32] : memref<32x32xbf16, #tpu.memory_space<vmem>>, vector<32x32xbf16>
    %cst_33 = arith.constant dense<0.000000e+00> : vector<128x32xf32>
    %53 = tpu.matmul %2, %52, %cst_33 {dimension_numbers = #tpu.dot_dimension_numbers<[1], [0], [0], [1], [0, 0, 1, 1], [], []>} : vector<128x32xbf16>, vector<32x32xbf16>, vector<128x32xf32> -> vector<128x32xf32>
    %54 = arith.addf %51, %53 : vector<128x32xf32>
    %55 = arith.truncf %54 : vector<128x32xf32> to vector<128x32xbf16>
    %c0_34 = arith.constant 0 : index
    %c0_35 = arith.constant 0 : index
    %56 = vector.load %arg16[%c0_34, %c0_35] : memref<128x32xbf16, #tpu.memory_space<vmem>>, vector<128x32xbf16>
    tpu.vector_store %arg16[%c0_34, %c0_35], %55 {strides = array<i32>} : memref<128x32xbf16, #tpu.memory_space<vmem>>, vector<128x32xbf16>,
    %c0_36 = arith.constant 0 : index
    %c0_37 = arith.constant 0 : index
    %57 = vector.load %arg13[%c0_36, %c0_37] : memref<32x96xbf16, #tpu.memory_space<vmem>>, vector<32x96xbf16>
    %cst_38 = arith.constant dense<0.000000e+00> : vector<128x96xf32>
    %58 = tpu.matmul %12, %57, %cst_38 {dimension_numbers = #tpu.dot_dimension_numbers<[1], [0], [0], [1], [0, 0, 1, 1], [], []>} : vector<128x32xbf16>, vector<32x96xbf16>, vector<128x96xf32> -> vector<128x96xf32>
    %59 = arith.truncf %58 : vector<128x96xf32> to vector<128x96xbf16>
    %c0_39 = arith.constant 0 : index
    %c0_40 = arith.constant 0 : index
    %60 = vector.load %arg17[%c0_39, %c0_40] : memref<128x96xbf16, #tpu.memory_space<vmem>>, vector<128x96xbf16>
    tpu.vector_store %arg17[%c0_39, %c0_40], %59 {strides = array<i32>} : memref<128x96xbf16, #tpu.memory_space<vmem>>, vector<128x96xbf16>,
    %c0_41 = arith.constant 0 : index
    %c0_42 = arith.constant 0 : index
    %c0_43 = arith.constant 0 : index
    %61 = vector.load %arg2[%c0_41, %c0_42, %c0_43] : memref<2x128x32xf32, #tpu.memory_space<vmem>>, vector<1x128x32xf32>
    %62 = vector.shape_cast %61 : vector<1x128x32xf32> to vector<128x32xf32>
    %63 = arith.truncf %62 : vector<128x32xf32> to vector<128x32xbf16>
    %c0_44 = arith.constant 0 : index
    %c0_45 = arith.constant 0 : index
    %c0_46 = arith.constant 0 : index
    %64 = vector.load %arg14[%c0_44, %c0_45, %c0_46] : memref<2x32x64xbf16, #tpu.memory_space<vmem>>, vector<1x32x64xbf16>
    %65 = vector.shape_cast %64 : vector<1x32x64xbf16> to vector<32x64xbf16>
    %cst_47 = arith.constant dense<0.000000e+00> : vector<128x64xf32>
    %66 = tpu.matmul %63, %65, %cst_47 {dimension_numbers = #tpu.dot_dimension_numbers<[1], [0], [0], [1], [0, 0, 1, 1], [], []>} : vector<128x32xbf16>, vector<32x64xbf16>, vector<128x64xf32> -> vector<128x64xf32>
    %67 = arith.truncf %66 : vector<128x64xf32> to vector<128x64xbf16>
    %c0_48 = arith.constant 0 : index
    %c0_49 = arith.constant 0 : index
    %68 = vector.load %arg18[%c0_48, %c0_49] : memref<128x64xbf16, #tpu.memory_space<vmem>>, vector<128x64xbf16>
    tpu.vector_store %arg18[%c0_48, %c0_49], %67 {strides = array<i32>} : memref<128x64xbf16, #tpu.memory_space<vmem>>, vector<128x64xbf16>,
    %c1_50 = arith.constant 1 : index
    %c0_51 = arith.constant 0 : index
    %c0_52 = arith.constant 0 : index
    %69 = vector.load %arg2[%c1_50, %c0_51, %c0_52] : memref<2x128x32xf32, #tpu.memory_space<vmem>>, vector<1x128x32xf32>
    %70 = vector.shape_cast %69 : vector<1x128x32xf32> to vector<128x32xf32>
    %71 = arith.truncf %70 : vector<128x32xf32> to vector<128x32xbf16>
    %c1_53 = arith.constant 1 : index
    %c0_54 = arith.constant 0 : index
    %c0_55 = arith.constant 0 : index
    %72 = vector.load %arg14[%c1_53, %c0_54, %c0_55] : memref<2x32x64xbf16, #tpu.memory_space<vmem>>, vector<1x32x64xbf16>
    %73 = vector.shape_cast %72 : vector<1x32x64xbf16> to vector<32x64xbf16>
    %cst_56 = arith.constant dense<0.000000e+00> : vector<128x64xf32>
    %74 = tpu.matmul %71, %73, %cst_56 {dimension_numbers = #tpu.dot_dimension_numbers<[1], [0], [0], [1], [0, 0, 1, 1], [], []>} : vector<128x32xbf16>, vector<32x64xbf16>, vector<128x64xf32> -> vector<128x64xf32>
    %75 = arith.truncf %74 : vector<128x64xf32> to vector<128x64xbf16>
    %c0_57 = arith.constant 0 : index
    %c0_58 = arith.constant 0 : index
    %76 = vector.load %arg19[%c0_57, %c0_58] : memref<128x64xbf16, #tpu.memory_space<vmem>>, vector<128x64xbf16>
    tpu.vector_store %arg19[%c0_57, %c0_58], %75 {strides = array<i32>} : memref<128x64xbf16, #tpu.memory_space<vmem>>, vector<128x64xbf16>,
    return
  }
  func.func @transform_0(%arg0: i32) -> (i32, i32) {
    %c0_i32 = arith.constant 0 : i32
    %c0_i32_0 = arith.constant 0 : i32
    return %arg0, %c0_i32 : i32, i32
  }
  func.func @transform_1(%arg0: i32) -> (i32, i32, i32) {
    %c0_i32 = arith.constant 0 : i32
    %c0_i32_0 = arith.constant 0 : i32
    %c0_i32_1 = arith.constant 0 : i32
    return %c0_i32, %arg0, %c0_i32_0 : i32, i32, i32
  }
  func.func @transform_2(%arg0: i32) -> (i32, i32) {
    %c0_i32 = arith.constant 0 : i32
    %c0_i32_0 = arith.constant 0 : i32
    return %arg0, %c0_i32 : i32, i32
  }
  func.func @transform_3(%arg0: i32) -> (i32, i32) {
    %c0_i32 = arith.constant 0 : i32
    %c0_i32_0 = arith.constant 0 : i32
    %c0_i32_1 = arith.constant 0 : i32
    return %c0_i32, %c0_i32_0 : i32, i32
  }
  func.func @transform_4(%arg0: i32) -> (i32, i32) {
    %c0_i32 = arith.constant 0 : i32
    %c0_i32_0 = arith.constant 0 : i32
    %c0_i32_1 = arith.constant 0 : i32
    return %c0_i32, %c0_i32_0 : i32, i32
  }
  func.func @transform_5(%arg0: i32) -> (i32, i32) {
    %c0_i32 = arith.constant 0 : i32
    %c0_i32_0 = arith.constant 0 : i32
    %c0_i32_1 = arith.constant 0 : i32
    return %c0_i32, %c0_i32_0 : i32, i32
  }
  func.func @transform_6(%arg0: i32) -> (i32, i32) {
    %c0_i32 = arith.constant 0 : i32
    %c0_i32_0 = arith.constant 0 : i32
    %c0_i32_1 = arith.constant 0 : i32
    return %c0_i32, %c0_i32_0 : i32, i32
  }
  func.func @transform_7(%arg0: i32) -> (i32, i32) {
    %c0_i32 = arith.constant 0 : i32
    %c0_i32_0 = arith.constant 0 : i32
    %c0_i32_1 = arith.constant 0 : i32
    return %c0_i32, %c0_i32_0 : i32, i32
  }
  func.func @transform_8(%arg0: i32) -> (i32, i32) {
    %c0_i32 = arith.constant 0 : i32
    %c0_i32_0 = arith.constant 0 : i32
    %c0_i32_1 = arith.constant 0 : i32
    return %c0_i32, %c0_i32_0 : i32, i32
  }
  func.func @transform_9(%arg0: i32) -> (i32, i32) {
    %c0_i32 = arith.constant 0 : i32
    %c0_i32_0 = arith.constant 0 : i32
    %c0_i32_1 = arith.constant 0 : i32
    return %c0_i32, %c0_i32_0 : i32, i32
  }
  func.func @transform_10(%arg0: i32) -> (i32, i32) {
    %c0_i32 = arith.constant 0 : i32
    %c0_i32_0 = arith.constant 0 : i32
    %c0_i32_1 = arith.constant 0 : i32
    return %c0_i32, %c0_i32_0 : i32, i32
  }
  func.func @transform_11(%arg0: i32) -> (i32, i32) {
    %c0_i32 = arith.constant 0 : i32
    %c0_i32_0 = arith.constant 0 : i32
    %c0_i32_1 = arith.constant 0 : i32
    return %c0_i32, %c0_i32_0 : i32, i32
  }
  func.func @transform_12(%arg0: i32) -> (i32, i32) {
    %c0_i32 = arith.constant 0 : i32
    %c0_i32_0 = arith.constant 0 : i32
    %c0_i32_1 = arith.constant 0 : i32
    return %c0_i32, %c0_i32_0 : i32, i32
  }
  func.func @transform_13(%arg0: i32) -> (i32, i32, i32) {
    %c0_i32 = arith.constant 0 : i32
    %c0_i32_0 = arith.constant 0 : i32
    %c0_i32_1 = arith.constant 0 : i32
    %c0_i32_2 = arith.constant 0 : i32
    return %c0_i32, %c0_i32_0, %c0_i32_1 : i32, i32, i32
  }
  func.func @transform_14(%arg0: i32) -> (i32, i32) {
    %c0_i32 = arith.constant 0 : i32
    %c0_i32_0 = arith.constant 0 : i32
    return %arg0, %c0_i32 : i32, i32
  }
  func.func @transform_15(%arg0: i32) -> (i32, i32) {
    %c0_i32 = arith.constant 0 : i32
    %c0_i32_0 = arith.constant 0 : i32
    return %arg0, %c0_i32 : i32, i32
  }
  func.func @transform_16(%arg0: i32) -> (i32, i32) {
    %c0_i32 = arith.constant 0 : i32
    %c0_i32_0 = arith.constant 0 : i32
    return %arg0, %c0_i32 : i32, i32
  }
  func.func @transform_17(%arg0: i32) -> (i32, i32) {
    %c0_i32 = arith.constant 0 : i32
    %c0_i32_0 = arith.constant 0 : i32
    return %arg0, %c0_i32 : i32, i32
  }
  func.func @transform_18(%arg0: i32) -> (i32, i32) {
    %c0_i32 = arith.constant 0 : i32
    %c0_i32_0 = arith.constant 0 : i32
    return %arg0, %c0_i32 : i32, i32
  }
}

module attributes {stable_mosaic.version = 11 : i64} {
  func.func @_enc_heads_kernel(%arg0: i32, %arg1: i32, %arg2: memref<128x256xbf16, #tpu.memory_space<vmem>>, %arg3: memref<256x64xbf16, #tpu.memory_space<vmem>>, %arg4: memref<1x64xf32, #tpu.memory_space<vmem>>, %arg5: memref<128x32xf32, #tpu.memory_space<vmem>>, %arg6: memref<32x32xbf16, #tpu.memory_space<vmem>>, %arg7: memref<1x32xf32, #tpu.memory_space<vmem>>, %arg8: memref<32x96xbf16, #tpu.memory_space<vmem>>, %arg9: memref<128x96xbf16, #tpu.memory_space<vmem>>, %arg10: memref<128x64xbf16, #tpu.memory_space<vmem>>, %arg11: memref<128x64xf32, #tpu.memory_space<vmem>>, %arg12: memref<128x32xf32, #tpu.memory_space<vmem>>, %arg13: memref<128x160xbf16, #tpu.memory_space<vmem>>, %arg14: memref<128x64xf32, #tpu.memory_space<vmem>>) attributes {dimension_semantics = [#tpu.dimension_semantics<parallel>, #tpu.dimension_semantics<arbitrary>], iteration_bounds = array<i64: 2, 1>, scalar_prefetch = 0 : i64, scratch_operands = 1 : i64, tpu.core_type = #tpu.core_type<tc>, window_params = [{transform_indices = @transform_0, window_bounds = array<i64: 128, 256>}, {transform_indices = @transform_1, window_bounds = array<i64: 256, 64>}, {pipeline_mode = #tpu.pipeline_mode<synchronous>, transform_indices = @transform_2, window_bounds = array<i64: 1, 64>}, {transform_indices = @transform_3, window_bounds = array<i64: 128, 32>}, {pipeline_mode = #tpu.pipeline_mode<synchronous>, transform_indices = @transform_4, window_bounds = array<i64: 32, 32>}, {pipeline_mode = #tpu.pipeline_mode<synchronous>, transform_indices = @transform_5, window_bounds = array<i64: 1, 32>}, {pipeline_mode = #tpu.pipeline_mode<synchronous>, transform_indices = @transform_6, window_bounds = array<i64: 32, 96>}, {transform_indices = @transform_7, window_bounds = array<i64: 128, 96>}, {transform_indices = @transform_8, window_bounds = array<i64: 128, 64>}, {transform_indices = @transform_9, window_bounds = array<i64: 128, 64>}, {transform_indices = @transform_10, window_bounds = array<i64: 128, 32>}, {transform_indices = @transform_11, window_bounds = array<i64: 128, 160>}]} {
    %c0_i32 = arith.constant 0 : i32
    %0 = arith.cmpi eq, %arg1, %c0_i32 : i32
    %1 = arith.extui %0 : i1 to i32
    %c0_i32_0 = arith.constant 0 : i32
    %2 = arith.cmpi ne, %1, %c0_i32_0 : i32
    scf.if %2 {
      %cst_10 = arith.constant 0.000000e+00 : f32
      %12 = vector.broadcast %cst_10 : f32 to vector<128x64xf32>
      %c0_11 = arith.constant 0 : index
      %c0_12 = arith.constant 0 : index
      %13 = vector.load %arg14[%c0_11, %c0_12] : memref<128x64xf32, #tpu.memory_space<vmem>>, vector<128x64xf32>
      tpu.vector_store %arg14[%c0_11, %c0_12], %12 {strides = array<i32>} : memref<128x64xf32, #tpu.memory_space<vmem>>, vector<128x64xf32>,
    } else {
    }
    %c0 = arith.constant 0 : index
    %c0_1 = arith.constant 0 : index
    %3 = vector.load %arg14[%c0, %c0_1] : memref<128x64xf32, #tpu.memory_space<vmem>>, vector<128x64xf32>
    %c0_2 = arith.constant 0 : index
    %c0_3 = arith.constant 0 : index
    %4 = vector.load %arg2[%c0_2, %c0_3] : memref<128x256xbf16, #tpu.memory_space<vmem>>, vector<128x256xbf16>
    %c0_4 = arith.constant 0 : index
    %c0_5 = arith.constant 0 : index
    %5 = vector.load %arg3[%c0_4, %c0_5] : memref<256x64xbf16, #tpu.memory_space<vmem>>, vector<256x64xbf16>
    %cst = arith.constant dense<0.000000e+00> : vector<128x64xf32>
    %6 = tpu.matmul %4, %5, %cst {dimension_numbers = #tpu.dot_dimension_numbers<[1], [0], [0], [1], [0, 0, 1, 1], [], []>} : vector<128x256xbf16>, vector<256x64xbf16>, vector<128x64xf32> -> vector<128x64xf32>
    %7 = arith.addf %3, %6 : vector<128x64xf32>
    %c0_6 = arith.constant 0 : index
    %c0_7 = arith.constant 0 : index
    %8 = vector.load %arg14[%c0_6, %c0_7] : memref<128x64xf32, #tpu.memory_space<vmem>>, vector<128x64xf32>
    tpu.vector_store %arg14[%c0_6, %c0_7], %7 {strides = array<i32>} : memref<128x64xf32, #tpu.memory_space<vmem>>, vector<128x64xf32>,
    %c0_i32_8 = arith.constant 0 : i32
    %9 = arith.cmpi eq, %arg1, %c0_i32_8 : i32
    %10 = arith.extui %9 : i1 to i32
    %c0_i32_9 = arith.constant 0 : i32
    %11 = arith.cmpi ne, %10, %c0_i32_9 : i32
    scf.if %11 {
      %c0_10 = arith.constant 0 : index
      %c0_11 = arith.constant 0 : index
      %12 = vector.load %arg14[%c0_10, %c0_11] : memref<128x64xf32, #tpu.memory_space<vmem>>, vector<128x64xf32>
      %c0_12 = arith.constant 0 : index
      %c0_13 = arith.constant 0 : index
      %13 = vector.load %arg4[%c0_12, %c0_13] : memref<1x64xf32, #tpu.memory_space<vmem>>, vector<1x64xf32>
      %14 = vector.broadcast %13 : vector<1x64xf32> to vector<128x64xf32>
      %15 = arith.addf %12, %14 : vector<128x64xf32>
      %16 = vector.extract_strided_slice %15 {offsets = [0, 0], sizes = [128, 32], strides = [1, 1]} : vector<128x64xf32> to vector<128x32xf32>
      %17 = vector.extract_strided_slice %15 {offsets = [0, 32], sizes = [128, 32], strides = [1, 1]} : vector<128x64xf32> to vector<128x32xf32>
      %cst_14 = arith.constant 0.000000e+00 : f32
      %18 = vector.broadcast %cst_14 : f32 to vector<128x32xf32>
      %19 = arith.maximumf %17, %18 : vector<128x32xf32>
      %20 = vector.broadcast %cst_14 : f32 to vector<128x32xf32>
      %21 = arith.subf %17, %20 : vector<128x32xf32>
      %22 = arith.cmpf one, %21, %21 : vector<128x32xf32>
      %23 = vector.broadcast %cst_14 : f32 to vector<128x32xf32>
      %24 = arith.addf %17, %23 : vector<128x32xf32>
      %25 = math.absf %21 : vector<128x32xf32>
      %cst_15 = arith.constant 0.000000e+00 : f32
      %26 = vector.broadcast %cst_15 : f32 to vector<128x32xf32>
      %27 = arith.subf %26, %25 : vector<128x32xf32>
      %28 = math.exp %27 : vector<128x32xf32>
      %29 = math.log1p %28 : vector<128x32xf32>
      %30 = arith.addf %19, %29 : vector<128x32xf32>
      %31 = arith.select %22, %24, %30 : vector<128x32xi1>, vector<128x32xf32>
      %c0_16 = arith.constant 0 : index
      %c0_17 = arith.constant 0 : index
      %32 = vector.load %arg11[%c0_16, %c0_17] : memref<128x64xf32, #tpu.memory_space<vmem>>, vector<128x32xf32>
      tpu.vector_store %arg11[%c0_16, %c0_17], %16 {strides = array<i32>} : memref<128x64xf32, #tpu.memory_space<vmem>>, vector<128x32xf32>,
      %c0_18 = arith.constant 0 : index
      %c32 = arith.constant 32 : index
      %33 = vector.load %arg11[%c0_18, %c32] : memref<128x64xf32, #tpu.memory_space<vmem>>, vector<128x32xf32>
      tpu.vector_store %arg11[%c0_18, %c32], %31 {strides = array<i32>} : memref<128x64xf32, #tpu.memory_space<vmem>>, vector<128x32xf32>,
      %c0_19 = arith.constant 0 : index
      %c0_20 = arith.constant 0 : index
      %34 = vector.load %arg5[%c0_19, %c0_20] : memref<128x32xf32, #tpu.memory_space<vmem>>, vector<128x32xf32>
      %35 = arith.mulf %34, %31 : vector<128x32xf32>
      %36 = arith.addf %35, %16 : vector<128x32xf32>
      %c0_21 = arith.constant 0 : index
      %c0_22 = arith.constant 0 : index
      %37 = vector.load %arg12[%c0_21, %c0_22] : memref<128x32xf32, #tpu.memory_space<vmem>>, vector<128x32xf32>
      tpu.vector_store %arg12[%c0_21, %c0_22], %36 {strides = array<i32>} : memref<128x32xf32, #tpu.memory_space<vmem>>, vector<128x32xf32>,
      %38 = arith.truncf %36 : vector<128x32xf32> to vector<128x32xbf16>
      %c0_23 = arith.constant 0 : index
      %c0_24 = arith.constant 0 : index
      %39 = vector.load %arg6[%c0_23, %c0_24] : memref<32x32xbf16, #tpu.memory_space<vmem>>, vector<32x32xbf16>
      %cst_25 = arith.constant dense<0.000000e+00> : vector<128x32xf32>
      %40 = tpu.matmul %38, %39, %cst_25 {dimension_numbers = #tpu.dot_dimension_numbers<[1], [0], [0], [1], [0, 0, 1, 1], [], []>} : vector<128x32xbf16>, vector<32x32xbf16>, vector<128x32xf32> -> vector<128x32xf32>
      %c0_26 = arith.constant 0 : index
      %c0_27 = arith.constant 0 : index
      %41 = vector.load %arg7[%c0_26, %c0_27] : memref<1x32xf32, #tpu.memory_space<vmem>>, vector<1x32xf32>
      %42 = vector.broadcast %41 : vector<1x32xf32> to vector<128x32xf32>
      %43 = arith.addf %40, %42 : vector<128x32xf32>
      %cst_28 = arith.constant 0.000000e+00 : f32
      %44 = vector.broadcast %cst_28 : f32 to vector<128x32xf32>
      %45 = arith.maximumf %43, %44 : vector<128x32xf32>
      %c0_29 = arith.constant 0 : index
      %c0_30 = arith.constant 0 : index
      %46 = vector.load %arg9[%c0_29, %c0_30] : memref<128x96xbf16, #tpu.memory_space<vmem>>, vector<128x96xbf16>
      %47 = arith.extf %46 : vector<128x96xbf16> to vector<128x96xf32>
      %48 = arith.truncf %45 : vector<128x32xf32> to vector<128x32xbf16>
      %c0_31 = arith.constant 0 : index
      %c0_32 = arith.constant 0 : index
      %49 = vector.load %arg8[%c0_31, %c0_32] : memref<32x96xbf16, #tpu.memory_space<vmem>>, vector<32x96xbf16>
      %cst_33 = arith.constant dense<0.000000e+00> : vector<128x96xf32>
      %50 = tpu.matmul %48, %49, %cst_33 {dimension_numbers = #tpu.dot_dimension_numbers<[1], [0], [0], [1], [0, 0, 1, 1], [], []>} : vector<128x32xbf16>, vector<32x96xbf16>, vector<128x96xf32> -> vector<128x96xf32>
      %51 = arith.addf %47, %50 : vector<128x96xf32>
      %52 = arith.truncf %51 : vector<128x96xf32> to vector<128x96xbf16>
      %c0_34 = arith.constant 0 : index
      %c0_35 = arith.constant 0 : index
      %53 = vector.load %arg13[%c0_34, %c0_35] : memref<128x160xbf16, #tpu.memory_space<vmem>>, vector<128x96xbf16>
      tpu.vector_store %arg13[%c0_34, %c0_35], %52 {strides = array<i32>} : memref<128x160xbf16, #tpu.memory_space<vmem>>, vector<128x96xbf16>,
      %c0_36 = arith.constant 0 : index
      %c0_37 = arith.constant 0 : index
      %54 = vector.load %arg10[%c0_36, %c0_37] : memref<128x64xbf16, #tpu.memory_space<vmem>>, vector<128x64xbf16>
      %c0_38 = arith.constant 0 : index
      %c96 = arith.constant 96 : index
      %55 = vector.load %arg13[%c0_38, %c96] : memref<128x160xbf16, #tpu.memory_space<vmem>>, vector<128x64xbf16>
      tpu.vector_store %arg13[%c0_38, %c96], %54 {strides = array<i32>} : memref<128x160xbf16, #tpu.memory_space<vmem>>, vector<128x64xbf16>,
    } else {
    }
    return
  }
  func.func @transform_0(%arg0: i32, %arg1: i32) -> (i32, i32) {
    %c0_i32 = arith.constant 0 : i32
    return %arg0, %arg1 : i32, i32
  }
  func.func @transform_1(%arg0: i32, %arg1: i32) -> (i32, i32) {
    %c0_i32 = arith.constant 0 : i32
    %c0_i32_0 = arith.constant 0 : i32
    return %arg1, %c0_i32 : i32, i32
  }
  func.func @transform_2(%arg0: i32, %arg1: i32) -> (i32, i32) {
    %c0_i32 = arith.constant 0 : i32
    %c0_i32_0 = arith.constant 0 : i32
    %c0_i32_1 = arith.constant 0 : i32
    return %c0_i32, %c0_i32_0 : i32, i32
  }
  func.func @transform_3(%arg0: i32, %arg1: i32) -> (i32, i32) {
    %c0_i32 = arith.constant 0 : i32
    %c0_i32_0 = arith.constant 0 : i32
    return %arg0, %c0_i32 : i32, i32
  }
  func.func @transform_4(%arg0: i32, %arg1: i32) -> (i32, i32) {
    %c0_i32 = arith.constant 0 : i32
    %c0_i32_0 = arith.constant 0 : i32
    %c0_i32_1 = arith.constant 0 : i32
    return %c0_i32, %c0_i32_0 : i32, i32
  }
  func.func @transform_5(%arg0: i32, %arg1: i32) -> (i32, i32) {
    %c0_i32 = arith.constant 0 : i32
    %c0_i32_0 = arith.constant 0 : i32
    %c0_i32_1 = arith.constant 0 : i32
    return %c0_i32, %c0_i32_0 : i32, i32
  }
  func.func @transform_6(%arg0: i32, %arg1: i32) -> (i32, i32) {
    %c0_i32 = arith.constant 0 : i32
    %c0_i32_0 = arith.constant 0 : i32
    %c0_i32_1 = arith.constant 0 : i32
    return %c0_i32, %c0_i32_0 : i32, i32
  }
  func.func @transform_7(%arg0: i32, %arg1: i32) -> (i32, i32) {
    %c0_i32 = arith.constant 0 : i32
    %c0_i32_0 = arith.constant 0 : i32
    return %arg0, %c0_i32 : i32, i32
  }
  func.func @transform_8(%arg0: i32, %arg1: i32) -> (i32, i32) {
    %c0_i32 = arith.constant 0 : i32
    %c0_i32_0 = arith.constant 0 : i32
    return %arg0, %c0_i32 : i32, i32
  }
  func.func @transform_9(%arg0: i32, %arg1: i32) -> (i32, i32) {
    %c0_i32 = arith.constant 0 : i32
    %c0_i32_0 = arith.constant 0 : i32
    return %arg0, %c0_i32 : i32, i32
  }
  func.func @transform_10(%arg0: i32, %arg1: i32) -> (i32, i32) {
    %c0_i32 = arith.constant 0 : i32
    %c0_i32_0 = arith.constant 0 : i32
    return %arg0, %c0_i32 : i32, i32
  }
  func.func @transform_11(%arg0: i32, %arg1: i32) -> (i32, i32) {
    %c0_i32 = arith.constant 0 : i32
    %c0_i32_0 = arith.constant 0 : i32
    return %arg0, %c0_i32 : i32, i32
  }
}

module attributes {stable_mosaic.version = 11 : i64} {
  func.func @_gru1_kernel(%arg0: i32, %arg1: i32, %arg2: memref<128x256xbf16, #tpu.memory_space<vmem>>, %arg3: memref<256x160xbf16, #tpu.memory_space<vmem>>, %arg4: memref<1x96xf32, #tpu.memory_space<vmem>>, %arg5: memref<1x64xf32, #tpu.memory_space<vmem>>, %arg6: memref<128x32xf32, #tpu.memory_space<vmem>>, %arg7: memref<32x32xbf16, #tpu.memory_space<vmem>>, %arg8: memref<128x64xf32, #tpu.memory_space<vmem>>, %arg9: memref<128x32xbf16, #tpu.memory_space<vmem>>, %arg10: memref<128x160xf32, #tpu.memory_space<vmem>>) attributes {dimension_semantics = [#tpu.dimension_semantics<parallel>, #tpu.dimension_semantics<arbitrary>], iteration_bounds = array<i64: 2, 1>, scalar_prefetch = 0 : i64, scratch_operands = 1 : i64, tpu.core_type = #tpu.core_type<tc>, window_params = [{transform_indices = @transform_0, window_bounds = array<i64: 128, 256>}, {transform_indices = @transform_1, window_bounds = array<i64: 256, 160>}, {pipeline_mode = #tpu.pipeline_mode<synchronous>, transform_indices = @transform_2, window_bounds = array<i64: 1, 96>}, {pipeline_mode = #tpu.pipeline_mode<synchronous>, transform_indices = @transform_3, window_bounds = array<i64: 1, 64>}, {transform_indices = @transform_4, window_bounds = array<i64: 128, 32>}, {pipeline_mode = #tpu.pipeline_mode<synchronous>, transform_indices = @transform_5, window_bounds = array<i64: 32, 32>}, {transform_indices = @transform_6, window_bounds = array<i64: 128, 64>}, {transform_indices = @transform_7, window_bounds = array<i64: 128, 32>}]} {
    %c0_i32 = arith.constant 0 : i32
    %0 = arith.cmpi eq, %arg1, %c0_i32 : i32
    %1 = arith.extui %0 : i1 to i32
    %c0_i32_0 = arith.constant 0 : i32
    %2 = arith.cmpi ne, %1, %c0_i32_0 : i32
    scf.if %2 {
      %cst_10 = arith.constant 0.000000e+00 : f32
      %12 = vector.broadcast %cst_10 : f32 to vector<128x160xf32>
      %c0_11 = arith.constant 0 : index
      %c0_12 = arith.constant 0 : index
      %13 = vector.load %arg10[%c0_11, %c0_12] : memref<128x160xf32, #tpu.memory_space<vmem>>, vector<128x160xf32>
      tpu.vector_store %arg10[%c0_11, %c0_12], %12 {strides = array<i32>} : memref<128x160xf32, #tpu.memory_space<vmem>>, vector<128x160xf32>,
    } else {
    }
    %c0 = arith.constant 0 : index
    %c0_1 = arith.constant 0 : index
    %3 = vector.load %arg10[%c0, %c0_1] : memref<128x160xf32, #tpu.memory_space<vmem>>, vector<128x160xf32>
    %c0_2 = arith.constant 0 : index
    %c0_3 = arith.constant 0 : index
    %4 = vector.load %arg2[%c0_2, %c0_3] : memref<128x256xbf16, #tpu.memory_space<vmem>>, vector<128x256xbf16>
    %c0_4 = arith.constant 0 : index
    %c0_5 = arith.constant 0 : index
    %5 = vector.load %arg3[%c0_4, %c0_5] : memref<256x160xbf16, #tpu.memory_space<vmem>>, vector<256x160xbf16>
    %cst = arith.constant dense<0.000000e+00> : vector<128x160xf32>
    %6 = tpu.matmul %4, %5, %cst {dimension_numbers = #tpu.dot_dimension_numbers<[1], [0], [0], [1], [0, 0, 1, 1], [], []>} : vector<128x256xbf16>, vector<256x160xbf16>, vector<128x160xf32> -> vector<128x160xf32>
    %7 = arith.addf %3, %6 : vector<128x160xf32>
    %c0_6 = arith.constant 0 : index
    %c0_7 = arith.constant 0 : index
    %8 = vector.load %arg10[%c0_6, %c0_7] : memref<128x160xf32, #tpu.memory_space<vmem>>, vector<128x160xf32>
    tpu.vector_store %arg10[%c0_6, %c0_7], %7 {strides = array<i32>} : memref<128x160xf32, #tpu.memory_space<vmem>>, vector<128x160xf32>,
    %c0_i32_8 = arith.constant 0 : i32
    %9 = arith.cmpi eq, %arg1, %c0_i32_8 : i32
    %10 = arith.extui %9 : i1 to i32
    %c0_i32_9 = arith.constant 0 : i32
    %11 = arith.cmpi ne, %10, %c0_i32_9 : i32
    scf.if %11 {
      %c0_10 = arith.constant 0 : index
      %c0_11 = arith.constant 0 : index
      %12 = vector.load %arg10[%c0_10, %c0_11] : memref<128x160xf32, #tpu.memory_space<vmem>>, vector<128x160xf32>
      %13 = vector.extract_strided_slice %12 {offsets = [0, 0], sizes = [128, 96], strides = [1, 1]} : vector<128x160xf32> to vector<128x96xf32>
      %c0_12 = arith.constant 0 : index
      %c0_13 = arith.constant 0 : index
      %14 = vector.load %arg4[%c0_12, %c0_13] : memref<1x96xf32, #tpu.memory_space<vmem>>, vector<1x96xf32>
      %15 = vector.broadcast %14 : vector<1x96xf32> to vector<128x96xf32>
      %16 = arith.addf %13, %15 : vector<128x96xf32>
      %17 = vector.extract_strided_slice %12 {offsets = [0, 96], sizes = [128, 64], strides = [1, 1]} : vector<128x160xf32> to vector<128x64xf32>
      %c0_14 = arith.constant 0 : index
      %c0_15 = arith.constant 0 : index
      %18 = vector.load %arg5[%c0_14, %c0_15] : memref<1x64xf32, #tpu.memory_space<vmem>>, vector<1x64xf32>
      %19 = vector.broadcast %18 : vector<1x64xf32> to vector<128x64xf32>
      %20 = arith.addf %17, %19 : vector<128x64xf32>
      %21 = vector.extract_strided_slice %16 {offsets = [0, 0], sizes = [128, 32], strides = [1, 1]} : vector<128x96xf32> to vector<128x32xf32>
      %22 = vector.extract_strided_slice %20 {offsets = [0, 0], sizes = [128, 32], strides = [1, 1]} : vector<128x64xf32> to vector<128x32xf32>
      %23 = arith.addf %21, %22 : vector<128x32xf32>
      %24 = arith.negf %23 : vector<128x32xf32>
      %25 = math.exp %24 : vector<128x32xf32>
      %cst_16 = arith.constant 1.000000e+00 : f32
      %26 = vector.broadcast %cst_16 : f32 to vector<128x32xf32>
      %27 = arith.addf %26, %25 : vector<128x32xf32>
      %28 = arith.divf %26, %27 : vector<128x32xf32>
      %29 = vector.extract_strided_slice %16 {offsets = [0, 32], sizes = [128, 32], strides = [1, 1]} : vector<128x96xf32> to vector<128x32xf32>
      %30 = vector.extract_strided_slice %20 {offsets = [0, 32], sizes = [128, 32], strides = [1, 1]} : vector<128x64xf32> to vector<128x32xf32>
      %31 = arith.addf %29, %30 : vector<128x32xf32>
      %32 = arith.negf %31 : vector<128x32xf32>
      %33 = math.exp %32 : vector<128x32xf32>
      %cst_17 = arith.constant 1.000000e+00 : f32
      %34 = vector.broadcast %cst_17 : f32 to vector<128x32xf32>
      %35 = arith.addf %34, %33 : vector<128x32xf32>
      %36 = arith.divf %34, %35 : vector<128x32xf32>
      %c0_18 = arith.constant 0 : index
      %c0_19 = arith.constant 0 : index
      %37 = vector.load %arg8[%c0_18, %c0_19] : memref<128x64xf32, #tpu.memory_space<vmem>>, vector<128x32xf32>
      tpu.vector_store %arg8[%c0_18, %c0_19], %28 {strides = array<i32>} : memref<128x64xf32, #tpu.memory_space<vmem>>, vector<128x32xf32>,
      %38 = vector.extract_strided_slice %16 {offsets = [0, 64], sizes = [128, 32], strides = [1, 1]} : vector<128x96xf32> to vector<128x32xf32>
      %c0_20 = arith.constant 0 : index
      %c32 = arith.constant 32 : index
      %39 = vector.load %arg8[%c0_20, %c32] : memref<128x64xf32, #tpu.memory_space<vmem>>, vector<128x32xf32>
      tpu.vector_store %arg8[%c0_20, %c32], %38 {strides = array<i32>} : memref<128x64xf32, #tpu.memory_space<vmem>>, vector<128x32xf32>,
      %c0_21 = arith.constant 0 : index
      %c0_22 = arith.constant 0 : index
      %40 = vector.load %arg6[%c0_21, %c0_22] : memref<128x32xf32, #tpu.memory_space<vmem>>, vector<128x32xf32>
      %41 = arith.mulf %36, %40 : vector<128x32xf32>
      %42 = arith.truncf %41 : vector<128x32xf32> to vector<128x32xbf16>
      %c0_23 = arith.constant 0 : index
      %c0_24 = arith.constant 0 : index
      %43 = vector.load %arg7[%c0_23, %c0_24] : memref<32x32xbf16, #tpu.memory_space<vmem>>, vector<32x32xbf16>
      %cst_25 = arith.constant dense<0.000000e+00> : vector<128x32xf32>
      %44 = tpu.matmul %42, %43, %cst_25 {dimension_numbers = #tpu.dot_dimension_numbers<[1], [0], [0], [1], [0, 0, 1, 1], [], []>} : vector<128x32xbf16>, vector<32x32xbf16>, vector<128x32xf32> -> vector<128x32xf32>
      %45 = arith.truncf %44 : vector<128x32xf32> to vector<128x32xbf16>
      %c0_26 = arith.constant 0 : index
      %c0_27 = arith.constant 0 : index
      %46 = vector.load %arg9[%c0_26, %c0_27] : memref<128x32xbf16, #tpu.memory_space<vmem>>, vector<128x32xbf16>
      tpu.vector_store %arg9[%c0_26, %c0_27], %45 {strides = array<i32>} : memref<128x32xbf16, #tpu.memory_space<vmem>>, vector<128x32xbf16>,
    } else {
    }
    return
  }
  func.func @transform_0(%arg0: i32, %arg1: i32) -> (i32, i32) {
    %c0_i32 = arith.constant 0 : i32
    return %arg0, %arg1 : i32, i32
  }
  func.func @transform_1(%arg0: i32, %arg1: i32) -> (i32, i32) {
    %c0_i32 = arith.constant 0 : i32
    %c0_i32_0 = arith.constant 0 : i32
    return %arg1, %c0_i32 : i32, i32
  }
  func.func @transform_2(%arg0: i32, %arg1: i32) -> (i32, i32) {
    %c0_i32 = arith.constant 0 : i32
    %c0_i32_0 = arith.constant 0 : i32
    %c0_i32_1 = arith.constant 0 : i32
    return %c0_i32, %c0_i32_0 : i32, i32
  }
  func.func @transform_3(%arg0: i32, %arg1: i32) -> (i32, i32) {
    %c0_i32 = arith.constant 0 : i32
    %c0_i32_0 = arith.constant 0 : i32
    %c0_i32_1 = arith.constant 0 : i32
    return %c0_i32, %c0_i32_0 : i32, i32
  }
  func.func @transform_4(%arg0: i32, %arg1: i32) -> (i32, i32) {
    %c0_i32 = arith.constant 0 : i32
    %c0_i32_0 = arith.constant 0 : i32
    return %arg0, %c0_i32 : i32, i32
  }
  func.func @transform_5(%arg0: i32, %arg1: i32) -> (i32, i32) {
    %c0_i32 = arith.constant 0 : i32
    %c0_i32_0 = arith.constant 0 : i32
    %c0_i32_1 = arith.constant 0 : i32
    return %c0_i32, %c0_i32_0 : i32, i32
  }
  func.func @transform_6(%arg0: i32, %arg1: i32) -> (i32, i32) {
    %c0_i32 = arith.constant 0 : i32
    %c0_i32_0 = arith.constant 0 : i32
    return %arg0, %c0_i32 : i32, i32
  }
  func.func @transform_7(%arg0: i32, %arg1: i32) -> (i32, i32) {
    %c0_i32 = arith.constant 0 : i32
    %c0_i32_0 = arith.constant 0 : i32
    return %arg0, %c0_i32 : i32, i32
  }
}

module attributes {stable_mosaic.version = 11 : i64} {
  func.func @_gru2_kernel(%arg0: i32, %arg1: i32, %arg2: memref<128x256xbf16, #tpu.memory_space<vmem>>, %arg3: memref<256x32xbf16, #tpu.memory_space<vmem>>, %arg4: memref<1x32xf32, #tpu.memory_space<vmem>>, %arg5: memref<128x64xf32, #tpu.memory_space<vmem>>, %arg6: memref<128x32xf32, #tpu.memory_space<vmem>>, %arg7: memref<32x96xbf16, #tpu.memory_space<vmem>>, %arg8: memref<128x64xbf16, #tpu.memory_space<vmem>>, %arg9: memref<128x32xf32, #tpu.memory_space<vmem>>, %arg10: memref<128x160xbf16, #tpu.memory_space<vmem>>, %arg11: memref<128x32xf32, #tpu.memory_space<vmem>>) attributes {dimension_semantics = [#tpu.dimension_semantics<parallel>, #tpu.dimension_semantics<arbitrary>], iteration_bounds = array<i64: 2, 1>, scalar_prefetch = 0 : i64, scratch_operands = 1 : i64, tpu.core_type = #tpu.core_type<tc>, window_params = [{transform_indices = @transform_0, window_bounds = array<i64: 128, 256>}, {transform_indices = @transform_1, window_bounds = array<i64: 256, 32>}, {pipeline_mode = #tpu.pipeline_mode<synchronous>, transform_indices = @transform_2, window_bounds = array<i64: 1, 32>}, {transform_indices = @transform_3, window_bounds = array<i64: 128, 64>}, {transform_indices = @transform_4, window_bounds = array<i64: 128, 32>}, {pipeline_mode = #tpu.pipeline_mode<synchronous>, transform_indices = @transform_5, window_bounds = array<i64: 32, 96>}, {transform_indices = @transform_6, window_bounds = array<i64: 128, 64>}, {transform_indices = @transform_7, window_bounds = array<i64: 128, 32>}, {transform_indices = @transform_8, window_bounds = array<i64: 128, 160>}]} {
    %c0_i32 = arith.constant 0 : i32
    %0 = arith.cmpi eq, %arg1, %c0_i32 : i32
    %1 = arith.extui %0 : i1 to i32
    %c0_i32_0 = arith.constant 0 : i32
    %2 = arith.cmpi ne, %1, %c0_i32_0 : i32
    scf.if %2 {
      %cst_10 = arith.constant 0.000000e+00 : f32
      %12 = vector.broadcast %cst_10 : f32 to vector<128x32xf32>
      %c0_11 = arith.constant 0 : index
      %c0_12 = arith.constant 0 : index
      %13 = vector.load %arg11[%c0_11, %c0_12] : memref<128x32xf32, #tpu.memory_space<vmem>>, vector<128x32xf32>
      tpu.vector_store %arg11[%c0_11, %c0_12], %12 {strides = array<i32>} : memref<128x32xf32, #tpu.memory_space<vmem>>, vector<128x32xf32>,
    } else {
    }
    %c0 = arith.constant 0 : index
    %c0_1 = arith.constant 0 : index
    %3 = vector.load %arg11[%c0, %c0_1] : memref<128x32xf32, #tpu.memory_space<vmem>>, vector<128x32xf32>
    %c0_2 = arith.constant 0 : index
    %c0_3 = arith.constant 0 : index
    %4 = vector.load %arg2[%c0_2, %c0_3] : memref<128x256xbf16, #tpu.memory_space<vmem>>, vector<128x256xbf16>
    %c0_4 = arith.constant 0 : index
    %c0_5 = arith.constant 0 : index
    %5 = vector.load %arg3[%c0_4, %c0_5] : memref<256x32xbf16, #tpu.memory_space<vmem>>, vector<256x32xbf16>
    %cst = arith.constant dense<0.000000e+00> : vector<128x32xf32>
    %6 = tpu.matmul %4, %5, %cst {dimension_numbers = #tpu.dot_dimension_numbers<[1], [0], [0], [1], [0, 0, 1, 1], [], []>} : vector<128x256xbf16>, vector<256x32xbf16>, vector<128x32xf32> -> vector<128x32xf32>
    %7 = arith.addf %3, %6 : vector<128x32xf32>
    %c0_6 = arith.constant 0 : index
    %c0_7 = arith.constant 0 : index
    %8 = vector.load %arg11[%c0_6, %c0_7] : memref<128x32xf32, #tpu.memory_space<vmem>>, vector<128x32xf32>
    tpu.vector_store %arg11[%c0_6, %c0_7], %7 {strides = array<i32>} : memref<128x32xf32, #tpu.memory_space<vmem>>, vector<128x32xf32>,
    %c0_i32_8 = arith.constant 0 : i32
    %9 = arith.cmpi eq, %arg1, %c0_i32_8 : i32
    %10 = arith.extui %9 : i1 to i32
    %c0_i32_9 = arith.constant 0 : i32
    %11 = arith.cmpi ne, %10, %c0_i32_9 : i32
    scf.if %11 {
      %c0_10 = arith.constant 0 : index
      %c0_11 = arith.constant 0 : index
      %12 = vector.load %arg5[%c0_10, %c0_11] : memref<128x64xf32, #tpu.memory_space<vmem>>, vector<128x32xf32>
      %c0_12 = arith.constant 0 : index
      %c32 = arith.constant 32 : index
      %13 = vector.load %arg5[%c0_12, %c32] : memref<128x64xf32, #tpu.memory_space<vmem>>, vector<128x32xf32>
      %c0_13 = arith.constant 0 : index
      %c0_14 = arith.constant 0 : index
      %14 = vector.load %arg11[%c0_13, %c0_14] : memref<128x32xf32, #tpu.memory_space<vmem>>, vector<128x32xf32>
      %15 = arith.addf %13, %14 : vector<128x32xf32>
      %c0_15 = arith.constant 0 : index
      %c0_16 = arith.constant 0 : index
      %16 = vector.load %arg4[%c0_15, %c0_16] : memref<1x32xf32, #tpu.memory_space<vmem>>, vector<1x32xf32>
      %17 = vector.broadcast %16 : vector<1x32xf32> to vector<128x32xf32>
      %18 = arith.addf %15, %17 : vector<128x32xf32>
      %19 = math.tanh %18 : vector<128x32xf32>
      %c0_17 = arith.constant 0 : index
      %c0_18 = arith.constant 0 : index
      %20 = vector.load %arg6[%c0_17, %c0_18] : memref<128x32xf32, #tpu.memory_space<vmem>>, vector<128x32xf32>
      %21 = arith.mulf %12, %20 : vector<128x32xf32>
      %cst_19 = arith.constant 1.000000e+00 : f32
      %22 = vector.broadcast %cst_19 : f32 to vector<128x32xf32>
      %23 = arith.subf %22, %12 : vector<128x32xf32>
      %24 = arith.mulf %23, %19 : vector<128x32xf32>
      %25 = arith.addf %21, %24 : vector<128x32xf32>
      %c0_20 = arith.constant 0 : index
      %c0_21 = arith.constant 0 : index
      %26 = vector.load %arg9[%c0_20, %c0_21] : memref<128x32xf32, #tpu.memory_space<vmem>>, vector<128x32xf32>
      tpu.vector_store %arg9[%c0_20, %c0_21], %25 {strides = array<i32>} : memref<128x32xf32, #tpu.memory_space<vmem>>, vector<128x32xf32>,
      %27 = arith.truncf %25 : vector<128x32xf32> to vector<128x32xbf16>
      %c0_22 = arith.constant 0 : index
      %c0_23 = arith.constant 0 : index
      %28 = vector.load %arg7[%c0_22, %c0_23] : memref<32x96xbf16, #tpu.memory_space<vmem>>, vector<32x96xbf16>
      %cst_24 = arith.constant dense<0.000000e+00> : vector<128x96xf32>
      %29 = tpu.matmul %27, %28, %cst_24 {dimension_numbers = #tpu.dot_dimension_numbers<[1], [0], [0], [1], [0, 0, 1, 1], [], []>} : vector<128x32xbf16>, vector<32x96xbf16>, vector<128x96xf32> -> vector<128x96xf32>
      %30 = arith.truncf %29 : vector<128x96xf32> to vector<128x96xbf16>
      %c0_25 = arith.constant 0 : index
      %c0_26 = arith.constant 0 : index
      %31 = vector.load %arg10[%c0_25, %c0_26] : memref<128x160xbf16, #tpu.memory_space<vmem>>, vector<128x96xbf16>
      tpu.vector_store %arg10[%c0_25, %c0_26], %30 {strides = array<i32>} : memref<128x160xbf16, #tpu.memory_space<vmem>>, vector<128x96xbf16>,
      %c0_27 = arith.constant 0 : index
      %c0_28 = arith.constant 0 : index
      %32 = vector.load %arg8[%c0_27, %c0_28] : memref<128x64xbf16, #tpu.memory_space<vmem>>, vector<128x64xbf16>
      %c0_29 = arith.constant 0 : index
      %c96 = arith.constant 96 : index
      %33 = vector.load %arg10[%c0_29, %c96] : memref<128x160xbf16, #tpu.memory_space<vmem>>, vector<128x64xbf16>
      tpu.vector_store %arg10[%c0_29, %c96], %32 {strides = array<i32>} : memref<128x160xbf16, #tpu.memory_space<vmem>>, vector<128x64xbf16>,
    } else {
    }
    return
  }
  func.func @transform_0(%arg0: i32, %arg1: i32) -> (i32, i32) {
    %c0_i32 = arith.constant 0 : i32
    return %arg0, %arg1 : i32, i32
  }
  func.func @transform_1(%arg0: i32, %arg1: i32) -> (i32, i32) {
    %c0_i32 = arith.constant 0 : i32
    %c0_i32_0 = arith.constant 0 : i32
    return %arg1, %c0_i32 : i32, i32
  }
  func.func @transform_2(%arg0: i32, %arg1: i32) -> (i32, i32) {
    %c0_i32 = arith.constant 0 : i32
    %c0_i32_0 = arith.constant 0 : i32
    %c0_i32_1 = arith.constant 0 : i32
    return %c0_i32, %c0_i32_0 : i32, i32
  }
  func.func @transform_3(%arg0: i32, %arg1: i32) -> (i32, i32) {
    %c0_i32 = arith.constant 0 : i32
    %c0_i32_0 = arith.constant 0 : i32
    return %arg0, %c0_i32 : i32, i32
  }
  func.func @transform_4(%arg0: i32, %arg1: i32) -> (i32, i32) {
    %c0_i32 = arith.constant 0 : i32
    %c0_i32_0 = arith.constant 0 : i32
    return %arg0, %c0_i32 : i32, i32
  }
  func.func @transform_5(%arg0: i32, %arg1: i32) -> (i32, i32) {
    %c0_i32 = arith.constant 0 : i32
    %c0_i32_0 = arith.constant 0 : i32
    %c0_i32_1 = arith.constant 0 : i32
    return %c0_i32, %c0_i32_0 : i32, i32
  }
  func.func @transform_6(%arg0: i32, %arg1: i32) -> (i32, i32) {
    %c0_i32 = arith.constant 0 : i32
    %c0_i32_0 = arith.constant 0 : i32
    return %arg0, %c0_i32 : i32, i32
  }
  func.func @transform_7(%arg0: i32, %arg1: i32) -> (i32, i32) {
    %c0_i32 = arith.constant 0 : i32
    %c0_i32_0 = arith.constant 0 : i32
    return %arg0, %c0_i32 : i32, i32
  }
  func.func @transform_8(%arg0: i32, %arg1: i32) -> (i32, i32) {
    %c0_i32 = arith.constant 0 : i32
    %c0_i32_0 = arith.constant 0 : i32
    return %arg0, %c0_i32 : i32, i32
  }
}

module attributes {stable_mosaic.version = 11 : i64} {
  func.func @_gru2_kernel(%arg0: i32, %arg1: i32, %arg2: memref<128x256xbf16, #tpu.memory_space<vmem>>, %arg3: memref<256x32xbf16, #tpu.memory_space<vmem>>, %arg4: memref<1x32xf32, #tpu.memory_space<vmem>>, %arg5: memref<128x64xf32, #tpu.memory_space<vmem>>, %arg6: memref<128x32xf32, #tpu.memory_space<vmem>>, %arg7: memref<128x32xf32, #tpu.memory_space<vmem>>, %arg8: memref<128x32xf32, #tpu.memory_space<vmem>>) attributes {dimension_semantics = [#tpu.dimension_semantics<parallel>, #tpu.dimension_semantics<arbitrary>], iteration_bounds = array<i64: 2, 1>, scalar_prefetch = 0 : i64, scratch_operands = 1 : i64, tpu.core_type = #tpu.core_type<tc>, window_params = [{transform_indices = @transform_0, window_bounds = array<i64: 128, 256>}, {transform_indices = @transform_1, window_bounds = array<i64: 256, 32>}, {pipeline_mode = #tpu.pipeline_mode<synchronous>, transform_indices = @transform_2, window_bounds = array<i64: 1, 32>}, {transform_indices = @transform_3, window_bounds = array<i64: 128, 64>}, {transform_indices = @transform_4, window_bounds = array<i64: 128, 32>}, {transform_indices = @transform_5, window_bounds = array<i64: 128, 32>}]} {
    %c0_i32 = arith.constant 0 : i32
    %0 = arith.cmpi eq, %arg1, %c0_i32 : i32
    %1 = arith.extui %0 : i1 to i32
    %c0_i32_0 = arith.constant 0 : i32
    %2 = arith.cmpi ne, %1, %c0_i32_0 : i32
    scf.if %2 {
      %cst_10 = arith.constant 0.000000e+00 : f32
      %12 = vector.broadcast %cst_10 : f32 to vector<128x32xf32>
      %c0_11 = arith.constant 0 : index
      %c0_12 = arith.constant 0 : index
      %13 = vector.load %arg8[%c0_11, %c0_12] : memref<128x32xf32, #tpu.memory_space<vmem>>, vector<128x32xf32>
      tpu.vector_store %arg8[%c0_11, %c0_12], %12 {strides = array<i32>} : memref<128x32xf32, #tpu.memory_space<vmem>>, vector<128x32xf32>,
    } else {
    }
    %c0 = arith.constant 0 : index
    %c0_1 = arith.constant 0 : index
    %3 = vector.load %arg8[%c0, %c0_1] : memref<128x32xf32, #tpu.memory_space<vmem>>, vector<128x32xf32>
    %c0_2 = arith.constant 0 : index
    %c0_3 = arith.constant 0 : index
    %4 = vector.load %arg2[%c0_2, %c0_3] : memref<128x256xbf16, #tpu.memory_space<vmem>>, vector<128x256xbf16>
    %c0_4 = arith.constant 0 : index
    %c0_5 = arith.constant 0 : index
    %5 = vector.load %arg3[%c0_4, %c0_5] : memref<256x32xbf16, #tpu.memory_space<vmem>>, vector<256x32xbf16>
    %cst = arith.constant dense<0.000000e+00> : vector<128x32xf32>
    %6 = tpu.matmul %4, %5, %cst {dimension_numbers = #tpu.dot_dimension_numbers<[1], [0], [0], [1], [0, 0, 1, 1], [], []>} : vector<128x256xbf16>, vector<256x32xbf16>, vector<128x32xf32> -> vector<128x32xf32>
    %7 = arith.addf %3, %6 : vector<128x32xf32>
    %c0_6 = arith.constant 0 : index
    %c0_7 = arith.constant 0 : index
    %8 = vector.load %arg8[%c0_6, %c0_7] : memref<128x32xf32, #tpu.memory_space<vmem>>, vector<128x32xf32>
    tpu.vector_store %arg8[%c0_6, %c0_7], %7 {strides = array<i32>} : memref<128x32xf32, #tpu.memory_space<vmem>>, vector<128x32xf32>,
    %c0_i32_8 = arith.constant 0 : i32
    %9 = arith.cmpi eq, %arg1, %c0_i32_8 : i32
    %10 = arith.extui %9 : i1 to i32
    %c0_i32_9 = arith.constant 0 : i32
    %11 = arith.cmpi ne, %10, %c0_i32_9 : i32
    scf.if %11 {
      %c0_10 = arith.constant 0 : index
      %c0_11 = arith.constant 0 : index
      %12 = vector.load %arg5[%c0_10, %c0_11] : memref<128x64xf32, #tpu.memory_space<vmem>>, vector<128x32xf32>
      %c0_12 = arith.constant 0 : index
      %c32 = arith.constant 32 : index
      %13 = vector.load %arg5[%c0_12, %c32] : memref<128x64xf32, #tpu.memory_space<vmem>>, vector<128x32xf32>
      %c0_13 = arith.constant 0 : index
      %c0_14 = arith.constant 0 : index
      %14 = vector.load %arg8[%c0_13, %c0_14] : memref<128x32xf32, #tpu.memory_space<vmem>>, vector<128x32xf32>
      %15 = arith.addf %13, %14 : vector<128x32xf32>
      %c0_15 = arith.constant 0 : index
      %c0_16 = arith.constant 0 : index
      %16 = vector.load %arg4[%c0_15, %c0_16] : memref<1x32xf32, #tpu.memory_space<vmem>>, vector<1x32xf32>
      %17 = vector.broadcast %16 : vector<1x32xf32> to vector<128x32xf32>
      %18 = arith.addf %15, %17 : vector<128x32xf32>
      %19 = math.tanh %18 : vector<128x32xf32>
      %c0_17 = arith.constant 0 : index
      %c0_18 = arith.constant 0 : index
      %20 = vector.load %arg6[%c0_17, %c0_18] : memref<128x32xf32, #tpu.memory_space<vmem>>, vector<128x32xf32>
      %21 = arith.mulf %12, %20 : vector<128x32xf32>
      %cst_19 = arith.constant 1.000000e+00 : f32
      %22 = vector.broadcast %cst_19 : f32 to vector<128x32xf32>
      %23 = arith.subf %22, %12 : vector<128x32xf32>
      %24 = arith.mulf %23, %19 : vector<128x32xf32>
      %25 = arith.addf %21, %24 : vector<128x32xf32>
      %c0_20 = arith.constant 0 : index
      %c0_21 = arith.constant 0 : index
      %26 = vector.load %arg7[%c0_20, %c0_21] : memref<128x32xf32, #tpu.memory_space<vmem>>, vector<128x32xf32>
      tpu.vector_store %arg7[%c0_20, %c0_21], %25 {strides = array<i32>} : memref<128x32xf32, #tpu.memory_space<vmem>>, vector<128x32xf32>,
    } else {
    }
    return
  }
  func.func @transform_0(%arg0: i32, %arg1: i32) -> (i32, i32) {
    %c0_i32 = arith.constant 0 : i32
    return %arg0, %arg1 : i32, i32
  }
  func.func @transform_1(%arg0: i32, %arg1: i32) -> (i32, i32) {
    %c0_i32 = arith.constant 0 : i32
    %c0_i32_0 = arith.constant 0 : i32
    return %arg1, %c0_i32 : i32, i32
  }
  func.func @transform_2(%arg0: i32, %arg1: i32) -> (i32, i32) {
    %c0_i32 = arith.constant 0 : i32
    %c0_i32_0 = arith.constant 0 : i32
    %c0_i32_1 = arith.constant 0 : i32
    return %c0_i32, %c0_i32_0 : i32, i32
  }
  func.func @transform_3(%arg0: i32, %arg1: i32) -> (i32, i32) {
    %c0_i32 = arith.constant 0 : i32
    %c0_i32_0 = arith.constant 0 : i32
    return %arg0, %c0_i32 : i32, i32
  }
  func.func @transform_4(%arg0: i32, %arg1: i32) -> (i32, i32) {
    %c0_i32 = arith.constant 0 : i32
    %c0_i32_0 = arith.constant 0 : i32
    return %arg0, %c0_i32 : i32, i32
  }
  func.func @transform_5(%arg0: i32, %arg1: i32) -> (i32, i32) {
    %c0_i32 = arith.constant 0 : i32
    %c0_i32_0 = arith.constant 0 : i32
    return %arg0, %c0_i32 : i32, i32
  }
}

</mosaic_0001>

<llo_original>
// kernel: generative_step.8
$region0: #{generative_step.8}
  #allocation0 [shape = 'u32[]', space=smem, size = 0x4, offset = 0x4, fixed_abs, tag = 'smem constant byte address 0x4 - core index']
  #allocation1 [shape = 'u32[72,128]{1,0:T(1,128)}', space=vmem, size = 0x9000, scoped, tag = 'internal scratch']
  #allocation2 [shape = 'f32[128,32]{1,0:T(8,128)}', space=vmem, size = 0x10000, scoped, tag = 'scratch operand']
  %s0 = inlined_call_operand.vmem [shape: bf16[256,256], index: 0, kind: input, shape index: {}]
  %s1 = inlined_call_operand.vmem [shape: bf16[256,32], index: 1, kind: input, shape index: {}]
  %s2 = inlined_call_operand.vmem [shape: f32[1,32], index: 2, kind: input, shape index: {}]
  %s3 = inlined_call_operand.vmem [shape: bf16[32,64], index: 3, kind: input, shape index: {}]
  %s4 = inlined_call_operand.vmem [shape: bf16[256,64], index: 4, kind: output, shape index: {}]
  %s5 = sld [smem:[#allocation0]]
  $region57: #{generative_step.8} parent=0
    _
  %s7 = ssub.s32 1, %s5
  %s8 = scalar_select 0, %s7, %s5
  loop: start=0, step=1, limit=4
  $region2: #{generative_step.8} parent=0 // loop_pre_header
    _
  $region3: #{generative_step.8} parent=0 // loop_header
    %s10 = sphi 0, %s14
    %p11 = scmp.ge.s32.totalorder %s10, 4
    %s17 = sphi 0, %s29
    %s18 = sphi 0, %s25
    %s19 = sphi 0, %s17
    %s20 = sphi 0, %s18
    %s21 = sphi 0, %s19
    %s22 = sphi 0, %s20
    %s34 = sphi 0, %s36
    %s37 = sphi 0, %s34
    %s38 = sphi 0, %s37
    %s54 = sphi 0, %s38
    %s60 = sphi 0, %s62
    %s63 = sphi 0, %s60
    %s64 = sphi 0, %s63
    %s80 = sphi 0, %s64
    %s84 = sphi 0, %s84
    %s86 = sphi 0, %s84
    %s87 = sphi 0, %s86
    %s101 = sphi 0, %s87
    %s105 = sphi 0, %s105
    %s107 = sphi 0, %s105
    %s108 = sphi 0, %s107
    %s122 = sphi 0, %s108
    %s128 = sphi 0, %s130
    %s131 = sphi 0, %s128
    %s132 = sphi 0, %s131
    %s148 = sphi 0, %s132
  $region4: #{generative_step.8} parent=0 // loop_header_branch
    %13 = sbr.rel (%p11) target = $region8
  $region5: #{generative_step.8} parent=0 // loop_body
    %s15 = ssub.s32 %s10, 1
    %s16 = ssub.s32 %s10, 2
    %s23 = sadd.s32 1, %s18
    %p24 = scmp.ge.s32.totalorder %s23, 1
    %s25 = scalar_select %p24, 0, %s23
    %s26 = sadd.s32 1, %s17
    %s27 = scalar_select %p24, %s26, %s17
    %p28 = scmp.ge.s32.totalorder %s27, 2
    %s29 = scalar_select %p28, 0, %s27
    %s30 = ssub.s32 %s17, %s29
    %s31 = ssub.s32 %s18, %s25
    %s32 = sor.u32 %s30, %s31
    %p33 = scmp.eq.s32.totalorder %s32, 0
    %s35 = sadd.s32 %s34, 1
    %s36 = scalar_select %p33, %s34, %s35
    %p39 = pneg %p33
    %p40 = scmp.eq.s32.totalorder %s10, 1
    %p41 = por %p39, %p40
    %p42 = scmp.ne.s32.totalorder %s34, %s37
    %p43 = scmp.eq.s32.totalorder %s10, 0
    %p44 = por %p42, %p43
    %p45 = scmp.ne.s32.totalorder %s34, %s37
    %p46 = scmp.eq.s32.totalorder %s15, 1
    %p47 = por %p45, %p46
    %p48 = scmp.ne.s32.totalorder %s37, %s38
    %p49 = scmp.eq.s32.totalorder %s15, 0
    %p50 = por %p48, %p49
    %p51 = scmp.ne.s32.totalorder %s37, %s38
    %p52 = scmp.eq.s32.totalorder %s16, 1
    %p53 = por %p51, %p52
    %p55 = scmp.ne.s32.totalorder %s38, %s54
    %p56 = scmp.eq.s32.totalorder %s16, 0
    %p57 = por %p55, %p56
    %s58 = ssub.s32 %s18, %s25
    %p59 = scmp.eq.s32.totalorder %s58, 0
    %s61 = sadd.s32 %s60, 1
    %s62 = scalar_select %p59, %s60, %s61
    %p65 = pneg %p59
    %p66 = scmp.eq.s32.totalorder %s10, 1
    %p67 = por %p65, %p66
    %p68 = scmp.ne.s32.totalorder %s60, %s63
    %p69 = scmp.eq.s32.totalorder %s10, 0
    %p70 = por %p68, %p69
    %p71 = scmp.ne.s32.totalorder %s60, %s63
    %p72 = scmp.eq.s32.totalorder %s15, 1
    %p73 = por %p71, %p72
    %p74 = scmp.ne.s32.totalorder %s63, %s64
    %p75 = scmp.eq.s32.totalorder %s15, 0
    %p76 = por %p74, %p75
    %p77 = scmp.ne.s32.totalorder %s63, %s64
    %p78 = scmp.eq.s32.totalorder %s16, 1
    %p79 = por %p77, %p78
    %p81 = scmp.ne.s32.totalorder %s64, %s80
    %p82 = scmp.eq.s32.totalorder %s16, 0
    %p83 = por %p81, %p82
    %s85 = sadd.s32 %s84, 1
    %p88 = scmp.eq.s32.totalorder %s10, 1
    %p89 = scmp.ne.s32.totalorder %s84, %s86
    %p90 = scmp.eq.s32.totalorder %s10, 0
    %p91 = por %p89, %p90
    %p92 = scmp.ne.s32.totalorder %s84, %s86
    %p93 = scmp.eq.s32.totalorder %s15, 1
    %p94 = por %p92, %p93
    %p95 = scmp.ne.s32.totalorder %s86, %s87
    %p96 = scmp.eq.s32.totalorder %s15, 0
    %p97 = por %p95, %p96
    %p98 = scmp.ne.s32.totalorder %s86, %s87
    %p99 = scmp.eq.s32.totalorder %s16, 1
    %p100 = por %p98, %p99
    %p102 = scmp.ne.s32.totalorder %s87, %s101
    %p103 = scmp.eq.s32.totalorder %s16, 0
    %p104 = por %p102, %p103
    %s106 = sadd.s32 %s105, 1
    %p109 = scmp.eq.s32.totalorder %s10, 1
    %p110 = scmp.ne.s32.totalorder %s105, %s107
    %p111 = scmp.eq.s32.totalorder %s10, 0
    %p112 = por %p110, %p111
    %p113 = scmp.ne.s32.totalorder %s105, %s107
    %p114 = scmp.eq.s32.totalorder %s15, 1
    %p115 = por %p113, %p114
    %p116 = scmp.ne.s32.totalorder %s107, %s108
    %p117 = scmp.eq.s32.totalorder %s15, 0
    %p118 = por %p116, %p117
    %p119 = scmp.ne.s32.totalorder %s107, %s108
    %p120 = scmp.eq.s32.totalorder %s16, 1
    %p121 = por %p119, %p120
    %p123 = scmp.ne.s32.totalorder %s108, %s122
    %p124 = scmp.eq.s32.totalorder %s16, 0
    %p125 = por %p123, %p124
    %s126 = ssub.s32 %s17, %s29
    %p127 = scmp.eq.s32.totalorder %s126, 0
    %s129 = sadd.s32 %s128, 1
    %s130 = scalar_select %p127, %s128, %s129
    %p133 = pneg %p127
    %p134 = scmp.eq.s32.totalorder %s10, 1
    %p135 = por %p133, %p134
    %p136 = scmp.ne.s32.totalorder %s128, %s131
    %p137 = scmp.eq.s32.totalorder %s10, 0
    %p138 = por %p136, %p137
    %p139 = scmp.ne.s32.totalorder %s128, %s131
    %p140 = scmp.eq.s32.totalorder %s15, 1
    %p141 = por %p139, %p140
    %p142 = scmp.ne.s32.totalorder %s131, %s132
    %p143 = scmp.eq.s32.totalorder %s15, 0
    %p144 = por %p142, %p143
    %p145 = scmp.ne.s32.totalorder %s131, %s132
    %p146 = scmp.eq.s32.totalorder %s16, 1
    %p147 = por %p145, %p146
    %p149 = scmp.ne.s32.totalorder %s132, %s148
    %p150 = scmp.eq.s32.totalorder %s16, 0
    %p151 = por %p149, %p150
    %p152 = scmp.le.s32.totalorder 1, %s10
    %p153 = scmp.lt.s32.totalorder %s10, 3
    %p154 = pnand %p152, %p153
    %p155 = pneg %p154
    // Predicated region
    $region9: #{generative_step.8} parent=5 // pred_check
      _
    $region10: #{generative_step.8} parent=5 // pred_check_branch
      %157 = sbr.rel (%p154) target = $region12
    $region11: #{generative_step.8} parent=5 // pred_region
      %s158 = ssub.s32 %s10, 1
      // Predicated region
      $region13: #{generative_step.8} parent=11 // pred_check
        %p159 = pneg %p76
      $region14: #{generative_step.8} parent=11 // pred_check_branch
        %161 = sbr.rel (%p159) target = $region16
      $region15: #{generative_step.8} parent=11 // pred_region
        %s162 = smul.u32 32, %s20
        %p163 = scmp.lt.s32.totalorder %s162, 31
        %s164 = scalar_select %p163, %s162, 31
        %s165 = smul.addr %s164, 4
        %s166 = scalar_lea.vmem %s1, %s165
        %s167 = smul.u32 32, %s20
      $region16: #{generative_step.8} parent=11 // pred_fallthru
        _
      // Predicated region
      $region17: #{generative_step.8} parent=11 // pred_check
        %p168 = pneg %p97
      $region18: #{generative_step.8} parent=11 // pred_check_branch
        %170 = sbr.rel (%p168) target = $region20
      $region19: #{generative_step.8} parent=11 // pred_region
        _
      $region20: #{generative_step.8} parent=11 // pred_fallthru
        _
      // Predicated region
      $region21: #{generative_step.8} parent=11 // pred_check
        %p171 = pneg %p118
      $region22: #{generative_step.8} parent=11 // pred_check_branch
        %173 = sbr.rel (%p171) target = $region24
      $region23: #{generative_step.8} parent=11 // pred_region
        _
      $region24: #{generative_step.8} parent=11 // pred_fallthru
        _
    $region12: #{generative_step.8} parent=5 // pred_fallthru
      _
    %p174 = scmp.lt.s32.totalorder %s10, 2
    // Predicated region
    $region25: #{generative_step.8} parent=5 // pred_check
      %p175 = pneg %p174
    $region26: #{generative_step.8} parent=5 // pred_check_branch
      %177 = sbr.rel (%p175) target = $region28
    $region27: #{generative_step.8} parent=5 // pred_region
      // Predicated region
      $region29: #{generative_step.8} parent=27 // pred_check
        %p178 = pneg %p44
      $region30: #{generative_step.8} parent=27 // pred_check_branch
        %180 = sbr.rel (%p178) target = $region32
      $region31: #{generative_step.8} parent=27 // pred_region
        %s181 = smul.u32 16, %s17
        %s182 = smul.u32 2, %s18
        %p183 = scmp.lt.s32.totalorder %s181, 31
        %s184 = scalar_select %p183, %s181, 31
        %p185 = scmp.lt.s32.totalorder %s182, 1
        %s186 = scalar_select %p185, %s182, 1
        %s187 = smul.addr %s184, 2
        %s188 = sadd.s32 %s186, %s187
        %s189 = smul.addr %s188, 4
        %s190 = scalar_lea.vmem %s0, %s189
        %s191 = smul.u32 16, %s17
        %s192 = smul.u32 2, %s18
      $region32: #{generative_step.8} parent=27 // pred_fallthru
        _
    $region28: #{generative_step.8} parent=5 // pred_fallthru
      _
    %p193 = scmp.le.s32.totalorder 1, %s10
    %p194 = scmp.lt.s32.totalorder %s10, 3
    %p195 = pnand %p193, %p194
    %p196 = pneg %p195
    // Predicated region
    $region33: #{generative_step.8} parent=5 // pred_check
      _
    $region34: #{generative_step.8} parent=5 // pred_check_branch
      %198 = sbr.rel (%p195) target = $region36
    $region35: #{generative_step.8} parent=5 // pred_region
      %s199 = ssub.s32 %s10, 1
      %s200 = smul.u32 16, %s19
      %s201 = smul.u32 2, %s20
      %p202 = scmp.lt.s32.totalorder %s200, 31
      %s203 = scalar_select %p202, %s200, 31
      %p204 = scmp.lt.s32.totalorder %s201, 1
      %s205 = scalar_select %p204, %s201, 1
      %s206 = smul.addr %s203, 2
      %s207 = sadd.s32 %s205, %s206
      %s208 = smul.addr %s207, 4
      %s209 = scalar_lea.vmem %s0, %s208
      %p210 = pneg %p50
      %p211 = pneg %p47
      %s212 = smul.u32 32, %s20
      %p213 = scmp.lt.s32.totalorder %s212, 31
      %s214 = scalar_select %p213, %s212, 31
      %s215 = smul.addr %s214, 4
      %s216 = scalar_lea.vmem %s1, %s215
      %p217 = pneg %p76
      %p218 = pneg %p73
      %p219 = pneg %p97
      %p220 = pneg %p94
      %p221 = pneg %p118
      %p222 = pneg %p115
      %p223 = pneg %p144
      %p224 = pneg %p141
      %s225 = smul.u32 16, %s19
      %p226 = scmp.lt.s32.totalorder %s225, 31
      %s227 = scalar_select %p226, %s225, 31
      %s228 = smul.addr %s227, 4
      %s229 = scalar_lea.vmem %s4, %s228
      %s230 = smul.u32 16, %s19
      %s231 = smul.u32 2, %s20
      %p232 = scmp.lt.s32.totalorder %s230, 31
      %s233 = scalar_select %p232, %s230, 31
      %p234 = scmp.lt.s32.totalorder %s231, 1
      %s235 = scalar_select %p234, %s231, 1
      %s236 = smul.addr %s233, 2
      %s237 = sadd.s32 %s235, %s236
      %s238 = smul.addr %s237, 4
      %s239 = scalar_lea.vmem %s0, %s238
      %s240 = smul.u32 16, %s19
      %s241 = smul.u32 2, %s20
      %s242 = smul.u32 32, %s20
      %p243 = scmp.lt.s32.totalorder %s242, 31
      %s244 = scalar_select %p243, %s242, 31
      %s245 = smul.addr %s244, 4
      %s246 = scalar_lea.vmem %s1, %s245
      %s247 = smul.u32 32, %s20
      %s248 = smul.u32 16, %s19
      %p249 = scmp.lt.s32.totalorder %s248, 31
      %s250 = scalar_select %p249, %s248, 31
      %s251 = smul.addr %s250, 4
      %s252 = scalar_lea.vmem %s4, %s251
      %s253 = smul.u32 16, %s19
      %p255 = scmp.eq.s32.totalorder %s20, 0
      // Predicated region
      $region37: #{generative_step.8} parent=35 // pred_check
        %p256 = pneg %p255
      $region38: #{generative_step.8} parent=35 // pred_check_branch
        %258 = sbr.rel (%p256) target = $region40
      $region39: #{generative_step.8} parent=35 // pred_region
        %vm259 = vcmask 261120
        %260 = vst.msk [vmem:[#allocation2] sm:$0xff] %vm259, 0.0
        %261 = vst.msk [vmem:[#allocation2 + $0x8] sm:$0xff] %vm259, 0.0
        %262 = vst.msk [vmem:[#allocation2 + $0x10] sm:$0xff] %vm259, 0.0
        %263 = vst.msk [vmem:[#allocation2 + $0x18] sm:$0xff] %vm259, 0.0
        %264 = vst.msk [vmem:[#allocation2 + $0x20] sm:$0xff] %vm259, 0.0
        %265 = vst.msk [vmem:[#allocation2 + $0x28] sm:$0xff] %vm259, 0.0
        %266 = vst.msk [vmem:[#allocation2 + $0x30] sm:$0xff] %vm259, 0.0
        %267 = vst.msk [vmem:[#allocation2 + $0x38] sm:$0xff] %vm259, 0.0
        %268 = vst.msk [vmem:[#allocation2 + $0x40] sm:$0xff] %vm259, 0.0
        %269 = vst.msk [vmem:[#allocation2 + $0x48] sm:$0xff] %vm259, 0.0
        %270 = vst.msk [vmem:[#allocation2 + $0x50] sm:$0xff] %vm259, 0.0
        %271 = vst.msk [vmem:[#allocation2 + $0x58] sm:$0xff] %vm259, 0.0
        %272 = vst.msk [vmem:[#allocation2 + $0x60] sm:$0xff] %vm259, 0.0
        %273 = vst.msk [vmem:[#allocation2 + $0x68] sm:$0xff] %vm259, 0.0
        %274 = vst.msk [vmem:[#allocation2 + $0x70] sm:$0xff] %vm259, 0.0
        %275 = vst.msk [vmem:[#allocation2 + $0x78] sm:$0xff] %vm259, 0.0
      $region40: #{generative_step.8} parent=35 // pred_fallthru
        _
      %v276 = vld [vmem:[#allocation2] sm:$0xff]
      %v277 = vld [vmem:[#allocation2 + $0x8] sm:$0xff]
      %v278 = vld [vmem:[#allocation2 + $0x10] sm:$0xff]
      %v279 = vld [vmem:[#allocation2 + $0x18] sm:$0xff]
      %v280 = vld [vmem:[#allocation2 + $0x20] sm:$0xff]
      %v281 = vld [vmem:[#allocation2 + $0x28] sm:$0xff]
      %v282 = vld [vmem:[#allocation2 + $0x30] sm:$0xff]
      %v283 = vld [vmem:[#allocation2 + $0x38] sm:$0xff]
      %v284 = vld [vmem:[#allocation2 + $0x40] sm:$0xff]
      %v285 = vld [vmem:[#allocation2 + $0x48] sm:$0xff]
      %v286 = vld [vmem:[#allocation2 + $0x50] sm:$0xff]
      %v287 = vld [vmem:[#allocation2 + $0x58] sm:$0xff]
      %v288 = vld [vmem:[#allocation2 + $0x60] sm:$0xff]
      %v289 = vld [vmem:[#allocation2 + $0x68] sm:$0xff]
      %v290 = vld [vmem:[#allocation2 + $0x70] sm:$0xff]
      %v291 = vld [vmem:[#allocation2 + $0x78] sm:$0xff]
      %v292 = vld [vmem:[%s239] sm:$0xff]
      %v293 = vld [vmem:[%s239 + $0x8] sm:$0xff]
      %v294 = vld [vmem:[%s239 + $0x10] sm:$0xff]
      %v295 = vld [vmem:[%s239 + $0x18] sm:$0xff]
      %v296 = vld [vmem:[%s239 + $0x20] sm:$0xff]
      %v297 = vld [vmem:[%s239 + $0x28] sm:$0xff]
      %v298 = vld [vmem:[%s239 + $0x30] sm:$0xff]
      %v299 = vld [vmem:[%s239 + $0x38] sm:$0xff]
      %v300 = vld [vmem:[%s239 + $0x40] sm:$0xff]
      %v301 = vld [vmem:[%s239 + $0x48] sm:$0xff]
      %v302 = vld [vmem:[%s239 + $0x50] sm:$0xff]
      %v303 = vld [vmem:[%s239 + $0x58] sm:$0xff]
      %v304 = vld [vmem:[%s239 + $0x60] sm:$0xff]
      %v305 = vld [vmem:[%s239 + $0x68] sm:$0xff]
      %v306 = vld [vmem:[%s239 + $0x70] sm:$0xff]
      %v307 = vld [vmem:[%s239 + $0x78] sm:$0xff]
      %v308 = vld [vmem:[%s246] sm:$0xf]
      %v309 = vld [vmem:[%s246 + $0x4] sm:$0xf]
      %v310 = vld [vmem:[%s246 + $0x8] sm:$0xf]
      %v311 = vld [vmem:[%s246 + $0xc] sm:$0xf]
      %v312 = vld [vmem:[%s246 + $0x10] sm:$0xf]
      %v313 = vld [vmem:[%s246 + $0x14] sm:$0xf]
      %v314 = vld [vmem:[%s246 + $0x18] sm:$0xf]
      %v315 = vld [vmem:[%s246 + $0x1c] sm:$0xf]
      %v316 = vld [vmem:[%s246 + $0x20] sm:$0xf]
      %v317 = vld [vmem:[%s246 + $0x24] sm:$0xf]
      %v318 = vld [vmem:[%s246 + $0x28] sm:$0xf]
      %v319 = vld [vmem:[%s246 + $0x2c] sm:$0xf]
      %v320 = vld [vmem:[%s246 + $0x30] sm:$0xf]
      %v321 = vld [vmem:[%s246 + $0x34] sm:$0xf]
      %v322 = vld [vmem:[%s246 + $0x38] sm:$0xf]
      %v323 = vld [vmem:[%s246 + $0x3c] sm:$0xf]
      %v324 = vld [vmem:[%s246 + $0x40] sm:$0xf]
      %v325 = vld [vmem:[%s246 + $0x44] sm:$0xf]
      %v326 = vld [vmem:[%s246 + $0x48] sm:$0xf]
      %v327 = vld [vmem:[%s246 + $0x4c] sm:$0xf]
      %v328 = vld [vmem:[%s246 + $0x50] sm:$0xf]
      %v329 = vld [vmem:[%s246 + $0x54] sm:$0xf]
      %v330 = vld [vmem:[%s246 + $0x58] sm:$0xf]
      %v331 = vld [vmem:[%s246 + $0x5c] sm:$0xf]
      %v332 = vld [vmem:[%s246 + $0x60] sm:$0xf]
      %v333 = vld [vmem:[%s246 + $0x64] sm:$0xf]
      %v334 = vld [vmem:[%s246 + $0x68] sm:$0xf]
      %v335 = vld [vmem:[%s246 + $0x6c] sm:$0xf]
      %v336 = vld [vmem:[%s246 + $0x70] sm:$0xf]
      %v337 = vld [vmem:[%s246 + $0x74] sm:$0xf]
      %v338 = vld [vmem:[%s246 + $0x78] sm:$0xf]
      %v339 = vld [vmem:[%s246 + $0x7c] sm:$0xf]
      %v356 = vunpack.c.l.b16 %v292
      %v357 = vunpack.c.h.b16 %v292
      %v358 = vunpack.c.l.b16 %v293
      %v359 = vunpack.c.h.b16 %v293
      %v360 = vunpack.c.l.b16 %v294
      %v361 = vunpack.c.h.b16 %v294
      %v362 = vunpack.c.l.b16 %v295
      %v363 = vunpack.c.h.b16 %v295
      %v364 = vunpack.c.l.b16 %v296
      %v365 = vunpack.c.h.b16 %v296
      %v366 = vunpack.c.l.b16 %v297
      %v367 = vunpack.c.h.b16 %v297
      %v368 = vunpack.c.l.b16 %v298
      %v369 = vunpack.c.h.b16 %v298
      %v370 = vunpack.c.l.b16 %v299
      %v371 = vunpack.c.h.b16 %v299
      %v372 = vunpack.c.l.b16 %v300
      %v373 = vunpack.c.h.b16 %v300
      %v374 = vunpack.c.l.b16 %v301
      %v375 = vunpack.c.h.b16 %v301
      %v376 = vunpack.c.l.b16 %v302
      %v377 = vunpack.c.h.b16 %v302
      %v378 = vunpack.c.l.b16 %v303
      %v379 = vunpack.c.h.b16 %v303
      %v380 = vunpack.c.l.b16 %v304
      %v381 = vunpack.c.h.b16 %v304
      %v382 = vunpack.c.l.b16 %v305
      %v383 = vunpack.c.h.b16 %v305
      %v384 = vunpack.c.l.b16 %v306
      %v385 = vunpack.c.h.b16 %v306
      %v386 = vunpack.c.l.b16 %v307
      %v387 = vunpack.c.h.b16 %v307
      %v388 = vpack.c.b16 %v358, %v356
      %v389 = vpack.c.b16 %v359, %v357
      %v390 = vpack.c.b16 %v362, %v360
      %v391 = vpack.c.b16 %v363, %v361
      %v392 = vpack.c.b16 %v366, %v364
      %v393 = vpack.c.b16 %v367, %v365
      %v394 = vpack.c.b16 %v370, %v368
      %v395 = vpack.c.b16 %v371, %v369
      %v396 = vpack.c.b16 %v374, %v372
      %v397 = vpack.c.b16 %v375, %v373
      %v398 = vpack.c.b16 %v378, %v376
      %v399 = vpack.c.b16 %v379, %v377
      %v400 = vpack.c.b16 %v382, %v380
      %v401 = vpack.c.b16 %v383, %v381
      %v402 = vpack.c.b16 %v386, %v384
      %v403 = vpack.c.b16 %v387, %v385
      %v452 = vunpack.c.l.b16 %v308
      %v453 = vunpack.c.l.b16 %v309
      %v454 = vunpack.c.l.b16 %v310
      %v455 = vunpack.c.l.b16 %v311
      %v456 = vunpack.c.l.b16 %v312
      %v457 = vunpack.c.l.b16 %v313
      %v458 = vunpack.c.l.b16 %v314
      %v459 = vunpack.c.l.b16 %v315
      %v460 = vunpack.c.l.b16 %v316
      %v461 = vunpack.c.l.b16 %v317
      %v462 = vunpack.c.l.b16 %v318
      %v463 = vunpack.c.l.b16 %v319
      %v464 = vunpack.c.l.b16 %v320
      %v465 = vunpack.c.l.b16 %v321
      %v466 = vunpack.c.l.b16 %v322
      %v467 = vunpack.c.l.b16 %v323
      %v468 = vunpack.c.l.b16 %v324
      %v469 = vunpack.c.l.b16 %v325
      %v470 = vunpack.c.l.b16 %v326
      %v471 = vunpack.c.l.b16 %v327
      %v472 = vunpack.c.l.b16 %v328
      %v473 = vunpack.c.l.b16 %v329
      %v474 = vunpack.c.l.b16 %v330
      %v475 = vunpack.c.l.b16 %v331
      %v476 = vunpack.c.l.b16 %v332
      %v477 = vunpack.c.l.b16 %v333
      %v478 = vunpack.c.l.b16 %v334
      %v479 = vunpack.c.l.b16 %v335
      %v480 = vunpack.c.l.b16 %v336
      %v481 = vunpack.c.l.b16 %v337
      %v482 = vunpack.c.l.b16 %v338
      %v483 = vunpack.c.l.b16 %v339
      %v484 = vpack.c.b16 %v453, %v452
      %v485 = vpack.c.b16 %v455, %v454
      %v486 = vpack.c.b16 %v457, %v456
      %v487 = vpack.c.b16 %v459, %v458
      %v488 = vpack.c.b16 %v461, %v460
      %v489 = vpack.c.b16 %v463, %v462
      %v490 = vpack.c.b16 %v465, %v464
      %v491 = vpack.c.b16 %v467, %v466
      %v492 = vpack.c.b16 %v469, %v468
      %v493 = vpack.c.b16 %v471, %v470
      %v494 = vpack.c.b16 %v473, %v472
      %v495 = vpack.c.b16 %v475, %v474
      %v496 = vpack.c.b16 %v477, %v476
      %v497 = vpack.c.b16 %v479, %v478
      %v498 = vpack.c.b16 %v481, %v480
      %v499 = vpack.c.b16 %v483, %v482
      %516 = vmatpush.bf16.msra.mxu0 %v491
      %517 = vmatpush.bf16.msra.mxu0 %v490
      %518 = vmatpush.bf16.msra.mxu0 %v489
      %519 = vmatpush.bf16.msra.mxu0 %v488
      %520 = vmatpush.bf16.msra.mxu0 %v487
      %521 = vmatpush.bf16.msra.mxu0 %v486
      %522 = vmatpush.bf16.msra.mxu0 %v485
      %523 = vmatpush.bf16.msra.mxu0 %v484
      %524 = vmatmul.bf16.gmra.mxu0 %v388
      %v525 = vpop.f32.mrf.mxu0
      %v526 = vadd.f32 0.0, %v525
      %v527 = vpop.f32.mrf.mxu0
      %v528 = vadd.f32 0.0, %v527
      %529 = vmatmul.bf16.gmra.mxu0 %v390
      %v530 = vpop.f32.mrf.mxu0
      %v531 = vadd.f32 0.0, %v530
      %v532 = vpop.f32.mrf.mxu0
      %v533 = vadd.f32 0.0, %v532
      %534 = vmatmul.bf16.gmra.mxu0 %v392
      %v535 = vpop.f32.mrf.mxu0
      %v536 = vadd.f32 0.0, %v535
      %v537 = vpop.f32.mrf.mxu0
      %v538 = vadd.f32 0.0, %v537
      %539 = vmatmul.bf16.gmra.mxu0 %v394
      %v540 = vpop.f32.mrf.mxu0
      %v541 = vadd.f32 0.0, %v540
      %v542 = vpop.f32.mrf.mxu0
      %v543 = vadd.f32 0.0, %v542
      %544 = vmatmul.bf16.gmra.mxu0 %v396
      %v545 = vpop.f32.mrf.mxu0
      %v546 = vadd.f32 0.0, %v545
      %v547 = vpop.f32.mrf.mxu0
      %v548 = vadd.f32 0.0, %v547
      %549 = vmatmul.bf16.gmra.mxu0 %v398
      %v550 = vpop.f32.mrf.mxu0
      %v551 = vadd.f32 0.0, %v550
      %v552 = vpop.f32.mrf.mxu0
      %v553 = vadd.f32 0.0, %v552
      %554 = vmatmul.bf16.gmra.mxu0 %v400
      %v555 = vpop.f32.mrf.mxu0
      %v556 = vadd.f32 0.0, %v555
      %v557 = vpop.f32.mrf.mxu0
      %v558 = vadd.f32 0.0, %v557
      %559 = vmatmul.bf16.gmra.mxu0 %v402
      %v560 = vpop.f32.mrf.mxu0
      %v561 = vadd.f32 0.0, %v560
      %v562 = vpop.f32.mrf.mxu0
      %v563 = vadd.f32 0.0, %v562
      %564 = vdwg.mxu0
      %565 = vmatpush.bf16.msra.mxu0 %v499
      %566 = vmatpush.bf16.msra.mxu0 %v498
      %567 = vmatpush.bf16.msra.mxu0 %v497
      %568 = vmatpush.bf16.msra.mxu0 %v496
      %569 = vmatpush.bf16.msra.mxu0 %v495
      %570 = vmatpush.bf16.msra.mxu0 %v494
      %571 = vmatpush.bf16.msra.mxu0 %v493
      %572 = vmatpush.bf16.msra.mxu0 %v492
      %573 = vmatmul.bf16.gmra.mxu0 %v389
      %v574 = vpop.f32.mrf.mxu0
      %v575 = vadd.f32 %v526, %v574
      %v576 = vpop.f32.mrf.mxu0
      %v577 = vadd.f32 %v528, %v576
      %578 = vmatmul.bf16.gmra.mxu0 %v391
      %v579 = vpop.f32.mrf.mxu0
      %v580 = vadd.f32 %v531, %v579
      %v581 = vpop.f32.mrf.mxu0
      %v582 = vadd.f32 %v533, %v581
      %583 = vmatmul.bf16.gmra.mxu0 %v393
      %v584 = vpop.f32.mrf.mxu0
      %v585 = vadd.f32 %v536, %v584
      %v586 = vpop.f32.mrf.mxu0
      %v587 = vadd.f32 %v538, %v586
      %588 = vmatmul.bf16.gmra.mxu0 %v395
      %v589 = vpop.f32.mrf.mxu0
      %v590 = vadd.f32 %v541, %v589
      %v591 = vpop.f32.mrf.mxu0
      %v592 = vadd.f32 %v543, %v591
      %593 = vmatmul.bf16.gmra.mxu0 %v397
      %v594 = vpop.f32.mrf.mxu0
      %v595 = vadd.f32 %v546, %v594
      %v596 = vpop.f32.mrf.mxu0
      %v597 = vadd.f32 %v548, %v596
      %598 = vmatmul.bf16.gmra.mxu0 %v399
      %v599 = vpop.f32.mrf.mxu0
      %v600 = vadd.f32 %v551, %v599
      %v601 = vpop.f32.mrf.mxu0
      %v602 = vadd.f32 %v553, %v601
      %603 = vmatmul.bf16.gmra.mxu0 %v401
      %v604 = vpop.f32.mrf.mxu0
      %v605 = vadd.f32 %v556, %v604
      %v606 = vpop.f32.mrf.mxu0
      %v607 = vadd.f32 %v558, %v606
      %608 = vmatmul.bf16.gmra.mxu0 %v403
      %v609 = vpop.f32.mrf.mxu0
      %v610 = vadd.f32 %v561, %v609
      %v611 = vpop.f32.mrf.mxu0
      %v612 = vadd.f32 %v563, %v611
      %613 = vdwg.mxu0
      %v614 = vadd.f32 %v276, %v575
      %v615 = vadd.f32 %v277, %v577
      %v616 = vadd.f32 %v278, %v580
      %v617 = vadd.f32 %v279, %v582
      %v618 = vadd.f32 %v280, %v585
      %v619 = vadd.f32 %v281, %v587
      %v620 = vadd.f32 %v282, %v590
      %v621 = vadd.f32 %v283, %v592
      %v622 = vadd.f32 %v284, %v595
      %v623 = vadd.f32 %v285, %v597
      %v624 = vadd.f32 %v286, %v600
      %v625 = vadd.f32 %v287, %v602
      %v626 = vadd.f32 %v288, %v605
      %v627 = vadd.f32 %v289, %v607
      %v628 = vadd.f32 %v290, %v610
      %v629 = vadd.f32 %v291, %v612
      %vm630 = vcmask 261120
      %631 = vst.msk [vmem:[#allocation2] sm:$0xff] %vm630, %v614
      %632 = vst.msk [vmem:[#allocation2 + $0x8] sm:$0xff] %vm630, %v615
      %633 = vst.msk [vmem:[#allocation2 + $0x10] sm:$0xff] %vm630, %v616
      %634 = vst.msk [vmem:[#allocation2 + $0x18] sm:$0xff] %vm630, %v617
      %635 = vst.msk [vmem:[#allocation2 + $0x20] sm:$0xff] %vm630, %v618
      %636 = vst.msk [vmem:[#allocation2 + $0x28] sm:$0xff] %vm630, %v619
      %637 = vst.msk [vmem:[#allocation2 + $0x30] sm:$0xff] %vm630, %v620
      %638 = vst.msk [vmem:[#allocation2 + $0x38] sm:$0xff] %vm630, %v621
      %639 = vst.msk [vmem:[#allocation2 + $0x40] sm:$0xff] %vm630, %v622
      %640 = vst.msk [vmem:[#allocation2 + $0x48] sm:$0xff] %vm630, %v623
      %641 = vst.msk [vmem:[#allocation2 + $0x50] sm:$0xff] %vm630, %v624
      %642 = vst.msk [vmem:[#allocation2 + $0x58] sm:$0xff] %vm630, %v625
      %643 = vst.msk [vmem:[#allocation2 + $0x60] sm:$0xff] %vm630, %v626
      %644 = vst.msk [vmem:[#allocation2 + $0x68] sm:$0xff] %vm630, %v627
      %645 = vst.msk [vmem:[#allocation2 + $0x70] sm:$0xff] %vm630, %v628
      %646 = vst.msk [vmem:[#allocation2 + $0x78] sm:$0xff] %vm630, %v629
      // Predicated region
      $region41: #{generative_step.8} parent=35 // pred_check
        %p647 = pneg %p255
      $region42: #{generative_step.8} parent=35 // pred_check_branch
        %649 = sbr.rel (%p647) target = $region44
      $region43: #{generative_step.8} parent=35 // pred_region
        %v650 = vld [vmem:[#allocation2] sm:$0xff]
        %v651 = vld [vmem:[#allocation2 + $0x8] sm:$0xff]
        %v652 = vld [vmem:[#allocation2 + $0x10] sm:$0xff]
        %v653 = vld [vmem:[#allocation2 + $0x18] sm:$0xff]
        %v654 = vld [vmem:[#allocation2 + $0x20] sm:$0xff]
        %v655 = vld [vmem:[#allocation2 + $0x28] sm:$0xff]
        %v656 = vld [vmem:[#allocation2 + $0x30] sm:$0xff]
        %v657 = vld [vmem:[#allocation2 + $0x38] sm:$0xff]
        %v658 = vld [vmem:[#allocation2 + $0x40] sm:$0xff]
        %v659 = vld [vmem:[#allocation2 + $0x48] sm:$0xff]
        %v660 = vld [vmem:[#allocation2 + $0x50] sm:$0xff]
        %v661 = vld [vmem:[#allocation2 + $0x58] sm:$0xff]
        %v662 = vld [vmem:[#allocation2 + $0x60] sm:$0xff]
        %v663 = vld [vmem:[#allocation2 + $0x68] sm:$0xff]
        %v664 = vld [vmem:[#allocation2 + $0x70] sm:$0xff]
        %v665 = vld [vmem:[#allocation2 + $0x78] sm:$0xff]
        %v666 = vld [vmem:[%s2] sm:$0x1]
        %v668 = vperm.slane %v666, 0
        %v670 = vadd.f32 %v650, %v668
        %v671 = vadd.f32 %v651, %v668
        %v672 = vadd.f32 %v652, %v668
        %v673 = vadd.f32 %v653, %v668
        %v674 = vadd.f32 %v654, %v668
        %v675 = vadd.f32 %v655, %v668
        %v676 = vadd.f32 %v656, %v668
        %v677 = vadd.f32 %v657, %v668
        %v678 = vadd.f32 %v658, %v668
        %v679 = vadd.f32 %v659, %v668
        %v680 = vadd.f32 %v660, %v668
        %v681 = vadd.f32 %v661, %v668
        %v682 = vadd.f32 %v662, %v668
        %v683 = vadd.f32 %v663, %v668
        %v684 = vadd.f32 %v664, %v668
        %v685 = vadd.f32 %v665, %v668
        %v686 = vmax.f32 %v670, 0.0
        %v687 = vmax.f32 %v671, 0.0
        %v688 = vmax.f32 %v672, 0.0
        %v689 = vmax.f32 %v673, 0.0
        %v690 = vmax.f32 %v674, 0.0
        %v691 = vmax.f32 %v675, 0.0
        %v692 = vmax.f32 %v676, 0.0
        %v693 = vmax.f32 %v677, 0.0
        %v694 = vmax.f32 %v678, 0.0
        %v695 = vmax.f32 %v679, 0.0
        %v696 = vmax.f32 %v680, 0.0
        %v697 = vmax.f32 %v681, 0.0
        %v698 = vmax.f32 %v682, 0.0
        %v699 = vmax.f32 %v683, 0.0
        %v700 = vmax.f32 %v684, 0.0
        %v701 = vmax.f32 %v685, 0.0
        %v702 = vpack.c.bf16 %v687, %v686
        %v703 = vpack.c.bf16 %v689, %v688
        %v704 = vpack.c.bf16 %v691, %v690
        %v705 = vpack.c.bf16 %v693, %v692
        %v706 = vpack.c.bf16 %v695, %v694
        %v707 = vpack.c.bf16 %v697, %v696
        %v708 = vpack.c.bf16 %v699, %v698
        %v709 = vpack.c.bf16 %v701, %v700
        %v710 = vld [vmem:[%s3] sm:$0xf]
        %v711 = vld [vmem:[%s3 + $0x4] sm:$0xf]
        %v712 = vld [vmem:[%s3 + $0x8] sm:$0xf]
        %v713 = vld [vmem:[%s3 + $0xc] sm:$0xf]
        %v718 = vunpack.c.l.b16 %v710
        %v719 = vunpack.c.l.b16 %v711
        %v720 = vunpack.c.l.b16 %v712
        %v721 = vunpack.c.l.b16 %v713
        %v722 = vpack.c.b16 %v719, %v718
        %v723 = vpack.c.b16 %v721, %v720
        %v727 = vsel %vm630, %v702, 0
        %v730 = vsel %vm630, %v703, 0
        %v733 = vsel %vm630, %v704, 0
        %v736 = vsel %vm630, %v705, 0
        %v739 = vsel %vm630, %v706, 0
        %v742 = vsel %vm630, %v707, 0
        %v745 = vsel %vm630, %v708, 0
        %v748 = vsel %vm630, %v709, 0
        %750 = vmatpush.bf16.msra.mxu0 0
        %751 = vmatpush.bf16.msra.mxu0 0
        %752 = vmatpush.bf16.msra.mxu0 0
        %753 = vmatpush.bf16.msra.mxu0 0
        %754 = vmatpush.bf16.msra.mxu0 0
        %755 = vmatpush.bf16.msra.mxu0 0
        %756 = vmatpush.bf16.msra.mxu0 %v723
        %757 = vmatpush.bf16.msra.mxu0 %v722
        %758 = vmatmul.bf16.gmra.mxu0 %v727
        %v759 = vpop.f32.mrf.mxu0
        %v760 = vadd.f32 0.0, %v759
        %v761 = vpop.f32.mrf.mxu0
        %v762 = vadd.f32 0.0, %v761
        %763 = vmatmul.bf16.gmra.mxu0 %v730
        %v764 = vpop.f32.mrf.mxu0
        %v765 = vadd.f32 0.0, %v764
        %v766 = vpop.f32.mrf.mxu0
        %v767 = vadd.f32 0.0, %v766
        %768 = vmatmul.bf16.gmra.mxu0 %v733
        %v769 = vpop.f32.mrf.mxu0
        %v770 = vadd.f32 0.0, %v769
        %v771 = vpop.f32.mrf.mxu0
        %v772 = vadd.f32 0.0, %v771
        %773 = vmatmul.bf16.gmra.mxu0 %v736
        %v774 = vpop.f32.mrf.mxu0
        %v775 = vadd.f32 0.0, %v774
        %v776 = vpop.f32.mrf.mxu0
        %v777 = vadd.f32 0.0, %v776
        %778 = vmatmul.bf16.gmra.mxu0 %v739
        %v779 = vpop.f32.mrf.mxu0
        %v780 = vadd.f32 0.0, %v779
        %v781 = vpop.f32.mrf.mxu0
        %v782 = vadd.f32 0.0, %v781
        %783 = vmatmul.bf16.gmra.mxu0 %v742
        %v784 = vpop.f32.mrf.mxu0
        %v785 = vadd.f32 0.0, %v784
        %v786 = vpop.f32.mrf.mxu0
        %v787 = vadd.f32 0.0, %v786
        %788 = vmatmul.bf16.gmra.mxu0 %v745
        %v789 = vpop.f32.mrf.mxu0
        %v790 = vadd.f32 0.0, %v789
        %v791 = vpop.f32.mrf.mxu0
        %v792 = vadd.f32 0.0, %v791
        %793 = vmatmul.bf16.gmra.mxu0 %v748
        %v794 = vpop.f32.mrf.mxu0
        %v795 = vadd.f32 0.0, %v794
        %v796 = vpop.f32.mrf.mxu0
        %v797 = vadd.f32 0.0, %v796
        %798 = vdwg.mxu0
        %v799 = vpack.c.bf16 %v760, %v760
        %v800 = vpack.c.bf16 %v762, %v762
        %v801 = vpack.c.bf16 %v765, %v765
        %v802 = vpack.c.bf16 %v767, %v767
        %v803 = vpack.c.bf16 %v770, %v770
        %v804 = vpack.c.bf16 %v772, %v772
        %v805 = vpack.c.bf16 %v775, %v775
        %v806 = vpack.c.bf16 %v777, %v777
        %v807 = vpack.c.bf16 %v780, %v780
        %v808 = vpack.c.bf16 %v782, %v782
        %v809 = vpack.c.bf16 %v785, %v785
        %v810 = vpack.c.bf16 %v787, %v787
        %v811 = vpack.c.bf16 %v790, %v790
        %v812 = vpack.c.bf16 %v792, %v792
        %v813 = vpack.c.bf16 %v795, %v795
        %v814 = vpack.c.bf16 %v797, %v797
        %vm815 = vcmask 519168
        %816 = vst.msk [vmem:[%s252] sm:$0xf] %vm815, %v799
        %817 = vst.msk [vmem:[%s252 + $0x4] sm:$0xf] %vm815, %v800
        %818 = vst.msk [vmem:[%s252 + $0x8] sm:$0xf] %vm815, %v801
        %819 = vst.msk [vmem:[%s252 + $0xc] sm:$0xf] %vm815, %v802
        %820 = vst.msk [vmem:[%s252 + $0x10] sm:$0xf] %vm815, %v803
        %821 = vst.msk [vmem:[%s252 + $0x14] sm:$0xf] %vm815, %v804
        %822 = vst.msk [vmem:[%s252 + $0x18] sm:$0xf] %vm815, %v805
        %823 = vst.msk [vmem:[%s252 + $0x1c] sm:$0xf] %vm815, %v806
        %824 = vst.msk [vmem:[%s252 + $0x20] sm:$0xf] %vm815, %v807
        %825 = vst.msk [vmem:[%s252 + $0x24] sm:$0xf] %vm815, %v808
        %826 = vst.msk [vmem:[%s252 + $0x28] sm:$0xf] %vm815, %v809
        %827 = vst.msk [vmem:[%s252 + $0x2c] sm:$0xf] %vm815, %v810
        %828 = vst.msk [vmem:[%s252 + $0x30] sm:$0xf] %vm815, %v811
        %829 = vst.msk [vmem:[%s252 + $0x34] sm:$0xf] %vm815, %v812
        %830 = vst.msk [vmem:[%s252 + $0x38] sm:$0xf] %vm815, %v813
        %831 = vst.msk [vmem:[%s252 + $0x3c] sm:$0xf] %vm815, %v814
      $region44: #{generative_step.8} parent=35 // pred_fallthru
        _
      %s832 = smul.u32 16, %s19
      %p833 = scmp.lt.s32.totalorder %s832, 31
      %s834 = scalar_select %p833, %s832, 31
      %s835 = smul.addr %s834, 4
      %s836 = scalar_lea.vmem %s4, %s835
      // Predicated region
      $region45: #{generative_step.8} parent=35 // pred_check
        %p837 = pneg %p141
      $region46: #{generative_step.8} parent=35 // pred_check_branch
        %839 = sbr.rel (%p837) target = $region48
      $region47: #{generative_step.8} parent=35 // pred_region
        %s840 = smul.u32 16, %s19
      $region48: #{generative_step.8} parent=35 // pred_fallthru
        _
    $region36: #{generative_step.8} parent=5 // pred_fallthru
      _
    %p841 = scmp.le.s32.totalorder 2, %s10
    // Predicated region
    $region49: #{generative_step.8} parent=5 // pred_check
      %p842 = pneg %p841
    $region50: #{generative_step.8} parent=5 // pred_check_branch
      %844 = sbr.rel (%p842) target = $region52
    $region51: #{generative_step.8} parent=5 // pred_region
      %s845 = ssub.s32 %s10, 2
      // Predicated region
      $region53: #{generative_step.8} parent=51 // pred_check
        %p846 = pneg %p147
      $region54: #{generative_step.8} parent=51 // pred_check_branch
        %848 = sbr.rel (%p846) target = $region56
      $region55: #{generative_step.8} parent=51 // pred_region
        %s849 = smul.u32 16, %s21
        %p850 = scmp.lt.s32.totalorder %s849, 31
        %s851 = scalar_select %p850, %s849, 31
        %s852 = smul.addr %s851, 4
        %s853 = scalar_lea.vmem %s4, %s852
      $region56: #{generative_step.8} parent=51 // pred_fallthru
        _
    $region52: #{generative_step.8} parent=5 // pred_fallthru
      _
  $region6: #{generative_step.8} parent=0 // loop_footer
    %s14 = sadd.s32 1, %s10
  $region7: #{generative_step.8} parent=0 // loop_footer_branch
    %9 = sbr.rel target = $region3
  $region8: #{generative_step.8} parent=0 // loop_exit
    _

// kernel: generative_step.7
$region0: #{generative_step.7}
  #allocation0 [shape = 'u32[]', space=smem, size = 0x4, offset = 0x4, fixed_abs, tag = 'smem constant byte address 0x4 - core index']
  #allocation1 [shape = 'u32[72,128]{1,0:T(1,128)}', space=vmem, size = 0x9000, scoped, tag = 'internal scratch']
  %s0 = inlined_call_operand.vmem [shape: f32[256,16], index: 0, kind: input, shape index: {}]
  %s1 = inlined_call_operand.vmem [shape: f32[2,256,32], index: 1, kind: input, shape index: {}]
  %s2 = inlined_call_operand.vmem [shape: f32[256,1], index: 2, kind: input, shape index: {}]
  %s3 = inlined_call_operand.vmem [shape: bf16[16,32], index: 3, kind: input, shape index: {}]
  %s4 = inlined_call_operand.vmem [shape: f32[1,32], index: 4, kind: input, shape index: {}]
  %s5 = inlined_call_operand.vmem [shape: bf16[32,32], index: 5, kind: input, shape index: {}]
  %s6 = inlined_call_operand.vmem [shape: f32[1,32], index: 6, kind: input, shape index: {}]
  %s7 = inlined_call_operand.vmem [shape: f32[1,32], index: 7, kind: input, shape index: {}]
  %s8 = inlined_call_operand.vmem [shape: bf16[32,64], index: 8, kind: input, shape index: {}]
  %s9 = inlined_call_operand.vmem [shape: f32[1,64], index: 9, kind: input, shape index: {}]
  %s10 = inlined_call_operand.vmem [shape: bf16[32,32], index: 10, kind: input, shape index: {}]
  %s11 = inlined_call_operand.vmem [shape: bf16[32,32], index: 11, kind: input, shape index: {}]
  %s12 = inlined_call_operand.vmem [shape: bf16[32,96], index: 12, kind: input, shape index: {}]
  %s13 = inlined_call_operand.vmem [shape: bf16[2,32,64], index: 13, kind: input, shape index: {}]
  %s14 = inlined_call_operand.vmem [shape: f32[256,64], index: 14, kind: output, shape index: {0}]
  %s15 = inlined_call_operand.vmem [shape: bf16[256,32], index: 15, kind: output, shape index: {1}]
  %s16 = inlined_call_operand.vmem [shape: bf16[256,96], index: 16, kind: output, shape index: {2}]
  %s17 = inlined_call_operand.vmem [shape: bf16[256,64], index: 17, kind: output, shape index: {3}]
  %s18 = inlined_call_operand.vmem [shape: bf16[256,64], index: 18, kind: output, shape index: {4}]
  %19 = xla_tuple %s14, %s15, %s16, %s17, %s18
  %s20 = sld [smem:[#allocation0]]
  $region159: #{generative_step.7} parent=0
    _
  %s22 = ssub.s32 1, %s20
  %s23 = scalar_select 0, %s22, %s20
  $region1: #{generative_step.7} parent=0
    #allocation2 [shape = 'u8[262144]{0}', space=vmem, size = 0x40000, scoped, tag = 'input window, operand 1']
    loop: start=0, step=1, limit=4
    $region2: #{generative_step.7} parent=1 // loop_pre_header
      _
    $region3: #{generative_step.7} parent=1 // loop_header
      %s25 = sphi 0, %s29
      %p26 = scmp.ge.s32.totalorder %s25, 4
      %s35 = sphi 0, %s37
      %s38 = sphi 0, %s35
      %s39 = sphi 0, %s38
      %s55 = sphi 0, %s39
      %s61 = sphi 0, %s63
      %s64 = sphi 0, %s61
      %s65 = sphi 0, %s64
      %s81 = sphi 0, %s65
      %s87 = sphi 0, %s89
      %s90 = sphi 0, %s87
      %s91 = sphi 0, %s90
      %s107 = sphi 0, %s91
      %s111 = sphi 0, %s111
      %s113 = sphi 0, %s111
      %s114 = sphi 0, %s113
      %s128 = sphi 0, %s114
      %s132 = sphi 0, %s132
      %s134 = sphi 0, %s132
      %s135 = sphi 0, %s134
      %s149 = sphi 0, %s135
      %s153 = sphi 0, %s153
      %s155 = sphi 0, %s153
      %s156 = sphi 0, %s155
      %s170 = sphi 0, %s156
      %s174 = sphi 0, %s174
      %s176 = sphi 0, %s174
      %s177 = sphi 0, %s176
      %s191 = sphi 0, %s177
      %s195 = sphi 0, %s195
      %s197 = sphi 0, %s195
      %s198 = sphi 0, %s197
      %s212 = sphi 0, %s198
      %s216 = sphi 0, %s216
      %s218 = sphi 0, %s216
      %s219 = sphi 0, %s218
      %s233 = sphi 0, %s219
      %s237 = sphi 0, %s237
      %s239 = sphi 0, %s237
      %s240 = sphi 0, %s239
      %s254 = sphi 0, %s240
      %s258 = sphi 0, %s258
      %s260 = sphi 0, %s258
      %s261 = sphi 0, %s260
      %s275 = sphi 0, %s261
      %s279 = sphi 0, %s279
      %s281 = sphi 0, %s279
      %s282 = sphi 0, %s281
      %s296 = sphi 0, %s282
      %s300 = sphi 0, %s300
      %s302 = sphi 0, %s300
      %s303 = sphi 0, %s302
      %s317 = sphi 0, %s303
      %s321 = sphi 0, %s321
      %s323 = sphi 0, %s321
      %s324 = sphi 0, %s323
      %s338 = sphi 0, %s324
      %s344 = sphi 0, %s346
      %s347 = sphi 0, %s344
      %s348 = sphi 0, %s347
      %s364 = sphi 0, %s348
      %s370 = sphi 0, %s372
      %s373 = sphi 0, %s370
      %s374 = sphi 0, %s373
      %s390 = sphi 0, %s374
      %s396 = sphi 0, %s398
      %s399 = sphi 0, %s396
      %s400 = sphi 0, %s399
      %s416 = sphi 0, %s400
      %s422 = sphi 0, %s424
      %s425 = sphi 0, %s422
      %s426 = sphi 0, %s425
      %s442 = sphi 0, %s426
      %s448 = sphi 0, %s450
      %s451 = sphi 0, %s448
      %s452 = sphi 0, %s451
      %s468 = sphi 0, %s452
    $region4: #{generative_step.7} parent=1 // loop_header_branch
      %28 = sbr.rel (%p26) target = $region8
    $region5: #{generative_step.7} parent=1 // loop_body
      %s30 = ssub.s32 %s25, 1
      %s31 = ssub.s32 %s25, 2
      %s32 = sadd.s32 %s25, 1
      %s33 = ssub.s32 %s25, %s32
      %p34 = scmp.eq.s32.totalorder %s33, 0
      %s36 = sadd.s32 %s35, 1
      %s37 = scalar_select %p34, %s35, %s36
      %p40 = pneg %p34
      %p41 = scmp.eq.s32.totalorder %s25, 1
      %p42 = por %p40, %p41
      %p43 = scmp.ne.s32.totalorder %s35, %s38
      %p44 = scmp.eq.s32.totalorder %s25, 0
      %p45 = por %p43, %p44
      %p46 = scmp.ne.s32.totalorder %s35, %s38
      %p47 = scmp.eq.s32.totalorder %s30, 1
      %p48 = por %p46, %p47
      %p49 = scmp.ne.s32.totalorder %s38, %s39
      %p50 = scmp.eq.s32.totalorder %s30, 0
      %p51 = por %p49, %p50
      %p52 = scmp.ne.s32.totalorder %s38, %s39
      %p53 = scmp.eq.s32.totalorder %s31, 1
      %p54 = por %p52, %p53
      %p56 = scmp.ne.s32.totalorder %s39, %s55
      %p57 = scmp.eq.s32.totalorder %s31, 0
      %p58 = por %p56, %p57
      %s59 = ssub.s32 %s25, %s32
      %p60 = scmp.eq.s32.totalorder %s59, 0
      %s62 = sadd.s32 %s61, 1
      %s63 = scalar_select %p60, %s61, %s62
      %p66 = pneg %p60
      %p67 = scmp.eq.s32.totalorder %s25, 1
      %p68 = por %p66, %p67
      %p69 = scmp.ne.s32.totalorder %s61, %s64
      %p70 = scmp.eq.s32.totalorder %s25, 0
      %p71 = por %p69, %p70
      %p72 = scmp.ne.s32.totalorder %s61, %s64
      %p73 = scmp.eq.s32.totalorder %s30, 1
      %p74 = por %p72, %p73
      %p75 = scmp.ne.s32.totalorder %s64, %s65
      %p76 = scmp.eq.s32.totalorder %s30, 0
      %p77 = por %p75, %p76
      %p78 = scmp.ne.s32.totalorder %s64, %s65
      %p79 = scmp.eq.s32.totalorder %s31, 1
      %p80 = por %p78, %p79
      %p82 = scmp.ne.s32.totalorder %s65, %s81
      %p83 = scmp.eq.s32.totalorder %s31, 0
      %p84 = por %p82, %p83
      %s85 = ssub.s32 %s25, %s32
      %p86 = scmp.eq.s32.totalorder %s85, 0
      %s88 = sadd.s32 %s87, 1
      %s89 = scalar_select %p86, %s87, %s88
      %p92 = pneg %p86
      %p93 = scmp.eq.s32.totalorder %s25, 1
      %p94 = por %p92, %p93
      %p95 = scmp.ne.s32.totalorder %s87, %s90
      %p96 = scmp.eq.s32.totalorder %s25, 0
      %p97 = por %p95, %p96
      %p98 = scmp.ne.s32.totalorder %s87, %s90
      %p99 = scmp.eq.s32.totalorder %s30, 1
      %p100 = por %p98, %p99
      %p101 = scmp.ne.s32.totalorder %s90, %s91
      %p102 = scmp.eq.s32.totalorder %s30, 0
      %p103 = por %p101, %p102
      %p104 = scmp.ne.s32.totalorder %s90, %s91
      %p105 = scmp.eq.s32.totalorder %s31, 1
      %p106 = por %p104, %p105
      %p108 = scmp.ne.s32.totalorder %s91, %s107
      %p109 = scmp.eq.s32.totalorder %s31, 0
      %p110 = por %p108, %p109
      %s112 = sadd.s32 %s111, 1
      %p115 = scmp.eq.s32.totalorder %s25, 1
      %p116 = scmp.ne.s32.totalorder %s111, %s113
      %p117 = scmp.eq.s32.totalorder %s25, 0
      %p118 = por %p116, %p117
      %p119 = scmp.ne.s32.totalorder %s111, %s113
      %p120 = scmp.eq.s32.totalorder %s30, 1
      %p121 = por %p119, %p120
      %p122 = scmp.ne.s32.totalorder %s113, %s114
      %p123 = scmp.eq.s32.totalorder %s30, 0
      %p124 = por %p122, %p123
      %p125 = scmp.ne.s32.totalorder %s113, %s114
      %p126 = scmp.eq.s32.totalorder %s31, 1
      %p127 = por %p125, %p126
      %p129 = scmp.ne.s32.totalorder %s114, %s128
      %p130 = scmp.eq.s32.totalorder %s31, 0
      %p131 = por %p129, %p130
      %s133 = sadd.s32 %s132, 1
      %p136 = scmp.eq.s32.totalorder %s25, 1
      %p137 = scmp.ne.s32.totalorder %s132, %s134
      %p138 = scmp.eq.s32.totalorder %s25, 0
      %p139 = por %p137, %p138
      %p140 = scmp.ne.s32.totalorder %s132, %s134
      %p141 = scmp.eq.s32.totalorder %s30, 1
      %p142 = por %p140, %p141
      %p143 = scmp.ne.s32.totalorder %s134, %s135
      %p144 = scmp.eq.s32.totalorder %s30, 0
      %p145 = por %p143, %p144
      %p146 = scmp.ne.s32.totalorder %s134, %s135
      %p147 = scmp.eq.s32.totalorder %s31, 1
      %p148 = por %p146, %p147
      %p150 = scmp.ne.s32.totalorder %s135, %s149
      %p151 = scmp.eq.s32.totalorder %s31, 0
      %p152 = por %p150, %p151
      %s154 = sadd.s32 %s153, 1
      %p157 = scmp.eq.s32.totalorder %s25, 1
      %p158 = scmp.ne.s32.totalorder %s153, %s155
      %p159 = scmp.eq.s32.totalorder %s25, 0
      %p160 = por %p158, %p159
      %p161 = scmp.ne.s32.totalorder %s153, %s155
      %p162 = scmp.eq.s32.totalorder %s30, 1
      %p163 = por %p161, %p162
      %p164 = scmp.ne.s32.totalorder %s155, %s156
      %p165 = scmp.eq.s32.totalorder %s30, 0
      %p166 = por %p164, %p165
      %p167 = scmp.ne.s32.totalorder %s155, %s156
      %p168 = scmp.eq.s32.totalorder %s31, 1
      %p169 = por %p167, %p168
      %p171 = scmp.ne.s32.totalorder %s156, %s170
      %p172 = scmp.eq.s32.totalorder %s31, 0
      %p173 = por %p171, %p172
      %s175 = sadd.s32 %s174, 1
      %p178 = scmp.eq.s32.totalorder %s25, 1
      %p179 = scmp.ne.s32.totalorder %s174, %s176
      %p180 = scmp.eq.s32.totalorder %s25, 0
      %p181 = por %p179, %p180
      %p182 = scmp.ne.s32.totalorder %s174, %s176
      %p183 = scmp.eq.s32.totalorder %s30, 1
      %p184 = por %p182, %p183
      %p185 = scmp.ne.s32.totalorder %s176, %s177
      %p186 = scmp.eq.s32.totalorder %s30, 0
      %p187 = por %p185, %p186
      %p188 = scmp.ne.s32.totalorder %s176, %s177
      %p189 = scmp.eq.s32.totalorder %s31, 1
      %p190 = por %p188, %p189
      %p192 = scmp.ne.s32.totalorder %s177, %s191
      %p193 = scmp.eq.s32.totalorder %s31, 0
      %p194 = por %p192, %p193
      %s196 = sadd.s32 %s195, 1
      %p199 = scmp.eq.s32.totalorder %s25, 1
      %p200 = scmp.ne.s32.totalorder %s195, %s197
      %p201 = scmp.eq.s32.totalorder %s25, 0
      %p202 = por %p200, %p201
      %p203 = scmp.ne.s32.totalorder %s195, %s197
      %p204 = scmp.eq.s32.totalorder %s30, 1
      %p205 = por %p203, %p204
      %p206 = scmp.ne.s32.totalorder %s197, %s198
      %p207 = scmp.eq.s32.totalorder %s30, 0
      %p208 = por %p206, %p207
      %p209 = scmp.ne.s32.totalorder %s197, %s198
      %p210 = scmp.eq.s32.totalorder %s31, 1
      %p211 = por %p209, %p210
      %p213 = scmp.ne.s32.totalorder %s198, %s212
      %p214 = scmp.eq.s32.totalorder %s31, 0
      %p215 = por %p213, %p214
      %s217 = sadd.s32 %s216, 1
      %p220 = scmp.eq.s32.totalorder %s25, 1
      %p221 = scmp.ne.s32.totalorder %s216, %s218
      %p222 = scmp.eq.s32.totalorder %s25, 0
      %p223 = por %p221, %p222
      %p224 = scmp.ne.s32.totalorder %s216, %s218
      %p225 = scmp.eq.s32.totalorder %s30, 1
      %p226 = por %p224, %p225
      %p227 = scmp.ne.s32.totalorder %s218, %s219
      %p228 = scmp.eq.s32.totalorder %s30, 0
      %p229 = por %p227, %p228
      %p230 = scmp.ne.s32.totalorder %s218, %s219
      %p231 = scmp.eq.s32.totalorder %s31, 1
      %p232 = por %p230, %p231
      %p234 = scmp.ne.s32.totalorder %s219, %s233
      %p235 = scmp.eq.s32.totalorder %s31, 0
      %p236 = por %p234, %p235
      %s238 = sadd.s32 %s237, 1
      %p241 = scmp.eq.s32.totalorder %s25, 1
      %p242 = scmp.ne.s32.totalorder %s237, %s239
      %p243 = scmp.eq.s32.totalorder %s25, 0
      %p244 = por %p242, %p243
      %p245 = scmp.ne.s32.totalorder %s237, %s239
      %p246 = scmp.eq.s32.totalorder %s30, 1
      %p247 = por %p245, %p246
      %p248 = scmp.ne.s32.totalorder %s239, %s240
      %p249 = scmp.eq.s32.totalorder %s30, 0
      %p250 = por %p248, %p249
      %p251 = scmp.ne.s32.totalorder %s239, %s240
      %p252 = scmp.eq.s32.totalorder %s31, 1
      %p253 = por %p251, %p252
      %p255 = scmp.ne.s32.totalorder %s240, %s254
      %p256 = scmp.eq.s32.totalorder %s31, 0
      %p257 = por %p255, %p256
      %s259 = sadd.s32 %s258, 1
      %p262 = scmp.eq.s32.totalorder %s25, 1
      %p263 = scmp.ne.s32.totalorder %s258, %s260
      %p264 = scmp.eq.s32.totalorder %s25, 0
      %p265 = por %p263, %p264
      %p266 = scmp.ne.s32.totalorder %s258, %s260
      %p267 = scmp.eq.s32.totalorder %s30, 1
      %p268 = por %p266, %p267
      %p269 = scmp.ne.s32.totalorder %s260, %s261
      %p270 = scmp.eq.s32.totalorder %s30, 0
      %p271 = por %p269, %p270
      %p272 = scmp.ne.s32.totalorder %s260, %s261
      %p273 = scmp.eq.s32.totalorder %s31, 1
      %p274 = por %p272, %p273
      %p276 = scmp.ne.s32.totalorder %s261, %s275
      %p277 = scmp.eq.s32.totalorder %s31, 0
      %p278 = por %p276, %p277
      %s280 = sadd.s32 %s279, 1
      %p283 = scmp.eq.s32.totalorder %s25, 1
      %p284 = scmp.ne.s32.totalorder %s279, %s281
      %p285 = scmp.eq.s32.totalorder %s25, 0
      %p286 = por %p284, %p285
      %p287 = scmp.ne.s32.totalorder %s279, %s281
      %p288 = scmp.eq.s32.totalorder %s30, 1
      %p289 = por %p287, %p288
      %p290 = scmp.ne.s32.totalorder %s281, %s282
      %p291 = scmp.eq.s32.totalorder %s30, 0
      %p292 = por %p290, %p291
      %p293 = scmp.ne.s32.totalorder %s281, %s282
      %p294 = scmp.eq.s32.totalorder %s31, 1
      %p295 = por %p293, %p294
      %p297 = scmp.ne.s32.totalorder %s282, %s296
      %p298 = scmp.eq.s32.totalorder %s31, 0
      %p299 = por %p297, %p298
      %s301 = sadd.s32 %s300, 1
      %p304 = scmp.eq.s32.totalorder %s25, 1
      %p305 = scmp.ne.s32.totalorder %s300, %s302
      %p306 = scmp.eq.s32.totalorder %s25, 0
      %p307 = por %p305, %p306
      %p308 = scmp.ne.s32.totalorder %s300, %s302
      %p309 = scmp.eq.s32.totalorder %s30, 1
      %p310 = por %p308, %p309
      %p311 = scmp.ne.s32.totalorder %s302, %s303
      %p312 = scmp.eq.s32.totalorder %s30, 0
      %p313 = por %p311, %p312
      %p314 = scmp.ne.s32.totalorder %s302, %s303
      %p315 = scmp.eq.s32.totalorder %s31, 1
      %p316 = por %p314, %p315
      %p318 = scmp.ne.s32.totalorder %s303, %s317
      %p319 = scmp.eq.s32.totalorder %s31, 0
      %p320 = por %p318, %p319
      %s322 = sadd.s32 %s321, 1
      %p325 = scmp.eq.s32.totalorder %s25, 1
      %p326 = scmp.ne.s32.totalorder %s321, %s323
      %p327 = scmp.eq.s32.totalorder %s25, 0
      %p328 = por %p326, %p327
      %p329 = scmp.ne.s32.totalorder %s321, %s323
      %p330 = scmp.eq.s32.totalorder %s30, 1
      %p331 = por %p329, %p330
      %p332 = scmp.ne.s32.totalorder %s323, %s324
      %p333 = scmp.eq.s32.totalorder %s30, 0
      %p334 = por %p332, %p333
      %p335 = scmp.ne.s32.totalorder %s323, %s324
      %p336 = scmp.eq.s32.totalorder %s31, 1
      %p337 = por %p335, %p336
      %p339 = scmp.ne.s32.totalorder %s324, %s338
      %p340 = scmp.eq.s32.totalorder %s31, 0
      %p341 = por %p339, %p340
      %s342 = ssub.s32 %s25, %s32
      %p343 = scmp.eq.s32.totalorder %s342, 0
      %s345 = sadd.s32 %s344, 1
      %s346 = scalar_select %p343, %s344, %s345
      %p349 = pneg %p343
      %p350 = scmp.eq.s32.totalorder %s25, 1
      %p351 = por %p349, %p350
      %p352 = scmp.ne.s32.totalorder %s344, %s347
      %p353 = scmp.eq.s32.totalorder %s25, 0
      %p354 = por %p352, %p353
      %p355 = scmp.ne.s32.totalorder %s344, %s347
      %p356 = scmp.eq.s32.totalorder %s30, 1
      %p357 = por %p355, %p356
      %p358 = scmp.ne.s32.totalorder %s347, %s348
      %p359 = scmp.eq.s32.totalorder %s30, 0
      %p360 = por %p358, %p359
      %p361 = scmp.ne.s32.totalorder %s347, %s348
      %p362 = scmp.eq.s32.totalorder %s31, 1
      %p363 = por %p361, %p362
      %p365 = scmp.ne.s32.totalorder %s348, %s364
      %p366 = scmp.eq.s32.totalorder %s31, 0
      %p367 = por %p365, %p366
      %s368 = ssub.s32 %s25, %s32
      %p369 = scmp.eq.s32.totalorder %s368, 0
      %s371 = sadd.s32 %s370, 1
      %s372 = scalar_select %p369, %s370, %s371
      %p375 = pneg %p369
      %p376 = scmp.eq.s32.totalorder %s25, 1
      %p377 = por %p375, %p376
      %p378 = scmp.ne.s32.totalorder %s370, %s373
      %p379 = scmp.eq.s32.totalorder %s25, 0
      %p380 = por %p378, %p379
      %p381 = scmp.ne.s32.totalorder %s370, %s373
      %p382 = scmp.eq.s32.totalorder %s30, 1
      %p383 = por %p381, %p382
      %p384 = scmp.ne.s32.totalorder %s373, %s374
      %p385 = scmp.eq.s32.totalorder %s30, 0
      %p386 = por %p384, %p385
      %p387 = scmp.ne.s32.totalorder %s373, %s374
      %p388 = scmp.eq.s32.totalorder %s31, 1
      %p389 = por %p387, %p388
      %p391 = scmp.ne.s32.totalorder %s374, %s390
      %p392 = scmp.eq.s32.totalorder %s31, 0
      %p393 = por %p391, %p392
      %s394 = ssub.s32 %s25, %s32
      %p395 = scmp.eq.s32.totalorder %s394, 0
      %s397 = sadd.s32 %s396, 1
      %s398 = scalar_select %p395, %s396, %s397
      %p401 = pneg %p395
      %p402 = scmp.eq.s32.totalorder %s25, 1
      %p403 = por %p401, %p402
      %p404 = scmp.ne.s32.totalorder %s396, %s399
      %p405 = scmp.eq.s32.totalorder %s25, 0
      %p406 = por %p404, %p405
      %p407 = scmp.ne.s32.totalorder %s396, %s399
      %p408 = scmp.eq.s32.totalorder %s30, 1
      %p409 = por %p407, %p408
      %p410 = scmp.ne.s32.totalorder %s399, %s400
      %p411 = scmp.eq.s32.totalorder %s30, 0
      %p412 = por %p410, %p411
      %p413 = scmp.ne.s32.totalorder %s399, %s400
      %p414 = scmp.eq.s32.totalorder %s31, 1
      %p415 = por %p413, %p414
      %p417 = scmp.ne.s32.totalorder %s400, %s416
      %p418 = scmp.eq.s32.totalorder %s31, 0
      %p419 = por %p417, %p418
      %s420 = ssub.s32 %s25, %s32
      %p421 = scmp.eq.s32.totalorder %s420, 0
      %s423 = sadd.s32 %s422, 1
      %s424 = scalar_select %p421, %s422, %s423
      %p427 = pneg %p421
      %p428 = scmp.eq.s32.totalorder %s25, 1
      %p429 = por %p427, %p428
      %p430 = scmp.ne.s32.totalorder %s422, %s425
      %p431 = scmp.eq.s32.totalorder %s25, 0
      %p432 = por %p430, %p431
      %p433 = scmp.ne.s32.totalorder %s422, %s425
      %p434 = scmp.eq.s32.totalorder %s30, 1
      %p435 = por %p433, %p434
      %p436 = scmp.ne.s32.totalorder %s425, %s426
      %p437 = scmp.eq.s32.totalorder %s30, 0
      %p438 = por %p436, %p437
      %p439 = scmp.ne.s32.totalorder %s425, %s426
      %p440 = scmp.eq.s32.totalorder %s31, 1
      %p441 = por %p439, %p440
      %p443 = scmp.ne.s32.totalorder %s426, %s442
      %p444 = scmp.eq.s32.totalorder %s31, 0
      %p445 = por %p443, %p444
      %s446 = ssub.s32 %s25, %s32
      %p447 = scmp.eq.s32.totalorder %s446, 0
      %s449 = sadd.s32 %s448, 1
      %s450 = scalar_select %p447, %s448, %s449
      %p453 = pneg %p447
      %p454 = scmp.eq.s32.totalorder %s25, 1
      %p455 = por %p453, %p454
      %p456 = scmp.ne.s32.totalorder %s448, %s451
      %p457 = scmp.eq.s32.totalorder %s25, 0
      %p458 = por %p456, %p457
      %p459 = scmp.ne.s32.totalorder %s448, %s451
      %p460 = scmp.eq.s32.totalorder %s30, 1
      %p461 = por %p459, %p460
      %p462 = scmp.ne.s32.totalorder %s451, %s452
      %p463 = scmp.eq.s32.totalorder %s30, 0
      %p464 = por %p462, %p463
      %p465 = scmp.ne.s32.totalorder %s451, %s452
      %p466 = scmp.eq.s32.totalorder %s31, 1
      %p467 = por %p465, %p466
      %p469 = scmp.ne.s32.totalorder %s452, %s468
      %p470 = scmp.eq.s32.totalorder %s31, 0
      %p471 = por %p469, %p470
      %p472 = scmp.le.s32.totalorder 1, %s25
      %p473 = scmp.lt.s32.totalorder %s25, 3
      %p474 = pnand %p472, %p473
      %p475 = pneg %p474
      // Predicated region
      $region9: #{generative_step.7} parent=5 // pred_check
        _
      $region10: #{generative_step.7} parent=5 // pred_check_branch
        %477 = sbr.rel (%p474) target = $region12
      $region11: #{generative_step.7} parent=5 // pred_region
        %s478 = ssub.s32 %s25, 1
        // Predicated region
        $region13: #{generative_step.7} parent=11 // pred_check
          %p479 = pneg %p124
        $region14: #{generative_step.7} parent=11 // pred_check_branch
          %481 = sbr.rel (%p479) target = $region16
        $region15: #{generative_step.7} parent=11 // pred_region
          _
        $region16: #{generative_step.7} parent=11 // pred_fallthru
          _
        // Predicated region
        $region17: #{generative_step.7} parent=11 // pred_check
          %p482 = pneg %p145
        $region18: #{generative_step.7} parent=11 // pred_check_branch
          %484 = sbr.rel (%p482) target = $region20
        $region19: #{generative_step.7} parent=11 // pred_region
          _
        $region20: #{generative_step.7} parent=11 // pred_fallthru
          _
        // Predicated region
        $region21: #{generative_step.7} parent=11 // pred_check
          %p485 = pneg %p166
        $region22: #{generative_step.7} parent=11 // pred_check_branch
          %487 = sbr.rel (%p485) target = $region24
        $region23: #{generative_step.7} parent=11 // pred_region
          _
        $region24: #{generative_step.7} parent=11 // pred_fallthru
          _
        // Predicated region
        $region25: #{generative_step.7} parent=11 // pred_check
          %p488 = pneg %p187
        $region26: #{generative_step.7} parent=11 // pred_check_branch
          %490 = sbr.rel (%p488) target = $region28
        $region27: #{generative_step.7} parent=11 // pred_region
          _
        $region28: #{generative_step.7} parent=11 // pred_fallthru
          _
        // Predicated region
        $region29: #{generative_step.7} parent=11 // pred_check
          %p491 = pneg %p208
        $region30: #{generative_step.7} parent=11 // pred_check_branch
          %493 = sbr.rel (%p491) target = $region32
        $region31: #{generative_step.7} parent=11 // pred_region
          _
        $region32: #{generative_step.7} parent=11 // pred_fallthru
          _
        // Predicated region
        $region33: #{generative_step.7} parent=11 // pred_check
          %p494 = pneg %p229
        $region34: #{generative_step.7} parent=11 // pred_check_branch
          %496 = sbr.rel (%p494) target = $region36
        $region35: #{generative_step.7} parent=11 // pred_region
          _
        $region36: #{generative_step.7} parent=11 // pred_fallthru
          _
        // Predicated region
        $region37: #{generative_step.7} parent=11 // pred_check
          %p497 = pneg %p250
        $region38: #{generative_step.7} parent=11 // pred_check_branch
          %499 = sbr.rel (%p497) target = $region40
        $region39: #{generative_step.7} parent=11 // pred_region
          _
        $region40: #{generative_step.7} parent=11 // pred_fallthru
          _
        // Predicated region
        $region41: #{generative_step.7} parent=11 // pred_check
          %p500 = pneg %p271
        $region42: #{generative_step.7} parent=11 // pred_check_branch
          %502 = sbr.rel (%p500) target = $region44
        $region43: #{generative_step.7} parent=11 // pred_region
          _
        $region44: #{generative_step.7} parent=11 // pred_fallthru
          _
        // Predicated region
        $region45: #{generative_step.7} parent=11 // pred_check
          %p503 = pneg %p292
        $region46: #{generative_step.7} parent=11 // pred_check_branch
          %505 = sbr.rel (%p503) target = $region48
        $region47: #{generative_step.7} parent=11 // pred_region
          _
        $region48: #{generative_step.7} parent=11 // pred_fallthru
          _
        // Predicated region
        $region49: #{generative_step.7} parent=11 // pred_check
          %p506 = pneg %p313
        $region50: #{generative_step.7} parent=11 // pred_check_branch
          %508 = sbr.rel (%p506) target = $region52
        $region51: #{generative_step.7} parent=11 // pred_region
          _
        $region52: #{generative_step.7} parent=11 // pred_fallthru
          _
        // Predicated region
        $region53: #{generative_step.7} parent=11 // pred_check
          %p509 = pneg %p334
        $region54: #{generative_step.7} parent=11 // pred_check_branch
          %511 = sbr.rel (%p509) target = $region56
        $region55: #{generative_step.7} parent=11 // pred_region
          _
        $region56: #{generative_step.7} parent=11 // pred_fallthru
          _
      $region12: #{generative_step.7} parent=5 // pred_fallthru
        _
      %p512 = scmp.lt.s32.totalorder %s25, 2
      // Predicated region
      $region57: #{generative_step.7} parent=5 // pred_check
        %p513 = pneg %p512
      $region58: #{generative_step.7} parent=5 // pred_check_branch
        %515 = sbr.rel (%p513) target = $region60
      $region59: #{generative_step.7} parent=5 // pred_region
        // Predicated region
        $region61: #{generative_step.7} parent=59 // pred_check
          %p516 = pneg %p45
        $region62: #{generative_step.7} parent=59 // pred_check_branch
          %518 = sbr.rel (%p516) target = $region64
        $region63: #{generative_step.7} parent=59 // pred_region
          %s519 = smul.u32 16, %s25
          %p520 = scmp.lt.s32.totalorder %s519, 31
          %s521 = scalar_select %p520, %s519, 31
          %s522 = smul.addr %s521, 8
          %s523 = scalar_lea.vmem %s0, %s522
          %s524 = smul.u32 16, %s25
        $region64: #{generative_step.7} parent=59 // pred_fallthru
          _
        // Predicated region
        $region65: #{generative_step.7} parent=59 // pred_check
          %p525 = pneg %p71
        $region66: #{generative_step.7} parent=59 // pred_check_branch
          %527 = sbr.rel (%p525) target = $region68
        $region67: #{generative_step.7} parent=59 // pred_region
          %s528 = sand.u32 %s61, 1
          %s529 = sand.u32 %s61, 1
          %s530 = smul.addr %s529, 256
          %s531 = scalar_lea.vmem [#allocation2], %s530
          %s532 = smul.u32 16, %s25
          %s533 = smul.addr %s532, 8
          %s534 = scalar_lea.vmem %s1, %s533
          // Predicated region
          $region69: #{generative_step.7} parent=67 // pred_check
            _
          $region70: #{generative_step.7} parent=67 // pred_check_branch
            %536 = sbr.rel (0) target = $region72
          $region71: #{generative_step.7} parent=67 // pred_region
            // Predicated region
            $region73: #{generative_step.7} parent=71 // pred_check
              _
            $region74: #{generative_step.7} parent=71 // pred_check_branch
              %538 = sbr.rel (0) target = $region76
            $region75: #{generative_step.7} parent=71 // pred_region
              // Predicated region
              $region88: #{generative_step.7} parent=75 // pred_check
                _
              $region89: #{generative_step.7} parent=75 // pred_check_branch
                %616 = sbr.rel (0) target = $region91
              $region90: #{generative_step.7} parent=75 // pred_region
                loop: start=0, step=1, limit=1
                $region92: #{generative_step.7} parent=90 // loop_pre_header
                  _
                $region93: #{generative_step.7} parent=90 // loop_header
                  %s618 = sphi 0, %s622
                  %p619 = scmp.ge.s32.totalorder %s618, 1
                  %s623 = sphi %s534, %s534
                  %s624 = sphi %s531, %s531
                $region94: #{generative_step.7} parent=90 // loop_header_branch
                  %621 = sbr.rel (%p619) target = $region98
                $region95: #{generative_step.7} parent=90 // loop_body
                  %v625 = vld [vmem:[%s623] sm:$0xff]
                  %626 = vst [vmem:[%s624] sm:$0xff] %v625
                  %v627 = vld [vmem:[%s623 + $0x8] sm:$0xff]
                  %628 = vst [vmem:[%s624 + $0x8] sm:$0xff] %v627
                  %v629 = vld [vmem:[%s623 + $0x10] sm:$0xff]
                  %630 = vst [vmem:[%s624 + $0x10] sm:$0xff] %v629
                  %v631 = vld [vmem:[%s623 + $0x18] sm:$0xff]
                  %632 = vst [vmem:[%s624 + $0x18] sm:$0xff] %v631
                  %v633 = vld [vmem:[%s623 + $0x20] sm:$0xff]
                  %634 = vst [vmem:[%s624 + $0x20] sm:$0xff] %v633
                  %v635 = vld [vmem:[%s623 + $0x28] sm:$0xff]
                  %636 = vst [vmem:[%s624 + $0x28] sm:$0xff] %v635
                  %v637 = vld [vmem:[%s623 + $0x30] sm:$0xff]
                  %638 = vst [vmem:[%s624 + $0x30] sm:$0xff] %v637
                  %v639 = vld [vmem:[%s623 + $0x38] sm:$0xff]
                  %640 = vst [vmem:[%s624 + $0x38] sm:$0xff] %v639
                  %v641 = vld [vmem:[%s623 + $0x40] sm:$0xff]
                  %642 = vst [vmem:[%s624 + $0x40] sm:$0xff] %v641
                  %v643 = vld [vmem:[%s623 + $0x48] sm:$0xff]
                  %644 = vst [vmem:[%s624 + $0x48] sm:$0xff] %v643
                  %v645 = vld [vmem:[%s623 + $0x50] sm:$0xff]
                  %646 = vst [vmem:[%s624 + $0x50] sm:$0xff] %v645
                  %v647 = vld [vmem:[%s623 + $0x58] sm:$0xff]
                  %648 = vst [vmem:[%s624 + $0x58] sm:$0xff] %v647
                  %v649 = vld [vmem:[%s623 + $0x60] sm:$0xff]
                  %650 = vst [vmem:[%s624 + $0x60] sm:$0xff] %v649
                  %v651 = vld [vmem:[%s623 + $0x68] sm:$0xff]
                  %652 = vst [vmem:[%s624 + $0x68] sm:$0xff] %v651
                  %v653 = vld [vmem:[%s623 + $0x70] sm:$0xff]
                  %654 = vst [vmem:[%s624 + $0x70] sm:$0xff] %v653
                  %v655 = vld [vmem:[%s623 + $0x78] sm:$0xff]
                  %656 = vst [vmem:[%s624 + $0x78] sm:$0xff] %v655
                  %v657 = vld [vmem:[%s623 + $0x100] sm:$0xff]
                  %658 = vst [vmem:[%s624 + $0x80] sm:$0xff] %v657
                  %v659 = vld [vmem:[%s623 + $0x108] sm:$0xff]
                  %660 = vst [vmem:[%s624 + $0x88] sm:$0xff] %v659
                  %v661 = vld [vmem:[%s623 + $0x110] sm:$0xff]
                  %662 = vst [vmem:[%s624 + $0x90] sm:$0xff] %v661
                  %v663 = vld [vmem:[%s623 + $0x118] sm:$0xff]
                  %664 = vst [vmem:[%s624 + $0x98] sm:$0xff] %v663
                  %v665 = vld [vmem:[%s623 + $0x120] sm:$0xff]
                  %666 = vst [vmem:[%s624 + $0xa0] sm:$0xff] %v665
                  %v667 = vld [vmem:[%s623 + $0x128] sm:$0xff]
                  %668 = vst [vmem:[%s624 + $0xa8] sm:$0xff] %v667
                  %v669 = vld [vmem:[%s623 + $0x130] sm:$0xff]
                  %670 = vst [vmem:[%s624 + $0xb0] sm:$0xff] %v669
                  %v671 = vld [vmem:[%s623 + $0x138] sm:$0xff]
                  %672 = vst [vmem:[%s624 + $0xb8] sm:$0xff] %v671
                  %v673 = vld [vmem:[%s623 + $0x140] sm:$0xff]
                  %674 = vst [vmem:[%s624 + $0xc0] sm:$0xff] %v673
                  %v675 = vld [vmem:[%s623 + $0x148] sm:$0xff]
                  %676 = vst [vmem:[%s624 + $0xc8] sm:$0xff] %v675
                  %v677 = vld [vmem:[%s623 + $0x150] sm:$0xff]
                  %678 = vst [vmem:[%s624 + $0xd0] sm:$0xff] %v677
                  %v679 = vld [vmem:[%s623 + $0x158] sm:$0xff]
                  %680 = vst [vmem:[%s624 + $0xd8] sm:$0xff] %v679
                  %v681 = vld [vmem:[%s623 + $0x160] sm:$0xff]
                  %682 = vst [vmem:[%s624 + $0xe0] sm:$0xff] %v681
                  %v683 = vld [vmem:[%s623 + $0x168] sm:$0xff]
                  %684 = vst [vmem:[%s624 + $0xe8] sm:$0xff] %v683
                  %v685 = vld [vmem:[%s623 + $0x170] sm:$0xff]
                  %686 = vst [vmem:[%s624 + $0xf0] sm:$0xff] %v685
                  %v687 = vld [vmem:[%s623 + $0x178] sm:$0xff]
                  %688 = vst [vmem:[%s624 + $0xf8] sm:$0xff] %v687
                $region96: #{generative_step.7} parent=90 // loop_footer
                  %s622 = sadd.s32 1, %s618
                $region97: #{generative_step.7} parent=90 // loop_footer_branch
                  %617 = sbr.rel target = $region93
                $region98: #{generative_step.7} parent=90 // loop_exit
                  _
              $region91: #{generative_step.7} parent=75 // pred_fallthru
                _
              // Predicated region
              $region99: #{generative_step.7} parent=75 // pred_check
                _
              $region100: #{generative_step.7} parent=75 // pred_check_branch
                %690 = sbr.rel target = $region102
              $region101: #{generative_step.7} parent=75 // pred_region
                _
              $region102: #{generative_step.7} parent=75 // pred_fallthru
                _
            $region76: #{generative_step.7} parent=71 // pred_fallthru
              _
            // Predicated region
            $region77: #{generative_step.7} parent=71 // pred_check
              _
            $region78: #{generative_step.7} parent=71 // pred_check_branch
              %540 = sbr.rel target = $region80
            $region79: #{generative_step.7} parent=71 // pred_region
              %s542 = ssub.s32 256, 1
              loop: start=0, step=1, limit=1
              $region81: #{generative_step.7} parent=79 // loop_pre_header
                _
              $region82: #{generative_step.7} parent=79 // loop_header
                %s544 = sphi 0, %s548
                %p545 = scmp.ge.s32.totalorder %s544, 1
                %s549 = sphi %s534, %s534
                %s550 = sphi %s531, %s531
              $region83: #{generative_step.7} parent=79 // loop_header_branch
                %547 = sbr.rel (%p545) target = $region87
              $region84: #{generative_step.7} parent=79 // loop_body
                %v551 = vld [vmem:[%s549] sm:%s542]
                %552 = vst [vmem:[%s550] sm:%s542] %v551
                %v553 = vld [vmem:[%s549 + $0x8] sm:%s542]
                %554 = vst [vmem:[%s550 + $0x8] sm:%s542] %v553
                %v555 = vld [vmem:[%s549 + $0x10] sm:%s542]
                %556 = vst [vmem:[%s550 + $0x10] sm:%s542] %v555
                %v557 = vld [vmem:[%s549 + $0x18] sm:%s542]
                %558 = vst [vmem:[%s550 + $0x18] sm:%s542] %v557
                %v559 = vld [vmem:[%s549 + $0x20] sm:%s542]
                %560 = vst [vmem:[%s550 + $0x20] sm:%s542] %v559
                %v561 = vld [vmem:[%s549 + $0x28] sm:%s542]
                %562 = vst [vmem:[%s550 + $0x28] sm:%s542] %v561
                %v563 = vld [vmem:[%s549 + $0x30] sm:%s542]
                %564 = vst [vmem:[%s550 + $0x30] sm:%s542] %v563
                %v565 = vld [vmem:[%s549 + $0x38] sm:%s542]
                %566 = vst [vmem:[%s550 + $0x38] sm:%s542] %v565
                %v567 = vld [vmem:[%s549 + $0x40] sm:%s542]
                %568 = vst [vmem:[%s550 + $0x40] sm:%s542] %v567
                %v569 = vld [vmem:[%s549 + $0x48] sm:%s542]
                %570 = vst [vmem:[%s550 + $0x48] sm:%s542] %v569
                %v571 = vld [vmem:[%s549 + $0x50] sm:%s542]
                %572 = vst [vmem:[%s550 + $0x50] sm:%s542] %v571
                %v573 = vld [vmem:[%s549 + $0x58] sm:%s542]
                %574 = vst [vmem:[%s550 + $0x58] sm:%s542] %v573
                %v575 = vld [vmem:[%s549 + $0x60] sm:%s542]
                %576 = vst [vmem:[%s550 + $0x60] sm:%s542] %v575
                %v577 = vld [vmem:[%s549 + $0x68] sm:%s542]
                %578 = vst [vmem:[%s550 + $0x68] sm:%s542] %v577
                %v579 = vld [vmem:[%s549 + $0x70] sm:%s542]
                %580 = vst [vmem:[%s550 + $0x70] sm:%s542] %v579
                %v581 = vld [vmem:[%s549 + $0x78] sm:%s542]
                %582 = vst [vmem:[%s550 + $0x78] sm:%s542] %v581
                %v583 = vld [vmem:[%s549 + $0x100] sm:%s542]
                %584 = vst [vmem:[%s550 + $0x80] sm:%s542] %v583
                %v585 = vld [vmem:[%s549 + $0x108] sm:%s542]
                %586 = vst [vmem:[%s550 + $0x88] sm:%s542] %v585
                %v587 = vld [vmem:[%s549 + $0x110] sm:%s542]
                %588 = vst [vmem:[%s550 + $0x90] sm:%s542] %v587
                %v589 = vld [vmem:[%s549 + $0x118] sm:%s542]
                %590 = vst [vmem:[%s550 + $0x98] sm:%s542] %v589
                %v591 = vld [vmem:[%s549 + $0x120] sm:%s542]
                %592 = vst [vmem:[%s550 + $0xa0] sm:%s542] %v591
                %v593 = vld [vmem:[%s549 + $0x128] sm:%s542]
                %594 = vst [vmem:[%s550 + $0xa8] sm:%s542] %v593
                %v595 = vld [vmem:[%s549 + $0x130] sm:%s542]
                %596 = vst [vmem:[%s550 + $0xb0] sm:%s542] %v595
                %v597 = vld [vmem:[%s549 + $0x138] sm:%s542]
                %598 = vst [vmem:[%s550 + $0xb8] sm:%s542] %v597
                %v599 = vld [vmem:[%s549 + $0x140] sm:%s542]
                %600 = vst [vmem:[%s550 + $0xc0] sm:%s542] %v599
                %v601 = vld [vmem:[%s549 + $0x148] sm:%s542]
                %602 = vst [vmem:[%s550 + $0xc8] sm:%s542] %v601
                %v603 = vld [vmem:[%s549 + $0x150] sm:%s542]
                %604 = vst [vmem:[%s550 + $0xd0] sm:%s542] %v603
                %v605 = vld [vmem:[%s549 + $0x158] sm:%s542]
                %606 = vst [vmem:[%s550 + $0xd8] sm:%s542] %v605
                %v607 = vld [vmem:[%s549 + $0x160] sm:%s542]
                %608 = vst [vmem:[%s550 + $0xe0] sm:%s542] %v607
                %v609 = vld [vmem:[%s549 + $0x168] sm:%s542]
                %610 = vst [vmem:[%s550 + $0xe8] sm:%s542] %v609
                %v611 = vld [vmem:[%s549 + $0x170] sm:%s542]
                %612 = vst [vmem:[%s550 + $0xf0] sm:%s542] %v611
                %v613 = vld [vmem:[%s549 + $0x178] sm:%s542]
                %614 = vst [vmem:[%s550 + $0xf8] sm:%s542] %v613
              $region85: #{generative_step.7} parent=79 // loop_footer
                %s548 = sadd.s32 1, %s544
              $region86: #{generative_step.7} parent=79 // loop_footer_branch
                %543 = sbr.rel target = $region82
              $region87: #{generative_step.7} parent=79 // loop_exit
                _
            $region80: #{generative_step.7} parent=71 // pred_fallthru
              _
          $region72: #{generative_step.7} parent=67 // pred_fallthru
            _
          %691 = vnop
        $region68: #{generative_step.7} parent=59 // pred_fallthru
          _
        // Predicated region
        $region103: #{generative_step.7} parent=59 // pred_check
          %p692 = pneg %p97
        $region104: #{generative_step.7} parent=59 // pred_check_branch
          %694 = sbr.rel (%p692) target = $region106
        $region105: #{generative_step.7} parent=59 // pred_region
          %s695 = smul.u32 16, %s25
          %p696 = scmp.lt.s32.totalorder %s695, 31
          %s697 = scalar_select %p696, %s695, 31
          %s698 = smul.addr %s697, 8
          %s699 = scalar_lea.vmem %s2, %s698
          %s700 = smul.u32 16, %s25
        $region106: #{generative_step.7} parent=59 // pred_fallthru
          _
      $region60: #{generative_step.7} parent=5 // pred_fallthru
        _
      %p701 = scmp.le.s32.totalorder 1, %s25
      %p702 = scmp.lt.s32.totalorder %s25, 3
      %p703 = pnand %p701, %p702
      %p704 = pneg %p703
      // Predicated region
      $region107: #{generative_step.7} parent=5 // pred_check
        _
      $region108: #{generative_step.7} parent=5 // pred_check_branch
        %706 = sbr.rel (%p703) target = $region110
      $region109: #{generative_step.7} parent=5 // pred_region
        %s707 = ssub.s32 %s25, 1
        %s708 = sand.u32 %s64, 1
        %s709 = sand.u32 %s64, 1
        %s710 = smul.addr %s709, 256
        %s711 = scalar_lea.vmem [#allocation2], %s710
        // Predicated region
        $region111: #{generative_step.7} parent=109 // pred_check
          %p712 = pneg %p77
        $region112: #{generative_step.7} parent=109 // pred_check_branch
          %714 = sbr.rel (%p712) target = $region114
        $region113: #{generative_step.7} parent=109 // pred_region
          _
        $region114: #{generative_step.7} parent=109 // pred_fallthru
          _
        %s715 = smul.u32 16, %s30
        %p716 = scmp.lt.s32.totalorder %s715, 31
        %s717 = scalar_select %p716, %s715, 31
        %s718 = smul.addr %s717, 8
        %s719 = scalar_lea.vmem %s0, %s718
        %p720 = pneg %p51
        %p721 = pneg %p48
        %s722 = sand.u32 %s64, 1
        %s723 = sand.u32 %s64, 1
        %s724 = smul.addr %s723, 256
        %s725 = scalar_lea.vmem [#allocation2], %s724
        %p726 = pneg %p77
        %p727 = pneg %p74
        %s728 = smul.u32 16, %s30
        %p729 = scmp.lt.s32.totalorder %s728, 31
        %s730 = scalar_select %p729, %s728, 31
        %s731 = smul.addr %s730, 8
        %s732 = scalar_lea.vmem %s2, %s731
        %p733 = pneg %p103
        %p734 = pneg %p100
        %p735 = pneg %p124
        %p736 = pneg %p121
        %p737 = pneg %p145
        %p738 = pneg %p142
        %p739 = pneg %p166
        %p740 = pneg %p163
        %p741 = pneg %p187
        %p742 = pneg %p184
        %p743 = pneg %p208
        %p744 = pneg %p205
        %p745 = pneg %p229
        %p746 = pneg %p226
        %p747 = pneg %p250
        %p748 = pneg %p247
        %p749 = pneg %p271
        %p750 = pneg %p268
        %p751 = pneg %p292
        %p752 = pneg %p289
        %p753 = pneg %p313
        %p754 = pneg %p310
        %p755 = pneg %p334
        %p756 = pneg %p331
        %p757 = pneg %p360
        %p758 = pneg %p357
        %s759 = smul.u32 16, %s30
        %p760 = scmp.lt.s32.totalorder %s759, 31
        %s761 = scalar_select %p760, %s759, 31
        %s762 = smul.addr %s761, 8
        %s763 = scalar_lea.vmem %s14, %s762
        %p764 = pneg %p386
        %p765 = pneg %p383
        %s766 = smul.u32 16, %s30
        %p767 = scmp.lt.s32.totalorder %s766, 31
        %s768 = scalar_select %p767, %s766, 31
        %s769 = smul.addr %s768, 4
        %s770 = scalar_lea.vmem %s15, %s769
        %p771 = pneg %p412
        %p772 = pneg %p409
        %s773 = smul.u32 16, %s30
        %p774 = scmp.lt.s32.totalorder %s773, 31
        %s775 = scalar_select %p774, %s773, 31
        %s776 = smul.addr %s775, 4
        %s777 = scalar_lea.vmem %s16, %s776
        %p778 = pneg %p438
        %p779 = pneg %p435
        %s780 = smul.u32 16, %s30
        %p781 = scmp.lt.s32.totalorder %s780, 31
        %s782 = scalar_select %p781, %s780, 31
        %s783 = smul.addr %s782, 4
        %s784 = scalar_lea.vmem %s17, %s783
        %p785 = pneg %p464
        %p786 = pneg %p461
        %s787 = smul.u32 16, %s30
        %p788 = scmp.lt.s32.totalorder %s787, 31
        %s789 = scalar_select %p788, %s787, 31
        %s790 = smul.addr %s789, 4
        %s791 = scalar_lea.vmem %s18, %s790
        %s792 = smul.u32 16, %s30
        %p793 = scmp.lt.s32.totalorder %s792, 31
        %s794 = scalar_select %p793, %s792, 31
        %s795 = smul.addr %s794, 8
        %s796 = scalar_lea.vmem %s0, %s795
        %s797 = smul.u32 16, %s30
        %s798 = smul.u32 16, %s30
        %s799 = smul.u32 16, %s30
        %p800 = scmp.lt.s32.totalorder %s799, 31
        %s801 = scalar_select %p800, %s799, 31
        %s802 = smul.addr %s801, 8
        %s803 = scalar_lea.vmem %s2, %s802
        %s804 = smul.u32 16, %s30
        %s805 = smul.u32 16, %s30
        %p806 = scmp.lt.s32.totalorder %s805, 31
        %s807 = scalar_select %p806, %s805, 31
        %s808 = smul.addr %s807, 8
        %s809 = scalar_lea.vmem %s14, %s808
        %s810 = smul.u32 16, %s30
        %s811 = smul.u32 16, %s30
        %p812 = scmp.lt.s32.totalorder %s811, 31
        %s813 = scalar_select %p812, %s811, 31
        %s814 = smul.addr %s813, 4
        %s815 = scalar_lea.vmem %s15, %s814
        %s816 = smul.u32 16, %s30
        %s817 = smul.u32 16, %s30
        %p818 = scmp.lt.s32.totalorder %s817, 31
        %s819 = scalar_select %p818, %s817, 31
        %s820 = smul.addr %s819, 4
        %s821 = scalar_lea.vmem %s16, %s820
        %s822 = smul.u32 16, %s30
        %s823 = smul.u32 16, %s30
        %p824 = scmp.lt.s32.totalorder %s823, 31
        %s825 = scalar_select %p824, %s823, 31
        %s826 = smul.addr %s825, 4
        %s827 = scalar_lea.vmem %s17, %s826
        %s828 = smul.u32 16, %s30
        %s829 = smul.u32 16, %s30
        %p830 = scmp.lt.s32.totalorder %s829, 31
        %s831 = scalar_select %p830, %s829, 31
        %s832 = smul.addr %s831, 4
        %s833 = scalar_lea.vmem %s18, %s832
        %s834 = smul.u32 16, %s30
        %s836 = scalar_lea.vmem %s711, 128 [#allocation2]
        %v837 = vld [vmem:[%s836] sm:$0xff]
        %v838 = vld [vmem:[%s836 + $0x8] sm:$0xff]
        %v839 = vld [vmem:[%s836 + $0x10] sm:$0xff]
        %v840 = vld [vmem:[%s836 + $0x18] sm:$0xff]
        %v841 = vld [vmem:[%s836 + $0x20] sm:$0xff]
        %v842 = vld [vmem:[%s836 + $0x28] sm:$0xff]
        %v843 = vld [vmem:[%s836 + $0x30] sm:$0xff]
        %v844 = vld [vmem:[%s836 + $0x38] sm:$0xff]
        %v845 = vld [vmem:[%s836 + $0x40] sm:$0xff]
        %v846 = vld [vmem:[%s836 + $0x48] sm:$0xff]
        %v847 = vld [vmem:[%s836 + $0x50] sm:$0xff]
        %v848 = vld [vmem:[%s836 + $0x58] sm:$0xff]
        %v849 = vld [vmem:[%s836 + $0x60] sm:$0xff]
        %v850 = vld [vmem:[%s836 + $0x68] sm:$0xff]
        %v851 = vld [vmem:[%s836 + $0x70] sm:$0xff]
        %v852 = vld [vmem:[%s836 + $0x78] sm:$0xff]
        %v853 = vpack.c.bf16 %v838, %v837
        %v854 = vpack.c.bf16 %v840, %v839
        %v855 = vpack.c.bf16 %v842, %v841
        %v856 = vpack.c.bf16 %v844, %v843
        %v857 = vpack.c.bf16 %v846, %v845
        %v858 = vpack.c.bf16 %v848, %v847
        %v859 = vpack.c.bf16 %v850, %v849
        %v860 = vpack.c.bf16 %v852, %v851
        %v861 = vld [vmem:[%s796] sm:$0xff]
        %v862 = vld [vmem:[%s796 + $0x8] sm:$0xff]
        %v863 = vld [vmem:[%s796 + $0x10] sm:$0xff]
        %v864 = vld [vmem:[%s796 + $0x18] sm:$0xff]
        %v865 = vld [vmem:[%s796 + $0x20] sm:$0xff]
        %v866 = vld [vmem:[%s796 + $0x28] sm:$0xff]
        %v867 = vld [vmem:[%s796 + $0x30] sm:$0xff]
        %v868 = vld [vmem:[%s796 + $0x38] sm:$0xff]
        %v869 = vld [vmem:[%s796 + $0x40] sm:$0xff]
        %v870 = vld [vmem:[%s796 + $0x48] sm:$0xff]
        %v871 = vld [vmem:[%s796 + $0x50] sm:$0xff]
        %v872 = vld [vmem:[%s796 + $0x58] sm:$0xff]
        %v873 = vld [vmem:[%s796 + $0x60] sm:$0xff]
        %v874 = vld [vmem:[%s796 + $0x68] sm:$0xff]
        %v875 = vld [vmem:[%s796 + $0x70] sm:$0xff]
        %v876 = vld [vmem:[%s796 + $0x78] sm:$0xff]
        %v877 = vpack.c.bf16 %v862, %v861
        %v878 = vpack.c.bf16 %v864, %v863
        %v879 = vpack.c.bf16 %v866, %v865
        %v880 = vpack.c.bf16 %v868, %v867
        %v881 = vpack.c.bf16 %v870, %v869
        %v882 = vpack.c.bf16 %v872, %v871
        %v883 = vpack.c.bf16 %v874, %v873
        %v884 = vpack.c.bf16 %v876, %v875
        %v885 = vld [vmem:[%s3] sm:$0xf]
        %v886 = vld [vmem:[%s3 + $0x4] sm:$0xf]
        %v887 = vld [vmem:[%s4] sm:$0x1]
        %v889 = vperm.slane %v887, 0
        %v893 = vunpack.c.l.b16 %v885
        %v894 = vunpack.c.l.b16 %v886
        %v895 = vpack.c.b16 %v894, %v893
        %vm897 = vcmask 130048
        %v899 = vsel %vm897, %v877, 0
        %v902 = vsel %vm897, %v878, 0
        %v905 = vsel %vm897, %v879, 0
        %v908 = vsel %vm897, %v880, 0
        %v911 = vsel %vm897, %v881, 0
        %v914 = vsel %vm897, %v882, 0
        %v917 = vsel %vm897, %v883, 0
        %v920 = vsel %vm897, %v884, 0
        %922 = vmatpush.bf16.msra.mxu0 0
        %923 = vmatpush.bf16.msra.mxu0 0
        %924 = vmatpush.bf16.msra.mxu0 0
        %925 = vmatpush.bf16.msra.mxu0 0
        %926 = vmatpush.bf16.msra.mxu0 0
        %927 = vmatpush.bf16.msra.mxu0 0
        %928 = vmatpush.bf16.msra.mxu0 0
        %929 = vmatpush.bf16.msra.mxu0 %v895
        %930 = vmatmul.bf16.gmra.mxu0 %v899
        %v931 = vpop.f32.mrf.mxu0
        %v932 = vadd.f32 %v889, %v931
        %v933 = vpop.f32.mrf.mxu0
        %v934 = vadd.f32 %v889, %v933
        %935 = vmatmul.bf16.gmra.mxu0 %v902
        %v936 = vpop.f32.mrf.mxu0
        %v937 = vadd.f32 %v889, %v936
        %v938 = vpop.f32.mrf.mxu0
        %v939 = vadd.f32 %v889, %v938
        %940 = vmatmul.bf16.gmra.mxu0 %v905
        %v941 = vpop.f32.mrf.mxu0
        %v942 = vadd.f32 %v889, %v941
        %v943 = vpop.f32.mrf.mxu0
        %v944 = vadd.f32 %v889, %v943
        %945 = vmatmul.bf16.gmra.mxu0 %v908
        %v946 = vpop.f32.mrf.mxu0
        %v947 = vadd.f32 %v889, %v946
        %v948 = vpop.f32.mrf.mxu0
        %v949 = vadd.f32 %v889, %v948
        %950 = vmatmul.bf16.gmra.mxu0 %v911
        %v951 = vpop.f32.mrf.mxu0
        %v952 = vadd.f32 %v889, %v951
        %v953 = vpop.f32.mrf.mxu0
        %v954 = vadd.f32 %v889, %v953
        %955 = vmatmul.bf16.gmra.mxu0 %v914
        %v956 = vpop.f32.mrf.mxu0
        %v957 = vadd.f32 %v889, %v956
        %v958 = vpop.f32.mrf.mxu0
        %v959 = vadd.f32 %v889, %v958
        %960 = vmatmul.bf16.gmra.mxu0 %v917
        %v961 = vpop.f32.mrf.mxu0
        %v962 = vadd.f32 %v889, %v961
        %v963 = vpop.f32.mrf.mxu0
        %v964 = vadd.f32 %v889, %v963
        %965 = vmatmul.bf16.gmra.mxu0 %v920
        %v966 = vpop.f32.mrf.mxu0
        %v967 = vadd.f32 %v889, %v966
        %v968 = vpop.f32.mrf.mxu0
        %v969 = vadd.f32 %v889, %v968
        %970 = vdwg.mxu0
        %v971 = vmax.f32 %v932, 0.0
        %v972 = vmax.f32 %v934, 0.0
        %v973 = vmax.f32 %v937, 0.0
        %v974 = vmax.f32 %v939, 0.0
        %v975 = vmax.f32 %v942, 0.0
        %v976 = vmax.f32 %v944, 0.0
        %v977 = vmax.f32 %v947, 0.0
        %v978 = vmax.f32 %v949, 0.0
        %v979 = vmax.f32 %v952, 0.0
        %v980 = vmax.f32 %v954, 0.0
        %v981 = vmax.f32 %v957, 0.0
        %v982 = vmax.f32 %v959, 0.0
        %v983 = vmax.f32 %v962, 0.0
        %v984 = vmax.f32 %v964, 0.0
        %v985 = vmax.f32 %v967, 0.0
        %v986 = vmax.f32 %v969, 0.0
        %v987 = vpack.c.bf16 %v972, %v971
        %v988 = vpack.c.bf16 %v974, %v973
        %v989 = vpack.c.bf16 %v976, %v975
        %v990 = vpack.c.bf16 %v978, %v977
        %v991 = vpack.c.bf16 %v980, %v979
        %v992 = vpack.c.bf16 %v982, %v981
        %v993 = vpack.c.bf16 %v984, %v983
        %v994 = vpack.c.bf16 %v986, %v985
        %v995 = vld [vmem:[%s5] sm:$0xf]
        %v996 = vld [vmem:[%s5 + $0x4] sm:$0xf]
        %v997 = vld [vmem:[%s5 + $0x8] sm:$0xf]
        %v998 = vld [vmem:[%s5 + $0xc] sm:$0xf]
        %v999 = vld [vmem:[%s803] sm:$0xff]
        %v1000 = vld [vmem:[%s803 + $0x8] sm:$0xff]
        %v1001 = vld [vmem:[%s803 + $0x10] sm:$0xff]
        %v1002 = vld [vmem:[%s803 + $0x18] sm:$0xff]
        %v1003 = vld [vmem:[%s803 + $0x20] sm:$0xff]
        %v1004 = vld [vmem:[%s803 + $0x28] sm:$0xff]
        %v1005 = vld [vmem:[%s803 + $0x30] sm:$0xff]
        %v1006 = vld [vmem:[%s803 + $0x38] sm:$0xff]
        %v1007 = vld [vmem:[%s803 + $0x40] sm:$0xff]
        %v1008 = vld [vmem:[%s803 + $0x48] sm:$0xff]
        %v1009 = vld [vmem:[%s803 + $0x50] sm:$0xff]
        %v1010 = vld [vmem:[%s803 + $0x58] sm:$0xff]
        %v1011 = vld [vmem:[%s803 + $0x60] sm:$0xff]
        %v1012 = vld [vmem:[%s803 + $0x68] sm:$0xff]
        %v1013 = vld [vmem:[%s803 + $0x70] sm:$0xff]
        %v1014 = vld [vmem:[%s803 + $0x78] sm:$0xff]
        %v1015 = vld [vmem:[%s6] sm:$0x1]
        %1017 = vset.pattern.permute.xlu0 0
        %1018 = vperm.xlu0 %1017, %v999
        %v1019 = vpop.permute.xlu0 %1018
        %1022 = vset.pattern.permute.xlu0 0
        %1023 = vperm.xlu0 %1022, %v1000
        %v1024 = vpop.permute.xlu0 %1023
        %1027 = vset.pattern.permute.xlu0 0
        %1028 = vperm.xlu0 %1027, %v1001
        %v1029 = vpop.permute.xlu0 %1028
        %1032 = vset.pattern.permute.xlu0 0
        %1033 = vperm.xlu0 %1032, %v1002
        %v1034 = vpop.permute.xlu0 %1033
        %1037 = vset.pattern.permute.xlu0 0
        %1038 = vperm.xlu0 %1037, %v1003
        %v1039 = vpop.permute.xlu0 %1038
        %1042 = vset.pattern.permute.xlu0 0
        %1043 = vperm.xlu0 %1042, %v1004
        %v1044 = vpop.permute.xlu0 %1043
        %1047 = vset.pattern.permute.xlu0 0
        %1048 = vperm.xlu0 %1047, %v1005
        %v1049 = vpop.permute.xlu0 %1048
        %1052 = vset.pattern.permute.xlu0 0
        %1053 = vperm.xlu0 %1052, %v1006
        %v1054 = vpop.permute.xlu0 %1053
        %1057 = vset.pattern.permute.xlu0 0
        %1058 = vperm.xlu0 %1057, %v1007
        %v1059 = vpop.permute.xlu0 %1058
        %1062 = vset.pattern.permute.xlu0 0
        %1063 = vperm.xlu0 %1062, %v1008
        %v1064 = vpop.permute.xlu0 %1063
        %1067 = vset.pattern.permute.xlu0 0
        %1068 = vperm.xlu0 %1067, %v1009
        %v1069 = vpop.permute.xlu0 %1068
        %1072 = vset.pattern.permute.xlu0 0
        %1073 = vperm.xlu0 %1072, %v1010
        %v1074 = vpop.permute.xlu0 %1073
        %1077 = vset.pattern.permute.xlu0 0
        %1078 = vperm.xlu0 %1077, %v1011
        %v1079 = vpop.permute.xlu0 %1078
        %1082 = vset.pattern.permute.xlu0 0
        %1083 = vperm.xlu0 %1082, %v1012
        %v1084 = vpop.permute.xlu0 %1083
        %1087 = vset.pattern.permute.xlu0 0
        %1088 = vperm.xlu0 %1087, %v1013
        %v1089 = vpop.permute.xlu0 %1088
        %1092 = vset.pattern.permute.xlu0 0
        %1093 = vperm.xlu0 %1092, %v1014
        %v1094 = vpop.permute.xlu0 %1093
        %v1097 = vperm.slane %v1015, 0
        %v1099 = vmul.f32 %v1019, %v1097
        %v1100 = vmul.f32 %v1024, %v1097
        %v1101 = vmul.f32 %v1029, %v1097
        %v1102 = vmul.f32 %v1034, %v1097
        %v1103 = vmul.f32 %v1039, %v1097
        %v1104 = vmul.f32 %v1044, %v1097
        %v1105 = vmul.f32 %v1049, %v1097
        %v1106 = vmul.f32 %v1054, %v1097
        %v1107 = vmul.f32 %v1059, %v1097
        %v1108 = vmul.f32 %v1064, %v1097
        %v1109 = vmul.f32 %v1069, %v1097
        %v1110 = vmul.f32 %v1074, %v1097
        %v1111 = vmul.f32 %v1079, %v1097
        %v1112 = vmul.f32 %v1084, %v1097
        %v1113 = vmul.f32 %v1089, %v1097
        %v1114 = vmul.f32 %v1094, %v1097
        %v1119 = vunpack.c.l.b16 %v995
        %v1120 = vunpack.c.l.b16 %v996
        %v1121 = vunpack.c.l.b16 %v997
        %v1122 = vunpack.c.l.b16 %v998
        %v1123 = vpack.c.b16 %v1120, %v1119
        %v1124 = vpack.c.b16 %v1122, %v1121
        %vm1127 = vcmask 261120
        %v1129 = vsel %vm1127, %v853, 0
        %v1132 = vsel %vm1127, %v854, 0
        %v1135 = vsel %vm1127, %v855, 0
        %v1138 = vsel %vm1127, %v856, 0
        %v1141 = vsel %vm1127, %v857, 0
        %v1144 = vsel %vm1127, %v858, 0
        %v1147 = vsel %vm1127, %v859, 0
        %v1150 = vsel %vm1127, %v860, 0
        %1152 = vmatpush.bf16.msra.mxu0 0
        %1153 = vmatpush.bf16.msra.mxu0 0
        %1154 = vmatpush.bf16.msra.mxu0 0
        %1155 = vmatpush.bf16.msra.mxu0 0
        %1156 = vmatpush.bf16.msra.mxu0 0
        %1157 = vmatpush.bf16.msra.mxu0 0
        %1158 = vmatpush.bf16.msra.mxu0 %v1124
        %1159 = vmatpush.bf16.msra.mxu0 %v1123
        %1160 = vmatmul.bf16.gmra.mxu0 %v1129
        %v1161 = vpop.f32.mrf.mxu0
        %v1162 = vadd.f32 %v1099, %v1161
        %v1163 = vpop.f32.mrf.mxu0
        %v1164 = vadd.f32 %v1100, %v1163
        %1165 = vmatmul.bf16.gmra.mxu0 %v1132
        %v1166 = vpop.f32.mrf.mxu0
        %v1167 = vadd.f32 %v1101, %v1166
        %v1168 = vpop.f32.mrf.mxu0
        %v1169 = vadd.f32 %v1102, %v1168
        %1170 = vmatmul.bf16.gmra.mxu0 %v1135
        %v1171 = vpop.f32.mrf.mxu0
        %v1172 = vadd.f32 %v1103, %v1171
        %v1173 = vpop.f32.mrf.mxu0
        %v1174 = vadd.f32 %v1104, %v1173
        %1175 = vmatmul.bf16.gmra.mxu0 %v1138
        %v1176 = vpop.f32.mrf.mxu0
        %v1177 = vadd.f32 %v1105, %v1176
        %v1178 = vpop.f32.mrf.mxu0
        %v1179 = vadd.f32 %v1106, %v1178
        %1180 = vmatmul.bf16.gmra.mxu0 %v1141
        %v1181 = vpop.f32.mrf.mxu0
        %v1182 = vadd.f32 %v1107, %v1181
        %v1183 = vpop.f32.mrf.mxu0
        %v1184 = vadd.f32 %v1108, %v1183
        %1185 = vmatmul.bf16.gmra.mxu0 %v1144
        %v1186 = vpop.f32.mrf.mxu0
        %v1187 = vadd.f32 %v1109, %v1186
        %v1188 = vpop.f32.mrf.mxu0
        %v1189 = vadd.f32 %v1110, %v1188
        %1190 = vmatmul.bf16.gmra.mxu0 %v1147
        %v1191 = vpop.f32.mrf.mxu0
        %v1192 = vadd.f32 %v1111, %v1191
        %v1193 = vpop.f32.mrf.mxu0
        %v1194 = vadd.f32 %v1112, %v1193
        %1195 = vmatmul.bf16.gmra.mxu0 %v1150
        %v1196 = vpop.f32.mrf.mxu0
        %v1197 = vadd.f32 %v1113, %v1196
        %v1198 = vpop.f32.mrf.mxu0
        %v1199 = vadd.f32 %v1114, %v1198
        %1200 = vdwg.mxu0
        %v1201 = vld [vmem:[%s7] sm:$0x1]
        %v1203 = vperm.slane %v1201, 0
        %v1205 = vadd.f32 %v1162, %v1203
        %v1206 = vadd.f32 %v1164, %v1203
        %v1207 = vadd.f32 %v1167, %v1203
        %v1208 = vadd.f32 %v1169, %v1203
        %v1209 = vadd.f32 %v1172, %v1203
        %v1210 = vadd.f32 %v1174, %v1203
        %v1211 = vadd.f32 %v1177, %v1203
        %v1212 = vadd.f32 %v1179, %v1203
        %v1213 = vadd.f32 %v1182, %v1203
        %v1214 = vadd.f32 %v1184, %v1203
        %v1215 = vadd.f32 %v1187, %v1203
        %v1216 = vadd.f32 %v1189, %v1203
        %v1217 = vadd.f32 %v1192, %v1203
        %v1218 = vadd.f32 %v1194, %v1203
        %v1219 = vadd.f32 %v1197, %v1203
        %v1220 = vadd.f32 %v1199, %v1203
        %v1221 = vmax.f32 %v1205, 0.0
        %v1222 = vmax.f32 %v1206, 0.0
        %v1223 = vmax.f32 %v1207, 0.0
        %v1224 = vmax.f32 %v1208, 0.0
        %v1225 = vmax.f32 %v1209, 0.0
        %v1226 = vmax.f32 %v1210, 0.0
        %v1227 = vmax.f32 %v1211, 0.0
        %v1228 = vmax.f32 %v1212, 0.0
        %v1229 = vmax.f32 %v1213, 0.0
        %v1230 = vmax.f32 %v1214, 0.0
        %v1231 = vmax.f32 %v1215, 0.0
        %v1232 = vmax.f32 %v1216, 0.0
        %v1233 = vmax.f32 %v1217, 0.0
        %v1234 = vmax.f32 %v1218, 0.0
        %v1235 = vmax.f32 %v1219, 0.0
        %v1236 = vmax.f32 %v1220, 0.0
        %v1237 = vpack.c.bf16 %v1222, %v1221
        %v1238 = vpack.c.bf16 %v1224, %v1223
        %v1239 = vpack.c.bf16 %v1226, %v1225
        %v1240 = vpack.c.bf16 %v1228, %v1227
        %v1241 = vpack.c.bf16 %v1230, %v1229
        %v1242 = vpack.c.bf16 %v1232, %v1231
        %v1243 = vpack.c.bf16 %v1234, %v1233
        %v1244 = vpack.c.bf16 %v1236, %v1235
        %v1245 = vld [vmem:[%s8] sm:$0xf]
        %v1246 = vld [vmem:[%s8 + $0x4] sm:$0xf]
        %v1247 = vld [vmem:[%s8 + $0x8] sm:$0xf]
        %v1248 = vld [vmem:[%s8 + $0xc] sm:$0xf]
        %v1249 = vld [vmem:[%s9] sm:$0x1]
        %v1251 = vperm.slane %v1249, 0
        %v1257 = vunpack.c.l.b16 %v1245
        %v1258 = vunpack.c.l.b16 %v1246
        %v1259 = vunpack.c.l.b16 %v1247
        %v1260 = vunpack.c.l.b16 %v1248
        %v1261 = vpack.c.b16 %v1258, %v1257
        %v1262 = vpack.c.b16 %v1260, %v1259
        %v1266 = vsel %vm1127, %v1237, 0
        %v1269 = vsel %vm1127, %v1238, 0
        %v1272 = vsel %vm1127, %v1239, 0
        %v1275 = vsel %vm1127, %v1240, 0
        %v1278 = vsel %vm1127, %v1241, 0
        %v1281 = vsel %vm1127, %v1242, 0
        %v1284 = vsel %vm1127, %v1243, 0
        %v1287 = vsel %vm1127, %v1244, 0
        %1289 = vmatpush.bf16.msra.mxu0 0
        %1290 = vmatpush.bf16.msra.mxu0 0
        %1291 = vmatpush.bf16.msra.mxu0 0
        %1292 = vmatpush.bf16.msra.mxu0 0
        %1293 = vmatpush.bf16.msra.mxu0 0
        %1294 = vmatpush.bf16.msra.mxu0 0
        %1295 = vmatpush.bf16.msra.mxu0 %v1262
        %1296 = vmatpush.bf16.msra.mxu0 %v1261
        %1297 = vmatmul.bf16.gmra.mxu0 %v1266
        %v1298 = vpop.f32.mrf.mxu0
        %v1299 = vadd.f32 %v1251, %v1298
        %v1300 = vpop.f32.mrf.mxu0
        %v1301 = vadd.f32 %v1251, %v1300
        %1302 = vmatmul.bf16.gmra.mxu0 %v1269
        %v1303 = vpop.f32.mrf.mxu0
        %v1304 = vadd.f32 %v1251, %v1303
        %v1305 = vpop.f32.mrf.mxu0
        %v1306 = vadd.f32 %v1251, %v1305
        %1307 = vmatmul.bf16.gmra.mxu0 %v1272
        %v1308 = vpop.f32.mrf.mxu0
        %v1309 = vadd.f32 %v1251, %v1308
        %v1310 = vpop.f32.mrf.mxu0
        %v1311 = vadd.f32 %v1251, %v1310
        %1312 = vmatmul.bf16.gmra.mxu0 %v1275
        %v1313 = vpop.f32.mrf.mxu0
        %v1314 = vadd.f32 %v1251, %v1313
        %v1315 = vpop.f32.mrf.mxu0
        %v1316 = vadd.f32 %v1251, %v1315
        %1317 = vmatmul.bf16.gmra.mxu0 %v1278
        %v1318 = vpop.f32.mrf.mxu0
        %v1319 = vadd.f32 %v1251, %v1318
        %v1320 = vpop.f32.mrf.mxu0
        %v1321 = vadd.f32 %v1251, %v1320
        %1322 = vmatmul.bf16.gmra.mxu0 %v1281
        %v1323 = vpop.f32.mrf.mxu0
        %v1324 = vadd.f32 %v1251, %v1323
        %v1325 = vpop.f32.mrf.mxu0
        %v1326 = vadd.f32 %v1251, %v1325
        %1327 = vmatmul.bf16.gmra.mxu0 %v1284
        %v1328 = vpop.f32.mrf.mxu0
        %v1329 = vadd.f32 %v1251, %v1328
        %v1330 = vpop.f32.mrf.mxu0
        %v1331 = vadd.f32 %v1251, %v1330
        %1332 = vmatmul.bf16.gmra.mxu0 %v1287
        %v1333 = vpop.f32.mrf.mxu0
        %v1334 = vadd.f32 %v1251, %v1333
        %v1335 = vpop.f32.mrf.mxu0
        %v1336 = vadd.f32 %v1251, %v1335
        %1337 = vdwg.mxu0
        %1338 = vst.msk [vmem:[%s809] sm:$0xff] %vm1127, %v1299
        %1339 = vst.msk [vmem:[%s809 + $0x8] sm:$0xff] %vm1127, %v1301
        %1340 = vst.msk [vmem:[%s809 + $0x10] sm:$0xff] %vm1127, %v1304
        %1341 = vst.msk [vmem:[%s809 + $0x18] sm:$0xff] %vm1127, %v1306
        %1342 = vst.msk [vmem:[%s809 + $0x20] sm:$0xff] %vm1127, %v1309
        %1343 = vst.msk [vmem:[%s809 + $0x28] sm:$0xff] %vm1127, %v1311
        %1344 = vst.msk [vmem:[%s809 + $0x30] sm:$0xff] %vm1127, %v1314
        %1345 = vst.msk [vmem:[%s809 + $0x38] sm:$0xff] %vm1127, %v1316
        %1346 = vst.msk [vmem:[%s809 + $0x40] sm:$0xff] %vm1127, %v1319
        %1347 = vst.msk [vmem:[%s809 + $0x48] sm:$0xff] %vm1127, %v1321
        %1348 = vst.msk [vmem:[%s809 + $0x50] sm:$0xff] %vm1127, %v1324
        %1349 = vst.msk [vmem:[%s809 + $0x58] sm:$0xff] %vm1127, %v1326
        %1350 = vst.msk [vmem:[%s809 + $0x60] sm:$0xff] %vm1127, %v1329
        %1351 = vst.msk [vmem:[%s809 + $0x68] sm:$0xff] %vm1127, %v1331
        %1352 = vst.msk [vmem:[%s809 + $0x70] sm:$0xff] %vm1127, %v1334
        %1353 = vst.msk [vmem:[%s809 + $0x78] sm:$0xff] %vm1127, %v1336
        %v1354 = vmax.f32 %v1299, 0.0
        %v1355 = vmax.f32 %v1301, 0.0
        %v1356 = vmax.f32 %v1304, 0.0
        %v1357 = vmax.f32 %v1306, 0.0
        %v1358 = vmax.f32 %v1309, 0.0
        %v1359 = vmax.f32 %v1311, 0.0
        %v1360 = vmax.f32 %v1314, 0.0
        %v1361 = vmax.f32 %v1316, 0.0
        %v1362 = vmax.f32 %v1319, 0.0
        %v1363 = vmax.f32 %v1321, 0.0
        %v1364 = vmax.f32 %v1324, 0.0
        %v1365 = vmax.f32 %v1326, 0.0
        %v1366 = vmax.f32 %v1329, 0.0
        %v1367 = vmax.f32 %v1331, 0.0
        %v1368 = vmax.f32 %v1334, 0.0
        %v1369 = vmax.f32 %v1336, 0.0
        %vm1370 = vcmp.ne.f32.partialorder %v1299, %v1299
        %vm1371 = vcmp.ne.f32.partialorder %v1301, %v1301
        %vm1372 = vcmp.ne.f32.partialorder %v1304, %v1304
        %vm1373 = vcmp.ne.f32.partialorder %v1306, %v1306
        %vm1374 = vcmp.ne.f32.partialorder %v1309, %v1309
        %vm1375 = vcmp.ne.f32.partialorder %v1311, %v1311
        %vm1376 = vcmp.ne.f32.partialorder %v1314, %v1314
        %vm1377 = vcmp.ne.f32.partialorder %v1316, %v1316
        %vm1378 = vcmp.ne.f32.partialorder %v1319, %v1319
        %vm1379 = vcmp.ne.f32.partialorder %v1321, %v1321
        %vm1380 = vcmp.ne.f32.partialorder %v1324, %v1324
        %vm1381 = vcmp.ne.f32.partialorder %v1326, %v1326
        %vm1382 = vcmp.ne.f32.partialorder %v1329, %v1329
        %vm1383 = vcmp.ne.f32.partialorder %v1331, %v1331
        %vm1384 = vcmp.ne.f32.partialorder %v1334, %v1334
        %vm1385 = vcmp.ne.f32.partialorder %v1336, %v1336
        %v1386 = vadd.f32 %v1299, 0.0
        %v1387 = vadd.f32 %v1301, 0.0
        %v1388 = vadd.f32 %v1304, 0.0
        %v1389 = vadd.f32 %v1306, 0.0
        %v1390 = vadd.f32 %v1309, 0.0
        %v1391 = vadd.f32 %v1311, 0.0
        %v1392 = vadd.f32 %v1314, 0.0
        %v1393 = vadd.f32 %v1316, 0.0
        %v1394 = vadd.f32 %v1319, 0.0
        %v1395 = vadd.f32 %v1321, 0.0
        %v1396 = vadd.f32 %v1324, 0.0
        %v1397 = vadd.f32 %v1326, 0.0
        %v1398 = vadd.f32 %v1329, 0.0
        %v1399 = vadd.f32 %v1331, 0.0
        %v1400 = vadd.f32 %v1334, 0.0
        %v1401 = vadd.f32 %v1336, 0.0
        %v1402 = vand.u32 2147483647, %v1299
        %v1403 = vand.u32 2147483647, %v1301
        %v1404 = vand.u32 2147483647, %v1304
        %v1405 = vand.u32 2147483647, %v1306
        %v1406 = vand.u32 2147483647, %v1309
        %v1407 = vand.u32 2147483647, %v1311
        %v1408 = vand.u32 2147483647, %v1314
        %v1409 = vand.u32 2147483647, %v1316
        %v1410 = vand.u32 2147483647, %v1319
        %v1411 = vand.u32 2147483647, %v1321
        %v1412 = vand.u32 2147483647, %v1324
        %v1413 = vand.u32 2147483647, %v1326
        %v1414 = vand.u32 2147483647, %v1329
        %v1415 = vand.u32 2147483647, %v1331
        %v1416 = vand.u32 2147483647, %v1334
        %v1417 = vand.u32 2147483647, %v1336
        %v1418 = vsub.f32 0.0, %v1402
        %v1419 = vsub.f32 0.0, %v1403
        %v1420 = vsub.f32 0.0, %v1404
        %v1421 = vsub.f32 0.0, %v1405
        %v1422 = vsub.f32 0.0, %v1406
        %v1423 = vsub.f32 0.0, %v1407
        %v1424 = vsub.f32 0.0, %v1408
        %v1425 = vsub.f32 0.0, %v1409
        %v1426 = vsub.f32 0.0, %v1410
        %v1427 = vsub.f32 0.0, %v1411
        %v1428 = vsub.f32 0.0, %v1412
        %v1429 = vsub.f32 0.0, %v1413
        %v1430 = vsub.f32 0.0, %v1414
        %v1431 = vsub.f32 0.0, %v1415
        %v1432 = vsub.f32 0.0, %v1416
        %v1433 = vsub.f32 0.0, %v1417
        %v1434 = vmul.f32 %v1418, 1.442695
        %v1435 = vpow.pop %v1434
        %v1436 = vmul.f32 %v1419, 1.442695
        %v1437 = vpow.pop %v1436
        %v1438 = vmul.f32 %v1420, 1.442695
        %v1439 = vpow.pop %v1438
        %v1440 = vmul.f32 %v1421, 1.442695
        %v1441 = vpow.pop %v1440
        %v1442 = vmul.f32 %v1422, 1.442695
        %v1443 = vpow.pop %v1442
        %v1444 = vmul.f32 %v1423, 1.442695
        %v1445 = vpow.pop %v1444
        %v1446 = vmul.f32 %v1424, 1.442695
        %v1447 = vpow.pop %v1446
        %v1448 = vmul.f32 %v1425, 1.442695
        %v1449 = vpow.pop %v1448
        %v1450 = vmul.f32 %v1426, 1.442695
        %v1451 = vpow.pop %v1450
        %v1452 = vmul.f32 %v1427, 1.442695
        %v1453 = vpow.pop %v1452
        %v1454 = vmul.f32 %v1428, 1.442695
        %v1455 = vpow.pop %v1454
        %v1456 = vmul.f32 %v1429, 1.442695
        %v1457 = vpow.pop %v1456
        %v1458 = vmul.f32 %v1430, 1.442695
        %v1459 = vpow.pop %v1458
        %v1460 = vmul.f32 %v1431, 1.442695
        %v1461 = vpow.pop %v1460
        %v1462 = vmul.f32 %v1432, 1.442695
        %v1463 = vpow.pop %v1462
        %v1464 = vmul.f32 %v1433, 1.442695
        %v1465 = vpow.pop %v1464
        %v1466 = vadd.f32 %v1435, 1.0
        %v1467 = vlog2.pop %v1466
        %v1468 = vmul.f32 %v1467, 0.6931472
        %v1469 = vmul.f32 -0.5, %v1435
        %v1470 = vadd.f32 %v1469, 1.0
        %v1471 = vmul.f32 %v1470, %v1435
        %v1472 = vand.u32 2147483647, %v1435
        %vm1473 = vcmp.lt.f32.partialorder %v1472, 0.0004427343
        %v1474 = vsel %vm1473, %v1471, %v1468
        %v1475 = vadd.f32 %v1437, 1.0
        %v1476 = vlog2.pop %v1475
        %v1477 = vmul.f32 %v1476, 0.6931472
        %v1478 = vmul.f32 -0.5, %v1437
        %v1479 = vadd.f32 %v1478, 1.0
        %v1480 = vmul.f32 %v1479, %v1437
        %v1481 = vand.u32 2147483647, %v1437
        %vm1482 = vcmp.lt.f32.partialorder %v1481, 0.0004427343
        %v1483 = vsel %vm1482, %v1480, %v1477
        %v1484 = vadd.f32 %v1439, 1.0
        %v1485 = vlog2.pop %v1484
        %v1486 = vmul.f32 %v1485, 0.6931472
        %v1487 = vmul.f32 -0.5, %v1439
        %v1488 = vadd.f32 %v1487, 1.0
        %v1489 = vmul.f32 %v1488, %v1439
        %v1490 = vand.u32 2147483647, %v1439
        %vm1491 = vcmp.lt.f32.partialorder %v1490, 0.0004427343
        %v1492 = vsel %vm1491, %v1489, %v1486
        %v1493 = vadd.f32 %v1441, 1.0
        %v1494 = vlog2.pop %v1493
        %v1495 = vmul.f32 %v1494, 0.6931472
        %v1496 = vmul.f32 -0.5, %v1441
        %v1497 = vadd.f32 %v1496, 1.0
        %v1498 = vmul.f32 %v1497, %v1441
        %v1499 = vand.u32 2147483647, %v1441
        %vm1500 = vcmp.lt.f32.partialorder %v1499, 0.0004427343
        %v1501 = vsel %vm1500, %v1498, %v1495
        %v1502 = vadd.f32 %v1443, 1.0
        %v1503 = vlog2.pop %v1502
        %v1504 = vmul.f32 %v1503, 0.6931472
        %v1505 = vmul.f32 -0.5, %v1443
        %v1506 = vadd.f32 %v1505, 1.0
        %v1507 = vmul.f32 %v1506, %v1443
        %v1508 = vand.u32 2147483647, %v1443
        %vm1509 = vcmp.lt.f32.partialorder %v1508, 0.0004427343
        %v1510 = vsel %vm1509, %v1507, %v1504
        %v1511 = vadd.f32 %v1445, 1.0
        %v1512 = vlog2.pop %v1511
        %v1513 = vmul.f32 %v1512, 0.6931472
        %v1514 = vmul.f32 -0.5, %v1445
        %v1515 = vadd.f32 %v1514, 1.0
        %v1516 = vmul.f32 %v1515, %v1445
        %v1517 = vand.u32 2147483647, %v1445
        %vm1518 = vcmp.lt.f32.partialorder %v1517, 0.0004427343
        %v1519 = vsel %vm1518, %v1516, %v1513
        %v1520 = vadd.f32 %v1447, 1.0
        %v1521 = vlog2.pop %v1520
        %v1522 = vmul.f32 %v1521, 0.6931472
        %v1523 = vmul.f32 -0.5, %v1447
        %v1524 = vadd.f32 %v1523, 1.0
        %v1525 = vmul.f32 %v1524, %v1447
        %v1526 = vand.u32 2147483647, %v1447
        %vm1527 = vcmp.lt.f32.partialorder %v1526, 0.0004427343
        %v1528 = vsel %vm1527, %v1525, %v1522
        %v1529 = vadd.f32 %v1449, 1.0
        %v1530 = vlog2.pop %v1529
        %v1531 = vmul.f32 %v1530, 0.6931472
        %v1532 = vmul.f32 -0.5, %v1449
        %v1533 = vadd.f32 %v1532, 1.0
        %v1534 = vmul.f32 %v1533, %v1449
        %v1535 = vand.u32 2147483647, %v1449
        %vm1536 = vcmp.lt.f32.partialorder %v1535, 0.0004427343
        %v1537 = vsel %vm1536, %v1534, %v1531
        %v1538 = vadd.f32 %v1451, 1.0
        %v1539 = vlog2.pop %v1538
        %v1540 = vmul.f32 %v1539, 0.6931472
        %v1541 = vmul.f32 -0.5, %v1451
        %v1542 = vadd.f32 %v1541, 1.0
        %v1543 = vmul.f32 %v1542, %v1451
        %v1544 = vand.u32 2147483647, %v1451
        %vm1545 = vcmp.lt.f32.partialorder %v1544, 0.0004427343
        %v1546 = vsel %vm1545, %v1543, %v1540
        %v1547 = vadd.f32 %v1453, 1.0
        %v1548 = vlog2.pop %v1547
        %v1549 = vmul.f32 %v1548, 0.6931472
        %v1550 = vmul.f32 -0.5, %v1453
        %v1551 = vadd.f32 %v1550, 1.0
        %v1552 = vmul.f32 %v1551, %v1453
        %v1553 = vand.u32 2147483647, %v1453
        %vm1554 = vcmp.lt.f32.partialorder %v1553, 0.0004427343
        %v1555 = vsel %vm1554, %v1552, %v1549
        %v1556 = vadd.f32 %v1455, 1.0
        %v1557 = vlog2.pop %v1556
        %v1558 = vmul.f32 %v1557, 0.6931472
        %v1559 = vmul.f32 -0.5, %v1455
        %v1560 = vadd.f32 %v1559, 1.0
        %v1561 = vmul.f32 %v1560, %v1455
        %v1562 = vand.u32 2147483647, %v1455
        %vm1563 = vcmp.lt.f32.partialorder %v1562, 0.0004427343
        %v1564 = vsel %vm1563, %v1561, %v1558
        %v1565 = vadd.f32 %v1457, 1.0
        %v1566 = vlog2.pop %v1565
        %v1567 = vmul.f32 %v1566, 0.6931472
        %v1568 = vmul.f32 -0.5, %v1457
        %v1569 = vadd.f32 %v1568, 1.0
        %v1570 = vmul.f32 %v1569, %v1457
        %v1571 = vand.u32 2147483647, %v1457
        %vm1572 = vcmp.lt.f32.partialorder %v1571, 0.0004427343
        %v1573 = vsel %vm1572, %v1570, %v1567
        %v1574 = vadd.f32 %v1459, 1.0
        %v1575 = vlog2.pop %v1574
        %v1576 = vmul.f32 %v1575, 0.6931472
        %v1577 = vmul.f32 -0.5, %v1459
        %v1578 = vadd.f32 %v1577, 1.0
        %v1579 = vmul.f32 %v1578, %v1459
        %v1580 = vand.u32 2147483647, %v1459
        %vm1581 = vcmp.lt.f32.partialorder %v1580, 0.0004427343
        %v1582 = vsel %vm1581, %v1579, %v1576
        %v1583 = vadd.f32 %v1461, 1.0
        %v1584 = vlog2.pop %v1583
        %v1585 = vmul.f32 %v1584, 0.6931472
        %v1586 = vmul.f32 -0.5, %v1461
        %v1587 = vadd.f32 %v1586, 1.0
        %v1588 = vmul.f32 %v1587, %v1461
        %v1589 = vand.u32 2147483647, %v1461
        %vm1590 = vcmp.lt.f32.partialorder %v1589, 0.0004427343
        %v1591 = vsel %vm1590, %v1588, %v1585
        %v1592 = vadd.f32 %v1463, 1.0
        %v1593 = vlog2.pop %v1592
        %v1594 = vmul.f32 %v1593, 0.6931472
        %v1595 = vmul.f32 -0.5, %v1463
        %v1596 = vadd.f32 %v1595, 1.0
        %v1597 = vmul.f32 %v1596, %v1463
        %v1598 = vand.u32 2147483647, %v1463
        %vm1599 = vcmp.lt.f32.partialorder %v1598, 0.0004427343
        %v1600 = vsel %vm1599, %v1597, %v1594
        %v1601 = vadd.f32 %v1465, 1.0
        %v1602 = vlog2.pop %v1601
        %v1603 = vmul.f32 %v1602, 0.6931472
        %v1604 = vmul.f32 -0.5, %v1465
        %v1605 = vadd.f32 %v1604, 1.0
        %v1606 = vmul.f32 %v1605, %v1465
        %v1607 = vand.u32 2147483647, %v1465
        %vm1608 = vcmp.lt.f32.partialorder %v1607, 0.0004427343
        %v1609 = vsel %vm1608, %v1606, %v1603
        %v1610 = vadd.f32 %v1354, %v1474
        %v1611 = vadd.f32 %v1355, %v1483
        %v1612 = vadd.f32 %v1356, %v1492
        %v1613 = vadd.f32 %v1357, %v1501
        %v1614 = vadd.f32 %v1358, %v1510
        %v1615 = vadd.f32 %v1359, %v1519
        %v1616 = vadd.f32 %v1360, %v1528
        %v1617 = vadd.f32 %v1361, %v1537
        %v1618 = vadd.f32 %v1362, %v1546
        %v1619 = vadd.f32 %v1363, %v1555
        %v1620 = vadd.f32 %v1364, %v1564
        %v1621 = vadd.f32 %v1365, %v1573
        %v1622 = vadd.f32 %v1366, %v1582
        %v1623 = vadd.f32 %v1367, %v1591
        %v1624 = vadd.f32 %v1368, %v1600
        %v1625 = vadd.f32 %v1369, %v1609
        %v1626 = vsel %vm1370, %v1386, %v1610
        %v1627 = vsel %vm1371, %v1387, %v1611
        %v1628 = vsel %vm1372, %v1388, %v1612
        %v1629 = vsel %vm1373, %v1389, %v1613
        %v1630 = vsel %vm1374, %v1390, %v1614
        %v1631 = vsel %vm1375, %v1391, %v1615
        %v1632 = vsel %vm1376, %v1392, %v1616
        %v1633 = vsel %vm1377, %v1393, %v1617
        %v1634 = vsel %vm1378, %v1394, %v1618
        %v1635 = vsel %vm1379, %v1395, %v1619
        %v1636 = vsel %vm1380, %v1396, %v1620
        %v1637 = vsel %vm1381, %v1397, %v1621
        %v1638 = vsel %vm1382, %v1398, %v1622
        %v1639 = vsel %vm1383, %v1399, %v1623
        %v1640 = vsel %vm1384, %v1400, %v1624
        %v1641 = vsel %vm1385, %v1401, %v1625
        %vm1642 = vcmask 523520
        %1643 = vst.msk [vmem:[%s809] sm:$0xff] %vm1642, %v1626
        %1644 = vst.msk [vmem:[%s809 + $0x8] sm:$0xff] %vm1642, %v1627
        %1645 = vst.msk [vmem:[%s809 + $0x10] sm:$0xff] %vm1642, %v1628
        %1646 = vst.msk [vmem:[%s809 + $0x18] sm:$0xff] %vm1642, %v1629
        %1647 = vst.msk [vmem:[%s809 + $0x20] sm:$0xff] %vm1642, %v1630
        %1648 = vst.msk [vmem:[%s809 + $0x28] sm:$0xff] %vm1642, %v1631
        %1649 = vst.msk [vmem:[%s809 + $0x30] sm:$0xff] %vm1642, %v1632
        %1650 = vst.msk [vmem:[%s809 + $0x38] sm:$0xff] %vm1642, %v1633
        %1651 = vst.msk [vmem:[%s809 + $0x40] sm:$0xff] %vm1642, %v1634
        %1652 = vst.msk [vmem:[%s809 + $0x48] sm:$0xff] %vm1642, %v1635
        %1653 = vst.msk [vmem:[%s809 + $0x50] sm:$0xff] %vm1642, %v1636
        %1654 = vst.msk [vmem:[%s809 + $0x58] sm:$0xff] %vm1642, %v1637
        %1655 = vst.msk [vmem:[%s809 + $0x60] sm:$0xff] %vm1642, %v1638
        %1656 = vst.msk [vmem:[%s809 + $0x68] sm:$0xff] %vm1642, %v1639
        %1657 = vst.msk [vmem:[%s809 + $0x70] sm:$0xff] %vm1642, %v1640
        %1658 = vst.msk [vmem:[%s809 + $0x78] sm:$0xff] %vm1642, %v1641
        %v1659 = vld [vmem:[%s10] sm:$0xf]
        %v1660 = vld [vmem:[%s10 + $0x4] sm:$0xf]
        %v1661 = vld [vmem:[%s10 + $0x8] sm:$0xf]
        %v1662 = vld [vmem:[%s10 + $0xc] sm:$0xf]
        %v1663 = vld [vmem:[%s11] sm:$0xf]
        %v1664 = vld [vmem:[%s11 + $0x4] sm:$0xf]
        %v1665 = vld [vmem:[%s11 + $0x8] sm:$0xf]
        %v1666 = vld [vmem:[%s11 + $0xc] sm:$0xf]
        %v1671 = vunpack.c.l.b16 %v1663
        %v1672 = vunpack.c.l.b16 %v1664
        %v1673 = vunpack.c.l.b16 %v1665
        %v1674 = vunpack.c.l.b16 %v1666
        %v1675 = vpack.c.b16 %v1672, %v1671
        %v1676 = vpack.c.b16 %v1674, %v1673
        %1679 = vmatpush.bf16.msra.mxu0 0
        %1680 = vmatpush.bf16.msra.mxu0 0
        %1681 = vmatpush.bf16.msra.mxu0 0
        %1682 = vmatpush.bf16.msra.mxu0 0
        %1683 = vmatpush.bf16.msra.mxu0 0
        %1684 = vmatpush.bf16.msra.mxu0 0
        %1685 = vmatpush.bf16.msra.mxu0 %v1676
        %1686 = vmatpush.bf16.msra.mxu0 %v1675
        %1687 = vmatmul.bf16.gmra.mxu0 %v1129
        %v1688 = vpop.f32.mrf.mxu0
        %v1689 = vadd.f32 0.0, %v1688
        %v1690 = vpop.f32.mrf.mxu0
        %v1691 = vadd.f32 0.0, %v1690
        %1692 = vmatmul.bf16.gmra.mxu0 %v1132
        %v1693 = vpop.f32.mrf.mxu0
        %v1694 = vadd.f32 0.0, %v1693
        %v1695 = vpop.f32.mrf.mxu0
        %v1696 = vadd.f32 0.0, %v1695
        %1697 = vmatmul.bf16.gmra.mxu0 %v1135
        %v1698 = vpop.f32.mrf.mxu0
        %v1699 = vadd.f32 0.0, %v1698
        %v1700 = vpop.f32.mrf.mxu0
        %v1701 = vadd.f32 0.0, %v1700
        %1702 = vmatmul.bf16.gmra.mxu0 %v1138
        %v1703 = vpop.f32.mrf.mxu0
        %v1704 = vadd.f32 0.0, %v1703
        %v1705 = vpop.f32.mrf.mxu0
        %v1706 = vadd.f32 0.0, %v1705
        %1707 = vmatmul.bf16.gmra.mxu0 %v1141
        %v1708 = vpop.f32.mrf.mxu0
        %v1709 = vadd.f32 0.0, %v1708
        %v1710 = vpop.f32.mrf.mxu0
        %v1711 = vadd.f32 0.0, %v1710
        %1712 = vmatmul.bf16.gmra.mxu0 %v1144
        %v1713 = vpop.f32.mrf.mxu0
        %v1714 = vadd.f32 0.0, %v1713
        %v1715 = vpop.f32.mrf.mxu0
        %v1716 = vadd.f32 0.0, %v1715
        %1717 = vmatmul.bf16.gmra.mxu0 %v1147
        %v1718 = vpop.f32.mrf.mxu0
        %v1719 = vadd.f32 0.0, %v1718
        %v1720 = vpop.f32.mrf.mxu0
        %v1721 = vadd.f32 0.0, %v1720
        %1722 = vmatmul.bf16.gmra.mxu0 %v1150
        %v1723 = vpop.f32.mrf.mxu0
        %v1724 = vadd.f32 0.0, %v1723
        %v1725 = vpop.f32.mrf.mxu0
        %v1726 = vadd.f32 0.0, %v1725
        %1727 = vdwg.mxu0
        %v1732 = vunpack.c.l.b16 %v1659
        %v1733 = vunpack.c.l.b16 %v1660
        %v1734 = vunpack.c.l.b16 %v1661
        %v1735 = vunpack.c.l.b16 %v1662
        %v1736 = vpack.c.b16 %v1733, %v1732
        %v1737 = vpack.c.b16 %v1735, %v1734
        %v1741 = vsel %vm1127, %v987, 0
        %v1744 = vsel %vm1127, %v988, 0
        %v1747 = vsel %vm1127, %v989, 0
        %v1750 = vsel %vm1127, %v990, 0
        %v1753 = vsel %vm1127, %v991, 0
        %v1756 = vsel %vm1127, %v992, 0
        %v1759 = vsel %vm1127, %v993, 0
        %v1762 = vsel %vm1127, %v994, 0
        %1764 = vmatpush.bf16.msra.mxu0 0
        %1765 = vmatpush.bf16.msra.mxu0 0
        %1766 = vmatpush.bf16.msra.mxu0 0
        %1767 = vmatpush.bf16.msra.mxu0 0
        %1768 = vmatpush.bf16.msra.mxu0 0
        %1769 = vmatpush.bf16.msra.mxu0 0
        %1770 = vmatpush.bf16.msra.mxu0 %v1737
        %1771 = vmatpush.bf16.msra.mxu0 %v1736
        %1772 = vmatmul.bf16.gmra.mxu0 %v1741
        %v1773 = vpop.f32.mrf.mxu0
        %v1774 = vadd.f32 %v1689, %v1773
        %v1775 = vpop.f32.mrf.mxu0
        %v1776 = vadd.f32 %v1691, %v1775
        %1777 = vmatmul.bf16.gmra.mxu0 %v1744
        %v1778 = vpop.f32.mrf.mxu0
        %v1779 = vadd.f32 %v1694, %v1778
        %v1780 = vpop.f32.mrf.mxu0
        %v1781 = vadd.f32 %v1696, %v1780
        %1782 = vmatmul.bf16.gmra.mxu0 %v1747
        %v1783 = vpop.f32.mrf.mxu0
        %v1784 = vadd.f32 %v1699, %v1783
        %v1785 = vpop.f32.mrf.mxu0
        %v1786 = vadd.f32 %v1701, %v1785
        %1787 = vmatmul.bf16.gmra.mxu0 %v1750
        %v1788 = vpop.f32.mrf.mxu0
        %v1789 = vadd.f32 %v1704, %v1788
        %v1790 = vpop.f32.mrf.mxu0
        %v1791 = vadd.f32 %v1706, %v1790
        %1792 = vmatmul.bf16.gmra.mxu0 %v1753
        %v1793 = vpop.f32.mrf.mxu0
        %v1794 = vadd.f32 %v1709, %v1793
        %v1795 = vpop.f32.mrf.mxu0
        %v1796 = vadd.f32 %v1711, %v1795
        %1797 = vmatmul.bf16.gmra.mxu0 %v1756
        %v1798 = vpop.f32.mrf.mxu0
        %v1799 = vadd.f32 %v1714, %v1798
        %v1800 = vpop.f32.mrf.mxu0
        %v1801 = vadd.f32 %v1716, %v1800
        %1802 = vmatmul.bf16.gmra.mxu0 %v1759
        %v1803 = vpop.f32.mrf.mxu0
        %v1804 = vadd.f32 %v1719, %v1803
        %v1805 = vpop.f32.mrf.mxu0
        %v1806 = vadd.f32 %v1721, %v1805
        %1807 = vmatmul.bf16.gmra.mxu0 %v1762
        %v1808 = vpop.f32.mrf.mxu0
        %v1809 = vadd.f32 %v1724, %v1808
        %v1810 = vpop.f32.mrf.mxu0
        %v1811 = vadd.f32 %v1726, %v1810
        %1812 = vdwg.mxu0
        %v1813 = vpack.c.bf16 %v1774, %v1774
        %v1814 = vpack.c.bf16 %v1776, %v1776
        %v1815 = vpack.c.bf16 %v1779, %v1779
        %v1816 = vpack.c.bf16 %v1781, %v1781
        %v1817 = vpack.c.bf16 %v1784, %v1784
        %v1818 = vpack.c.bf16 %v1786, %v1786
        %v1819 = vpack.c.bf16 %v1789, %v1789
        %v1820 = vpack.c.bf16 %v1791, %v1791
        %v1821 = vpack.c.bf16 %v1794, %v1794
        %v1822 = vpack.c.bf16 %v1796, %v1796
        %v1823 = vpack.c.bf16 %v1799, %v1799
        %v1824 = vpack.c.bf16 %v1801, %v1801
        %v1825 = vpack.c.bf16 %v1804, %v1804
        %v1826 = vpack.c.bf16 %v1806, %v1806
        %v1827 = vpack.c.bf16 %v1809, %v1809
        %v1828 = vpack.c.bf16 %v1811, %v1811
        %vm1829 = vcmask 257024
        %1830 = vst.msk [vmem:[%s815] sm:$0xf] %vm1829, %v1813
        %1831 = vst.msk [vmem:[%s815 + $0x4] sm:$0xf] %vm1829, %v1814
        %1832 = vst.msk [vmem:[%s815 + $0x8] sm:$0xf] %vm1829, %v1815
        %1833 = vst.msk [vmem:[%s815 + $0xc] sm:$0xf] %vm1829, %v1816
        %1834 = vst.msk [vmem:[%s815 + $0x10] sm:$0xf] %vm1829, %v1817
        %1835 = vst.msk [vmem:[%s815 + $0x14] sm:$0xf] %vm1829, %v1818
        %1836 = vst.msk [vmem:[%s815 + $0x18] sm:$0xf] %vm1829, %v1819
        %1837 = vst.msk [vmem:[%s815 + $0x1c] sm:$0xf] %vm1829, %v1820
        %1838 = vst.msk [vmem:[%s815 + $0x20] sm:$0xf] %vm1829, %v1821
        %1839 = vst.msk [vmem:[%s815 + $0x24] sm:$0xf] %vm1829, %v1822
        %1840 = vst.msk [vmem:[%s815 + $0x28] sm:$0xf] %vm1829, %v1823
        %1841 = vst.msk [vmem:[%s815 + $0x2c] sm:$0xf] %vm1829, %v1824
        %1842 = vst.msk [vmem:[%s815 + $0x30] sm:$0xf] %vm1829, %v1825
        %1843 = vst.msk [vmem:[%s815 + $0x34] sm:$0xf] %vm1829, %v1826
        %1844 = vst.msk [vmem:[%s815 + $0x38] sm:$0xf] %vm1829, %v1827
        %1845 = vst.msk [vmem:[%s815 + $0x3c] sm:$0xf] %vm1829, %v1828
        %v1846 = vld [vmem:[%s12] sm:$0xf]
        %v1847 = vld [vmem:[%s12 + $0x4] sm:$0xf]
        %v1848 = vld [vmem:[%s12 + $0x8] sm:$0xf]
        %v1849 = vld [vmem:[%s12 + $0xc] sm:$0xf]
        %v1854 = vunpack.c.l.b16 %v1846
        %v1855 = vunpack.c.l.b16 %v1847
        %v1856 = vunpack.c.l.b16 %v1848
        %v1857 = vunpack.c.l.b16 %v1849
        %v1858 = vpack.c.b16 %v1855, %v1854
        %v1859 = vpack.c.b16 %v1857, %v1856
        %1862 = vmatpush.bf16.msra.mxu0 0
        %1863 = vmatpush.bf16.msra.mxu0 0
        %1864 = vmatpush.bf16.msra.mxu0 0
        %1865 = vmatpush.bf16.msra.mxu0 0
        %1866 = vmatpush.bf16.msra.mxu0 0
        %1867 = vmatpush.bf16.msra.mxu0 0
        %1868 = vmatpush.bf16.msra.mxu0 %v1859
        %1869 = vmatpush.bf16.msra.mxu0 %v1858
        %1870 = vmatmul.bf16.gmra.mxu0 %v1741
        %v1871 = vpop.f32.mrf.mxu0
        %v1872 = vadd.f32 0.0, %v1871
        %v1873 = vpop.f32.mrf.mxu0
        %v1874 = vadd.f32 0.0, %v1873
        %1875 = vmatmul.bf16.gmra.mxu0 %v1744
        %v1876 = vpop.f32.mrf.mxu0
        %v1877 = vadd.f32 0.0, %v1876
        %v1878 = vpop.f32.mrf.mxu0
        %v1879 = vadd.f32 0.0, %v1878
        %1880 = vmatmul.bf16.gmra.mxu0 %v1747
        %v1881 = vpop.f32.mrf.mxu0
        %v1882 = vadd.f32 0.0, %v1881
        %v1883 = vpop.f32.mrf.mxu0
        %v1884 = vadd.f32 0.0, %v1883
        %1885 = vmatmul.bf16.gmra.mxu0 %v1750
        %v1886 = vpop.f32.mrf.mxu0
        %v1887 = vadd.f32 0.0, %v1886
        %v1888 = vpop.f32.mrf.mxu0
        %v1889 = vadd.f32 0.0, %v1888
        %1890 = vmatmul.bf16.gmra.mxu0 %v1753
        %v1891 = vpop.f32.mrf.mxu0
        %v1892 = vadd.f32 0.0, %v1891
        %v1893 = vpop.f32.mrf.mxu0
        %v1894 = vadd.f32 0.0, %v1893
        %1895 = vmatmul.bf16.gmra.mxu0 %v1756
        %v1896 = vpop.f32.mrf.mxu0
        %v1897 = vadd.f32 0.0, %v1896
        %v1898 = vpop.f32.mrf.mxu0
        %v1899 = vadd.f32 0.0, %v1898
        %1900 = vmatmul.bf16.gmra.mxu0 %v1759
        %v1901 = vpop.f32.mrf.mxu0
        %v1902 = vadd.f32 0.0, %v1901
        %v1903 = vpop.f32.mrf.mxu0
        %v1904 = vadd.f32 0.0, %v1903
        %1905 = vmatmul.bf16.gmra.mxu0 %v1762
        %v1906 = vpop.f32.mrf.mxu0
        %v1907 = vadd.f32 0.0, %v1906
        %v1908 = vpop.f32.mrf.mxu0
        %v1909 = vadd.f32 0.0, %v1908
        %1910 = vdwg.mxu0
        %v1911 = vpack.c.bf16 %v1872, %v1872
        %v1912 = vpack.c.bf16 %v1874, %v1874
        %v1913 = vpack.c.bf16 %v1877, %v1877
        %v1914 = vpack.c.bf16 %v1879, %v1879
        %v1915 = vpack.c.bf16 %v1882, %v1882
        %v1916 = vpack.c.bf16 %v1884, %v1884
        %v1917 = vpack.c.bf16 %v1887, %v1887
        %v1918 = vpack.c.bf16 %v1889, %v1889
        %v1919 = vpack.c.bf16 %v1892, %v1892
        %v1920 = vpack.c.bf16 %v1894, %v1894
        %v1921 = vpack.c.bf16 %v1897, %v1897
        %v1922 = vpack.c.bf16 %v1899, %v1899
        %v1923 = vpack.c.bf16 %v1902, %v1902
        %v1924 = vpack.c.bf16 %v1904, %v1904
        %v1925 = vpack.c.bf16 %v1907, %v1907
        %v1926 = vpack.c.bf16 %v1909, %v1909
        %vm1927 = vcmask 781312
        %1928 = vst.msk [vmem:[%s821] sm:$0xf] %vm1927, %v1911
        %1929 = vst.msk [vmem:[%s821 + $0x4] sm:$0xf] %vm1927, %v1912
        %1930 = vst.msk [vmem:[%s821 + $0x8] sm:$0xf] %vm1927, %v1913
        %1931 = vst.msk [vmem:[%s821 + $0xc] sm:$0xf] %vm1927, %v1914
        %1932 = vst.msk [vmem:[%s821 + $0x10] sm:$0xf] %vm1927, %v1915
        %1933 = vst.msk [vmem:[%s821 + $0x14] sm:$0xf] %vm1927, %v1916
        %1934 = vst.msk [vmem:[%s821 + $0x18] sm:$0xf] %vm1927, %v1917
        %1935 = vst.msk [vmem:[%s821 + $0x1c] sm:$0xf] %vm1927, %v1918
        %1936 = vst.msk [vmem:[%s821 + $0x20] sm:$0xf] %vm1927, %v1919
        %1937 = vst.msk [vmem:[%s821 + $0x24] sm:$0xf] %vm1927, %v1920
        %1938 = vst.msk [vmem:[%s821 + $0x28] sm:$0xf] %vm1927, %v1921
        %1939 = vst.msk [vmem:[%s821 + $0x2c] sm:$0xf] %vm1927, %v1922
        %1940 = vst.msk [vmem:[%s821 + $0x30] sm:$0xf] %vm1927, %v1923
        %1941 = vst.msk [vmem:[%s821 + $0x34] sm:$0xf] %vm1927, %v1924
        %1942 = vst.msk [vmem:[%s821 + $0x38] sm:$0xf] %vm1927, %v1925
        %1943 = vst.msk [vmem:[%s821 + $0x3c] sm:$0xf] %vm1927, %v1926
        %v1944 = vld [vmem:[%s711] sm:$0xff]
        %v1945 = vld [vmem:[%s711 + $0x8] sm:$0xff]
        %v1946 = vld [vmem:[%s711 + $0x10] sm:$0xff]
        %v1947 = vld [vmem:[%s711 + $0x18] sm:$0xff]
        %v1948 = vld [vmem:[%s711 + $0x20] sm:$0xff]
        %v1949 = vld [vmem:[%s711 + $0x28] sm:$0xff]
        %v1950 = vld [vmem:[%s711 + $0x30] sm:$0xff]
        %v1951 = vld [vmem:[%s711 + $0x38] sm:$0xff]
        %v1952 = vld [vmem:[%s711 + $0x40] sm:$0xff]
        %v1953 = vld [vmem:[%s711 + $0x48] sm:$0xff]
        %v1954 = vld [vmem:[%s711 + $0x50] sm:$0xff]
        %v1955 = vld [vmem:[%s711 + $0x58] sm:$0xff]
        %v1956 = vld [vmem:[%s711 + $0x60] sm:$0xff]
        %v1957 = vld [vmem:[%s711 + $0x68] sm:$0xff]
        %v1958 = vld [vmem:[%s711 + $0x70] sm:$0xff]
        %v1959 = vld [vmem:[%s711 + $0x78] sm:$0xff]
        %v1960 = vpack.c.bf16 %v1945, %v1944
        %v1961 = vpack.c.bf16 %v1947, %v1946
        %v1962 = vpack.c.bf16 %v1949, %v1948
        %v1963 = vpack.c.bf16 %v1951, %v1950
        %v1964 = vpack.c.bf16 %v1953, %v1952
        %v1965 = vpack.c.bf16 %v1955, %v1954
        %v1966 = vpack.c.bf16 %v1957, %v1956
        %v1967 = vpack.c.bf16 %v1959, %v1958
        %v1968 = vld [vmem:[%s13] sm:$0xf]
        %v1969 = vld [vmem:[%s13 + $0x4] sm:$0xf]
        %v1970 = vld [vmem:[%s13 + $0x8] sm:$0xf]
        %v1971 = vld [vmem:[%s13 + $0xc] sm:$0xf]
        %v1976 = vunpack.c.l.b16 %v1968
        %v1977 = vunpack.c.l.b16 %v1969
        %v1978 = vunpack.c.l.b16 %v1970
        %v1979 = vunpack.c.l.b16 %v1971
        %v1980 = vpack.c.b16 %v1977, %v1976
        %v1981 = vpack.c.b16 %v1979, %v1978
        %v1985 = vsel %vm1127, %v1960, 0
        %v1988 = vsel %vm1127, %v1961, 0
        %v1991 = vsel %vm1127, %v1962, 0
        %v1994 = vsel %vm1127, %v1963, 0
        %v1997 = vsel %vm1127, %v1964, 0
        %v2000 = vsel %vm1127, %v1965, 0
        %v2003 = vsel %vm1127, %v1966, 0
        %v2006 = vsel %vm1127, %v1967, 0
        %2008 = vmatpush.bf16.msra.mxu0 0
        %2009 = vmatpush.bf16.msra.mxu0 0
        %2010 = vmatpush.bf16.msra.mxu0 0
        %2011 = vmatpush.bf16.msra.mxu0 0
        %2012 = vmatpush.bf16.msra.mxu0 0
        %2013 = vmatpush.bf16.msra.mxu0 0
        %2014 = vmatpush.bf16.msra.mxu0 %v1981
        %2015 = vmatpush.bf16.msra.mxu0 %v1980
        %2016 = vmatmul.bf16.gmra.mxu0 %v1985
        %v2017 = vpop.f32.mrf.mxu0
        %v2018 = vadd.f32 0.0, %v2017
        %v2019 = vpop.f32.mrf.mxu0
        %v2020 = vadd.f32 0.0, %v2019
        %2021 = vmatmul.bf16.gmra.mxu0 %v1988
        %v2022 = vpop.f32.mrf.mxu0
        %v2023 = vadd.f32 0.0, %v2022
        %v2024 = vpop.f32.mrf.mxu0
        %v2025 = vadd.f32 0.0, %v2024
        %2026 = vmatmul.bf16.gmra.mxu0 %v1991
        %v2027 = vpop.f32.mrf.mxu0
        %v2028 = vadd.f32 0.0, %v2027
        %v2029 = vpop.f32.mrf.mxu0
        %v2030 = vadd.f32 0.0, %v2029
        %2031 = vmatmul.bf16.gmra.mxu0 %v1994
        %v2032 = vpop.f32.mrf.mxu0
        %v2033 = vadd.f32 0.0, %v2032
        %v2034 = vpop.f32.mrf.mxu0
        %v2035 = vadd.f32 0.0, %v2034
        %2036 = vmatmul.bf16.gmra.mxu0 %v1997
        %v2037 = vpop.f32.mrf.mxu0
        %v2038 = vadd.f32 0.0, %v2037
        %v2039 = vpop.f32.mrf.mxu0
        %v2040 = vadd.f32 0.0, %v2039
        %2041 = vmatmul.bf16.gmra.mxu0 %v2000
        %v2042 = vpop.f32.mrf.mxu0
        %v2043 = vadd.f32 0.0, %v2042
        %v2044 = vpop.f32.mrf.mxu0
        %v2045 = vadd.f32 0.0, %v2044
        %2046 = vmatmul.bf16.gmra.mxu0 %v2003
        %v2047 = vpop.f32.mrf.mxu0
        %v2048 = vadd.f32 0.0, %v2047
        %v2049 = vpop.f32.mrf.mxu0
        %v2050 = vadd.f32 0.0, %v2049
        %2051 = vmatmul.bf16.gmra.mxu0 %v2006
        %v2052 = vpop.f32.mrf.mxu0
        %v2053 = vadd.f32 0.0, %v2052
        %v2054 = vpop.f32.mrf.mxu0
        %v2055 = vadd.f32 0.0, %v2054
        %2056 = vdwg.mxu0
        %v2057 = vpack.c.bf16 %v2018, %v2018
        %v2058 = vpack.c.bf16 %v2020, %v2020
        %v2059 = vpack.c.bf16 %v2023, %v2023
        %v2060 = vpack.c.bf16 %v2025, %v2025
        %v2061 = vpack.c.bf16 %v2028, %v2028
        %v2062 = vpack.c.bf16 %v2030, %v2030
        %v2063 = vpack.c.bf16 %v2033, %v2033
        %v2064 = vpack.c.bf16 %v2035, %v2035
        %v2065 = vpack.c.bf16 %v2038, %v2038
        %v2066 = vpack.c.bf16 %v2040, %v2040
        %v2067 = vpack.c.bf16 %v2043, %v2043
        %v2068 = vpack.c.bf16 %v2045, %v2045
        %v2069 = vpack.c.bf16 %v2048, %v2048
        %v2070 = vpack.c.bf16 %v2050, %v2050
        %v2071 = vpack.c.bf16 %v2053, %v2053
        %v2072 = vpack.c.bf16 %v2055, %v2055
        %vm2073 = vcmask 519168
        %2074 = vst.msk [vmem:[%s827] sm:$0xf] %vm2073, %v2057
        %2075 = vst.msk [vmem:[%s827 + $0x4] sm:$0xf] %vm2073, %v2058
        %2076 = vst.msk [vmem:[%s827 + $0x8] sm:$0xf] %vm2073, %v2059
        %2077 = vst.msk [vmem:[%s827 + $0xc] sm:$0xf] %vm2073, %v2060
        %2078 = vst.msk [vmem:[%s827 + $0x10] sm:$0xf] %vm2073, %v2061
        %2079 = vst.msk [vmem:[%s827 + $0x14] sm:$0xf] %vm2073, %v2062
        %2080 = vst.msk [vmem:[%s827 + $0x18] sm:$0xf] %vm2073, %v2063
        %2081 = vst.msk [vmem:[%s827 + $0x1c] sm:$0xf] %vm2073, %v2064
        %2082 = vst.msk [vmem:[%s827 + $0x20] sm:$0xf] %vm2073, %v2065
        %2083 = vst.msk [vmem:[%s827 + $0x24] sm:$0xf] %vm2073, %v2066
        %2084 = vst.msk [vmem:[%s827 + $0x28] sm:$0xf] %vm2073, %v2067
        %2085 = vst.msk [vmem:[%s827 + $0x2c] sm:$0xf] %vm2073, %v2068
        %2086 = vst.msk [vmem:[%s827 + $0x30] sm:$0xf] %vm2073, %v2069
        %2087 = vst.msk [vmem:[%s827 + $0x34] sm:$0xf] %vm2073, %v2070
        %2088 = vst.msk [vmem:[%s827 + $0x38] sm:$0xf] %vm2073, %v2071
        %2089 = vst.msk [vmem:[%s827 + $0x3c] sm:$0xf] %vm2073, %v2072
        %v2090 = vld [vmem:[%s836] sm:$0xff]
        %v2091 = vld [vmem:[%s836 + $0x8] sm:$0xff]
        %v2092 = vld [vmem:[%s836 + $0x10] sm:$0xff]
        %v2093 = vld [vmem:[%s836 + $0x18] sm:$0xff]
        %v2094 = vld [vmem:[%s836 + $0x20] sm:$0xff]
        %v2095 = vld [vmem:[%s836 + $0x28] sm:$0xff]
        %v2096 = vld [vmem:[%s836 + $0x30] sm:$0xff]
        %v2097 = vld [vmem:[%s836 + $0x38] sm:$0xff]
        %v2098 = vld [vmem:[%s836 + $0x40] sm:$0xff]
        %v2099 = vld [vmem:[%s836 + $0x48] sm:$0xff]
        %v2100 = vld [vmem:[%s836 + $0x50] sm:$0xff]
        %v2101 = vld [vmem:[%s836 + $0x58] sm:$0xff]
        %v2102 = vld [vmem:[%s836 + $0x60] sm:$0xff]
        %v2103 = vld [vmem:[%s836 + $0x68] sm:$0xff]
        %v2104 = vld [vmem:[%s836 + $0x70] sm:$0xff]
        %v2105 = vld [vmem:[%s836 + $0x78] sm:$0xff]
        %v2106 = vpack.c.bf16 %v2091, %v2090
        %v2107 = vpack.c.bf16 %v2093, %v2092
        %v2108 = vpack.c.bf16 %v2095, %v2094
        %v2109 = vpack.c.bf16 %v2097, %v2096
        %v2110 = vpack.c.bf16 %v2099, %v2098
        %v2111 = vpack.c.bf16 %v2101, %v2100
        %v2112 = vpack.c.bf16 %v2103, %v2102
        %v2113 = vpack.c.bf16 %v2105, %v2104
        %s2114 = scalar_lea.vmem %s13, 16
        %v2115 = vld [vmem:[%s2114] sm:$0xf]
        %v2116 = vld [vmem:[%s2114 + $0x4] sm:$0xf]
        %v2117 = vld [vmem:[%s2114 + $0x8] sm:$0xf]
        %v2118 = vld [vmem:[%s2114 + $0xc] sm:$0xf]
        %v2123 = vunpack.c.l.b16 %v2115
        %v2124 = vunpack.c.l.b16 %v2116
        %v2125 = vunpack.c.l.b16 %v2117
        %v2126 = vunpack.c.l.b16 %v2118
        %v2127 = vpack.c.b16 %v2124, %v2123
        %v2128 = vpack.c.b16 %v2126, %v2125
        %v2132 = vsel %vm1127, %v2106, 0
        %v2135 = vsel %vm1127, %v2107, 0
        %v2138 = vsel %vm1127, %v2108, 0
        %v2141 = vsel %vm1127, %v2109, 0
        %v2144 = vsel %vm1127, %v2110, 0
        %v2147 = vsel %vm1127, %v2111, 0
        %v2150 = vsel %vm1127, %v2112, 0
        %v2153 = vsel %vm1127, %v2113, 0
        %2155 = vmatpush.bf16.msra.mxu0 0
        %2156 = vmatpush.bf16.msra.mxu0 0
        %2157 = vmatpush.bf16.msra.mxu0 0
        %2158 = vmatpush.bf16.msra.mxu0 0
        %2159 = vmatpush.bf16.msra.mxu0 0
        %2160 = vmatpush.bf16.msra.mxu0 0
        %2161 = vmatpush.bf16.msra.mxu0 %v2128
        %2162 = vmatpush.bf16.msra.mxu0 %v2127
        %2163 = vmatmul.bf16.gmra.mxu0 %v2132
        %v2164 = vpop.f32.mrf.mxu0
        %v2165 = vadd.f32 0.0, %v2164
        %v2166 = vpop.f32.mrf.mxu0
        %v2167 = vadd.f32 0.0, %v2166
        %2168 = vmatmul.bf16.gmra.mxu0 %v2135
        %v2169 = vpop.f32.mrf.mxu0
        %v2170 = vadd.f32 0.0, %v2169
        %v2171 = vpop.f32.mrf.mxu0
        %v2172 = vadd.f32 0.0, %v2171
        %2173 = vmatmul.bf16.gmra.mxu0 %v2138
        %v2174 = vpop.f32.mrf.mxu0
        %v2175 = vadd.f32 0.0, %v2174
        %v2176 = vpop.f32.mrf.mxu0
        %v2177 = vadd.f32 0.0, %v2176
        %2178 = vmatmul.bf16.gmra.mxu0 %v2141
        %v2179 = vpop.f32.mrf.mxu0
        %v2180 = vadd.f32 0.0, %v2179
        %v2181 = vpop.f32.mrf.mxu0
        %v2182 = vadd.f32 0.0, %v2181
        %2183 = vmatmul.bf16.gmra.mxu0 %v2144
        %v2184 = vpop.f32.mrf.mxu0
        %v2185 = vadd.f32 0.0, %v2184
        %v2186 = vpop.f32.mrf.mxu0
        %v2187 = vadd.f32 0.0, %v2186
        %2188 = vmatmul.bf16.gmra.mxu0 %v2147
        %v2189 = vpop.f32.mrf.mxu0
        %v2190 = vadd.f32 0.0, %v2189
        %v2191 = vpop.f32.mrf.mxu0
        %v2192 = vadd.f32 0.0, %v2191
        %2193 = vmatmul.bf16.gmra.mxu0 %v2150
        %v2194 = vpop.f32.mrf.mxu0
        %v2195 = vadd.f32 0.0, %v2194
        %v2196 = vpop.f32.mrf.mxu0
        %v2197 = vadd.f32 0.0, %v2196
        %2198 = vmatmul.bf16.gmra.mxu0 %v2153
        %v2199 = vpop.f32.mrf.mxu0
        %v2200 = vadd.f32 0.0, %v2199
        %v2201 = vpop.f32.mrf.mxu0
        %v2202 = vadd.f32 0.0, %v2201
        %2203 = vdwg.mxu0
        %v2204 = vpack.c.bf16 %v2165, %v2165
        %v2205 = vpack.c.bf16 %v2167, %v2167
        %v2206 = vpack.c.bf16 %v2170, %v2170
        %v2207 = vpack.c.bf16 %v2172, %v2172
        %v2208 = vpack.c.bf16 %v2175, %v2175
        %v2209 = vpack.c.bf16 %v2177, %v2177
        %v2210 = vpack.c.bf16 %v2180, %v2180
        %v2211 = vpack.c.bf16 %v2182, %v2182
        %v2212 = vpack.c.bf16 %v2185, %v2185
        %v2213 = vpack.c.bf16 %v2187, %v2187
        %v2214 = vpack.c.bf16 %v2190, %v2190
        %v2215 = vpack.c.bf16 %v2192, %v2192
        %v2216 = vpack.c.bf16 %v2195, %v2195
        %v2217 = vpack.c.bf16 %v2197, %v2197
        %v2218 = vpack.c.bf16 %v2200, %v2200
        %v2219 = vpack.c.bf16 %v2202, %v2202
        %2220 = vst.msk [vmem:[%s833] sm:$0xf] %vm2073, %v2204
        %2221 = vst.msk [vmem:[%s833 + $0x4] sm:$0xf] %vm2073, %v2205
        %2222 = vst.msk [vmem:[%s833 + $0x8] sm:$0xf] %vm2073, %v2206
        %2223 = vst.msk [vmem:[%s833 + $0xc] sm:$0xf] %vm2073, %v2207
        %2224 = vst.msk [vmem:[%s833 + $0x10] sm:$0xf] %vm2073, %v2208
        %2225 = vst.msk [vmem:[%s833 + $0x14] sm:$0xf] %vm2073, %v2209
        %2226 = vst.msk [vmem:[%s833 + $0x18] sm:$0xf] %vm2073, %v2210
        %2227 = vst.msk [vmem:[%s833 + $0x1c] sm:$0xf] %vm2073, %v2211
        %2228 = vst.msk [vmem:[%s833 + $0x20] sm:$0xf] %vm2073, %v2212
        %2229 = vst.msk [vmem:[%s833 + $0x24] sm:$0xf] %vm2073, %v2213
        %2230 = vst.msk [vmem:[%s833 + $0x28] sm:$0xf] %vm2073, %v2214
        %2231 = vst.msk [vmem:[%s833 + $0x2c] sm:$0xf] %vm2073, %v2215
        %2232 = vst.msk [vmem:[%s833 + $0x30] sm:$0xf] %vm2073, %v2216
        %2233 = vst.msk [vmem:[%s833 + $0x34] sm:$0xf] %vm2073, %v2217
        %2234 = vst.msk [vmem:[%s833 + $0x38] sm:$0xf] %vm2073, %v2218
        %2235 = vst.msk [vmem:[%s833 + $0x3c] sm:$0xf] %vm2073, %v2219
        %s2236 = smul.u32 16, %s30
        %p2237 = scmp.lt.s32.totalorder %s2236, 31
        %s2238 = scalar_select %p2237, %s2236, 31
        %s2239 = smul.addr %s2238, 8
        %s2240 = scalar_lea.vmem %s14, %s2239
        %s2241 = smul.u32 16, %s30
        %p2242 = scmp.lt.s32.totalorder %s2241, 31
        %s2243 = scalar_select %p2242, %s2241, 31
        %s2244 = smul.addr %s2243, 4
        %s2245 = scalar_lea.vmem %s15, %s2244
        %s2246 = smul.u32 16, %s30
        %p2247 = scmp.lt.s32.totalorder %s2246, 31
        %s2248 = scalar_select %p2247, %s2246, 31
        %s2249 = smul.addr %s2248, 4
        %s2250 = scalar_lea.vmem %s16, %s2249
        %s2251 = smul.u32 16, %s30
        %p2252 = scmp.lt.s32.totalorder %s2251, 31
        %s2253 = scalar_select %p2252, %s2251, 31
        %s2254 = smul.addr %s2253, 4
        %s2255 = scalar_lea.vmem %s17, %s2254
        %s2256 = smul.u32 16, %s30
        %p2257 = scmp.lt.s32.totalorder %s2256, 31
        %s2258 = scalar_select %p2257, %s2256, 31
        %s2259 = smul.addr %s2258, 4
        %s2260 = scalar_lea.vmem %s18, %s2259
        // Predicated region
        $region115: #{generative_step.7} parent=109 // pred_check
          %p2261 = pneg %p357
        $region116: #{generative_step.7} parent=109 // pred_check_branch
          %2263 = sbr.rel (%p2261) target = $region118
        $region117: #{generative_step.7} parent=109 // pred_region
          %s2264 = smul.u32 16, %s30
        $region118: #{generative_step.7} parent=109 // pred_fallthru
          _
        // Predicated region
        $region119: #{generative_step.7} parent=109 // pred_check
          %p2265 = pneg %p383
        $region120: #{generative_step.7} parent=109 // pred_check_branch
          %2267 = sbr.rel (%p2265) target = $region122
        $region121: #{generative_step.7} parent=109 // pred_region
          %s2268 = smul.u32 16, %s30
        $region122: #{generative_step.7} parent=109 // pred_fallthru
          _
        // Predicated region
        $region123: #{generative_step.7} parent=109 // pred_check
          %p2269 = pneg %p409
        $region124: #{generative_step.7} parent=109 // pred_check_branch
          %2271 = sbr.rel (%p2269) target = $region126
        $region125: #{generative_step.7} parent=109 // pred_region
          %s2272 = smul.u32 16, %s30
        $region126: #{generative_step.7} parent=109 // pred_fallthru
          _
        // Predicated region
        $region127: #{generative_step.7} parent=109 // pred_check
          %p2273 = pneg %p435
        $region128: #{generative_step.7} parent=109 // pred_check_branch
          %2275 = sbr.rel (%p2273) target = $region130
        $region129: #{generative_step.7} parent=109 // pred_region
          %s2276 = smul.u32 16, %s30
        $region130: #{generative_step.7} parent=109 // pred_fallthru
          _
        // Predicated region
        $region131: #{generative_step.7} parent=109 // pred_check
          %p2277 = pneg %p461
        $region132: #{generative_step.7} parent=109 // pred_check_branch
          %2279 = sbr.rel (%p2277) target = $region134
        $region133: #{generative_step.7} parent=109 // pred_region
          %s2280 = smul.u32 16, %s30
        $region134: #{generative_step.7} parent=109 // pred_fallthru
          _
      $region110: #{generative_step.7} parent=5 // pred_fallthru
        _
      %p2281 = scmp.le.s32.totalorder 2, %s25
      // Predicated region
      $region135: #{generative_step.7} parent=5 // pred_check
        %p2282 = pneg %p2281
      $region136: #{generative_step.7} parent=5 // pred_check_branch
        %2284 = sbr.rel (%p2282) target = $region138
      $region137: #{generative_step.7} parent=5 // pred_region
        %s2285 = ssub.s32 %s25, 2
        // Predicated region
        $region139: #{generative_step.7} parent=137 // pred_check
          %p2286 = pneg %p363
        $region140: #{generative_step.7} parent=137 // pred_check_branch
          %2288 = sbr.rel (%p2286) target = $region142
        $region141: #{generative_step.7} parent=137 // pred_region
          %s2289 = smul.u32 16, %s31
          %p2290 = scmp.lt.s32.totalorder %s2289, 31
          %s2291 = scalar_select %p2290, %s2289, 31
          %s2292 = smul.addr %s2291, 8
          %s2293 = scalar_lea.vmem %s14, %s2292
        $region142: #{generative_step.7} parent=137 // pred_fallthru
          _
        // Predicated region
        $region143: #{generative_step.7} parent=137 // pred_check
          %p2294 = pneg %p389
        $region144: #{generative_step.7} parent=137 // pred_check_branch
          %2296 = sbr.rel (%p2294) target = $region146
        $region145: #{generative_step.7} parent=137 // pred_region
          %s2297 = smul.u32 16, %s31
          %p2298 = scmp.lt.s32.totalorder %s2297, 31
          %s2299 = scalar_select %p2298, %s2297, 31
          %s2300 = smul.addr %s2299, 4
          %s2301 = scalar_lea.vmem %s15, %s2300
        $region146: #{generative_step.7} parent=137 // pred_fallthru
          _
        // Predicated region
        $region147: #{generative_step.7} parent=137 // pred_check
          %p2302 = pneg %p415
        $region148: #{generative_step.7} parent=137 // pred_check_branch
          %2304 = sbr.rel (%p2302) target = $region150
        $region149: #{generative_step.7} parent=137 // pred_region
          %s2305 = smul.u32 16, %s31
          %p2306 = scmp.lt.s32.totalorder %s2305, 31
          %s2307 = scalar_select %p2306, %s2305, 31
          %s2308 = smul.addr %s2307, 4
          %s2309 = scalar_lea.vmem %s16, %s2308
        $region150: #{generative_step.7} parent=137 // pred_fallthru
          _
        // Predicated region
        $region151: #{generative_step.7} parent=137 // pred_check
          %p2310 = pneg %p441
        $region152: #{generative_step.7} parent=137 // pred_check_branch
          %2312 = sbr.rel (%p2310) target = $region154
        $region153: #{generative_step.7} parent=137 // pred_region
          %s2313 = smul.u32 16, %s31
          %p2314 = scmp.lt.s32.totalorder %s2313, 31
          %s2315 = scalar_select %p2314, %s2313, 31
          %s2316 = smul.addr %s2315, 4
          %s2317 = scalar_lea.vmem %s17, %s2316
        $region154: #{generative_step.7} parent=137 // pred_fallthru
          _
        // Predicated region
        $region155: #{generative_step.7} parent=137 // pred_check
          %p2318 = pneg %p467
        $region156: #{generative_step.7} parent=137 // pred_check_branch
          %2320 = sbr.rel (%p2318) target = $region158
        $region157: #{generative_step.7} parent=137 // pred_region
          %s2321 = smul.u32 16, %s31
          %p2322 = scmp.lt.s32.totalorder %s2321, 31
          %s2323 = scalar_select %p2322, %s2321, 31
          %s2324 = smul.addr %s2323, 4
          %s2325 = scalar_lea.vmem %s18, %s2324
        $region158: #{generative_step.7} parent=137 // pred_fallthru
          _
      $region138: #{generative_step.7} parent=5 // pred_fallthru
        _
    $region6: #{generative_step.7} parent=1 // loop_footer
      %s29 = sadd.s32 1, %s25
    $region7: #{generative_step.7} parent=1 // loop_footer_branch
      %24 = sbr.rel target = $region3
    $region8: #{generative_step.7} parent=1 // loop_exit
      _

// kernel: generative_step.9
$region0: #{generative_step.9}
  #allocation0 [shape = 'u32[]', space=smem, size = 0x4, offset = 0x4, fixed_abs, tag = 'smem constant byte address 0x4 - core index']
  #allocation1 [shape = 'u32[72,128]{1,0:T(1,128)}', space=vmem, size = 0x9000, scoped, tag = 'internal scratch']
  #allocation2 [shape = 'f32[128,64]{1,0:T(8,128)}', space=vmem, size = 0x10000, scoped, tag = 'scratch operand']
  %s0 = inlined_call_operand.vmem [shape: bf16[256,256], index: 0, kind: input, shape index: {}]
  %s1 = inlined_call_operand.vmem [shape: bf16[256,64], index: 1, kind: input, shape index: {}]
  %s2 = inlined_call_operand.vmem [shape: f32[1,64], index: 2, kind: input, shape index: {}]
  %s3 = inlined_call_operand.vmem [shape: f32[256,32], index: 3, kind: input, shape index: {}]
  %s4 = inlined_call_operand.vmem [shape: bf16[32,32], index: 4, kind: input, shape index: {}]
  %s5 = inlined_call_operand.vmem [shape: f32[1,32], index: 5, kind: input, shape index: {}]
  %s6 = inlined_call_operand.vmem [shape: bf16[32,96], index: 6, kind: input, shape index: {}]
  %s7 = inlined_call_operand.vmem [shape: bf16[256,96], index: 7, kind: input, shape index: {}]
  %s8 = inlined_call_operand.vmem [shape: bf16[256,64], index: 8, kind: input, shape index: {}]
  %s9 = inlined_call_operand.vmem [shape: f32[256,64], index: 9, kind: output, shape index: {0}]
  %s10 = inlined_call_operand.vmem [shape: f32[256,32], index: 10, kind: output, shape index: {1}]
  %s11 = inlined_call_operand.vmem [shape: bf16[256,160], index: 11, kind: output, shape index: {2}]
  %12 = xla_tuple %s9, %s10, %s11
  %s13 = sld [smem:[#allocation0]]
  $region93: #{generative_step.9} parent=0
    _
  %s15 = ssub.s32 1, %s13
  %s16 = scalar_select 0, %s15, %s13
  loop: start=0, step=1, limit=4
  $region2: #{generative_step.9} parent=0 // loop_pre_header
    _
  $region3: #{generative_step.9} parent=0 // loop_header
    %s18 = sphi 0, %s22
    %p19 = scmp.ge.s32.totalorder %s18, 4
    %s25 = sphi 0, %s37
    %s26 = sphi 0, %s33
    %s27 = sphi 0, %s25
    %s28 = sphi 0, %s26
    %s29 = sphi 0, %s27
    %s30 = sphi 0, %s28
    %s42 = sphi 0, %s44
    %s45 = sphi 0, %s42
    %s46 = sphi 0, %s45
    %s62 = sphi 0, %s46
    %s68 = sphi 0, %s70
    %s71 = sphi 0, %s68
    %s72 = sphi 0, %s71
    %s88 = sphi 0, %s72
    %s92 = sphi 0, %s92
    %s94 = sphi 0, %s92
    %s95 = sphi 0, %s94
    %s109 = sphi 0, %s95
    %s115 = sphi 0, %s117
    %s118 = sphi 0, %s115
    %s119 = sphi 0, %s118
    %s135 = sphi 0, %s119
    %s139 = sphi 0, %s139
    %s141 = sphi 0, %s139
    %s142 = sphi 0, %s141
    %s156 = sphi 0, %s142
    %s160 = sphi 0, %s160
    %s162 = sphi 0, %s160
    %s163 = sphi 0, %s162
    %s177 = sphi 0, %s163
    %s181 = sphi 0, %s181
    %s183 = sphi 0, %s181
    %s184 = sphi 0, %s183
    %s198 = sphi 0, %s184
    %s204 = sphi 0, %s206
    %s207 = sphi 0, %s204
    %s208 = sphi 0, %s207
    %s224 = sphi 0, %s208
    %s230 = sphi 0, %s232
    %s233 = sphi 0, %s230
    %s234 = sphi 0, %s233
    %s250 = sphi 0, %s234
    %s256 = sphi 0, %s258
    %s259 = sphi 0, %s256
    %s260 = sphi 0, %s259
    %s276 = sphi 0, %s260
    %s282 = sphi 0, %s284
    %s285 = sphi 0, %s282
    %s286 = sphi 0, %s285
    %s302 = sphi 0, %s286
    %s308 = sphi 0, %s310
    %s311 = sphi 0, %s308
    %s312 = sphi 0, %s311
    %s328 = sphi 0, %s312
  $region4: #{generative_step.9} parent=0 // loop_header_branch
    %21 = sbr.rel (%p19) target = $region8
  $region5: #{generative_step.9} parent=0 // loop_body
    %s23 = ssub.s32 %s18, 1
    %s24 = ssub.s32 %s18, 2
    %s31 = sadd.s32 1, %s26
    %p32 = scmp.ge.s32.totalorder %s31, 1
    %s33 = scalar_select %p32, 0, %s31
    %s34 = sadd.s32 1, %s25
    %s35 = scalar_select %p32, %s34, %s25
    %p36 = scmp.ge.s32.totalorder %s35, 2
    %s37 = scalar_select %p36, 0, %s35
    %s38 = ssub.s32 %s25, %s37
    %s39 = ssub.s32 %s26, %s33
    %s40 = sor.u32 %s38, %s39
    %p41 = scmp.eq.s32.totalorder %s40, 0
    %s43 = sadd.s32 %s42, 1
    %s44 = scalar_select %p41, %s42, %s43
    %p47 = pneg %p41
    %p48 = scmp.eq.s32.totalorder %s18, 1
    %p49 = por %p47, %p48
    %p50 = scmp.ne.s32.totalorder %s42, %s45
    %p51 = scmp.eq.s32.totalorder %s18, 0
    %p52 = por %p50, %p51
    %p53 = scmp.ne.s32.totalorder %s42, %s45
    %p54 = scmp.eq.s32.totalorder %s23, 1
    %p55 = por %p53, %p54
    %p56 = scmp.ne.s32.totalorder %s45, %s46
    %p57 = scmp.eq.s32.totalorder %s23, 0
    %p58 = por %p56, %p57
    %p59 = scmp.ne.s32.totalorder %s45, %s46
    %p60 = scmp.eq.s32.totalorder %s24, 1
    %p61 = por %p59, %p60
    %p63 = scmp.ne.s32.totalorder %s46, %s62
    %p64 = scmp.eq.s32.totalorder %s24, 0
    %p65 = por %p63, %p64
    %s66 = ssub.s32 %s26, %s33
    %p67 = scmp.eq.s32.totalorder %s66, 0
    %s69 = sadd.s32 %s68, 1
    %s70 = scalar_select %p67, %s68, %s69
    %p73 = pneg %p67
    %p74 = scmp.eq.s32.totalorder %s18, 1
    %p75 = por %p73, %p74
    %p76 = scmp.ne.s32.totalorder %s68, %s71
    %p77 = scmp.eq.s32.totalorder %s18, 0
    %p78 = por %p76, %p77
    %p79 = scmp.ne.s32.totalorder %s68, %s71
    %p80 = scmp.eq.s32.totalorder %s23, 1
    %p81 = por %p79, %p80
    %p82 = scmp.ne.s32.totalorder %s71, %s72
    %p83 = scmp.eq.s32.totalorder %s23, 0
    %p84 = por %p82, %p83
    %p85 = scmp.ne.s32.totalorder %s71, %s72
    %p86 = scmp.eq.s32.totalorder %s24, 1
    %p87 = por %p85, %p86
    %p89 = scmp.ne.s32.totalorder %s72, %s88
    %p90 = scmp.eq.s32.totalorder %s24, 0
    %p91 = por %p89, %p90
    %s93 = sadd.s32 %s92, 1
    %p96 = scmp.eq.s32.totalorder %s18, 1
    %p97 = scmp.ne.s32.totalorder %s92, %s94
    %p98 = scmp.eq.s32.totalorder %s18, 0
    %p99 = por %p97, %p98
    %p100 = scmp.ne.s32.totalorder %s92, %s94
    %p101 = scmp.eq.s32.totalorder %s23, 1
    %p102 = por %p100, %p101
    %p103 = scmp.ne.s32.totalorder %s94, %s95
    %p104 = scmp.eq.s32.totalorder %s23, 0
    %p105 = por %p103, %p104
    %p106 = scmp.ne.s32.totalorder %s94, %s95
    %p107 = scmp.eq.s32.totalorder %s24, 1
    %p108 = por %p106, %p107
    %p110 = scmp.ne.s32.totalorder %s95, %s109
    %p111 = scmp.eq.s32.totalorder %s24, 0
    %p112 = por %p110, %p111
    %s113 = ssub.s32 %s25, %s37
    %p114 = scmp.eq.s32.totalorder %s113, 0
    %s116 = sadd.s32 %s115, 1
    %s117 = scalar_select %p114, %s115, %s116
    %p120 = pneg %p114
    %p121 = scmp.eq.s32.totalorder %s18, 1
    %p122 = por %p120, %p121
    %p123 = scmp.ne.s32.totalorder %s115, %s118
    %p124 = scmp.eq.s32.totalorder %s18, 0
    %p125 = por %p123, %p124
    %p126 = scmp.ne.s32.totalorder %s115, %s118
    %p127 = scmp.eq.s32.totalorder %s23, 1
    %p128 = por %p126, %p127
    %p129 = scmp.ne.s32.totalorder %s118, %s119
    %p130 = scmp.eq.s32.totalorder %s23, 0
    %p131 = por %p129, %p130
    %p132 = scmp.ne.s32.totalorder %s118, %s119
    %p133 = scmp.eq.s32.totalorder %s24, 1
    %p134 = por %p132, %p133
    %p136 = scmp.ne.s32.totalorder %s119, %s135
    %p137 = scmp.eq.s32.totalorder %s24, 0
    %p138 = por %p136, %p137
    %s140 = sadd.s32 %s139, 1
    %p143 = scmp.eq.s32.totalorder %s18, 1
    %p144 = scmp.ne.s32.totalorder %s139, %s141
    %p145 = scmp.eq.s32.totalorder %s18, 0
    %p146 = por %p144, %p145
    %p147 = scmp.ne.s32.totalorder %s139, %s141
    %p148 = scmp.eq.s32.totalorder %s23, 1
    %p149 = por %p147, %p148
    %p150 = scmp.ne.s32.totalorder %s141, %s142
    %p151 = scmp.eq.s32.totalorder %s23, 0
    %p152 = por %p150, %p151
    %p153 = scmp.ne.s32.totalorder %s141, %s142
    %p154 = scmp.eq.s32.totalorder %s24, 1
    %p155 = por %p153, %p154
    %p157 = scmp.ne.s32.totalorder %s142, %s156
    %p158 = scmp.eq.s32.totalorder %s24, 0
    %p159 = por %p157, %p158
    %s161 = sadd.s32 %s160, 1
    %p164 = scmp.eq.s32.totalorder %s18, 1
    %p165 = scmp.ne.s32.totalorder %s160, %s162
    %p166 = scmp.eq.s32.totalorder %s18, 0
    %p167 = por %p165, %p166
    %p168 = scmp.ne.s32.totalorder %s160, %s162
    %p169 = scmp.eq.s32.totalorder %s23, 1
    %p170 = por %p168, %p169
    %p171 = scmp.ne.s32.totalorder %s162, %s163
    %p172 = scmp.eq.s32.totalorder %s23, 0
    %p173 = por %p171, %p172
    %p174 = scmp.ne.s32.totalorder %s162, %s163
    %p175 = scmp.eq.s32.totalorder %s24, 1
    %p176 = por %p174, %p175
    %p178 = scmp.ne.s32.totalorder %s163, %s177
    %p179 = scmp.eq.s32.totalorder %s24, 0
    %p180 = por %p178, %p179
    %s182 = sadd.s32 %s181, 1
    %p185 = scmp.eq.s32.totalorder %s18, 1
    %p186 = scmp.ne.s32.totalorder %s181, %s183
    %p187 = scmp.eq.s32.totalorder %s18, 0
    %p188 = por %p186, %p187
    %p189 = scmp.ne.s32.totalorder %s181, %s183
    %p190 = scmp.eq.s32.totalorder %s23, 1
    %p191 = por %p189, %p190
    %p192 = scmp.ne.s32.totalorder %s183, %s184
    %p193 = scmp.eq.s32.totalorder %s23, 0
    %p194 = por %p192, %p193
    %p195 = scmp.ne.s32.totalorder %s183, %s184
    %p196 = scmp.eq.s32.totalorder %s24, 1
    %p197 = por %p195, %p196
    %p199 = scmp.ne.s32.totalorder %s184, %s198
    %p200 = scmp.eq.s32.totalorder %s24, 0
    %p201 = por %p199, %p200
    %s202 = ssub.s32 %s25, %s37
    %p203 = scmp.eq.s32.totalorder %s202, 0
    %s205 = sadd.s32 %s204, 1
    %s206 = scalar_select %p203, %s204, %s205
    %p209 = pneg %p203
    %p210 = scmp.eq.s32.totalorder %s18, 1
    %p211 = por %p209, %p210
    %p212 = scmp.ne.s32.totalorder %s204, %s207
    %p213 = scmp.eq.s32.totalorder %s18, 0
    %p214 = por %p212, %p213
    %p215 = scmp.ne.s32.totalorder %s204, %s207
    %p216 = scmp.eq.s32.totalorder %s23, 1
    %p217 = por %p215, %p216
    %p218 = scmp.ne.s32.totalorder %s207, %s208
    %p219 = scmp.eq.s32.totalorder %s23, 0
    %p220 = por %p218, %p219
    %p221 = scmp.ne.s32.totalorder %s207, %s208
    %p222 = scmp.eq.s32.totalorder %s24, 1
    %p223 = por %p221, %p222
    %p225 = scmp.ne.s32.totalorder %s208, %s224
    %p226 = scmp.eq.s32.totalorder %s24, 0
    %p227 = por %p225, %p226
    %s228 = ssub.s32 %s25, %s37
    %p229 = scmp.eq.s32.totalorder %s228, 0
    %s231 = sadd.s32 %s230, 1
    %s232 = scalar_select %p229, %s230, %s231
    %p235 = pneg %p229
    %p236 = scmp.eq.s32.totalorder %s18, 1
    %p237 = por %p235, %p236
    %p238 = scmp.ne.s32.totalorder %s230, %s233
    %p239 = scmp.eq.s32.totalorder %s18, 0
    %p240 = por %p238, %p239
    %p241 = scmp.ne.s32.totalorder %s230, %s233
    %p242 = scmp.eq.s32.totalorder %s23, 1
    %p243 = por %p241, %p242
    %p244 = scmp.ne.s32.totalorder %s233, %s234
    %p245 = scmp.eq.s32.totalorder %s23, 0
    %p246 = por %p244, %p245
    %p247 = scmp.ne.s32.totalorder %s233, %s234
    %p248 = scmp.eq.s32.totalorder %s24, 1
    %p249 = por %p247, %p248
    %p251 = scmp.ne.s32.totalorder %s234, %s250
    %p252 = scmp.eq.s32.totalorder %s24, 0
    %p253 = por %p251, %p252
    %s254 = ssub.s32 %s25, %s37
    %p255 = scmp.eq.s32.totalorder %s254, 0
    %s257 = sadd.s32 %s256, 1
    %s258 = scalar_select %p255, %s256, %s257
    %p261 = pneg %p255
    %p262 = scmp.eq.s32.totalorder %s18, 1
    %p263 = por %p261, %p262
    %p264 = scmp.ne.s32.totalorder %s256, %s259
    %p265 = scmp.eq.s32.totalorder %s18, 0
    %p266 = por %p264, %p265
    %p267 = scmp.ne.s32.totalorder %s256, %s259
    %p268 = scmp.eq.s32.totalorder %s23, 1
    %p269 = por %p267, %p268
    %p270 = scmp.ne.s32.totalorder %s259, %s260
    %p271 = scmp.eq.s32.totalorder %s23, 0
    %p272 = por %p270, %p271
    %p273 = scmp.ne.s32.totalorder %s259, %s260
    %p274 = scmp.eq.s32.totalorder %s24, 1
    %p275 = por %p273, %p274
    %p277 = scmp.ne.s32.totalorder %s260, %s276
    %p278 = scmp.eq.s32.totalorder %s24, 0
    %p279 = por %p277, %p278
    %s280 = ssub.s32 %s25, %s37
    %p281 = scmp.eq.s32.totalorder %s280, 0
    %s283 = sadd.s32 %s282, 1
    %s284 = scalar_select %p281, %s282, %s283
    %p287 = pneg %p281
    %p288 = scmp.eq.s32.totalorder %s18, 1
    %p289 = por %p287, %p288
    %p290 = scmp.ne.s32.totalorder %s282, %s285
    %p291 = scmp.eq.s32.totalorder %s18, 0
    %p292 = por %p290, %p291
    %p293 = scmp.ne.s32.totalorder %s282, %s285
    %p294 = scmp.eq.s32.totalorder %s23, 1
    %p295 = por %p293, %p294
    %p296 = scmp.ne.s32.totalorder %s285, %s286
    %p297 = scmp.eq.s32.totalorder %s23, 0
    %p298 = por %p296, %p297
    %p299 = scmp.ne.s32.totalorder %s285, %s286
    %p300 = scmp.eq.s32.totalorder %s24, 1
    %p301 = por %p299, %p300
    %p303 = scmp.ne.s32.totalorder %s286, %s302
    %p304 = scmp.eq.s32.totalorder %s24, 0
    %p305 = por %p303, %p304
    %s306 = ssub.s32 %s25, %s37
    %p307 = scmp.eq.s32.totalorder %s306, 0
    %s309 = sadd.s32 %s308, 1
    %s310 = scalar_select %p307, %s308, %s309
    %p313 = pneg %p307
    %p314 = scmp.eq.s32.totalorder %s18, 1
    %p315 = por %p313, %p314
    %p316 = scmp.ne.s32.totalorder %s308, %s311
    %p317 = scmp.eq.s32.totalorder %s18, 0
    %p318 = por %p316, %p317
    %p319 = scmp.ne.s32.totalorder %s308, %s311
    %p320 = scmp.eq.s32.totalorder %s23, 1
    %p321 = por %p319, %p320
    %p322 = scmp.ne.s32.totalorder %s311, %s312
    %p323 = scmp.eq.s32.totalorder %s23, 0
    %p324 = por %p322, %p323
    %p325 = scmp.ne.s32.totalorder %s311, %s312
    %p326 = scmp.eq.s32.totalorder %s24, 1
    %p327 = por %p325, %p326
    %p329 = scmp.ne.s32.totalorder %s312, %s328
    %p330 = scmp.eq.s32.totalorder %s24, 0
    %p331 = por %p329, %p330
    %p332 = scmp.le.s32.totalorder 1, %s18
    %p333 = scmp.lt.s32.totalorder %s18, 3
    %p334 = pnand %p332, %p333
    %p335 = pneg %p334
    // Predicated region
    $region9: #{generative_step.9} parent=5 // pred_check
      _
    $region10: #{generative_step.9} parent=5 // pred_check_branch
      %337 = sbr.rel (%p334) target = $region12
    $region11: #{generative_step.9} parent=5 // pred_region
      %s338 = ssub.s32 %s18, 1
      // Predicated region
      $region13: #{generative_step.9} parent=11 // pred_check
        %p339 = pneg %p84
      $region14: #{generative_step.9} parent=11 // pred_check_branch
        %341 = sbr.rel (%p339) target = $region16
      $region15: #{generative_step.9} parent=11 // pred_region
        %s342 = smul.u32 32, %s28
        %p343 = scmp.lt.s32.totalorder %s342, 31
        %s344 = scalar_select %p343, %s342, 31
        %s345 = smul.addr %s344, 4
        %s346 = scalar_lea.vmem %s1, %s345
        %s347 = smul.u32 32, %s28
      $region16: #{generative_step.9} parent=11 // pred_fallthru
        _
      // Predicated region
      $region17: #{generative_step.9} parent=11 // pred_check
        %p348 = pneg %p105
      $region18: #{generative_step.9} parent=11 // pred_check_branch
        %350 = sbr.rel (%p348) target = $region20
      $region19: #{generative_step.9} parent=11 // pred_region
        _
      $region20: #{generative_step.9} parent=11 // pred_fallthru
        _
      // Predicated region
      $region21: #{generative_step.9} parent=11 // pred_check
        %p351 = pneg %p152
      $region22: #{generative_step.9} parent=11 // pred_check_branch
        %353 = sbr.rel (%p351) target = $region24
      $region23: #{generative_step.9} parent=11 // pred_region
        _
      $region24: #{generative_step.9} parent=11 // pred_fallthru
        _
      // Predicated region
      $region25: #{generative_step.9} parent=11 // pred_check
        %p354 = pneg %p173
      $region26: #{generative_step.9} parent=11 // pred_check_branch
        %356 = sbr.rel (%p354) target = $region28
      $region27: #{generative_step.9} parent=11 // pred_region
        _
      $region28: #{generative_step.9} parent=11 // pred_fallthru
        _
      // Predicated region
      $region29: #{generative_step.9} parent=11 // pred_check
        %p357 = pneg %p194
      $region30: #{generative_step.9} parent=11 // pred_check_branch
        %359 = sbr.rel (%p357) target = $region32
      $region31: #{generative_step.9} parent=11 // pred_region
        _
      $region32: #{generative_step.9} parent=11 // pred_fallthru
        _
    $region12: #{generative_step.9} parent=5 // pred_fallthru
      _
    %p360 = scmp.lt.s32.totalorder %s18, 2
    // Predicated region
    $region33: #{generative_step.9} parent=5 // pred_check
      %p361 = pneg %p360
    $region34: #{generative_step.9} parent=5 // pred_check_branch
      %363 = sbr.rel (%p361) target = $region36
    $region35: #{generative_step.9} parent=5 // pred_region
      // Predicated region
      $region37: #{generative_step.9} parent=35 // pred_check
        %p364 = pneg %p52
      $region38: #{generative_step.9} parent=35 // pred_check_branch
        %366 = sbr.rel (%p364) target = $region40
      $region39: #{generative_step.9} parent=35 // pred_region
        %s367 = smul.u32 16, %s25
        %s368 = smul.u32 2, %s26
        %p369 = scmp.lt.s32.totalorder %s367, 31
        %s370 = scalar_select %p369, %s367, 31
        %p371 = scmp.lt.s32.totalorder %s368, 1
        %s372 = scalar_select %p371, %s368, 1
        %s373 = smul.addr %s370, 2
        %s374 = sadd.s32 %s372, %s373
        %s375 = smul.addr %s374, 4
        %s376 = scalar_lea.vmem %s0, %s375
        %s377 = smul.u32 16, %s25
        %s378 = smul.u32 2, %s26
      $region40: #{generative_step.9} parent=35 // pred_fallthru
        _
      // Predicated region
      $region41: #{generative_step.9} parent=35 // pred_check
        %p379 = pneg %p125
      $region42: #{generative_step.9} parent=35 // pred_check_branch
        %381 = sbr.rel (%p379) target = $region44
      $region43: #{generative_step.9} parent=35 // pred_region
        %s382 = smul.u32 16, %s25
        %p383 = scmp.lt.s32.totalorder %s382, 31
        %s384 = scalar_select %p383, %s382, 31
        %s385 = smul.addr %s384, 8
        %s386 = scalar_lea.vmem %s3, %s385
        %s387 = smul.u32 16, %s25
      $region44: #{generative_step.9} parent=35 // pred_fallthru
        _
      // Predicated region
      $region45: #{generative_step.9} parent=35 // pred_check
        %p388 = pneg %p214
      $region46: #{generative_step.9} parent=35 // pred_check_branch
        %390 = sbr.rel (%p388) target = $region48
      $region47: #{generative_step.9} parent=35 // pred_region
        %s391 = smul.u32 16, %s25
        %p392 = scmp.lt.s32.totalorder %s391, 31
        %s393 = scalar_select %p392, %s391, 31
        %s394 = smul.addr %s393, 4
        %s395 = scalar_lea.vmem %s7, %s394
        %s396 = smul.u32 16, %s25
      $region48: #{generative_step.9} parent=35 // pred_fallthru
        _
      // Predicated region
      $region49: #{generative_step.9} parent=35 // pred_check
        %p397 = pneg %p240
      $region50: #{generative_step.9} parent=35 // pred_check_branch
        %399 = sbr.rel (%p397) target = $region52
      $region51: #{generative_step.9} parent=35 // pred_region
        %s400 = smul.u32 16, %s25
        %p401 = scmp.lt.s32.totalorder %s400, 31
        %s402 = scalar_select %p401, %s400, 31
        %s403 = smul.addr %s402, 4
        %s404 = scalar_lea.vmem %s8, %s403
        %s405 = smul.u32 16, %s25
      $region52: #{generative_step.9} parent=35 // pred_fallthru
        _
    $region36: #{generative_step.9} parent=5 // pred_fallthru
      _
    %p406 = scmp.le.s32.totalorder 1, %s18
    %p407 = scmp.lt.s32.totalorder %s18, 3
    %p408 = pnand %p406, %p407
    %p409 = pneg %p408
    // Predicated region
    $region53: #{generative_step.9} parent=5 // pred_check
      _
    $region54: #{generative_step.9} parent=5 // pred_check_branch
      %411 = sbr.rel (%p408) target = $region56
    $region55: #{generative_step.9} parent=5 // pred_region
      %s412 = ssub.s32 %s18, 1
      %s413 = smul.u32 16, %s27
      %s414 = smul.u32 2, %s28
      %p415 = scmp.lt.s32.totalorder %s413, 31
      %s416 = scalar_select %p415, %s413, 31
      %p417 = scmp.lt.s32.totalorder %s414, 1
      %s418 = scalar_select %p417, %s414, 1
      %s419 = smul.addr %s416, 2
      %s420 = sadd.s32 %s418, %s419
      %s421 = smul.addr %s420, 4
      %s422 = scalar_lea.vmem %s0, %s421
      %p423 = pneg %p58
      %p424 = pneg %p55
      %s425 = smul.u32 32, %s28
      %p426 = scmp.lt.s32.totalorder %s425, 31
      %s427 = scalar_select %p426, %s425, 31
      %s428 = smul.addr %s427, 4
      %s429 = scalar_lea.vmem %s1, %s428
      %p430 = pneg %p84
      %p431 = pneg %p81
      %p432 = pneg %p105
      %p433 = pneg %p102
      %s434 = smul.u32 16, %s27
      %p435 = scmp.lt.s32.totalorder %s434, 31
      %s436 = scalar_select %p435, %s434, 31
      %s437 = smul.addr %s436, 8
      %s438 = scalar_lea.vmem %s3, %s437
      %p439 = pneg %p131
      %p440 = pneg %p128
      %p441 = pneg %p152
      %p442 = pneg %p149
      %p443 = pneg %p173
      %p444 = pneg %p170
      %p445 = pneg %p194
      %p446 = pneg %p191
      %s447 = smul.u32 16, %s27
      %p448 = scmp.lt.s32.totalorder %s447, 31
      %s449 = scalar_select %p448, %s447, 31
      %s450 = smul.addr %s449, 4
      %s451 = scalar_lea.vmem %s7, %s450
      %p452 = pneg %p220
      %p453 = pneg %p217
      %s454 = smul.u32 16, %s27
      %p455 = scmp.lt.s32.totalorder %s454, 31
      %s456 = scalar_select %p455, %s454, 31
      %s457 = smul.addr %s456, 4
      %s458 = scalar_lea.vmem %s8, %s457
      %p459 = pneg %p246
      %p460 = pneg %p243
      %p461 = pneg %p272
      %p462 = pneg %p269
      %s463 = smul.u32 16, %s27
      %p464 = scmp.lt.s32.totalorder %s463, 31
      %s465 = scalar_select %p464, %s463, 31
      %s466 = smul.addr %s465, 8
      %s467 = scalar_lea.vmem %s9, %s466
      %p468 = pneg %p298
      %p469 = pneg %p295
      %s470 = smul.u32 16, %s27
      %p471 = scmp.lt.s32.totalorder %s470, 31
      %s472 = scalar_select %p471, %s470, 31
      %s473 = smul.addr %s472, 8
      %s474 = scalar_lea.vmem %s10, %s473
      %p475 = pneg %p324
      %p476 = pneg %p321
      %s477 = smul.u32 16, %s27
      %p478 = scmp.lt.s32.totalorder %s477, 31
      %s479 = scalar_select %p478, %s477, 31
      %s480 = smul.addr %s479, 2
      %s481 = smul.addr %s480, 4
      %s482 = scalar_lea.vmem %s11, %s481
      %s483 = smul.u32 16, %s27
      %s484 = smul.u32 2, %s28
      %p485 = scmp.lt.s32.totalorder %s483, 31
      %s486 = scalar_select %p485, %s483, 31
      %p487 = scmp.lt.s32.totalorder %s484, 1
      %s488 = scalar_select %p487, %s484, 1
      %s489 = smul.addr %s486, 2
      %s490 = sadd.s32 %s488, %s489
      %s491 = smul.addr %s490, 4
      %s492 = scalar_lea.vmem %s0, %s491
      %s493 = smul.u32 16, %s27
      %s494 = smul.u32 2, %s28
      %s495 = smul.u32 32, %s28
      %p496 = scmp.lt.s32.totalorder %s495, 31
      %s497 = scalar_select %p496, %s495, 31
      %s498 = smul.addr %s497, 4
      %s499 = scalar_lea.vmem %s1, %s498
      %s500 = smul.u32 32, %s28
      %s501 = smul.u32 16, %s27
      %p502 = scmp.lt.s32.totalorder %s501, 31
      %s503 = scalar_select %p502, %s501, 31
      %s504 = smul.addr %s503, 8
      %s505 = scalar_lea.vmem %s3, %s504
      %s506 = smul.u32 16, %s27
      %s507 = smul.u32 16, %s27
      %p508 = scmp.lt.s32.totalorder %s507, 31
      %s509 = scalar_select %p508, %s507, 31
      %s510 = smul.addr %s509, 4
      %s511 = scalar_lea.vmem %s7, %s510
      %s512 = smul.u32 16, %s27
      %s513 = smul.u32 16, %s27
      %p514 = scmp.lt.s32.totalorder %s513, 31
      %s515 = scalar_select %p514, %s513, 31
      %s516 = smul.addr %s515, 4
      %s517 = scalar_lea.vmem %s8, %s516
      %s518 = smul.u32 16, %s27
      %s519 = smul.u32 16, %s27
      %p520 = scmp.lt.s32.totalorder %s519, 31
      %s521 = scalar_select %p520, %s519, 31
      %s522 = smul.addr %s521, 8
      %s523 = scalar_lea.vmem %s9, %s522
      %s524 = smul.u32 16, %s27
      %s525 = smul.u32 16, %s27
      %p526 = scmp.lt.s32.totalorder %s525, 31
      %s527 = scalar_select %p526, %s525, 31
      %s528 = smul.addr %s527, 8
      %s529 = scalar_lea.vmem %s10, %s528
      %s530 = smul.u32 16, %s27
      %s531 = smul.u32 16, %s27
      %p532 = scmp.lt.s32.totalorder %s531, 31
      %s533 = scalar_select %p532, %s531, 31
      %s534 = smul.addr %s533, 2
      %s535 = smul.addr %s534, 4
      %s536 = scalar_lea.vmem %s11, %s535
      %s537 = smul.u32 16, %s27
      %p539 = scmp.eq.s32.totalorder %s28, 0
      // Predicated region
      $region57: #{generative_step.9} parent=55 // pred_check
        %p540 = pneg %p539
      $region58: #{generative_step.9} parent=55 // pred_check_branch
        %542 = sbr.rel (%p540) target = $region60
      $region59: #{generative_step.9} parent=55 // pred_region
        %vm543 = vcmask 523264
        %544 = vst.msk [vmem:[#allocation2] sm:$0xff] %vm543, 0.0
        %545 = vst.msk [vmem:[#allocation2 + $0x8] sm:$0xff] %vm543, 0.0
        %546 = vst.msk [vmem:[#allocation2 + $0x10] sm:$0xff] %vm543, 0.0
        %547 = vst.msk [vmem:[#allocation2 + $0x18] sm:$0xff] %vm543, 0.0
        %548 = vst.msk [vmem:[#allocation2 + $0x20] sm:$0xff] %vm543, 0.0
        %549 = vst.msk [vmem:[#allocation2 + $0x28] sm:$0xff] %vm543, 0.0
        %550 = vst.msk [vmem:[#allocation2 + $0x30] sm:$0xff] %vm543, 0.0
        %551 = vst.msk [vmem:[#allocation2 + $0x38] sm:$0xff] %vm543, 0.0
        %552 = vst.msk [vmem:[#allocation2 + $0x40] sm:$0xff] %vm543, 0.0
        %553 = vst.msk [vmem:[#allocation2 + $0x48] sm:$0xff] %vm543, 0.0
        %554 = vst.msk [vmem:[#allocation2 + $0x50] sm:$0xff] %vm543, 0.0
        %555 = vst.msk [vmem:[#allocation2 + $0x58] sm:$0xff] %vm543, 0.0
        %556 = vst.msk [vmem:[#allocation2 + $0x60] sm:$0xff] %vm543, 0.0
        %557 = vst.msk [vmem:[#allocation2 + $0x68] sm:$0xff] %vm543, 0.0
        %558 = vst.msk [vmem:[#allocation2 + $0x70] sm:$0xff] %vm543, 0.0
        %559 = vst.msk [vmem:[#allocation2 + $0x78] sm:$0xff] %vm543, 0.0
      $region60: #{generative_step.9} parent=55 // pred_fallthru
        _
      %v560 = vld [vmem:[#allocation2] sm:$0xff]
      %v561 = vld [vmem:[#allocation2 + $0x8] sm:$0xff]
      %v562 = vld [vmem:[#allocation2 + $0x10] sm:$0xff]
      %v563 = vld [vmem:[#allocation2 + $0x18] sm:$0xff]
      %v564 = vld [vmem:[#allocation2 + $0x20] sm:$0xff]
      %v565 = vld [vmem:[#allocation2 + $0x28] sm:$0xff]
      %v566 = vld [vmem:[#allocation2 + $0x30] sm:$0xff]
      %v567 = vld [vmem:[#allocation2 + $0x38] sm:$0xff]
      %v568 = vld [vmem:[#allocation2 + $0x40] sm:$0xff]
      %v569 = vld [vmem:[#allocation2 + $0x48] sm:$0xff]
      %v570 = vld [vmem:[#allocation2 + $0x50] sm:$0xff]
      %v571 = vld [vmem:[#allocation2 + $0x58] sm:$0xff]
      %v572 = vld [vmem:[#allocation2 + $0x60] sm:$0xff]
      %v573 = vld [vmem:[#allocation2 + $0x68] sm:$0xff]
      %v574 = vld [vmem:[#allocation2 + $0x70] sm:$0xff]
      %v575 = vld [vmem:[#allocation2 + $0x78] sm:$0xff]
      %v576 = vld [vmem:[%s492] sm:$0xff]
      %v577 = vld [vmem:[%s492 + $0x8] sm:$0xff]
      %v578 = vld [vmem:[%s492 + $0x10] sm:$0xff]
      %v579 = vld [vmem:[%s492 + $0x18] sm:$0xff]
      %v580 = vld [vmem:[%s492 + $0x20] sm:$0xff]
      %v581 = vld [vmem:[%s492 + $0x28] sm:$0xff]
      %v582 = vld [vmem:[%s492 + $0x30] sm:$0xff]
      %v583 = vld [vmem:[%s492 + $0x38] sm:$0xff]
      %v584 = vld [vmem:[%s492 + $0x40] sm:$0xff]
      %v585 = vld [vmem:[%s492 + $0x48] sm:$0xff]
      %v586 = vld [vmem:[%s492 + $0x50] sm:$0xff]
      %v587 = vld [vmem:[%s492 + $0x58] sm:$0xff]
      %v588 = vld [vmem:[%s492 + $0x60] sm:$0xff]
      %v589 = vld [vmem:[%s492 + $0x68] sm:$0xff]
      %v590 = vld [vmem:[%s492 + $0x70] sm:$0xff]
      %v591 = vld [vmem:[%s492 + $0x78] sm:$0xff]
      %v592 = vld [vmem:[%s499] sm:$0xf]
      %v593 = vld [vmem:[%s499 + $0x4] sm:$0xf]
      %v594 = vld [vmem:[%s499 + $0x8] sm:$0xf]
      %v595 = vld [vmem:[%s499 + $0xc] sm:$0xf]
      %v596 = vld [vmem:[%s499 + $0x10] sm:$0xf]
      %v597 = vld [vmem:[%s499 + $0x14] sm:$0xf]
      %v598 = vld [vmem:[%s499 + $0x18] sm:$0xf]
      %v599 = vld [vmem:[%s499 + $0x1c] sm:$0xf]
      %v600 = vld [vmem:[%s499 + $0x20] sm:$0xf]
      %v601 = vld [vmem:[%s499 + $0x24] sm:$0xf]
      %v602 = vld [vmem:[%s499 + $0x28] sm:$0xf]
      %v603 = vld [vmem:[%s499 + $0x2c] sm:$0xf]
      %v604 = vld [vmem:[%s499 + $0x30] sm:$0xf]
      %v605 = vld [vmem:[%s499 + $0x34] sm:$0xf]
      %v606 = vld [vmem:[%s499 + $0x38] sm:$0xf]
      %v607 = vld [vmem:[%s499 + $0x3c] sm:$0xf]
      %v608 = vld [vmem:[%s499 + $0x40] sm:$0xf]
      %v609 = vld [vmem:[%s499 + $0x44] sm:$0xf]
      %v610 = vld [vmem:[%s499 + $0x48] sm:$0xf]
      %v611 = vld [vmem:[%s499 + $0x4c] sm:$0xf]
      %v612 = vld [vmem:[%s499 + $0x50] sm:$0xf]
      %v613 = vld [vmem:[%s499 + $0x54] sm:$0xf]
      %v614 = vld [vmem:[%s499 + $0x58] sm:$0xf]
      %v615 = vld [vmem:[%s499 + $0x5c] sm:$0xf]
      %v616 = vld [vmem:[%s499 + $0x60] sm:$0xf]
      %v617 = vld [vmem:[%s499 + $0x64] sm:$0xf]
      %v618 = vld [vmem:[%s499 + $0x68] sm:$0xf]
      %v619 = vld [vmem:[%s499 + $0x6c] sm:$0xf]
      %v620 = vld [vmem:[%s499 + $0x70] sm:$0xf]
      %v621 = vld [vmem:[%s499 + $0x74] sm:$0xf]
      %v622 = vld [vmem:[%s499 + $0x78] sm:$0xf]
      %v623 = vld [vmem:[%s499 + $0x7c] sm:$0xf]
      %v640 = vunpack.c.l.b16 %v576
      %v641 = vunpack.c.h.b16 %v576
      %v642 = vunpack.c.l.b16 %v577
      %v643 = vunpack.c.h.b16 %v577
      %v644 = vunpack.c.l.b16 %v578
      %v645 = vunpack.c.h.b16 %v578
      %v646 = vunpack.c.l.b16 %v579
      %v647 = vunpack.c.h.b16 %v579
      %v648 = vunpack.c.l.b16 %v580
      %v649 = vunpack.c.h.b16 %v580
      %v650 = vunpack.c.l.b16 %v581
      %v651 = vunpack.c.h.b16 %v581
      %v652 = vunpack.c.l.b16 %v582
      %v653 = vunpack.c.h.b16 %v582
      %v654 = vunpack.c.l.b16 %v583
      %v655 = vunpack.c.h.b16 %v583
      %v656 = vunpack.c.l.b16 %v584
      %v657 = vunpack.c.h.b16 %v584
      %v658 = vunpack.c.l.b16 %v585
      %v659 = vunpack.c.h.b16 %v585
      %v660 = vunpack.c.l.b16 %v586
      %v661 = vunpack.c.h.b16 %v586
      %v662 = vunpack.c.l.b16 %v587
      %v663 = vunpack.c.h.b16 %v587
      %v664 = vunpack.c.l.b16 %v588
      %v665 = vunpack.c.h.b16 %v588
      %v666 = vunpack.c.l.b16 %v589
      %v667 = vunpack.c.h.b16 %v589
      %v668 = vunpack.c.l.b16 %v590
      %v669 = vunpack.c.h.b16 %v590
      %v670 = vunpack.c.l.b16 %v591
      %v671 = vunpack.c.h.b16 %v591
      %v672 = vpack.c.b16 %v642, %v640
      %v673 = vpack.c.b16 %v643, %v641
      %v674 = vpack.c.b16 %v646, %v644
      %v675 = vpack.c.b16 %v647, %v645
      %v676 = vpack.c.b16 %v650, %v648
      %v677 = vpack.c.b16 %v651, %v649
      %v678 = vpack.c.b16 %v654, %v652
      %v679 = vpack.c.b16 %v655, %v653
      %v680 = vpack.c.b16 %v658, %v656
      %v681 = vpack.c.b16 %v659, %v657
      %v682 = vpack.c.b16 %v662, %v660
      %v683 = vpack.c.b16 %v663, %v661
      %v684 = vpack.c.b16 %v666, %v664
      %v685 = vpack.c.b16 %v667, %v665
      %v686 = vpack.c.b16 %v670, %v668
      %v687 = vpack.c.b16 %v671, %v669
      %v736 = vunpack.c.l.b16 %v592
      %v737 = vunpack.c.l.b16 %v593
      %v738 = vunpack.c.l.b16 %v594
      %v739 = vunpack.c.l.b16 %v595
      %v740 = vunpack.c.l.b16 %v596
      %v741 = vunpack.c.l.b16 %v597
      %v742 = vunpack.c.l.b16 %v598
      %v743 = vunpack.c.l.b16 %v599
      %v744 = vunpack.c.l.b16 %v600
      %v745 = vunpack.c.l.b16 %v601
      %v746 = vunpack.c.l.b16 %v602
      %v747 = vunpack.c.l.b16 %v603
      %v748 = vunpack.c.l.b16 %v604
      %v749 = vunpack.c.l.b16 %v605
      %v750 = vunpack.c.l.b16 %v606
      %v751 = vunpack.c.l.b16 %v607
      %v752 = vunpack.c.l.b16 %v608
      %v753 = vunpack.c.l.b16 %v609
      %v754 = vunpack.c.l.b16 %v610
      %v755 = vunpack.c.l.b16 %v611
      %v756 = vunpack.c.l.b16 %v612
      %v757 = vunpack.c.l.b16 %v613
      %v758 = vunpack.c.l.b16 %v614
      %v759 = vunpack.c.l.b16 %v615
      %v760 = vunpack.c.l.b16 %v616
      %v761 = vunpack.c.l.b16 %v617
      %v762 = vunpack.c.l.b16 %v618
      %v763 = vunpack.c.l.b16 %v619
      %v764 = vunpack.c.l.b16 %v620
      %v765 = vunpack.c.l.b16 %v621
      %v766 = vunpack.c.l.b16 %v622
      %v767 = vunpack.c.l.b16 %v623
      %v768 = vpack.c.b16 %v737, %v736
      %v769 = vpack.c.b16 %v739, %v738
      %v770 = vpack.c.b16 %v741, %v740
      %v771 = vpack.c.b16 %v743, %v742
      %v772 = vpack.c.b16 %v745, %v744
      %v773 = vpack.c.b16 %v747, %v746
      %v774 = vpack.c.b16 %v749, %v748
      %v775 = vpack.c.b16 %v751, %v750
      %v776 = vpack.c.b16 %v753, %v752
      %v777 = vpack.c.b16 %v755, %v754
      %v778 = vpack.c.b16 %v757, %v756
      %v779 = vpack.c.b16 %v759, %v758
      %v780 = vpack.c.b16 %v761, %v760
      %v781 = vpack.c.b16 %v763, %v762
      %v782 = vpack.c.b16 %v765, %v764
      %v783 = vpack.c.b16 %v767, %v766
      %800 = vmatpush.bf16.msra.mxu0 %v775
      %801 = vmatpush.bf16.msra.mxu0 %v774
      %802 = vmatpush.bf16.msra.mxu0 %v773
      %803 = vmatpush.bf16.msra.mxu0 %v772
      %804 = vmatpush.bf16.msra.mxu0 %v771
      %805 = vmatpush.bf16.msra.mxu0 %v770
      %806 = vmatpush.bf16.msra.mxu0 %v769
      %807 = vmatpush.bf16.msra.mxu0 %v768
      %808 = vmatmul.bf16.gmra.mxu0 %v672
      %v809 = vpop.f32.mrf.mxu0
      %v810 = vadd.f32 0.0, %v809
      %v811 = vpop.f32.mrf.mxu0
      %v812 = vadd.f32 0.0, %v811
      %813 = vmatmul.bf16.gmra.mxu0 %v674
      %v814 = vpop.f32.mrf.mxu0
      %v815 = vadd.f32 0.0, %v814
      %v816 = vpop.f32.mrf.mxu0
      %v817 = vadd.f32 0.0, %v816
      %818 = vmatmul.bf16.gmra.mxu0 %v676
      %v819 = vpop.f32.mrf.mxu0
      %v820 = vadd.f32 0.0, %v819
      %v821 = vpop.f32.mrf.mxu0
      %v822 = vadd.f32 0.0, %v821
      %823 = vmatmul.bf16.gmra.mxu0 %v678
      %v824 = vpop.f32.mrf.mxu0
      %v825 = vadd.f32 0.0, %v824
      %v826 = vpop.f32.mrf.mxu0
      %v827 = vadd.f32 0.0, %v826
      %828 = vmatmul.bf16.gmra.mxu0 %v680
      %v829 = vpop.f32.mrf.mxu0
      %v830 = vadd.f32 0.0, %v829
      %v831 = vpop.f32.mrf.mxu0
      %v832 = vadd.f32 0.0, %v831
      %833 = vmatmul.bf16.gmra.mxu0 %v682
      %v834 = vpop.f32.mrf.mxu0
      %v835 = vadd.f32 0.0, %v834
      %v836 = vpop.f32.mrf.mxu0
      %v837 = vadd.f32 0.0, %v836
      %838 = vmatmul.bf16.gmra.mxu0 %v684
      %v839 = vpop.f32.mrf.mxu0
      %v840 = vadd.f32 0.0, %v839
      %v841 = vpop.f32.mrf.mxu0
      %v842 = vadd.f32 0.0, %v841
      %843 = vmatmul.bf16.gmra.mxu0 %v686
      %v844 = vpop.f32.mrf.mxu0
      %v845 = vadd.f32 0.0, %v844
      %v846 = vpop.f32.mrf.mxu0
      %v847 = vadd.f32 0.0, %v846
      %848 = vdwg.mxu0
      %849 = vmatpush.bf16.msra.mxu0 %v783
      %850 = vmatpush.bf16.msra.mxu0 %v782
      %851 = vmatpush.bf16.msra.mxu0 %v781
      %852 = vmatpush.bf16.msra.mxu0 %v780
      %853 = vmatpush.bf16.msra.mxu0 %v779
      %854 = vmatpush.bf16.msra.mxu0 %v778
      %855 = vmatpush.bf16.msra.mxu0 %v777
      %856 = vmatpush.bf16.msra.mxu0 %v776
      %857 = vmatmul.bf16.gmra.mxu0 %v673
      %v858 = vpop.f32.mrf.mxu0
      %v859 = vadd.f32 %v810, %v858
      %v860 = vpop.f32.mrf.mxu0
      %v861 = vadd.f32 %v812, %v860
      %862 = vmatmul.bf16.gmra.mxu0 %v675
      %v863 = vpop.f32.mrf.mxu0
      %v864 = vadd.f32 %v815, %v863
      %v865 = vpop.f32.mrf.mxu0
      %v866 = vadd.f32 %v817, %v865
      %867 = vmatmul.bf16.gmra.mxu0 %v677
      %v868 = vpop.f32.mrf.mxu0
      %v869 = vadd.f32 %v820, %v868
      %v870 = vpop.f32.mrf.mxu0
      %v871 = vadd.f32 %v822, %v870
      %872 = vmatmul.bf16.gmra.mxu0 %v679
      %v873 = vpop.f32.mrf.mxu0
      %v874 = vadd.f32 %v825, %v873
      %v875 = vpop.f32.mrf.mxu0
      %v876 = vadd.f32 %v827, %v875
      %877 = vmatmul.bf16.gmra.mxu0 %v681
      %v878 = vpop.f32.mrf.mxu0
      %v879 = vadd.f32 %v830, %v878
      %v880 = vpop.f32.mrf.mxu0
      %v881 = vadd.f32 %v832, %v880
      %882 = vmatmul.bf16.gmra.mxu0 %v683
      %v883 = vpop.f32.mrf.mxu0
      %v884 = vadd.f32 %v835, %v883
      %v885 = vpop.f32.mrf.mxu0
      %v886 = vadd.f32 %v837, %v885
      %887 = vmatmul.bf16.gmra.mxu0 %v685
      %v888 = vpop.f32.mrf.mxu0
      %v889 = vadd.f32 %v840, %v888
      %v890 = vpop.f32.mrf.mxu0
      %v891 = vadd.f32 %v842, %v890
      %892 = vmatmul.bf16.gmra.mxu0 %v687
      %v893 = vpop.f32.mrf.mxu0
      %v894 = vadd.f32 %v845, %v893
      %v895 = vpop.f32.mrf.mxu0
      %v896 = vadd.f32 %v847, %v895
      %897 = vdwg.mxu0
      %v898 = vadd.f32 %v560, %v859
      %v899 = vadd.f32 %v561, %v861
      %v900 = vadd.f32 %v562, %v864
      %v901 = vadd.f32 %v563, %v866
      %v902 = vadd.f32 %v564, %v869
      %v903 = vadd.f32 %v565, %v871
      %v904 = vadd.f32 %v566, %v874
      %v905 = vadd.f32 %v567, %v876
      %v906 = vadd.f32 %v568, %v879
      %v907 = vadd.f32 %v569, %v881
      %v908 = vadd.f32 %v570, %v884
      %v909 = vadd.f32 %v571, %v886
      %v910 = vadd.f32 %v572, %v889
      %v911 = vadd.f32 %v573, %v891
      %v912 = vadd.f32 %v574, %v894
      %v913 = vadd.f32 %v575, %v896
      %vm914 = vcmask 523264
      %915 = vst.msk [vmem:[#allocation2] sm:$0xff] %vm914, %v898
      %916 = vst.msk [vmem:[#allocation2 + $0x8] sm:$0xff] %vm914, %v899
      %917 = vst.msk [vmem:[#allocation2 + $0x10] sm:$0xff] %vm914, %v900
      %918 = vst.msk [vmem:[#allocation2 + $0x18] sm:$0xff] %vm914, %v901
      %919 = vst.msk [vmem:[#allocation2 + $0x20] sm:$0xff] %vm914, %v902
      %920 = vst.msk [vmem:[#allocation2 + $0x28] sm:$0xff] %vm914, %v903
      %921 = vst.msk [vmem:[#allocation2 + $0x30] sm:$0xff] %vm914, %v904
      %922 = vst.msk [vmem:[#allocation2 + $0x38] sm:$0xff] %vm914, %v905
      %923 = vst.msk [vmem:[#allocation2 + $0x40] sm:$0xff] %vm914, %v906
      %924 = vst.msk [vmem:[#allocation2 + $0x48] sm:$0xff] %vm914, %v907
      %925 = vst.msk [vmem:[#allocation2 + $0x50] sm:$0xff] %vm914, %v908
      %926 = vst.msk [vmem:[#allocation2 + $0x58] sm:$0xff] %vm914, %v909
      %927 = vst.msk [vmem:[#allocation2 + $0x60] sm:$0xff] %vm914, %v910
      %928 = vst.msk [vmem:[#allocation2 + $0x68] sm:$0xff] %vm914, %v911
      %929 = vst.msk [vmem:[#allocation2 + $0x70] sm:$0xff] %vm914, %v912
      %930 = vst.msk [vmem:[#allocation2 + $0x78] sm:$0xff] %vm914, %v913
      // Predicated region
      $region61: #{generative_step.9} parent=55 // pred_check
        %p931 = pneg %p539
      $region62: #{generative_step.9} parent=55 // pred_check_branch
        %933 = sbr.rel (%p931) target = $region64
      $region63: #{generative_step.9} parent=55 // pred_region
        %v934 = vld [vmem:[#allocation2] sm:$0xff]
        %v935 = vld [vmem:[#allocation2 + $0x8] sm:$0xff]
        %v936 = vld [vmem:[#allocation2 + $0x10] sm:$0xff]
        %v937 = vld [vmem:[#allocation2 + $0x18] sm:$0xff]
        %v938 = vld [vmem:[#allocation2 + $0x20] sm:$0xff]
        %v939 = vld [vmem:[#allocation2 + $0x28] sm:$0xff]
        %v940 = vld [vmem:[#allocation2 + $0x30] sm:$0xff]
        %v941 = vld [vmem:[#allocation2 + $0x38] sm:$0xff]
        %v942 = vld [vmem:[#allocation2 + $0x40] sm:$0xff]
        %v943 = vld [vmem:[#allocation2 + $0x48] sm:$0xff]
        %v944 = vld [vmem:[#allocation2 + $0x50] sm:$0xff]
        %v945 = vld [vmem:[#allocation2 + $0x58] sm:$0xff]
        %v946 = vld [vmem:[#allocation2 + $0x60] sm:$0xff]
        %v947 = vld [vmem:[#allocation2 + $0x68] sm:$0xff]
        %v948 = vld [vmem:[#allocation2 + $0x70] sm:$0xff]
        %v949 = vld [vmem:[#allocation2 + $0x78] sm:$0xff]
        %v950 = vld [vmem:[%s2] sm:$0x1]
        %v952 = vperm.slane %v950, 0
        %v954 = vadd.f32 %v934, %v952
        %v955 = vadd.f32 %v935, %v952
        %v956 = vadd.f32 %v936, %v952
        %v957 = vadd.f32 %v937, %v952
        %v958 = vadd.f32 %v938, %v952
        %v959 = vadd.f32 %v939, %v952
        %v960 = vadd.f32 %v940, %v952
        %v961 = vadd.f32 %v941, %v952
        %v962 = vadd.f32 %v942, %v952
        %v963 = vadd.f32 %v943, %v952
        %v964 = vadd.f32 %v944, %v952
        %v965 = vadd.f32 %v945, %v952
        %v966 = vadd.f32 %v946, %v952
        %v967 = vadd.f32 %v947, %v952
        %v968 = vadd.f32 %v948, %v952
        %v969 = vadd.f32 %v949, %v952
        %v970 = vmax.f32 %v954, 0.0
        %v971 = vmax.f32 %v955, 0.0
        %v972 = vmax.f32 %v956, 0.0
        %v973 = vmax.f32 %v957, 0.0
        %v974 = vmax.f32 %v958, 0.0
        %v975 = vmax.f32 %v959, 0.0
        %v976 = vmax.f32 %v960, 0.0
        %v977 = vmax.f32 %v961, 0.0
        %v978 = vmax.f32 %v962, 0.0
        %v979 = vmax.f32 %v963, 0.0
        %v980 = vmax.f32 %v964, 0.0
        %v981 = vmax.f32 %v965, 0.0
        %v982 = vmax.f32 %v966, 0.0
        %v983 = vmax.f32 %v967, 0.0
        %v984 = vmax.f32 %v968, 0.0
        %v985 = vmax.f32 %v969, 0.0
        %vm986 = vcmp.ne.f32.partialorder %v954, %v954
        %vm987 = vcmp.ne.f32.partialorder %v955, %v955
        %vm988 = vcmp.ne.f32.partialorder %v956, %v956
        %vm989 = vcmp.ne.f32.partialorder %v957, %v957
        %vm990 = vcmp.ne.f32.partialorder %v958, %v958
        %vm991 = vcmp.ne.f32.partialorder %v959, %v959
        %vm992 = vcmp.ne.f32.partialorder %v960, %v960
        %vm993 = vcmp.ne.f32.partialorder %v961, %v961
        %vm994 = vcmp.ne.f32.partialorder %v962, %v962
        %vm995 = vcmp.ne.f32.partialorder %v963, %v963
        %vm996 = vcmp.ne.f32.partialorder %v964, %v964
        %vm997 = vcmp.ne.f32.partialorder %v965, %v965
        %vm998 = vcmp.ne.f32.partialorder %v966, %v966
        %vm999 = vcmp.ne.f32.partialorder %v967, %v967
        %vm1000 = vcmp.ne.f32.partialorder %v968, %v968
        %vm1001 = vcmp.ne.f32.partialorder %v969, %v969
        %v1002 = vadd.f32 %v954, 0.0
        %v1003 = vadd.f32 %v955, 0.0
        %v1004 = vadd.f32 %v956, 0.0
        %v1005 = vadd.f32 %v957, 0.0
        %v1006 = vadd.f32 %v958, 0.0
        %v1007 = vadd.f32 %v959, 0.0
        %v1008 = vadd.f32 %v960, 0.0
        %v1009 = vadd.f32 %v961, 0.0
        %v1010 = vadd.f32 %v962, 0.0
        %v1011 = vadd.f32 %v963, 0.0
        %v1012 = vadd.f32 %v964, 0.0
        %v1013 = vadd.f32 %v965, 0.0
        %v1014 = vadd.f32 %v966, 0.0
        %v1015 = vadd.f32 %v967, 0.0
        %v1016 = vadd.f32 %v968, 0.0
        %v1017 = vadd.f32 %v969, 0.0
        %v1018 = vand.u32 2147483647, %v954
        %v1019 = vand.u32 2147483647, %v955
        %v1020 = vand.u32 2147483647, %v956
        %v1021 = vand.u32 2147483647, %v957
        %v1022 = vand.u32 2147483647, %v958
        %v1023 = vand.u32 2147483647, %v959
        %v1024 = vand.u32 2147483647, %v960
        %v1025 = vand.u32 2147483647, %v961
        %v1026 = vand.u32 2147483647, %v962
        %v1027 = vand.u32 2147483647, %v963
        %v1028 = vand.u32 2147483647, %v964
        %v1029 = vand.u32 2147483647, %v965
        %v1030 = vand.u32 2147483647, %v966
        %v1031 = vand.u32 2147483647, %v967
        %v1032 = vand.u32 2147483647, %v968
        %v1033 = vand.u32 2147483647, %v969
        %v1034 = vsub.f32 0.0, %v1018
        %v1035 = vsub.f32 0.0, %v1019
        %v1036 = vsub.f32 0.0, %v1020
        %v1037 = vsub.f32 0.0, %v1021
        %v1038 = vsub.f32 0.0, %v1022
        %v1039 = vsub.f32 0.0, %v1023
        %v1040 = vsub.f32 0.0, %v1024
        %v1041 = vsub.f32 0.0, %v1025
        %v1042 = vsub.f32 0.0, %v1026
        %v1043 = vsub.f32 0.0, %v1027
        %v1044 = vsub.f32 0.0, %v1028
        %v1045 = vsub.f32 0.0, %v1029
        %v1046 = vsub.f32 0.0, %v1030
        %v1047 = vsub.f32 0.0, %v1031
        %v1048 = vsub.f32 0.0, %v1032
        %v1049 = vsub.f32 0.0, %v1033
        %v1050 = vmul.f32 %v1034, 1.442695
        %v1051 = vpow.pop %v1050
        %v1052 = vmul.f32 %v1035, 1.442695
        %v1053 = vpow.pop %v1052
        %v1054 = vmul.f32 %v1036, 1.442695
        %v1055 = vpow.pop %v1054
        %v1056 = vmul.f32 %v1037, 1.442695
        %v1057 = vpow.pop %v1056
        %v1058 = vmul.f32 %v1038, 1.442695
        %v1059 = vpow.pop %v1058
        %v1060 = vmul.f32 %v1039, 1.442695
        %v1061 = vpow.pop %v1060
        %v1062 = vmul.f32 %v1040, 1.442695
        %v1063 = vpow.pop %v1062
        %v1064 = vmul.f32 %v1041, 1.442695
        %v1065 = vpow.pop %v1064
        %v1066 = vmul.f32 %v1042, 1.442695
        %v1067 = vpow.pop %v1066
        %v1068 = vmul.f32 %v1043, 1.442695
        %v1069 = vpow.pop %v1068
        %v1070 = vmul.f32 %v1044, 1.442695
        %v1071 = vpow.pop %v1070
        %v1072 = vmul.f32 %v1045, 1.442695
        %v1073 = vpow.pop %v1072
        %v1074 = vmul.f32 %v1046, 1.442695
        %v1075 = vpow.pop %v1074
        %v1076 = vmul.f32 %v1047, 1.442695
        %v1077 = vpow.pop %v1076
        %v1078 = vmul.f32 %v1048, 1.442695
        %v1079 = vpow.pop %v1078
        %v1080 = vmul.f32 %v1049, 1.442695
        %v1081 = vpow.pop %v1080
        %v1082 = vadd.f32 %v1051, 1.0
        %v1083 = vlog2.pop %v1082
        %v1084 = vmul.f32 %v1083, 0.6931472
        %v1085 = vmul.f32 -0.5, %v1051
        %v1086 = vadd.f32 %v1085, 1.0
        %v1087 = vmul.f32 %v1086, %v1051
        %v1088 = vand.u32 2147483647, %v1051
        %vm1089 = vcmp.lt.f32.partialorder %v1088, 0.0004427343
        %v1090 = vsel %vm1089, %v1087, %v1084
        %v1091 = vadd.f32 %v1053, 1.0
        %v1092 = vlog2.pop %v1091
        %v1093 = vmul.f32 %v1092, 0.6931472
        %v1094 = vmul.f32 -0.5, %v1053
        %v1095 = vadd.f32 %v1094, 1.0
        %v1096 = vmul.f32 %v1095, %v1053
        %v1097 = vand.u32 2147483647, %v1053
        %vm1098 = vcmp.lt.f32.partialorder %v1097, 0.0004427343
        %v1099 = vsel %vm1098, %v1096, %v1093
        %v1100 = vadd.f32 %v1055, 1.0
        %v1101 = vlog2.pop %v1100
        %v1102 = vmul.f32 %v1101, 0.6931472
        %v1103 = vmul.f32 -0.5, %v1055
        %v1104 = vadd.f32 %v1103, 1.0
        %v1105 = vmul.f32 %v1104, %v1055
        %v1106 = vand.u32 2147483647, %v1055
        %vm1107 = vcmp.lt.f32.partialorder %v1106, 0.0004427343
        %v1108 = vsel %vm1107, %v1105, %v1102
        %v1109 = vadd.f32 %v1057, 1.0
        %v1110 = vlog2.pop %v1109
        %v1111 = vmul.f32 %v1110, 0.6931472
        %v1112 = vmul.f32 -0.5, %v1057
        %v1113 = vadd.f32 %v1112, 1.0
        %v1114 = vmul.f32 %v1113, %v1057
        %v1115 = vand.u32 2147483647, %v1057
        %vm1116 = vcmp.lt.f32.partialorder %v1115, 0.0004427343
        %v1117 = vsel %vm1116, %v1114, %v1111
        %v1118 = vadd.f32 %v1059, 1.0
        %v1119 = vlog2.pop %v1118
        %v1120 = vmul.f32 %v1119, 0.6931472
        %v1121 = vmul.f32 -0.5, %v1059
        %v1122 = vadd.f32 %v1121, 1.0
        %v1123 = vmul.f32 %v1122, %v1059
        %v1124 = vand.u32 2147483647, %v1059
        %vm1125 = vcmp.lt.f32.partialorder %v1124, 0.0004427343
        %v1126 = vsel %vm1125, %v1123, %v1120
        %v1127 = vadd.f32 %v1061, 1.0
        %v1128 = vlog2.pop %v1127
        %v1129 = vmul.f32 %v1128, 0.6931472
        %v1130 = vmul.f32 -0.5, %v1061
        %v1131 = vadd.f32 %v1130, 1.0
        %v1132 = vmul.f32 %v1131, %v1061
        %v1133 = vand.u32 2147483647, %v1061
        %vm1134 = vcmp.lt.f32.partialorder %v1133, 0.0004427343
        %v1135 = vsel %vm1134, %v1132, %v1129
        %v1136 = vadd.f32 %v1063, 1.0
        %v1137 = vlog2.pop %v1136
        %v1138 = vmul.f32 %v1137, 0.6931472
        %v1139 = vmul.f32 -0.5, %v1063
        %v1140 = vadd.f32 %v1139, 1.0
        %v1141 = vmul.f32 %v1140, %v1063
        %v1142 = vand.u32 2147483647, %v1063
        %vm1143 = vcmp.lt.f32.partialorder %v1142, 0.0004427343
        %v1144 = vsel %vm1143, %v1141, %v1138
        %v1145 = vadd.f32 %v1065, 1.0
        %v1146 = vlog2.pop %v1145
        %v1147 = vmul.f32 %v1146, 0.6931472
        %v1148 = vmul.f32 -0.5, %v1065
        %v1149 = vadd.f32 %v1148, 1.0
        %v1150 = vmul.f32 %v1149, %v1065
        %v1151 = vand.u32 2147483647, %v1065
        %vm1152 = vcmp.lt.f32.partialorder %v1151, 0.0004427343
        %v1153 = vsel %vm1152, %v1150, %v1147
        %v1154 = vadd.f32 %v1067, 1.0
        %v1155 = vlog2.pop %v1154
        %v1156 = vmul.f32 %v1155, 0.6931472
        %v1157 = vmul.f32 -0.5, %v1067
        %v1158 = vadd.f32 %v1157, 1.0
        %v1159 = vmul.f32 %v1158, %v1067
        %v1160 = vand.u32 2147483647, %v1067
        %vm1161 = vcmp.lt.f32.partialorder %v1160, 0.0004427343
        %v1162 = vsel %vm1161, %v1159, %v1156
        %v1163 = vadd.f32 %v1069, 1.0
        %v1164 = vlog2.pop %v1163
        %v1165 = vmul.f32 %v1164, 0.6931472
        %v1166 = vmul.f32 -0.5, %v1069
        %v1167 = vadd.f32 %v1166, 1.0
        %v1168 = vmul.f32 %v1167, %v1069
        %v1169 = vand.u32 2147483647, %v1069
        %vm1170 = vcmp.lt.f32.partialorder %v1169, 0.0004427343
        %v1171 = vsel %vm1170, %v1168, %v1165
        %v1172 = vadd.f32 %v1071, 1.0
        %v1173 = vlog2.pop %v1172
        %v1174 = vmul.f32 %v1173, 0.6931472
        %v1175 = vmul.f32 -0.5, %v1071
        %v1176 = vadd.f32 %v1175, 1.0
        %v1177 = vmul.f32 %v1176, %v1071
        %v1178 = vand.u32 2147483647, %v1071
        %vm1179 = vcmp.lt.f32.partialorder %v1178, 0.0004427343
        %v1180 = vsel %vm1179, %v1177, %v1174
        %v1181 = vadd.f32 %v1073, 1.0
        %v1182 = vlog2.pop %v1181
        %v1183 = vmul.f32 %v1182, 0.6931472
        %v1184 = vmul.f32 -0.5, %v1073
        %v1185 = vadd.f32 %v1184, 1.0
        %v1186 = vmul.f32 %v1185, %v1073
        %v1187 = vand.u32 2147483647, %v1073
        %vm1188 = vcmp.lt.f32.partialorder %v1187, 0.0004427343
        %v1189 = vsel %vm1188, %v1186, %v1183
        %v1190 = vadd.f32 %v1075, 1.0
        %v1191 = vlog2.pop %v1190
        %v1192 = vmul.f32 %v1191, 0.6931472
        %v1193 = vmul.f32 -0.5, %v1075
        %v1194 = vadd.f32 %v1193, 1.0
        %v1195 = vmul.f32 %v1194, %v1075
        %v1196 = vand.u32 2147483647, %v1075
        %vm1197 = vcmp.lt.f32.partialorder %v1196, 0.0004427343
        %v1198 = vsel %vm1197, %v1195, %v1192
        %v1199 = vadd.f32 %v1077, 1.0
        %v1200 = vlog2.pop %v1199
        %v1201 = vmul.f32 %v1200, 0.6931472
        %v1202 = vmul.f32 -0.5, %v1077
        %v1203 = vadd.f32 %v1202, 1.0
        %v1204 = vmul.f32 %v1203, %v1077
        %v1205 = vand.u32 2147483647, %v1077
        %vm1206 = vcmp.lt.f32.partialorder %v1205, 0.0004427343
        %v1207 = vsel %vm1206, %v1204, %v1201
        %v1208 = vadd.f32 %v1079, 1.0
        %v1209 = vlog2.pop %v1208
        %v1210 = vmul.f32 %v1209, 0.6931472
        %v1211 = vmul.f32 -0.5, %v1079
        %v1212 = vadd.f32 %v1211, 1.0
        %v1213 = vmul.f32 %v1212, %v1079
        %v1214 = vand.u32 2147483647, %v1079
        %vm1215 = vcmp.lt.f32.partialorder %v1214, 0.0004427343
        %v1216 = vsel %vm1215, %v1213, %v1210
        %v1217 = vadd.f32 %v1081, 1.0
        %v1218 = vlog2.pop %v1217
        %v1219 = vmul.f32 %v1218, 0.6931472
        %v1220 = vmul.f32 -0.5, %v1081
        %v1221 = vadd.f32 %v1220, 1.0
        %v1222 = vmul.f32 %v1221, %v1081
        %v1223 = vand.u32 2147483647, %v1081
        %vm1224 = vcmp.lt.f32.partialorder %v1223, 0.0004427343
        %v1225 = vsel %vm1224, %v1222, %v1219
        %v1226 = vadd.f32 %v970, %v1090
        %v1227 = vadd.f32 %v971, %v1099
        %v1228 = vadd.f32 %v972, %v1108
        %v1229 = vadd.f32 %v973, %v1117
        %v1230 = vadd.f32 %v974, %v1126
        %v1231 = vadd.f32 %v975, %v1135
        %v1232 = vadd.f32 %v976, %v1144
        %v1233 = vadd.f32 %v977, %v1153
        %v1234 = vadd.f32 %v978, %v1162
        %v1235 = vadd.f32 %v979, %v1171
        %v1236 = vadd.f32 %v980, %v1180
        %v1237 = vadd.f32 %v981, %v1189
        %v1238 = vadd.f32 %v982, %v1198
        %v1239 = vadd.f32 %v983, %v1207
        %v1240 = vadd.f32 %v984, %v1216
        %v1241 = vadd.f32 %v985, %v1225
        %v1242 = vsel %vm986, %v1002, %v1226
        %v1243 = vsel %vm987, %v1003, %v1227
        %v1244 = vsel %vm988, %v1004, %v1228
        %v1245 = vsel %vm989, %v1005, %v1229
        %v1246 = vsel %vm990, %v1006, %v1230
        %v1247 = vsel %vm991, %v1007, %v1231
        %v1248 = vsel %vm992, %v1008, %v1232
        %v1249 = vsel %vm993, %v1009, %v1233
        %v1250 = vsel %vm994, %v1010, %v1234
        %v1251 = vsel %vm995, %v1011, %v1235
        %v1252 = vsel %vm996, %v1012, %v1236
        %v1253 = vsel %vm997, %v1013, %v1237
        %v1254 = vsel %vm998, %v1014, %v1238
        %v1255 = vsel %vm999, %v1015, %v1239
        %v1256 = vsel %vm1000, %v1016, %v1240
        %v1257 = vsel %vm1001, %v1017, %v1241
        %vm1258 = vcmask 261120
        %1259 = vst.msk [vmem:[%s523] sm:$0xff] %vm1258, %v954
        %1260 = vst.msk [vmem:[%s523 + $0x8] sm:$0xff] %vm1258, %v955
        %1261 = vst.msk [vmem:[%s523 + $0x10] sm:$0xff] %vm1258, %v956
        %1262 = vst.msk [vmem:[%s523 + $0x18] sm:$0xff] %vm1258, %v957
        %1263 = vst.msk [vmem:[%s523 + $0x20] sm:$0xff] %vm1258, %v958
        %1264 = vst.msk [vmem:[%s523 + $0x28] sm:$0xff] %vm1258, %v959
        %1265 = vst.msk [vmem:[%s523 + $0x30] sm:$0xff] %vm1258, %v960
        %1266 = vst.msk [vmem:[%s523 + $0x38] sm:$0xff] %vm1258, %v961
        %1267 = vst.msk [vmem:[%s523 + $0x40] sm:$0xff] %vm1258, %v962
        %1268 = vst.msk [vmem:[%s523 + $0x48] sm:$0xff] %vm1258, %v963
        %1269 = vst.msk [vmem:[%s523 + $0x50] sm:$0xff] %vm1258, %v964
        %1270 = vst.msk [vmem:[%s523 + $0x58] sm:$0xff] %vm1258, %v965
        %1271 = vst.msk [vmem:[%s523 + $0x60] sm:$0xff] %vm1258, %v966
        %1272 = vst.msk [vmem:[%s523 + $0x68] sm:$0xff] %vm1258, %v967
        %1273 = vst.msk [vmem:[%s523 + $0x70] sm:$0xff] %vm1258, %v968
        %1274 = vst.msk [vmem:[%s523 + $0x78] sm:$0xff] %vm1258, %v969
        %vm1275 = vcmask 523520
        %1276 = vst.msk [vmem:[%s523] sm:$0xff] %vm1275, %v1242
        %1277 = vst.msk [vmem:[%s523 + $0x8] sm:$0xff] %vm1275, %v1243
        %1278 = vst.msk [vmem:[%s523 + $0x10] sm:$0xff] %vm1275, %v1244
        %1279 = vst.msk [vmem:[%s523 + $0x18] sm:$0xff] %vm1275, %v1245
        %1280 = vst.msk [vmem:[%s523 + $0x20] sm:$0xff] %vm1275, %v1246
        %1281 = vst.msk [vmem:[%s523 + $0x28] sm:$0xff] %vm1275, %v1247
        %1282 = vst.msk [vmem:[%s523 + $0x30] sm:$0xff] %vm1275, %v1248
        %1283 = vst.msk [vmem:[%s523 + $0x38] sm:$0xff] %vm1275, %v1249
        %1284 = vst.msk [vmem:[%s523 + $0x40] sm:$0xff] %vm1275, %v1250
        %1285 = vst.msk [vmem:[%s523 + $0x48] sm:$0xff] %vm1275, %v1251
        %1286 = vst.msk [vmem:[%s523 + $0x50] sm:$0xff] %vm1275, %v1252
        %1287 = vst.msk [vmem:[%s523 + $0x58] sm:$0xff] %vm1275, %v1253
        %1288 = vst.msk [vmem:[%s523 + $0x60] sm:$0xff] %vm1275, %v1254
        %1289 = vst.msk [vmem:[%s523 + $0x68] sm:$0xff] %vm1275, %v1255
        %1290 = vst.msk [vmem:[%s523 + $0x70] sm:$0xff] %vm1275, %v1256
        %1291 = vst.msk [vmem:[%s523 + $0x78] sm:$0xff] %vm1275, %v1257
        %v1292 = vld [vmem:[%s505] sm:$0xff]
        %v1293 = vld [vmem:[%s505 + $0x8] sm:$0xff]
        %v1294 = vld [vmem:[%s505 + $0x10] sm:$0xff]
        %v1295 = vld [vmem:[%s505 + $0x18] sm:$0xff]
        %v1296 = vld [vmem:[%s505 + $0x20] sm:$0xff]
        %v1297 = vld [vmem:[%s505 + $0x28] sm:$0xff]
        %v1298 = vld [vmem:[%s505 + $0x30] sm:$0xff]
        %v1299 = vld [vmem:[%s505 + $0x38] sm:$0xff]
        %v1300 = vld [vmem:[%s505 + $0x40] sm:$0xff]
        %v1301 = vld [vmem:[%s505 + $0x48] sm:$0xff]
        %v1302 = vld [vmem:[%s505 + $0x50] sm:$0xff]
        %v1303 = vld [vmem:[%s505 + $0x58] sm:$0xff]
        %v1304 = vld [vmem:[%s505 + $0x60] sm:$0xff]
        %v1305 = vld [vmem:[%s505 + $0x68] sm:$0xff]
        %v1306 = vld [vmem:[%s505 + $0x70] sm:$0xff]
        %v1307 = vld [vmem:[%s505 + $0x78] sm:$0xff]
        %1324 = vrot.lane.b32.xlu0 %v1242, 96
        %v1325 = vpop.permute.xlu0 %1324
        %1326 = vrot.lane.b32.xlu0 %v1243, 96
        %v1327 = vpop.permute.xlu0 %1326
        %1328 = vrot.lane.b32.xlu0 %v1244, 96
        %v1329 = vpop.permute.xlu0 %1328
        %1330 = vrot.lane.b32.xlu0 %v1245, 96
        %v1331 = vpop.permute.xlu0 %1330
        %1332 = vrot.lane.b32.xlu0 %v1246, 96
        %v1333 = vpop.permute.xlu0 %1332
        %1334 = vrot.lane.b32.xlu0 %v1247, 96
        %v1335 = vpop.permute.xlu0 %1334
        %1336 = vrot.lane.b32.xlu0 %v1248, 96
        %v1337 = vpop.permute.xlu0 %1336
        %1338 = vrot.lane.b32.xlu0 %v1249, 96
        %v1339 = vpop.permute.xlu0 %1338
        %1340 = vrot.lane.b32.xlu0 %v1250, 96
        %v1341 = vpop.permute.xlu0 %1340
        %1342 = vrot.lane.b32.xlu0 %v1251, 96
        %v1343 = vpop.permute.xlu0 %1342
        %1344 = vrot.lane.b32.xlu0 %v1252, 96
        %v1345 = vpop.permute.xlu0 %1344
        %1346 = vrot.lane.b32.xlu0 %v1253, 96
        %v1347 = vpop.permute.xlu0 %1346
        %1348 = vrot.lane.b32.xlu0 %v1254, 96
        %v1349 = vpop.permute.xlu0 %1348
        %1350 = vrot.lane.b32.xlu0 %v1255, 96
        %v1351 = vpop.permute.xlu0 %1350
        %1352 = vrot.lane.b32.xlu0 %v1256, 96
        %v1353 = vpop.permute.xlu0 %1352
        %1354 = vrot.lane.b32.xlu0 %v1257, 96
        %v1355 = vpop.permute.xlu0 %1354
        %v1372 = vmul.f32 %v1292, %v1325
        %v1373 = vmul.f32 %v1293, %v1327
        %v1374 = vmul.f32 %v1294, %v1329
        %v1375 = vmul.f32 %v1295, %v1331
        %v1376 = vmul.f32 %v1296, %v1333
        %v1377 = vmul.f32 %v1297, %v1335
        %v1378 = vmul.f32 %v1298, %v1337
        %v1379 = vmul.f32 %v1299, %v1339
        %v1380 = vmul.f32 %v1300, %v1341
        %v1381 = vmul.f32 %v1301, %v1343
        %v1382 = vmul.f32 %v1302, %v1345
        %v1383 = vmul.f32 %v1303, %v1347
        %v1384 = vmul.f32 %v1304, %v1349
        %v1385 = vmul.f32 %v1305, %v1351
        %v1386 = vmul.f32 %v1306, %v1353
        %v1387 = vmul.f32 %v1307, %v1355
        %v1388 = vadd.f32 %v1372, %v954
        %v1389 = vadd.f32 %v1373, %v955
        %v1390 = vadd.f32 %v1374, %v956
        %v1391 = vadd.f32 %v1375, %v957
        %v1392 = vadd.f32 %v1376, %v958
        %v1393 = vadd.f32 %v1377, %v959
        %v1394 = vadd.f32 %v1378, %v960
        %v1395 = vadd.f32 %v1379, %v961
        %v1396 = vadd.f32 %v1380, %v962
        %v1397 = vadd.f32 %v1381, %v963
        %v1398 = vadd.f32 %v1382, %v964
        %v1399 = vadd.f32 %v1383, %v965
        %v1400 = vadd.f32 %v1384, %v966
        %v1401 = vadd.f32 %v1385, %v967
        %v1402 = vadd.f32 %v1386, %v968
        %v1403 = vadd.f32 %v1387, %v969
        %1404 = vst.msk [vmem:[%s529] sm:$0xff] %vm1258, %v1388
        %1405 = vst.msk [vmem:[%s529 + $0x8] sm:$0xff] %vm1258, %v1389
        %1406 = vst.msk [vmem:[%s529 + $0x10] sm:$0xff] %vm1258, %v1390
        %1407 = vst.msk [vmem:[%s529 + $0x18] sm:$0xff] %vm1258, %v1391
        %1408 = vst.msk [vmem:[%s529 + $0x20] sm:$0xff] %vm1258, %v1392
        %1409 = vst.msk [vmem:[%s529 + $0x28] sm:$0xff] %vm1258, %v1393
        %1410 = vst.msk [vmem:[%s529 + $0x30] sm:$0xff] %vm1258, %v1394
        %1411 = vst.msk [vmem:[%s529 + $0x38] sm:$0xff] %vm1258, %v1395
        %1412 = vst.msk [vmem:[%s529 + $0x40] sm:$0xff] %vm1258, %v1396
        %1413 = vst.msk [vmem:[%s529 + $0x48] sm:$0xff] %vm1258, %v1397
        %1414 = vst.msk [vmem:[%s529 + $0x50] sm:$0xff] %vm1258, %v1398
        %1415 = vst.msk [vmem:[%s529 + $0x58] sm:$0xff] %vm1258, %v1399
        %1416 = vst.msk [vmem:[%s529 + $0x60] sm:$0xff] %vm1258, %v1400
        %1417 = vst.msk [vmem:[%s529 + $0x68] sm:$0xff] %vm1258, %v1401
        %1418 = vst.msk [vmem:[%s529 + $0x70] sm:$0xff] %vm1258, %v1402
        %1419 = vst.msk [vmem:[%s529 + $0x78] sm:$0xff] %vm1258, %v1403
        %v1420 = vpack.c.bf16 %v1389, %v1388
        %v1421 = vpack.c.bf16 %v1391, %v1390
        %v1422 = vpack.c.bf16 %v1393, %v1392
        %v1423 = vpack.c.bf16 %v1395, %v1394
        %v1424 = vpack.c.bf16 %v1397, %v1396
        %v1425 = vpack.c.bf16 %v1399, %v1398
        %v1426 = vpack.c.bf16 %v1401, %v1400
        %v1427 = vpack.c.bf16 %v1403, %v1402
        %v1428 = vld [vmem:[%s4] sm:$0xf]
        %v1429 = vld [vmem:[%s4 + $0x4] sm:$0xf]
        %v1430 = vld [vmem:[%s4 + $0x8] sm:$0xf]
        %v1431 = vld [vmem:[%s4 + $0xc] sm:$0xf]
        %v1432 = vld [vmem:[%s5] sm:$0x1]
        %v1434 = vperm.slane %v1432, 0
        %v1440 = vunpack.c.l.b16 %v1428
        %v1441 = vunpack.c.l.b16 %v1429
        %v1442 = vunpack.c.l.b16 %v1430
        %v1443 = vunpack.c.l.b16 %v1431
        %v1444 = vpack.c.b16 %v1441, %v1440
        %v1445 = vpack.c.b16 %v1443, %v1442
        %v1449 = vsel %vm1258, %v1420, 0
        %v1452 = vsel %vm1258, %v1421, 0
        %v1455 = vsel %vm1258, %v1422, 0
        %v1458 = vsel %vm1258, %v1423, 0
        %v1461 = vsel %vm1258, %v1424, 0
        %v1464 = vsel %vm1258, %v1425, 0
        %v1467 = vsel %vm1258, %v1426, 0
        %v1470 = vsel %vm1258, %v1427, 0
        %1472 = vmatpush.bf16.msra.mxu0 0
        %1473 = vmatpush.bf16.msra.mxu0 0
        %1474 = vmatpush.bf16.msra.mxu0 0
        %1475 = vmatpush.bf16.msra.mxu0 0
        %1476 = vmatpush.bf16.msra.mxu0 0
        %1477 = vmatpush.bf16.msra.mxu0 0
        %1478 = vmatpush.bf16.msra.mxu0 %v1445
        %1479 = vmatpush.bf16.msra.mxu0 %v1444
        %1480 = vmatmul.bf16.gmra.mxu0 %v1449
        %v1481 = vpop.f32.mrf.mxu0
        %v1482 = vadd.f32 %v1434, %v1481
        %v1483 = vpop.f32.mrf.mxu0
        %v1484 = vadd.f32 %v1434, %v1483
        %1485 = vmatmul.bf16.gmra.mxu0 %v1452
        %v1486 = vpop.f32.mrf.mxu0
        %v1487 = vadd.f32 %v1434, %v1486
        %v1488 = vpop.f32.mrf.mxu0
        %v1489 = vadd.f32 %v1434, %v1488
        %1490 = vmatmul.bf16.gmra.mxu0 %v1455
        %v1491 = vpop.f32.mrf.mxu0
        %v1492 = vadd.f32 %v1434, %v1491
        %v1493 = vpop.f32.mrf.mxu0
        %v1494 = vadd.f32 %v1434, %v1493
        %1495 = vmatmul.bf16.gmra.mxu0 %v1458
        %v1496 = vpop.f32.mrf.mxu0
        %v1497 = vadd.f32 %v1434, %v1496
        %v1498 = vpop.f32.mrf.mxu0
        %v1499 = vadd.f32 %v1434, %v1498
        %1500 = vmatmul.bf16.gmra.mxu0 %v1461
        %v1501 = vpop.f32.mrf.mxu0
        %v1502 = vadd.f32 %v1434, %v1501
        %v1503 = vpop.f32.mrf.mxu0
        %v1504 = vadd.f32 %v1434, %v1503
        %1505 = vmatmul.bf16.gmra.mxu0 %v1464
        %v1506 = vpop.f32.mrf.mxu0
        %v1507 = vadd.f32 %v1434, %v1506
        %v1508 = vpop.f32.mrf.mxu0
        %v1509 = vadd.f32 %v1434, %v1508
        %1510 = vmatmul.bf16.gmra.mxu0 %v1467
        %v1511 = vpop.f32.mrf.mxu0
        %v1512 = vadd.f32 %v1434, %v1511
        %v1513 = vpop.f32.mrf.mxu0
        %v1514 = vadd.f32 %v1434, %v1513
        %1515 = vmatmul.bf16.gmra.mxu0 %v1470
        %v1516 = vpop.f32.mrf.mxu0
        %v1517 = vadd.f32 %v1434, %v1516
        %v1518 = vpop.f32.mrf.mxu0
        %v1519 = vadd.f32 %v1434, %v1518
        %1520 = vdwg.mxu0
        %v1521 = vmax.f32 %v1482, 0.0
        %v1522 = vmax.f32 %v1484, 0.0
        %v1523 = vmax.f32 %v1487, 0.0
        %v1524 = vmax.f32 %v1489, 0.0
        %v1525 = vmax.f32 %v1492, 0.0
        %v1526 = vmax.f32 %v1494, 0.0
        %v1527 = vmax.f32 %v1497, 0.0
        %v1528 = vmax.f32 %v1499, 0.0
        %v1529 = vmax.f32 %v1502, 0.0
        %v1530 = vmax.f32 %v1504, 0.0
        %v1531 = vmax.f32 %v1507, 0.0
        %v1532 = vmax.f32 %v1509, 0.0
        %v1533 = vmax.f32 %v1512, 0.0
        %v1534 = vmax.f32 %v1514, 0.0
        %v1535 = vmax.f32 %v1517, 0.0
        %v1536 = vmax.f32 %v1519, 0.0
        %v1537 = vld [vmem:[%s511] sm:$0xf]
        %v1538 = vld [vmem:[%s511 + $0x4] sm:$0xf]
        %v1539 = vld [vmem:[%s511 + $0x8] sm:$0xf]
        %v1540 = vld [vmem:[%s511 + $0xc] sm:$0xf]
        %v1541 = vld [vmem:[%s511 + $0x10] sm:$0xf]
        %v1542 = vld [vmem:[%s511 + $0x14] sm:$0xf]
        %v1543 = vld [vmem:[%s511 + $0x18] sm:$0xf]
        %v1544 = vld [vmem:[%s511 + $0x1c] sm:$0xf]
        %v1545 = vld [vmem:[%s511 + $0x20] sm:$0xf]
        %v1546 = vld [vmem:[%s511 + $0x24] sm:$0xf]
        %v1547 = vld [vmem:[%s511 + $0x28] sm:$0xf]
        %v1548 = vld [vmem:[%s511 + $0x2c] sm:$0xf]
        %v1549 = vld [vmem:[%s511 + $0x30] sm:$0xf]
        %v1550 = vld [vmem:[%s511 + $0x34] sm:$0xf]
        %v1551 = vld [vmem:[%s511 + $0x38] sm:$0xf]
        %v1552 = vld [vmem:[%s511 + $0x3c] sm:$0xf]
        %v1553 = vunpack.c.l.bf16 %v1537
        %v1554 = vunpack.c.l.bf16 %v1538
        %v1555 = vunpack.c.l.bf16 %v1539
        %v1556 = vunpack.c.l.bf16 %v1540
        %v1557 = vunpack.c.l.bf16 %v1541
        %v1558 = vunpack.c.l.bf16 %v1542
        %v1559 = vunpack.c.l.bf16 %v1543
        %v1560 = vunpack.c.l.bf16 %v1544
        %v1561 = vunpack.c.l.bf16 %v1545
        %v1562 = vunpack.c.l.bf16 %v1546
        %v1563 = vunpack.c.l.bf16 %v1547
        %v1564 = vunpack.c.l.bf16 %v1548
        %v1565 = vunpack.c.l.bf16 %v1549
        %v1566 = vunpack.c.l.bf16 %v1550
        %v1567 = vunpack.c.l.bf16 %v1551
        %v1568 = vunpack.c.l.bf16 %v1552
        %v1569 = vpack.c.bf16 %v1522, %v1521
        %v1570 = vpack.c.bf16 %v1524, %v1523
        %v1571 = vpack.c.bf16 %v1526, %v1525
        %v1572 = vpack.c.bf16 %v1528, %v1527
        %v1573 = vpack.c.bf16 %v1530, %v1529
        %v1574 = vpack.c.bf16 %v1532, %v1531
        %v1575 = vpack.c.bf16 %v1534, %v1533
        %v1576 = vpack.c.bf16 %v1536, %v1535
        %v1577 = vld [vmem:[%s6] sm:$0xf]
        %v1578 = vld [vmem:[%s6 + $0x4] sm:$0xf]
        %v1579 = vld [vmem:[%s6 + $0x8] sm:$0xf]
        %v1580 = vld [vmem:[%s6 + $0xc] sm:$0xf]
        %v1585 = vunpack.c.l.b16 %v1577
        %v1586 = vunpack.c.l.b16 %v1578
        %v1587 = vunpack.c.l.b16 %v1579
        %v1588 = vunpack.c.l.b16 %v1580
        %v1589 = vpack.c.b16 %v1586, %v1585
        %v1590 = vpack.c.b16 %v1588, %v1587
        %v1594 = vsel %vm1258, %v1569, 0
        %v1597 = vsel %vm1258, %v1570, 0
        %v1600 = vsel %vm1258, %v1571, 0
        %v1603 = vsel %vm1258, %v1572, 0
        %v1606 = vsel %vm1258, %v1573, 0
        %v1609 = vsel %vm1258, %v1574, 0
        %v1612 = vsel %vm1258, %v1575, 0
        %v1615 = vsel %vm1258, %v1576, 0
        %1617 = vmatpush.bf16.msra.mxu0 0
        %1618 = vmatpush.bf16.msra.mxu0 0
        %1619 = vmatpush.bf16.msra.mxu0 0
        %1620 = vmatpush.bf16.msra.mxu0 0
        %1621 = vmatpush.bf16.msra.mxu0 0
        %1622 = vmatpush.bf16.msra.mxu0 0
        %1623 = vmatpush.bf16.msra.mxu0 %v1590
        %1624 = vmatpush.bf16.msra.mxu0 %v1589
        %1625 = vmatmul.bf16.gmra.mxu0 %v1594
        %v1626 = vpop.f32.mrf.mxu0
        %v1627 = vadd.f32 0.0, %v1626
        %v1628 = vpop.f32.mrf.mxu0
        %v1629 = vadd.f32 0.0, %v1628
        %1630 = vmatmul.bf16.gmra.mxu0 %v1597
        %v1631 = vpop.f32.mrf.mxu0
        %v1632 = vadd.f32 0.0, %v1631
        %v1633 = vpop.f32.mrf.mxu0
        %v1634 = vadd.f32 0.0, %v1633
        %1635 = vmatmul.bf16.gmra.mxu0 %v1600
        %v1636 = vpop.f32.mrf.mxu0
        %v1637 = vadd.f32 0.0, %v1636
        %v1638 = vpop.f32.mrf.mxu0
        %v1639 = vadd.f32 0.0, %v1638
        %1640 = vmatmul.bf16.gmra.mxu0 %v1603
        %v1641 = vpop.f32.mrf.mxu0
        %v1642 = vadd.f32 0.0, %v1641
        %v1643 = vpop.f32.mrf.mxu0
        %v1644 = vadd.f32 0.0, %v1643
        %1645 = vmatmul.bf16.gmra.mxu0 %v1606
        %v1646 = vpop.f32.mrf.mxu0
        %v1647 = vadd.f32 0.0, %v1646
        %v1648 = vpop.f32.mrf.mxu0
        %v1649 = vadd.f32 0.0, %v1648
        %1650 = vmatmul.bf16.gmra.mxu0 %v1609
        %v1651 = vpop.f32.mrf.mxu0
        %v1652 = vadd.f32 0.0, %v1651
        %v1653 = vpop.f32.mrf.mxu0
        %v1654 = vadd.f32 0.0, %v1653
        %1655 = vmatmul.bf16.gmra.mxu0 %v1612
        %v1656 = vpop.f32.mrf.mxu0
        %v1657 = vadd.f32 0.0, %v1656
        %v1658 = vpop.f32.mrf.mxu0
        %v1659 = vadd.f32 0.0, %v1658
        %1660 = vmatmul.bf16.gmra.mxu0 %v1615
        %v1661 = vpop.f32.mrf.mxu0
        %v1662 = vadd.f32 0.0, %v1661
        %v1663 = vpop.f32.mrf.mxu0
        %v1664 = vadd.f32 0.0, %v1663
        %1665 = vdwg.mxu0
        %v1666 = vadd.f32 %v1553, %v1627
        %v1667 = vadd.f32 %v1554, %v1629
        %v1668 = vadd.f32 %v1555, %v1632
        %v1669 = vadd.f32 %v1556, %v1634
        %v1670 = vadd.f32 %v1557, %v1637
        %v1671 = vadd.f32 %v1558, %v1639
        %v1672 = vadd.f32 %v1559, %v1642
        %v1673 = vadd.f32 %v1560, %v1644
        %v1674 = vadd.f32 %v1561, %v1647
        %v1675 = vadd.f32 %v1562, %v1649
        %v1676 = vadd.f32 %v1563, %v1652
        %v1677 = vadd.f32 %v1564, %v1654
        %v1678 = vadd.f32 %v1565, %v1657
        %v1679 = vadd.f32 %v1566, %v1659
        %v1680 = vadd.f32 %v1567, %v1662
        %v1681 = vadd.f32 %v1568, %v1664
        %v1682 = vpack.c.bf16 %v1666, %v1666
        %v1683 = vpack.c.bf16 %v1667, %v1667
        %v1684 = vpack.c.bf16 %v1668, %v1668
        %v1685 = vpack.c.bf16 %v1669, %v1669
        %v1686 = vpack.c.bf16 %v1670, %v1670
        %v1687 = vpack.c.bf16 %v1671, %v1671
        %v1688 = vpack.c.bf16 %v1672, %v1672
        %v1689 = vpack.c.bf16 %v1673, %v1673
        %v1690 = vpack.c.bf16 %v1674, %v1674
        %v1691 = vpack.c.bf16 %v1675, %v1675
        %v1692 = vpack.c.bf16 %v1676, %v1676
        %v1693 = vpack.c.bf16 %v1677, %v1677
        %v1694 = vpack.c.bf16 %v1678, %v1678
        %v1695 = vpack.c.bf16 %v1679, %v1679
        %v1696 = vpack.c.bf16 %v1680, %v1680
        %v1697 = vpack.c.bf16 %v1681, %v1681
        %vm1698 = vcmask 781312
        %1699 = vst.msk [vmem:[%s536] sm:$0xf] %vm1698, %v1682
        %1700 = vst.msk [vmem:[%s536 + $0x8] sm:$0xf] %vm1698, %v1683
        %1701 = vst.msk [vmem:[%s536 + $0x10] sm:$0xf] %vm1698, %v1684
        %1702 = vst.msk [vmem:[%s536 + $0x18] sm:$0xf] %vm1698, %v1685
        %1703 = vst.msk [vmem:[%s536 + $0x20] sm:$0xf] %vm1698, %v1686
        %1704 = vst.msk [vmem:[%s536 + $0x28] sm:$0xf] %vm1698, %v1687
        %1705 = vst.msk [vmem:[%s536 + $0x30] sm:$0xf] %vm1698, %v1688
        %1706 = vst.msk [vmem:[%s536 + $0x38] sm:$0xf] %vm1698, %v1689
        %1707 = vst.msk [vmem:[%s536 + $0x40] sm:$0xf] %vm1698, %v1690
        %1708 = vst.msk [vmem:[%s536 + $0x48] sm:$0xf] %vm1698, %v1691
        %1709 = vst.msk [vmem:[%s536 + $0x50] sm:$0xf] %vm1698, %v1692
        %1710 = vst.msk [vmem:[%s536 + $0x58] sm:$0xf] %vm1698, %v1693
        %1711 = vst.msk [vmem:[%s536 + $0x60] sm:$0xf] %vm1698, %v1694
        %1712 = vst.msk [vmem:[%s536 + $0x68] sm:$0xf] %vm1698, %v1695
        %1713 = vst.msk [vmem:[%s536 + $0x70] sm:$0xf] %vm1698, %v1696
        %1714 = vst.msk [vmem:[%s536 + $0x78] sm:$0xf] %vm1698, %v1697
        %v1715 = vld [vmem:[%s517] sm:$0xf]
        %v1716 = vld [vmem:[%s517 + $0x4] sm:$0xf]
        %v1717 = vld [vmem:[%s517 + $0x8] sm:$0xf]
        %v1718 = vld [vmem:[%s517 + $0xc] sm:$0xf]
        %v1719 = vld [vmem:[%s517 + $0x10] sm:$0xf]
        %v1720 = vld [vmem:[%s517 + $0x14] sm:$0xf]
        %v1721 = vld [vmem:[%s517 + $0x18] sm:$0xf]
        %v1722 = vld [vmem:[%s517 + $0x1c] sm:$0xf]
        %v1723 = vld [vmem:[%s517 + $0x20] sm:$0xf]
        %v1724 = vld [vmem:[%s517 + $0x24] sm:$0xf]
        %v1725 = vld [vmem:[%s517 + $0x28] sm:$0xf]
        %v1726 = vld [vmem:[%s517 + $0x2c] sm:$0xf]
        %v1727 = vld [vmem:[%s517 + $0x30] sm:$0xf]
        %v1728 = vld [vmem:[%s517 + $0x34] sm:$0xf]
        %v1729 = vld [vmem:[%s517 + $0x38] sm:$0xf]
        %v1730 = vld [vmem:[%s517 + $0x3c] sm:$0xf]
        %1747 = vrot.lane.b32.xlu0 %v1715, 96
        %v1748 = vpop.permute.xlu0 %1747
        %1749 = vrot.lane.b32.xlu0 %v1716, 96
        %v1750 = vpop.permute.xlu0 %1749
        %1751 = vrot.lane.b32.xlu0 %v1717, 96
        %v1752 = vpop.permute.xlu0 %1751
        %1753 = vrot.lane.b32.xlu0 %v1718, 96
        %v1754 = vpop.permute.xlu0 %1753
        %1755 = vrot.lane.b32.xlu0 %v1719, 96
        %v1756 = vpop.permute.xlu0 %1755
        %1757 = vrot.lane.b32.xlu0 %v1720, 96
        %v1758 = vpop.permute.xlu0 %1757
        %1759 = vrot.lane.b32.xlu0 %v1721, 96
        %v1760 = vpop.permute.xlu0 %1759
        %1761 = vrot.lane.b32.xlu0 %v1722, 96
        %v1762 = vpop.permute.xlu0 %1761
        %1763 = vrot.lane.b32.xlu0 %v1723, 96
        %v1764 = vpop.permute.xlu0 %1763
        %1765 = vrot.lane.b32.xlu0 %v1724, 96
        %v1766 = vpop.permute.xlu0 %1765
        %1767 = vrot.lane.b32.xlu0 %v1725, 96
        %v1768 = vpop.permute.xlu0 %1767
        %1769 = vrot.lane.b32.xlu0 %v1726, 96
        %v1770 = vpop.permute.xlu0 %1769
        %1771 = vrot.lane.b32.xlu0 %v1727, 96
        %v1772 = vpop.permute.xlu0 %1771
        %1773 = vrot.lane.b32.xlu0 %v1728, 96
        %v1774 = vpop.permute.xlu0 %1773
        %1775 = vrot.lane.b32.xlu0 %v1729, 96
        %v1776 = vpop.permute.xlu0 %1775
        %1777 = vrot.lane.b32.xlu0 %v1730, 96
        %v1778 = vpop.permute.xlu0 %1777
        %v1779 = vrot.slane %v1748, 4
        %v1780 = vrot.slane %v1750, 4
        %v1781 = vrot.slane %v1752, 4
        %v1782 = vrot.slane %v1754, 4
        %v1783 = vrot.slane %v1756, 4
        %v1784 = vrot.slane %v1758, 4
        %v1785 = vrot.slane %v1760, 4
        %v1786 = vrot.slane %v1762, 4
        %v1787 = vrot.slane %v1764, 4
        %v1788 = vrot.slane %v1766, 4
        %v1789 = vrot.slane %v1768, 4
        %v1790 = vrot.slane %v1770, 4
        %v1791 = vrot.slane %v1772, 4
        %v1792 = vrot.slane %v1774, 4
        %v1793 = vrot.slane %v1776, 4
        %v1794 = vrot.slane %v1778, 4
        %vm1795 = vcmask 785408
        %v1796 = vsel %vm1795, %v1779, %v1748
        %v1797 = vsel %vm1795, %v1780, %v1750
        %v1798 = vsel %vm1795, %v1781, %v1752
        %v1799 = vsel %vm1795, %v1782, %v1754
        %v1800 = vsel %vm1795, %v1783, %v1756
        %v1801 = vsel %vm1795, %v1784, %v1758
        %v1802 = vsel %vm1795, %v1785, %v1760
        %v1803 = vsel %vm1795, %v1786, %v1762
        %v1804 = vsel %vm1795, %v1787, %v1764
        %v1805 = vsel %vm1795, %v1788, %v1766
        %v1806 = vsel %vm1795, %v1789, %v1768
        %v1807 = vsel %vm1795, %v1790, %v1770
        %v1808 = vsel %vm1795, %v1791, %v1772
        %v1809 = vsel %vm1795, %v1792, %v1774
        %v1810 = vsel %vm1795, %v1793, %v1776
        %v1811 = vsel %vm1795, %v1794, %v1778
        %vm1828 = vcmask 1044224
        %vm1829 = vcmask 261124
        %vm1830 = vmor %vm1829, %vm1828
        %1831 = vst.msk [vmem:[%s536] sm:$0xff] %vm1830, %v1796
        %1832 = vst.msk [vmem:[%s536 + $0x8] sm:$0xff] %vm1830, %v1797
        %1833 = vst.msk [vmem:[%s536 + $0x10] sm:$0xff] %vm1830, %v1798
        %1834 = vst.msk [vmem:[%s536 + $0x18] sm:$0xff] %vm1830, %v1799
        %1835 = vst.msk [vmem:[%s536 + $0x20] sm:$0xff] %vm1830, %v1800
        %1836 = vst.msk [vmem:[%s536 + $0x28] sm:$0xff] %vm1830, %v1801
        %1837 = vst.msk [vmem:[%s536 + $0x30] sm:$0xff] %vm1830, %v1802
        %1838 = vst.msk [vmem:[%s536 + $0x38] sm:$0xff] %vm1830, %v1803
        %1839 = vst.msk [vmem:[%s536 + $0x40] sm:$0xff] %vm1830, %v1804
        %1840 = vst.msk [vmem:[%s536 + $0x48] sm:$0xff] %vm1830, %v1805
        %1841 = vst.msk [vmem:[%s536 + $0x50] sm:$0xff] %vm1830, %v1806
        %1842 = vst.msk [vmem:[%s536 + $0x58] sm:$0xff] %vm1830, %v1807
        %1843 = vst.msk [vmem:[%s536 + $0x60] sm:$0xff] %vm1830, %v1808
        %1844 = vst.msk [vmem:[%s536 + $0x68] sm:$0xff] %vm1830, %v1809
        %1845 = vst.msk [vmem:[%s536 + $0x70] sm:$0xff] %vm1830, %v1810
        %1846 = vst.msk [vmem:[%s536 + $0x78] sm:$0xff] %vm1830, %v1811
      $region64: #{generative_step.9} parent=55 // pred_fallthru
        _
      %s1847 = smul.u32 16, %s27
      %p1848 = scmp.lt.s32.totalorder %s1847, 31
      %s1849 = scalar_select %p1848, %s1847, 31
      %s1850 = smul.addr %s1849, 8
      %s1851 = scalar_lea.vmem %s9, %s1850
      %s1852 = smul.u32 16, %s27
      %p1853 = scmp.lt.s32.totalorder %s1852, 31
      %s1854 = scalar_select %p1853, %s1852, 31
      %s1855 = smul.addr %s1854, 8
      %s1856 = scalar_lea.vmem %s10, %s1855
      %s1857 = smul.u32 16, %s27
      %p1858 = scmp.lt.s32.totalorder %s1857, 31
      %s1859 = scalar_select %p1858, %s1857, 31
      %s1860 = smul.addr %s1859, 2
      %s1861 = smul.addr %s1860, 4
      %s1862 = scalar_lea.vmem %s11, %s1861
      // Predicated region
      $region65: #{generative_step.9} parent=55 // pred_check
        %p1863 = pneg %p269
      $region66: #{generative_step.9} parent=55 // pred_check_branch
        %1865 = sbr.rel (%p1863) target = $region68
      $region67: #{generative_step.9} parent=55 // pred_region
        %s1866 = smul.u32 16, %s27
      $region68: #{generative_step.9} parent=55 // pred_fallthru
        _
      // Predicated region
      $region69: #{generative_step.9} parent=55 // pred_check
        %p1867 = pneg %p295
      $region70: #{generative_step.9} parent=55 // pred_check_branch
        %1869 = sbr.rel (%p1867) target = $region72
      $region71: #{generative_step.9} parent=55 // pred_region
        %s1870 = smul.u32 16, %s27
      $region72: #{generative_step.9} parent=55 // pred_fallthru
        _
      // Predicated region
      $region73: #{generative_step.9} parent=55 // pred_check
        %p1871 = pneg %p321
      $region74: #{generative_step.9} parent=55 // pred_check_branch
        %1873 = sbr.rel (%p1871) target = $region76
      $region75: #{generative_step.9} parent=55 // pred_region
        %s1874 = smul.u32 16, %s27
      $region76: #{generative_step.9} parent=55 // pred_fallthru
        _
    $region56: #{generative_step.9} parent=5 // pred_fallthru
      _
    %p1875 = scmp.le.s32.totalorder 2, %s18
    // Predicated region
    $region77: #{generative_step.9} parent=5 // pred_check
      %p1876 = pneg %p1875
    $region78: #{generative_step.9} parent=5 // pred_check_branch
      %1878 = sbr.rel (%p1876) target = $region80
    $region79: #{generative_step.9} parent=5 // pred_region
      %s1879 = ssub.s32 %s18, 2
      // Predicated region
      $region81: #{generative_step.9} parent=79 // pred_check
        %p1880 = pneg %p275
      $region82: #{generative_step.9} parent=79 // pred_check_branch
        %1882 = sbr.rel (%p1880) target = $region84
      $region83: #{generative_step.9} parent=79 // pred_region
        %s1883 = smul.u32 16, %s29
        %p1884 = scmp.lt.s32.totalorder %s1883, 31
        %s1885 = scalar_select %p1884, %s1883, 31
        %s1886 = smul.addr %s1885, 8
        %s1887 = scalar_lea.vmem %s9, %s1886
      $region84: #{generative_step.9} parent=79 // pred_fallthru
        _
      // Predicated region
      $region85: #{generative_step.9} parent=79 // pred_check
        %p1888 = pneg %p301
      $region86: #{generative_step.9} parent=79 // pred_check_branch
        %1890 = sbr.rel (%p1888) target = $region88
      $region87: #{generative_step.9} parent=79 // pred_region
        %s1891 = smul.u32 16, %s29
        %p1892 = scmp.lt.s32.totalorder %s1891, 31
        %s1893 = scalar_select %p1892, %s1891, 31
        %s1894 = smul.addr %s1893, 8
        %s1895 = scalar_lea.vmem %s10, %s1894
      $region88: #{generative_step.9} parent=79 // pred_fallthru
        _
      // Predicated region
      $region89: #{generative_step.9} parent=79 // pred_check
        %p1896 = pneg %p327
      $region90: #{generative_step.9} parent=79 // pred_check_branch
        %1898 = sbr.rel (%p1896) target = $region92
      $region91: #{generative_step.9} parent=79 // pred_region
        %s1899 = smul.u32 16, %s29
        %p1900 = scmp.lt.s32.totalorder %s1899, 31
        %s1901 = scalar_select %p1900, %s1899, 31
        %s1902 = smul.addr %s1901, 2
        %s1903 = smul.addr %s1902, 4
        %s1904 = scalar_lea.vmem %s11, %s1903
      $region92: #{generative_step.9} parent=79 // pred_fallthru
        _
    $region80: #{generative_step.9} parent=5 // pred_fallthru
      _
  $region6: #{generative_step.9} parent=0 // loop_footer
    %s22 = sadd.s32 1, %s18
  $region7: #{generative_step.9} parent=0 // loop_footer_branch
    %17 = sbr.rel target = $region3
  $region8: #{generative_step.9} parent=0 // loop_exit
    _

// kernel: generative_step.10
$region0: #{generative_step.10}
  #allocation0 [shape = 'u32[]', space=smem, size = 0x4, offset = 0x4, fixed_abs, tag = 'smem constant byte address 0x4 - core index']
  #allocation1 [shape = 'u32[72,128]{1,0:T(1,128)}', space=vmem, size = 0x9000, scoped, tag = 'internal scratch']
  #allocation2 [shape = 'f32[128,160]{1,0:T(8,128)}', space=vmem, size = 0x20000, scoped, tag = 'scratch operand']
  %s0 = inlined_call_operand.vmem [shape: bf16[256,256], index: 0, kind: input, shape index: {}]
  %s1 = inlined_call_operand.vmem [shape: bf16[256,160], index: 1, kind: input, shape index: {}]
  %s2 = inlined_call_operand.vmem [shape: f32[1,96], index: 2, kind: input, shape index: {}]
  %s3 = inlined_call_operand.vmem [shape: f32[1,64], index: 3, kind: input, shape index: {}]
  %s4 = inlined_call_operand.vmem [shape: f32[256,32], index: 4, kind: input, shape index: {}]
  %s5 = inlined_call_operand.vmem [shape: bf16[32,32], index: 5, kind: input, shape index: {}]
  %s6 = inlined_call_operand.vmem [shape: f32[256,64], index: 6, kind: output, shape index: {0}]
  %s7 = inlined_call_operand.vmem [shape: bf16[256,32], index: 7, kind: output, shape index: {1}]
  %8 = xla_tuple %s6, %s7
  %s9 = sld [smem:[#allocation0]]
  $region73: #{generative_step.10} parent=0
    _
  %s11 = ssub.s32 1, %s9
  %s12 = scalar_select 0, %s11, %s9
  loop: start=0, step=1, limit=4
  $region2: #{generative_step.10} parent=0 // loop_pre_header
    _
  $region3: #{generative_step.10} parent=0 // loop_header
    %s14 = sphi 0, %s18
    %p15 = scmp.ge.s32.totalorder %s14, 4
    %s21 = sphi 0, %s33
    %s22 = sphi 0, %s29
    %s23 = sphi 0, %s21
    %s24 = sphi 0, %s22
    %s25 = sphi 0, %s23
    %s26 = sphi 0, %s24
    %s38 = sphi 0, %s40
    %s41 = sphi 0, %s38
    %s42 = sphi 0, %s41
    %s58 = sphi 0, %s42
    %s64 = sphi 0, %s66
    %s67 = sphi 0, %s64
    %s68 = sphi 0, %s67
    %s84 = sphi 0, %s68
    %s88 = sphi 0, %s88
    %s90 = sphi 0, %s88
    %s91 = sphi 0, %s90
    %s105 = sphi 0, %s91
    %s109 = sphi 0, %s109
    %s111 = sphi 0, %s109
    %s112 = sphi 0, %s111
    %s126 = sphi 0, %s112
    %s132 = sphi 0, %s134
    %s135 = sphi 0, %s132
    %s136 = sphi 0, %s135
    %s152 = sphi 0, %s136
    %s156 = sphi 0, %s156
    %s158 = sphi 0, %s156
    %s159 = sphi 0, %s158
    %s173 = sphi 0, %s159
    %s179 = sphi 0, %s181
    %s182 = sphi 0, %s179
    %s183 = sphi 0, %s182
    %s199 = sphi 0, %s183
    %s205 = sphi 0, %s207
    %s208 = sphi 0, %s205
    %s209 = sphi 0, %s208
    %s225 = sphi 0, %s209
  $region4: #{generative_step.10} parent=0 // loop_header_branch
    %17 = sbr.rel (%p15) target = $region8
  $region5: #{generative_step.10} parent=0 // loop_body
    %s19 = ssub.s32 %s14, 1
    %s20 = ssub.s32 %s14, 2
    %s27 = sadd.s32 1, %s22
    %p28 = scmp.ge.s32.totalorder %s27, 1
    %s29 = scalar_select %p28, 0, %s27
    %s30 = sadd.s32 1, %s21
    %s31 = scalar_select %p28, %s30, %s21
    %p32 = scmp.ge.s32.totalorder %s31, 2
    %s33 = scalar_select %p32, 0, %s31
    %s34 = ssub.s32 %s21, %s33
    %s35 = ssub.s32 %s22, %s29
    %s36 = sor.u32 %s34, %s35
    %p37 = scmp.eq.s32.totalorder %s36, 0
    %s39 = sadd.s32 %s38, 1
    %s40 = scalar_select %p37, %s38, %s39
    %p43 = pneg %p37
    %p44 = scmp.eq.s32.totalorder %s14, 1
    %p45 = por %p43, %p44
    %p46 = scmp.ne.s32.totalorder %s38, %s41
    %p47 = scmp.eq.s32.totalorder %s14, 0
    %p48 = por %p46, %p47
    %p49 = scmp.ne.s32.totalorder %s38, %s41
    %p50 = scmp.eq.s32.totalorder %s19, 1
    %p51 = por %p49, %p50
    %p52 = scmp.ne.s32.totalorder %s41, %s42
    %p53 = scmp.eq.s32.totalorder %s19, 0
    %p54 = por %p52, %p53
    %p55 = scmp.ne.s32.totalorder %s41, %s42
    %p56 = scmp.eq.s32.totalorder %s20, 1
    %p57 = por %p55, %p56
    %p59 = scmp.ne.s32.totalorder %s42, %s58
    %p60 = scmp.eq.s32.totalorder %s20, 0
    %p61 = por %p59, %p60
    %s62 = ssub.s32 %s22, %s29
    %p63 = scmp.eq.s32.totalorder %s62, 0
    %s65 = sadd.s32 %s64, 1
    %s66 = scalar_select %p63, %s64, %s65
    %p69 = pneg %p63
    %p70 = scmp.eq.s32.totalorder %s14, 1
    %p71 = por %p69, %p70
    %p72 = scmp.ne.s32.totalorder %s64, %s67
    %p73 = scmp.eq.s32.totalorder %s14, 0
    %p74 = por %p72, %p73
    %p75 = scmp.ne.s32.totalorder %s64, %s67
    %p76 = scmp.eq.s32.totalorder %s19, 1
    %p77 = por %p75, %p76
    %p78 = scmp.ne.s32.totalorder %s67, %s68
    %p79 = scmp.eq.s32.totalorder %s19, 0
    %p80 = por %p78, %p79
    %p81 = scmp.ne.s32.totalorder %s67, %s68
    %p82 = scmp.eq.s32.totalorder %s20, 1
    %p83 = por %p81, %p82
    %p85 = scmp.ne.s32.totalorder %s68, %s84
    %p86 = scmp.eq.s32.totalorder %s20, 0
    %p87 = por %p85, %p86
    %s89 = sadd.s32 %s88, 1
    %p92 = scmp.eq.s32.totalorder %s14, 1
    %p93 = scmp.ne.s32.totalorder %s88, %s90
    %p94 = scmp.eq.s32.totalorder %s14, 0
    %p95 = por %p93, %p94
    %p96 = scmp.ne.s32.totalorder %s88, %s90
    %p97 = scmp.eq.s32.totalorder %s19, 1
    %p98 = por %p96, %p97
    %p99 = scmp.ne.s32.totalorder %s90, %s91
    %p100 = scmp.eq.s32.totalorder %s19, 0
    %p101 = por %p99, %p100
    %p102 = scmp.ne.s32.totalorder %s90, %s91
    %p103 = scmp.eq.s32.totalorder %s20, 1
    %p104 = por %p102, %p103
    %p106 = scmp.ne.s32.totalorder %s91, %s105
    %p107 = scmp.eq.s32.totalorder %s20, 0
    %p108 = por %p106, %p107
    %s110 = sadd.s32 %s109, 1
    %p113 = scmp.eq.s32.totalorder %s14, 1
    %p114 = scmp.ne.s32.totalorder %s109, %s111
    %p115 = scmp.eq.s32.totalorder %s14, 0
    %p116 = por %p114, %p115
    %p117 = scmp.ne.s32.totalorder %s109, %s111
    %p118 = scmp.eq.s32.totalorder %s19, 1
    %p119 = por %p117, %p118
    %p120 = scmp.ne.s32.totalorder %s111, %s112
    %p121 = scmp.eq.s32.totalorder %s19, 0
    %p122 = por %p120, %p121
    %p123 = scmp.ne.s32.totalorder %s111, %s112
    %p124 = scmp.eq.s32.totalorder %s20, 1
    %p125 = por %p123, %p124
    %p127 = scmp.ne.s32.totalorder %s112, %s126
    %p128 = scmp.eq.s32.totalorder %s20, 0
    %p129 = por %p127, %p128
    %s130 = ssub.s32 %s21, %s33
    %p131 = scmp.eq.s32.totalorder %s130, 0
    %s133 = sadd.s32 %s132, 1
    %s134 = scalar_select %p131, %s132, %s133
    %p137 = pneg %p131
    %p138 = scmp.eq.s32.totalorder %s14, 1
    %p139 = por %p137, %p138
    %p140 = scmp.ne.s32.totalorder %s132, %s135
    %p141 = scmp.eq.s32.totalorder %s14, 0
    %p142 = por %p140, %p141
    %p143 = scmp.ne.s32.totalorder %s132, %s135
    %p144 = scmp.eq.s32.totalorder %s19, 1
    %p145 = por %p143, %p144
    %p146 = scmp.ne.s32.totalorder %s135, %s136
    %p147 = scmp.eq.s32.totalorder %s19, 0
    %p148 = por %p146, %p147
    %p149 = scmp.ne.s32.totalorder %s135, %s136
    %p150 = scmp.eq.s32.totalorder %s20, 1
    %p151 = por %p149, %p150
    %p153 = scmp.ne.s32.totalorder %s136, %s152
    %p154 = scmp.eq.s32.totalorder %s20, 0
    %p155 = por %p153, %p154
    %s157 = sadd.s32 %s156, 1
    %p160 = scmp.eq.s32.totalorder %s14, 1
    %p161 = scmp.ne.s32.totalorder %s156, %s158
    %p162 = scmp.eq.s32.totalorder %s14, 0
    %p163 = por %p161, %p162
    %p164 = scmp.ne.s32.totalorder %s156, %s158
    %p165 = scmp.eq.s32.totalorder %s19, 1
    %p166 = por %p164, %p165
    %p167 = scmp.ne.s32.totalorder %s158, %s159
    %p168 = scmp.eq.s32.totalorder %s19, 0
    %p169 = por %p167, %p168
    %p170 = scmp.ne.s32.totalorder %s158, %s159
    %p171 = scmp.eq.s32.totalorder %s20, 1
    %p172 = por %p170, %p171
    %p174 = scmp.ne.s32.totalorder %s159, %s173
    %p175 = scmp.eq.s32.totalorder %s20, 0
    %p176 = por %p174, %p175
    %s177 = ssub.s32 %s21, %s33
    %p178 = scmp.eq.s32.totalorder %s177, 0
    %s180 = sadd.s32 %s179, 1
    %s181 = scalar_select %p178, %s179, %s180
    %p184 = pneg %p178
    %p185 = scmp.eq.s32.totalorder %s14, 1
    %p186 = por %p184, %p185
    %p187 = scmp.ne.s32.totalorder %s179, %s182
    %p188 = scmp.eq.s32.totalorder %s14, 0
    %p189 = por %p187, %p188
    %p190 = scmp.ne.s32.totalorder %s179, %s182
    %p191 = scmp.eq.s32.totalorder %s19, 1
    %p192 = por %p190, %p191
    %p193 = scmp.ne.s32.totalorder %s182, %s183
    %p194 = scmp.eq.s32.totalorder %s19, 0
    %p195 = por %p193, %p194
    %p196 = scmp.ne.s32.totalorder %s182, %s183
    %p197 = scmp.eq.s32.totalorder %s20, 1
    %p198 = por %p196, %p197
    %p200 = scmp.ne.s32.totalorder %s183, %s199
    %p201 = scmp.eq.s32.totalorder %s20, 0
    %p202 = por %p200, %p201
    %s203 = ssub.s32 %s21, %s33
    %p204 = scmp.eq.s32.totalorder %s203, 0
    %s206 = sadd.s32 %s205, 1
    %s207 = scalar_select %p204, %s205, %s206
    %p210 = pneg %p204
    %p211 = scmp.eq.s32.totalorder %s14, 1
    %p212 = por %p210, %p211
    %p213 = scmp.ne.s32.totalorder %s205, %s208
    %p214 = scmp.eq.s32.totalorder %s14, 0
    %p215 = por %p213, %p214
    %p216 = scmp.ne.s32.totalorder %s205, %s208
    %p217 = scmp.eq.s32.totalorder %s19, 1
    %p218 = por %p216, %p217
    %p219 = scmp.ne.s32.totalorder %s208, %s209
    %p220 = scmp.eq.s32.totalorder %s19, 0
    %p221 = por %p219, %p220
    %p222 = scmp.ne.s32.totalorder %s208, %s209
    %p223 = scmp.eq.s32.totalorder %s20, 1
    %p224 = por %p222, %p223
    %p226 = scmp.ne.s32.totalorder %s209, %s225
    %p227 = scmp.eq.s32.totalorder %s20, 0
    %p228 = por %p226, %p227
    %p229 = scmp.le.s32.totalorder 1, %s14
    %p230 = scmp.lt.s32.totalorder %s14, 3
    %p231 = pnand %p229, %p230
    %p232 = pneg %p231
    // Predicated region
    $region9: #{generative_step.10} parent=5 // pred_check
      _
    $region10: #{generative_step.10} parent=5 // pred_check_branch
      %234 = sbr.rel (%p231) target = $region12
    $region11: #{generative_step.10} parent=5 // pred_region
      %s235 = ssub.s32 %s14, 1
      // Predicated region
      $region13: #{generative_step.10} parent=11 // pred_check
        %p236 = pneg %p80
      $region14: #{generative_step.10} parent=11 // pred_check_branch
        %238 = sbr.rel (%p236) target = $region16
      $region15: #{generative_step.10} parent=11 // pred_region
        %s239 = smul.u32 32, %s24
        %p240 = scmp.lt.s32.totalorder %s239, 31
        %s241 = scalar_select %p240, %s239, 31
        %s242 = smul.addr %s241, 2
        %s243 = smul.addr %s242, 4
        %s244 = scalar_lea.vmem %s1, %s243
        %s245 = smul.u32 32, %s24
      $region16: #{generative_step.10} parent=11 // pred_fallthru
        _
      // Predicated region
      $region17: #{generative_step.10} parent=11 // pred_check
        %p246 = pneg %p101
      $region18: #{generative_step.10} parent=11 // pred_check_branch
        %248 = sbr.rel (%p246) target = $region20
      $region19: #{generative_step.10} parent=11 // pred_region
        _
      $region20: #{generative_step.10} parent=11 // pred_fallthru
        _
      // Predicated region
      $region21: #{generative_step.10} parent=11 // pred_check
        %p249 = pneg %p122
      $region22: #{generative_step.10} parent=11 // pred_check_branch
        %251 = sbr.rel (%p249) target = $region24
      $region23: #{generative_step.10} parent=11 // pred_region
        _
      $region24: #{generative_step.10} parent=11 // pred_fallthru
        _
      // Predicated region
      $region25: #{generative_step.10} parent=11 // pred_check
        %p252 = pneg %p169
      $region26: #{generative_step.10} parent=11 // pred_check_branch
        %254 = sbr.rel (%p252) target = $region28
      $region27: #{generative_step.10} parent=11 // pred_region
        _
      $region28: #{generative_step.10} parent=11 // pred_fallthru
        _
    $region12: #{generative_step.10} parent=5 // pred_fallthru
      _
    %p255 = scmp.lt.s32.totalorder %s14, 2
    // Predicated region
    $region29: #{generative_step.10} parent=5 // pred_check
      %p256 = pneg %p255
    $region30: #{generative_step.10} parent=5 // pred_check_branch
      %258 = sbr.rel (%p256) target = $region32
    $region31: #{generative_step.10} parent=5 // pred_region
      // Predicated region
      $region33: #{generative_step.10} parent=31 // pred_check
        %p259 = pneg %p48
      $region34: #{generative_step.10} parent=31 // pred_check_branch
        %261 = sbr.rel (%p259) target = $region36
      $region35: #{generative_step.10} parent=31 // pred_region
        %s262 = smul.u32 16, %s21
        %s263 = smul.u32 2, %s22
        %p264 = scmp.lt.s32.totalorder %s262, 31
        %s265 = scalar_select %p264, %s262, 31
        %p266 = scmp.lt.s32.totalorder %s263, 1
        %s267 = scalar_select %p266, %s263, 1
        %s268 = smul.addr %s265, 2
        %s269 = sadd.s32 %s267, %s268
        %s270 = smul.addr %s269, 4
        %s271 = scalar_lea.vmem %s0, %s270
        %s272 = smul.u32 16, %s21
        %s273 = smul.u32 2, %s22
      $region36: #{generative_step.10} parent=31 // pred_fallthru
        _
      // Predicated region
      $region37: #{generative_step.10} parent=31 // pred_check
        %p274 = pneg %p142
      $region38: #{generative_step.10} parent=31 // pred_check_branch
        %276 = sbr.rel (%p274) target = $region40
      $region39: #{generative_step.10} parent=31 // pred_region
        %s277 = smul.u32 16, %s21
        %p278 = scmp.lt.s32.totalorder %s277, 31
        %s279 = scalar_select %p278, %s277, 31
        %s280 = smul.addr %s279, 8
        %s281 = scalar_lea.vmem %s4, %s280
        %s282 = smul.u32 16, %s21
      $region40: #{generative_step.10} parent=31 // pred_fallthru
        _
    $region32: #{generative_step.10} parent=5 // pred_fallthru
      _
    %p283 = scmp.le.s32.totalorder 1, %s14
    %p284 = scmp.lt.s32.totalorder %s14, 3
    %p285 = pnand %p283, %p284
    %p286 = pneg %p285
    // Predicated region
    $region41: #{generative_step.10} parent=5 // pred_check
      _
    $region42: #{generative_step.10} parent=5 // pred_check_branch
      %288 = sbr.rel (%p285) target = $region44
    $region43: #{generative_step.10} parent=5 // pred_region
      %s289 = ssub.s32 %s14, 1
      %s290 = smul.u32 16, %s23
      %s291 = smul.u32 2, %s24
      %p292 = scmp.lt.s32.totalorder %s290, 31
      %s293 = scalar_select %p292, %s290, 31
      %p294 = scmp.lt.s32.totalorder %s291, 1
      %s295 = scalar_select %p294, %s291, 1
      %s296 = smul.addr %s293, 2
      %s297 = sadd.s32 %s295, %s296
      %s298 = smul.addr %s297, 4
      %s299 = scalar_lea.vmem %s0, %s298
      %p300 = pneg %p54
      %p301 = pneg %p51
      %s302 = smul.u32 32, %s24
      %p303 = scmp.lt.s32.totalorder %s302, 31
      %s304 = scalar_select %p303, %s302, 31
      %s305 = smul.addr %s304, 2
      %s306 = smul.addr %s305, 4
      %s307 = scalar_lea.vmem %s1, %s306
      %p308 = pneg %p80
      %p309 = pneg %p77
      %p310 = pneg %p101
      %p311 = pneg %p98
      %p312 = pneg %p122
      %p313 = pneg %p119
      %s314 = smul.u32 16, %s23
      %p315 = scmp.lt.s32.totalorder %s314, 31
      %s316 = scalar_select %p315, %s314, 31
      %s317 = smul.addr %s316, 8
      %s318 = scalar_lea.vmem %s4, %s317
      %p319 = pneg %p148
      %p320 = pneg %p145
      %p321 = pneg %p169
      %p322 = pneg %p166
      %p323 = pneg %p195
      %p324 = pneg %p192
      %s325 = smul.u32 16, %s23
      %p326 = scmp.lt.s32.totalorder %s325, 31
      %s327 = scalar_select %p326, %s325, 31
      %s328 = smul.addr %s327, 8
      %s329 = scalar_lea.vmem %s6, %s328
      %p330 = pneg %p221
      %p331 = pneg %p218
      %s332 = smul.u32 16, %s23
      %p333 = scmp.lt.s32.totalorder %s332, 31
      %s334 = scalar_select %p333, %s332, 31
      %s335 = smul.addr %s334, 4
      %s336 = scalar_lea.vmem %s7, %s335
      %s337 = smul.u32 16, %s23
      %s338 = smul.u32 2, %s24
      %p339 = scmp.lt.s32.totalorder %s337, 31
      %s340 = scalar_select %p339, %s337, 31
      %p341 = scmp.lt.s32.totalorder %s338, 1
      %s342 = scalar_select %p341, %s338, 1
      %s343 = smul.addr %s340, 2
      %s344 = sadd.s32 %s342, %s343
      %s345 = smul.addr %s344, 4
      %s346 = scalar_lea.vmem %s0, %s345
      %s347 = smul.u32 16, %s23
      %s348 = smul.u32 2, %s24
      %s349 = smul.u32 32, %s24
      %p350 = scmp.lt.s32.totalorder %s349, 31
      %s351 = scalar_select %p350, %s349, 31
      %s352 = smul.addr %s351, 2
      %s353 = smul.addr %s352, 4
      %s354 = scalar_lea.vmem %s1, %s353
      %s355 = smul.u32 32, %s24
      %s356 = smul.u32 16, %s23
      %p357 = scmp.lt.s32.totalorder %s356, 31
      %s358 = scalar_select %p357, %s356, 31
      %s359 = smul.addr %s358, 8
      %s360 = scalar_lea.vmem %s4, %s359
      %s361 = smul.u32 16, %s23
      %s362 = smul.u32 16, %s23
      %p363 = scmp.lt.s32.totalorder %s362, 31
      %s364 = scalar_select %p363, %s362, 31
      %s365 = smul.addr %s364, 8
      %s366 = scalar_lea.vmem %s6, %s365
      %s367 = smul.u32 16, %s23
      %s368 = smul.u32 16, %s23
      %p369 = scmp.lt.s32.totalorder %s368, 31
      %s370 = scalar_select %p369, %s368, 31
      %s371 = smul.addr %s370, 4
      %s372 = scalar_lea.vmem %s7, %s371
      %s373 = smul.u32 16, %s23
      %p375 = scmp.eq.s32.totalorder %s24, 0
      // Predicated region
      $region45: #{generative_step.10} parent=43 // pred_check
        %p376 = pneg %p375
      $region46: #{generative_step.10} parent=43 // pred_check_branch
        %378 = sbr.rel (%p376) target = $region48
      $region47: #{generative_step.10} parent=43 // pred_region
        %379 = vst [vmem:[#allocation2] sm:$0xff] 0.0
        %vm380 = vcmask 261120
        %381 = vst.msk [vmem:[#allocation2 + $0x8] sm:$0xff] %vm380, 0.0
        %382 = vst [vmem:[#allocation2 + $0x10] sm:$0xff] 0.0
        %383 = vst.msk [vmem:[#allocation2 + $0x18] sm:$0xff] %vm380, 0.0
        %384 = vst [vmem:[#allocation2 + $0x20] sm:$0xff] 0.0
        %385 = vst.msk [vmem:[#allocation2 + $0x28] sm:$0xff] %vm380, 0.0
        %386 = vst [vmem:[#allocation2 + $0x30] sm:$0xff] 0.0
        %387 = vst.msk [vmem:[#allocation2 + $0x38] sm:$0xff] %vm380, 0.0
        %388 = vst [vmem:[#allocation2 + $0x40] sm:$0xff] 0.0
        %389 = vst.msk [vmem:[#allocation2 + $0x48] sm:$0xff] %vm380, 0.0
        %390 = vst [vmem:[#allocation2 + $0x50] sm:$0xff] 0.0
        %391 = vst.msk [vmem:[#allocation2 + $0x58] sm:$0xff] %vm380, 0.0
        %392 = vst [vmem:[#allocation2 + $0x60] sm:$0xff] 0.0
        %393 = vst.msk [vmem:[#allocation2 + $0x68] sm:$0xff] %vm380, 0.0
        %394 = vst [vmem:[#allocation2 + $0x70] sm:$0xff] 0.0
        %395 = vst.msk [vmem:[#allocation2 + $0x78] sm:$0xff] %vm380, 0.0
        %396 = vst [vmem:[#allocation2 + $0x80] sm:$0xff] 0.0
        %397 = vst.msk [vmem:[#allocation2 + $0x88] sm:$0xff] %vm380, 0.0
        %398 = vst [vmem:[#allocation2 + $0x90] sm:$0xff] 0.0
        %399 = vst.msk [vmem:[#allocation2 + $0x98] sm:$0xff] %vm380, 0.0
        %400 = vst [vmem:[#allocation2 + $0xa0] sm:$0xff] 0.0
        %401 = vst.msk [vmem:[#allocation2 + $0xa8] sm:$0xff] %vm380, 0.0
        %402 = vst [vmem:[#allocation2 + $0xb0] sm:$0xff] 0.0
        %403 = vst.msk [vmem:[#allocation2 + $0xb8] sm:$0xff] %vm380, 0.0
        %404 = vst [vmem:[#allocation2 + $0xc0] sm:$0xff] 0.0
        %405 = vst.msk [vmem:[#allocation2 + $0xc8] sm:$0xff] %vm380, 0.0
        %406 = vst [vmem:[#allocation2 + $0xd0] sm:$0xff] 0.0
        %407 = vst.msk [vmem:[#allocation2 + $0xd8] sm:$0xff] %vm380, 0.0
        %408 = vst [vmem:[#allocation2 + $0xe0] sm:$0xff] 0.0
        %409 = vst.msk [vmem:[#allocation2 + $0xe8] sm:$0xff] %vm380, 0.0
        %410 = vst [vmem:[#allocation2 + $0xf0] sm:$0xff] 0.0
        %411 = vst.msk [vmem:[#allocation2 + $0xf8] sm:$0xff] %vm380, 0.0
      $region48: #{generative_step.10} parent=43 // pred_fallthru
        _
      %v412 = vld [vmem:[#allocation2] sm:$0xff]
      %v413 = vld [vmem:[#allocation2 + $0x8] sm:$0xff]
      %v414 = vld [vmem:[#allocation2 + $0x10] sm:$0xff]
      %v415 = vld [vmem:[#allocation2 + $0x18] sm:$0xff]
      %v416 = vld [vmem:[#allocation2 + $0x20] sm:$0xff]
      %v417 = vld [vmem:[#allocation2 + $0x28] sm:$0xff]
      %v418 = vld [vmem:[#allocation2 + $0x30] sm:$0xff]
      %v419 = vld [vmem:[#allocation2 + $0x38] sm:$0xff]
      %v420 = vld [vmem:[#allocation2 + $0x40] sm:$0xff]
      %v421 = vld [vmem:[#allocation2 + $0x48] sm:$0xff]
      %v422 = vld [vmem:[#allocation2 + $0x50] sm:$0xff]
      %v423 = vld [vmem:[#allocation2 + $0x58] sm:$0xff]
      %v424 = vld [vmem:[#allocation2 + $0x60] sm:$0xff]
      %v425 = vld [vmem:[#allocation2 + $0x68] sm:$0xff]
      %v426 = vld [vmem:[#allocation2 + $0x70] sm:$0xff]
      %v427 = vld [vmem:[#allocation2 + $0x78] sm:$0xff]
      %v428 = vld [vmem:[#allocation2 + $0x80] sm:$0xff]
      %v429 = vld [vmem:[#allocation2 + $0x88] sm:$0xff]
      %v430 = vld [vmem:[#allocation2 + $0x90] sm:$0xff]
      %v431 = vld [vmem:[#allocation2 + $0x98] sm:$0xff]
      %v432 = vld [vmem:[#allocation2 + $0xa0] sm:$0xff]
      %v433 = vld [vmem:[#allocation2 + $0xa8] sm:$0xff]
      %v434 = vld [vmem:[#allocation2 + $0xb0] sm:$0xff]
      %v435 = vld [vmem:[#allocation2 + $0xb8] sm:$0xff]
      %v436 = vld [vmem:[#allocation2 + $0xc0] sm:$0xff]
      %v437 = vld [vmem:[#allocation2 + $0xc8] sm:$0xff]
      %v438 = vld [vmem:[#allocation2 + $0xd0] sm:$0xff]
      %v439 = vld [vmem:[#allocation2 + $0xd8] sm:$0xff]
      %v440 = vld [vmem:[#allocation2 + $0xe0] sm:$0xff]
      %v441 = vld [vmem:[#allocation2 + $0xe8] sm:$0xff]
      %v442 = vld [vmem:[#allocation2 + $0xf0] sm:$0xff]
      %v443 = vld [vmem:[#allocation2 + $0xf8] sm:$0xff]
      %v444 = vld [vmem:[%s346] sm:$0xff]
      %v445 = vld [vmem:[%s346 + $0x8] sm:$0xff]
      %v446 = vld [vmem:[%s346 + $0x10] sm:$0xff]
      %v447 = vld [vmem:[%s346 + $0x18] sm:$0xff]
      %v448 = vld [vmem:[%s346 + $0x20] sm:$0xff]
      %v449 = vld [vmem:[%s346 + $0x28] sm:$0xff]
      %v450 = vld [vmem:[%s346 + $0x30] sm:$0xff]
      %v451 = vld [vmem:[%s346 + $0x38] sm:$0xff]
      %v452 = vld [vmem:[%s346 + $0x40] sm:$0xff]
      %v453 = vld [vmem:[%s346 + $0x48] sm:$0xff]
      %v454 = vld [vmem:[%s346 + $0x50] sm:$0xff]
      %v455 = vld [vmem:[%s346 + $0x58] sm:$0xff]
      %v456 = vld [vmem:[%s346 + $0x60] sm:$0xff]
      %v457 = vld [vmem:[%s346 + $0x68] sm:$0xff]
      %v458 = vld [vmem:[%s346 + $0x70] sm:$0xff]
      %v459 = vld [vmem:[%s346 + $0x78] sm:$0xff]
      %v460 = vld [vmem:[%s354] sm:$0xff]
      %v461 = vld [vmem:[%s354 + $0x8] sm:$0xff]
      %v462 = vld [vmem:[%s354 + $0x10] sm:$0xff]
      %v463 = vld [vmem:[%s354 + $0x18] sm:$0xff]
      %v464 = vld [vmem:[%s354 + $0x20] sm:$0xff]
      %v465 = vld [vmem:[%s354 + $0x28] sm:$0xff]
      %v466 = vld [vmem:[%s354 + $0x30] sm:$0xff]
      %v467 = vld [vmem:[%s354 + $0x38] sm:$0xff]
      %v468 = vld [vmem:[%s354 + $0x40] sm:$0xff]
      %v469 = vld [vmem:[%s354 + $0x48] sm:$0xff]
      %v470 = vld [vmem:[%s354 + $0x50] sm:$0xff]
      %v471 = vld [vmem:[%s354 + $0x58] sm:$0xff]
      %v472 = vld [vmem:[%s354 + $0x60] sm:$0xff]
      %v473 = vld [vmem:[%s354 + $0x68] sm:$0xff]
      %v474 = vld [vmem:[%s354 + $0x70] sm:$0xff]
      %v475 = vld [vmem:[%s354 + $0x78] sm:$0xff]
      %v476 = vld [vmem:[%s354 + $0x80] sm:$0xff]
      %v477 = vld [vmem:[%s354 + $0x88] sm:$0xff]
      %v478 = vld [vmem:[%s354 + $0x90] sm:$0xff]
      %v479 = vld [vmem:[%s354 + $0x98] sm:$0xff]
      %v480 = vld [vmem:[%s354 + $0xa0] sm:$0xff]
      %v481 = vld [vmem:[%s354 + $0xa8] sm:$0xff]
      %v482 = vld [vmem:[%s354 + $0xb0] sm:$0xff]
      %v483 = vld [vmem:[%s354 + $0xb8] sm:$0xff]
      %v484 = vld [vmem:[%s354 + $0xc0] sm:$0xff]
      %v485 = vld [vmem:[%s354 + $0xc8] sm:$0xff]
      %v486 = vld [vmem:[%s354 + $0xd0] sm:$0xff]
      %v487 = vld [vmem:[%s354 + $0xd8] sm:$0xff]
      %v488 = vld [vmem:[%s354 + $0xe0] sm:$0xff]
      %v489 = vld [vmem:[%s354 + $0xe8] sm:$0xff]
      %v490 = vld [vmem:[%s354 + $0xf0] sm:$0xff]
      %v491 = vld [vmem:[%s354 + $0xf8] sm:$0xff]
      %v508 = vunpack.c.l.b16 %v444
      %v509 = vunpack.c.h.b16 %v444
      %v510 = vunpack.c.l.b16 %v445
      %v511 = vunpack.c.h.b16 %v445
      %v512 = vunpack.c.l.b16 %v446
      %v513 = vunpack.c.h.b16 %v446
      %v514 = vunpack.c.l.b16 %v447
      %v515 = vunpack.c.h.b16 %v447
      %v516 = vunpack.c.l.b16 %v448
      %v517 = vunpack.c.h.b16 %v448
      %v518 = vunpack.c.l.b16 %v449
      %v519 = vunpack.c.h.b16 %v449
      %v520 = vunpack.c.l.b16 %v450
      %v521 = vunpack.c.h.b16 %v450
      %v522 = vunpack.c.l.b16 %v451
      %v523 = vunpack.c.h.b16 %v451
      %v524 = vunpack.c.l.b16 %v452
      %v525 = vunpack.c.h.b16 %v452
      %v526 = vunpack.c.l.b16 %v453
      %v527 = vunpack.c.h.b16 %v453
      %v528 = vunpack.c.l.b16 %v454
      %v529 = vunpack.c.h.b16 %v454
      %v530 = vunpack.c.l.b16 %v455
      %v531 = vunpack.c.h.b16 %v455
      %v532 = vunpack.c.l.b16 %v456
      %v533 = vunpack.c.h.b16 %v456
      %v534 = vunpack.c.l.b16 %v457
      %v535 = vunpack.c.h.b16 %v457
      %v536 = vunpack.c.l.b16 %v458
      %v537 = vunpack.c.h.b16 %v458
      %v538 = vunpack.c.l.b16 %v459
      %v539 = vunpack.c.h.b16 %v459
      %v540 = vpack.c.b16 %v510, %v508
      %v541 = vpack.c.b16 %v511, %v509
      %v542 = vpack.c.b16 %v514, %v512
      %v543 = vpack.c.b16 %v515, %v513
      %v544 = vpack.c.b16 %v518, %v516
      %v545 = vpack.c.b16 %v519, %v517
      %v546 = vpack.c.b16 %v522, %v520
      %v547 = vpack.c.b16 %v523, %v521
      %v548 = vpack.c.b16 %v526, %v524
      %v549 = vpack.c.b16 %v527, %v525
      %v550 = vpack.c.b16 %v530, %v528
      %v551 = vpack.c.b16 %v531, %v529
      %v552 = vpack.c.b16 %v534, %v532
      %v553 = vpack.c.b16 %v535, %v533
      %v554 = vpack.c.b16 %v538, %v536
      %v555 = vpack.c.b16 %v539, %v537
      %v604 = vunpack.c.l.b16 %v460
      %v605 = vunpack.c.h.b16 %v460
      %v606 = vunpack.c.l.b16 %v461
      %v607 = vunpack.c.h.b16 %v461
      %v608 = vunpack.c.l.b16 %v462
      %v609 = vunpack.c.h.b16 %v462
      %v610 = vunpack.c.l.b16 %v463
      %v611 = vunpack.c.h.b16 %v463
      %v612 = vunpack.c.l.b16 %v464
      %v613 = vunpack.c.h.b16 %v464
      %v614 = vunpack.c.l.b16 %v465
      %v615 = vunpack.c.h.b16 %v465
      %v616 = vunpack.c.l.b16 %v466
      %v617 = vunpack.c.h.b16 %v466
      %v618 = vunpack.c.l.b16 %v467
      %v619 = vunpack.c.h.b16 %v467
      %v620 = vunpack.c.l.b16 %v468
      %v621 = vunpack.c.h.b16 %v468
      %v622 = vunpack.c.l.b16 %v469
      %v623 = vunpack.c.h.b16 %v469
      %v624 = vunpack.c.l.b16 %v470
      %v625 = vunpack.c.h.b16 %v470
      %v626 = vunpack.c.l.b16 %v471
      %v627 = vunpack.c.h.b16 %v471
      %v628 = vunpack.c.l.b16 %v472
      %v629 = vunpack.c.h.b16 %v472
      %v630 = vunpack.c.l.b16 %v473
      %v631 = vunpack.c.h.b16 %v473
      %v632 = vunpack.c.l.b16 %v474
      %v633 = vunpack.c.h.b16 %v474
      %v634 = vunpack.c.l.b16 %v475
      %v635 = vunpack.c.h.b16 %v475
      %v636 = vunpack.c.l.b16 %v476
      %v637 = vunpack.c.h.b16 %v476
      %v638 = vunpack.c.l.b16 %v477
      %v639 = vunpack.c.h.b16 %v477
      %v640 = vunpack.c.l.b16 %v478
      %v641 = vunpack.c.h.b16 %v478
      %v642 = vunpack.c.l.b16 %v479
      %v643 = vunpack.c.h.b16 %v479
      %v644 = vunpack.c.l.b16 %v480
      %v645 = vunpack.c.h.b16 %v480
      %v646 = vunpack.c.l.b16 %v481
      %v647 = vunpack.c.h.b16 %v481
      %v648 = vunpack.c.l.b16 %v482
      %v649 = vunpack.c.h.b16 %v482
      %v650 = vunpack.c.l.b16 %v483
      %v651 = vunpack.c.h.b16 %v483
      %v652 = vunpack.c.l.b16 %v484
      %v653 = vunpack.c.h.b16 %v484
      %v654 = vunpack.c.l.b16 %v485
      %v655 = vunpack.c.h.b16 %v485
      %v656 = vunpack.c.l.b16 %v486
      %v657 = vunpack.c.h.b16 %v486
      %v658 = vunpack.c.l.b16 %v487
      %v659 = vunpack.c.h.b16 %v487
      %v660 = vunpack.c.l.b16 %v488
      %v661 = vunpack.c.h.b16 %v488
      %v662 = vunpack.c.l.b16 %v489
      %v663 = vunpack.c.h.b16 %v489
      %v664 = vunpack.c.l.b16 %v490
      %v665 = vunpack.c.h.b16 %v490
      %v666 = vunpack.c.l.b16 %v491
      %v667 = vunpack.c.h.b16 %v491
      %v668 = vpack.c.b16 %v606, %v604
      %v669 = vpack.c.b16 %v607, %v605
      %v670 = vpack.c.b16 %v610, %v608
      %v671 = vpack.c.b16 %v611, %v609
      %v672 = vpack.c.b16 %v614, %v612
      %v673 = vpack.c.b16 %v615, %v613
      %v674 = vpack.c.b16 %v618, %v616
      %v675 = vpack.c.b16 %v619, %v617
      %v676 = vpack.c.b16 %v622, %v620
      %v677 = vpack.c.b16 %v623, %v621
      %v678 = vpack.c.b16 %v626, %v624
      %v679 = vpack.c.b16 %v627, %v625
      %v680 = vpack.c.b16 %v630, %v628
      %v681 = vpack.c.b16 %v631, %v629
      %v682 = vpack.c.b16 %v634, %v632
      %v683 = vpack.c.b16 %v635, %v633
      %v684 = vpack.c.b16 %v638, %v636
      %v685 = vpack.c.b16 %v639, %v637
      %v686 = vpack.c.b16 %v642, %v640
      %v687 = vpack.c.b16 %v643, %v641
      %v688 = vpack.c.b16 %v646, %v644
      %v689 = vpack.c.b16 %v647, %v645
      %v690 = vpack.c.b16 %v650, %v648
      %v691 = vpack.c.b16 %v651, %v649
      %v692 = vpack.c.b16 %v654, %v652
      %v693 = vpack.c.b16 %v655, %v653
      %v694 = vpack.c.b16 %v658, %v656
      %v695 = vpack.c.b16 %v659, %v657
      %v696 = vpack.c.b16 %v662, %v660
      %v697 = vpack.c.b16 %v663, %v661
      %v698 = vpack.c.b16 %v666, %v664
      %v699 = vpack.c.b16 %v667, %v665
      %732 = vmatpush.bf16.msra.mxu0 %v682
      %733 = vmatpush.bf16.msra.mxu0 %v680
      %734 = vmatpush.bf16.msra.mxu0 %v678
      %735 = vmatpush.bf16.msra.mxu0 %v676
      %736 = vmatpush.bf16.msra.mxu0 %v674
      %737 = vmatpush.bf16.msra.mxu0 %v672
      %738 = vmatpush.bf16.msra.mxu0 %v670
      %739 = vmatpush.bf16.msra.mxu0 %v668
      %740 = vmatmul.bf16.gmra.mxu0 %v540
      %v741 = vpop.f32.mrf.mxu0
      %v742 = vadd.f32 0.0, %v741
      %v743 = vpop.f32.mrf.mxu0
      %v744 = vadd.f32 0.0, %v743
      %745 = vmatmul.bf16.gmra.mxu0 %v542
      %v746 = vpop.f32.mrf.mxu0
      %v747 = vadd.f32 0.0, %v746
      %v748 = vpop.f32.mrf.mxu0
      %v749 = vadd.f32 0.0, %v748
      %750 = vmatmul.bf16.gmra.mxu0 %v544
      %v751 = vpop.f32.mrf.mxu0
      %v752 = vadd.f32 0.0, %v751
      %v753 = vpop.f32.mrf.mxu0
      %v754 = vadd.f32 0.0, %v753
      %755 = vmatmul.bf16.gmra.mxu0 %v546
      %v756 = vpop.f32.mrf.mxu0
      %v757 = vadd.f32 0.0, %v756
      %v758 = vpop.f32.mrf.mxu0
      %v759 = vadd.f32 0.0, %v758
      %760 = vmatmul.bf16.gmra.mxu0 %v548
      %v761 = vpop.f32.mrf.mxu0
      %v762 = vadd.f32 0.0, %v761
      %v763 = vpop.f32.mrf.mxu0
      %v764 = vadd.f32 0.0, %v763
      %765 = vmatmul.bf16.gmra.mxu0 %v550
      %v766 = vpop.f32.mrf.mxu0
      %v767 = vadd.f32 0.0, %v766
      %v768 = vpop.f32.mrf.mxu0
      %v769 = vadd.f32 0.0, %v768
      %770 = vmatmul.bf16.gmra.mxu0 %v552
      %v771 = vpop.f32.mrf.mxu0
      %v772 = vadd.f32 0.0, %v771
      %v773 = vpop.f32.mrf.mxu0
      %v774 = vadd.f32 0.0, %v773
      %775 = vmatmul.bf16.gmra.mxu0 %v554
      %v776 = vpop.f32.mrf.mxu0
      %v777 = vadd.f32 0.0, %v776
      %v778 = vpop.f32.mrf.mxu0
      %v779 = vadd.f32 0.0, %v778
      %780 = vdwg.mxu0
      %781 = vmatpush.bf16.msra.mxu0 %v698
      %782 = vmatpush.bf16.msra.mxu0 %v696
      %783 = vmatpush.bf16.msra.mxu0 %v694
      %784 = vmatpush.bf16.msra.mxu0 %v692
      %785 = vmatpush.bf16.msra.mxu0 %v690
      %786 = vmatpush.bf16.msra.mxu0 %v688
      %787 = vmatpush.bf16.msra.mxu0 %v686
      %788 = vmatpush.bf16.msra.mxu0 %v684
      %789 = vmatmul.bf16.gmra.mxu0 %v541
      %v790 = vpop.f32.mrf.mxu0
      %v791 = vadd.f32 %v742, %v790
      %v792 = vpop.f32.mrf.mxu0
      %v793 = vadd.f32 %v744, %v792
      %794 = vmatmul.bf16.gmra.mxu0 %v543
      %v795 = vpop.f32.mrf.mxu0
      %v796 = vadd.f32 %v747, %v795
      %v797 = vpop.f32.mrf.mxu0
      %v798 = vadd.f32 %v749, %v797
      %799 = vmatmul.bf16.gmra.mxu0 %v545
      %v800 = vpop.f32.mrf.mxu0
      %v801 = vadd.f32 %v752, %v800
      %v802 = vpop.f32.mrf.mxu0
      %v803 = vadd.f32 %v754, %v802
      %804 = vmatmul.bf16.gmra.mxu0 %v547
      %v805 = vpop.f32.mrf.mxu0
      %v806 = vadd.f32 %v757, %v805
      %v807 = vpop.f32.mrf.mxu0
      %v808 = vadd.f32 %v759, %v807
      %809 = vmatmul.bf16.gmra.mxu0 %v549
      %v810 = vpop.f32.mrf.mxu0
      %v811 = vadd.f32 %v762, %v810
      %v812 = vpop.f32.mrf.mxu0
      %v813 = vadd.f32 %v764, %v812
      %814 = vmatmul.bf16.gmra.mxu0 %v551
      %v815 = vpop.f32.mrf.mxu0
      %v816 = vadd.f32 %v767, %v815
      %v817 = vpop.f32.mrf.mxu0
      %v818 = vadd.f32 %v769, %v817
      %819 = vmatmul.bf16.gmra.mxu0 %v553
      %v820 = vpop.f32.mrf.mxu0
      %v821 = vadd.f32 %v772, %v820
      %v822 = vpop.f32.mrf.mxu0
      %v823 = vadd.f32 %v774, %v822
      %824 = vmatmul.bf16.gmra.mxu0 %v555
      %v825 = vpop.f32.mrf.mxu0
      %v826 = vadd.f32 %v777, %v825
      %v827 = vpop.f32.mrf.mxu0
      %v828 = vadd.f32 %v779, %v827
      %829 = vdwg.mxu0
      %830 = vmatpush.bf16.msra.mxu0 %v683
      %831 = vmatpush.bf16.msra.mxu0 %v681
      %832 = vmatpush.bf16.msra.mxu0 %v679
      %833 = vmatpush.bf16.msra.mxu0 %v677
      %834 = vmatpush.bf16.msra.mxu0 %v675
      %835 = vmatpush.bf16.msra.mxu0 %v673
      %836 = vmatpush.bf16.msra.mxu0 %v671
      %837 = vmatpush.bf16.msra.mxu0 %v669
      %838 = vmatmul.bf16.gmra.mxu0 %v540
      %v839 = vpop.f32.mrf.mxu0
      %v840 = vadd.f32 0.0, %v839
      %v841 = vpop.f32.mrf.mxu0
      %v842 = vadd.f32 0.0, %v841
      %843 = vmatmul.bf16.gmra.mxu0 %v542
      %v844 = vpop.f32.mrf.mxu0
      %v845 = vadd.f32 0.0, %v844
      %v846 = vpop.f32.mrf.mxu0
      %v847 = vadd.f32 0.0, %v846
      %848 = vmatmul.bf16.gmra.mxu0 %v544
      %v849 = vpop.f32.mrf.mxu0
      %v850 = vadd.f32 0.0, %v849
      %v851 = vpop.f32.mrf.mxu0
      %v852 = vadd.f32 0.0, %v851
      %853 = vmatmul.bf16.gmra.mxu0 %v546
      %v854 = vpop.f32.mrf.mxu0
      %v855 = vadd.f32 0.0, %v854
      %v856 = vpop.f32.mrf.mxu0
      %v857 = vadd.f32 0.0, %v856
      %858 = vmatmul.bf16.gmra.mxu0 %v548
      %v859 = vpop.f32.mrf.mxu0
      %v860 = vadd.f32 0.0, %v859
      %v861 = vpop.f32.mrf.mxu0
      %v862 = vadd.f32 0.0, %v861
      %863 = vmatmul.bf16.gmra.mxu0 %v550
      %v864 = vpop.f32.mrf.mxu0
      %v865 = vadd.f32 0.0, %v864
      %v866 = vpop.f32.mrf.mxu0
      %v867 = vadd.f32 0.0, %v866
      %868 = vmatmul.bf16.gmra.mxu0 %v552
      %v869 = vpop.f32.mrf.mxu0
      %v870 = vadd.f32 0.0, %v869
      %v871 = vpop.f32.mrf.mxu0
      %v872 = vadd.f32 0.0, %v871
      %873 = vmatmul.bf16.gmra.mxu0 %v554
      %v874 = vpop.f32.mrf.mxu0
      %v875 = vadd.f32 0.0, %v874
      %v876 = vpop.f32.mrf.mxu0
      %v877 = vadd.f32 0.0, %v876
      %878 = vdwg.mxu0
      %879 = vmatpush.bf16.msra.mxu0 %v699
      %880 = vmatpush.bf16.msra.mxu0 %v697
      %881 = vmatpush.bf16.msra.mxu0 %v695
      %882 = vmatpush.bf16.msra.mxu0 %v693
      %883 = vmatpush.bf16.msra.mxu0 %v691
      %884 = vmatpush.bf16.msra.mxu0 %v689
      %885 = vmatpush.bf16.msra.mxu0 %v687
      %886 = vmatpush.bf16.msra.mxu0 %v685
      %887 = vmatmul.bf16.gmra.mxu0 %v541
      %v888 = vpop.f32.mrf.mxu0
      %v889 = vadd.f32 %v840, %v888
      %v890 = vpop.f32.mrf.mxu0
      %v891 = vadd.f32 %v842, %v890
      %892 = vmatmul.bf16.gmra.mxu0 %v543
      %v893 = vpop.f32.mrf.mxu0
      %v894 = vadd.f32 %v845, %v893
      %v895 = vpop.f32.mrf.mxu0
      %v896 = vadd.f32 %v847, %v895
      %897 = vmatmul.bf16.gmra.mxu0 %v545
      %v898 = vpop.f32.mrf.mxu0
      %v899 = vadd.f32 %v850, %v898
      %v900 = vpop.f32.mrf.mxu0
      %v901 = vadd.f32 %v852, %v900
      %902 = vmatmul.bf16.gmra.mxu0 %v547
      %v903 = vpop.f32.mrf.mxu0
      %v904 = vadd.f32 %v855, %v903
      %v905 = vpop.f32.mrf.mxu0
      %v906 = vadd.f32 %v857, %v905
      %907 = vmatmul.bf16.gmra.mxu0 %v549
      %v908 = vpop.f32.mrf.mxu0
      %v909 = vadd.f32 %v860, %v908
      %v910 = vpop.f32.mrf.mxu0
      %v911 = vadd.f32 %v862, %v910
      %912 = vmatmul.bf16.gmra.mxu0 %v551
      %v913 = vpop.f32.mrf.mxu0
      %v914 = vadd.f32 %v865, %v913
      %v915 = vpop.f32.mrf.mxu0
      %v916 = vadd.f32 %v867, %v915
      %917 = vmatmul.bf16.gmra.mxu0 %v553
      %v918 = vpop.f32.mrf.mxu0
      %v919 = vadd.f32 %v870, %v918
      %v920 = vpop.f32.mrf.mxu0
      %v921 = vadd.f32 %v872, %v920
      %922 = vmatmul.bf16.gmra.mxu0 %v555
      %v923 = vpop.f32.mrf.mxu0
      %v924 = vadd.f32 %v875, %v923
      %v925 = vpop.f32.mrf.mxu0
      %v926 = vadd.f32 %v877, %v925
      %927 = vdwg.mxu0
      %v928 = vadd.f32 %v412, %v791
      %v929 = vadd.f32 %v413, %v889
      %v930 = vadd.f32 %v414, %v793
      %v931 = vadd.f32 %v415, %v891
      %v932 = vadd.f32 %v416, %v796
      %v933 = vadd.f32 %v417, %v894
      %v934 = vadd.f32 %v418, %v798
      %v935 = vadd.f32 %v419, %v896
      %v936 = vadd.f32 %v420, %v801
      %v937 = vadd.f32 %v421, %v899
      %v938 = vadd.f32 %v422, %v803
      %v939 = vadd.f32 %v423, %v901
      %v940 = vadd.f32 %v424, %v806
      %v941 = vadd.f32 %v425, %v904
      %v942 = vadd.f32 %v426, %v808
      %v943 = vadd.f32 %v427, %v906
      %v944 = vadd.f32 %v428, %v811
      %v945 = vadd.f32 %v429, %v909
      %v946 = vadd.f32 %v430, %v813
      %v947 = vadd.f32 %v431, %v911
      %v948 = vadd.f32 %v432, %v816
      %v949 = vadd.f32 %v433, %v914
      %v950 = vadd.f32 %v434, %v818
      %v951 = vadd.f32 %v435, %v916
      %v952 = vadd.f32 %v436, %v821
      %v953 = vadd.f32 %v437, %v919
      %v954 = vadd.f32 %v438, %v823
      %v955 = vadd.f32 %v439, %v921
      %v956 = vadd.f32 %v440, %v826
      %v957 = vadd.f32 %v441, %v924
      %v958 = vadd.f32 %v442, %v828
      %v959 = vadd.f32 %v443, %v926
      %960 = vst [vmem:[#allocation2] sm:$0xff] %v928
      %vm961 = vcmask 261120
      %962 = vst.msk [vmem:[#allocation2 + $0x8] sm:$0xff] %vm961, %v929
      %963 = vst [vmem:[#allocation2 + $0x10] sm:$0xff] %v930
      %964 = vst.msk [vmem:[#allocation2 + $0x18] sm:$0xff] %vm961, %v931
      %965 = vst [vmem:[#allocation2 + $0x20] sm:$0xff] %v932
      %966 = vst.msk [vmem:[#allocation2 + $0x28] sm:$0xff] %vm961, %v933
      %967 = vst [vmem:[#allocation2 + $0x30] sm:$0xff] %v934
      %968 = vst.msk [vmem:[#allocation2 + $0x38] sm:$0xff] %vm961, %v935
      %969 = vst [vmem:[#allocation2 + $0x40] sm:$0xff] %v936
      %970 = vst.msk [vmem:[#allocation2 + $0x48] sm:$0xff] %vm961, %v937
      %971 = vst [vmem:[#allocation2 + $0x50] sm:$0xff] %v938
      %972 = vst.msk [vmem:[#allocation2 + $0x58] sm:$0xff] %vm961, %v939
      %973 = vst [vmem:[#allocation2 + $0x60] sm:$0xff] %v940
      %974 = vst.msk [vmem:[#allocation2 + $0x68] sm:$0xff] %vm961, %v941
      %975 = vst [vmem:[#allocation2 + $0x70] sm:$0xff] %v942
      %976 = vst.msk [vmem:[#allocation2 + $0x78] sm:$0xff] %vm961, %v943
      %977 = vst [vmem:[#allocation2 + $0x80] sm:$0xff] %v944
      %978 = vst.msk [vmem:[#allocation2 + $0x88] sm:$0xff] %vm961, %v945
      %979 = vst [vmem:[#allocation2 + $0x90] sm:$0xff] %v946
      %980 = vst.msk [vmem:[#allocation2 + $0x98] sm:$0xff] %vm961, %v947
      %981 = vst [vmem:[#allocation2 + $0xa0] sm:$0xff] %v948
      %982 = vst.msk [vmem:[#allocation2 + $0xa8] sm:$0xff] %vm961, %v949
      %983 = vst [vmem:[#allocation2 + $0xb0] sm:$0xff] %v950
      %984 = vst.msk [vmem:[#allocation2 + $0xb8] sm:$0xff] %vm961, %v951
      %985 = vst [vmem:[#allocation2 + $0xc0] sm:$0xff] %v952
      %986 = vst.msk [vmem:[#allocation2 + $0xc8] sm:$0xff] %vm961, %v953
      %987 = vst [vmem:[#allocation2 + $0xd0] sm:$0xff] %v954
      %988 = vst.msk [vmem:[#allocation2 + $0xd8] sm:$0xff] %vm961, %v955
      %989 = vst [vmem:[#allocation2 + $0xe0] sm:$0xff] %v956
      %990 = vst.msk [vmem:[#allocation2 + $0xe8] sm:$0xff] %vm961, %v957
      %991 = vst [vmem:[#allocation2 + $0xf0] sm:$0xff] %v958
      %992 = vst.msk [vmem:[#allocation2 + $0xf8] sm:$0xff] %vm961, %v959
      // Predicated region
      $region49: #{generative_step.10} parent=43 // pred_check
        %p993 = pneg %p375
      $region50: #{generative_step.10} parent=43 // pred_check_branch
        %995 = sbr.rel (%p993) target = $region52
      $region51: #{generative_step.10} parent=43 // pred_region
        %v996 = vld [vmem:[#allocation2] sm:$0xff]
        %v997 = vld [vmem:[#allocation2 + $0x8] sm:$0xff]
        %v998 = vld [vmem:[#allocation2 + $0x10] sm:$0xff]
        %v999 = vld [vmem:[#allocation2 + $0x18] sm:$0xff]
        %v1000 = vld [vmem:[#allocation2 + $0x20] sm:$0xff]
        %v1001 = vld [vmem:[#allocation2 + $0x28] sm:$0xff]
        %v1002 = vld [vmem:[#allocation2 + $0x30] sm:$0xff]
        %v1003 = vld [vmem:[#allocation2 + $0x38] sm:$0xff]
        %v1004 = vld [vmem:[#allocation2 + $0x40] sm:$0xff]
        %v1005 = vld [vmem:[#allocation2 + $0x48] sm:$0xff]
        %v1006 = vld [vmem:[#allocation2 + $0x50] sm:$0xff]
        %v1007 = vld [vmem:[#allocation2 + $0x58] sm:$0xff]
        %v1008 = vld [vmem:[#allocation2 + $0x60] sm:$0xff]
        %v1009 = vld [vmem:[#allocation2 + $0x68] sm:$0xff]
        %v1010 = vld [vmem:[#allocation2 + $0x70] sm:$0xff]
        %v1011 = vld [vmem:[#allocation2 + $0x78] sm:$0xff]
        %v1012 = vld [vmem:[#allocation2 + $0x80] sm:$0xff]
        %v1013 = vld [vmem:[#allocation2 + $0x88] sm:$0xff]
        %v1014 = vld [vmem:[#allocation2 + $0x90] sm:$0xff]
        %v1015 = vld [vmem:[#allocation2 + $0x98] sm:$0xff]
        %v1016 = vld [vmem:[#allocation2 + $0xa0] sm:$0xff]
        %v1017 = vld [vmem:[#allocation2 + $0xa8] sm:$0xff]
        %v1018 = vld [vmem:[#allocation2 + $0xb0] sm:$0xff]
        %v1019 = vld [vmem:[#allocation2 + $0xb8] sm:$0xff]
        %v1020 = vld [vmem:[#allocation2 + $0xc0] sm:$0xff]
        %v1021 = vld [vmem:[#allocation2 + $0xc8] sm:$0xff]
        %v1022 = vld [vmem:[#allocation2 + $0xd0] sm:$0xff]
        %v1023 = vld [vmem:[#allocation2 + $0xd8] sm:$0xff]
        %v1024 = vld [vmem:[#allocation2 + $0xe0] sm:$0xff]
        %v1025 = vld [vmem:[#allocation2 + $0xe8] sm:$0xff]
        %v1026 = vld [vmem:[#allocation2 + $0xf0] sm:$0xff]
        %v1027 = vld [vmem:[#allocation2 + $0xf8] sm:$0xff]
        %v1028 = vld [vmem:[%s2] sm:$0x1]
        %v1030 = vperm.slane %v1028, 0
        %v1032 = vadd.f32 %v996, %v1030
        %v1033 = vadd.f32 %v998, %v1030
        %v1034 = vadd.f32 %v1000, %v1030
        %v1035 = vadd.f32 %v1002, %v1030
        %v1036 = vadd.f32 %v1004, %v1030
        %v1037 = vadd.f32 %v1006, %v1030
        %v1038 = vadd.f32 %v1008, %v1030
        %v1039 = vadd.f32 %v1010, %v1030
        %v1040 = vadd.f32 %v1012, %v1030
        %v1041 = vadd.f32 %v1014, %v1030
        %v1042 = vadd.f32 %v1016, %v1030
        %v1043 = vadd.f32 %v1018, %v1030
        %v1044 = vadd.f32 %v1020, %v1030
        %v1045 = vadd.f32 %v1022, %v1030
        %v1046 = vadd.f32 %v1024, %v1030
        %v1047 = vadd.f32 %v1026, %v1030
        %v1048 = vld [vmem:[%s3] sm:$0x1]
        %v1050 = vperm.slane %v1048, 0
        %1051 = vrot.lane.b32.xlu0 %v1050, 96
        %v1052 = vpop.permute.xlu0 %1051
        %v1054 = vadd.f32 %v996, %v1052
        %v1055 = vadd.f32 %v997, %v1052
        %v1056 = vadd.f32 %v998, %v1052
        %v1057 = vadd.f32 %v999, %v1052
        %v1058 = vadd.f32 %v1000, %v1052
        %v1059 = vadd.f32 %v1001, %v1052
        %v1060 = vadd.f32 %v1002, %v1052
        %v1061 = vadd.f32 %v1003, %v1052
        %v1062 = vadd.f32 %v1004, %v1052
        %v1063 = vadd.f32 %v1005, %v1052
        %v1064 = vadd.f32 %v1006, %v1052
        %v1065 = vadd.f32 %v1007, %v1052
        %v1066 = vadd.f32 %v1008, %v1052
        %v1067 = vadd.f32 %v1009, %v1052
        %v1068 = vadd.f32 %v1010, %v1052
        %v1069 = vadd.f32 %v1011, %v1052
        %v1070 = vadd.f32 %v1012, %v1052
        %v1071 = vadd.f32 %v1013, %v1052
        %v1072 = vadd.f32 %v1014, %v1052
        %v1073 = vadd.f32 %v1015, %v1052
        %v1074 = vadd.f32 %v1016, %v1052
        %v1075 = vadd.f32 %v1017, %v1052
        %v1076 = vadd.f32 %v1018, %v1052
        %v1077 = vadd.f32 %v1019, %v1052
        %v1078 = vadd.f32 %v1020, %v1052
        %v1079 = vadd.f32 %v1021, %v1052
        %v1080 = vadd.f32 %v1022, %v1052
        %v1081 = vadd.f32 %v1023, %v1052
        %v1082 = vadd.f32 %v1024, %v1052
        %v1083 = vadd.f32 %v1025, %v1052
        %v1084 = vadd.f32 %v1026, %v1052
        %v1085 = vadd.f32 %v1027, %v1052
        %1102 = vrot.lane.b32.xlu0 %v1054, 32
        %v1103 = vpop.permute.xlu0 %1102
        %1104 = vrot.lane.b32.xlu0 %v1056, 32
        %v1105 = vpop.permute.xlu0 %1104
        %1106 = vrot.lane.b32.xlu0 %v1058, 32
        %v1107 = vpop.permute.xlu0 %1106
        %1108 = vrot.lane.b32.xlu0 %v1060, 32
        %v1109 = vpop.permute.xlu0 %1108
        %1110 = vrot.lane.b32.xlu0 %v1062, 32
        %v1111 = vpop.permute.xlu0 %1110
        %1112 = vrot.lane.b32.xlu0 %v1064, 32
        %v1113 = vpop.permute.xlu0 %1112
        %1114 = vrot.lane.b32.xlu0 %v1066, 32
        %v1115 = vpop.permute.xlu0 %1114
        %1116 = vrot.lane.b32.xlu0 %v1068, 32
        %v1117 = vpop.permute.xlu0 %1116
        %1118 = vrot.lane.b32.xlu0 %v1070, 32
        %v1119 = vpop.permute.xlu0 %1118
        %1120 = vrot.lane.b32.xlu0 %v1072, 32
        %v1121 = vpop.permute.xlu0 %1120
        %1122 = vrot.lane.b32.xlu0 %v1074, 32
        %v1123 = vpop.permute.xlu0 %1122
        %1124 = vrot.lane.b32.xlu0 %v1076, 32
        %v1125 = vpop.permute.xlu0 %1124
        %1126 = vrot.lane.b32.xlu0 %v1078, 32
        %v1127 = vpop.permute.xlu0 %1126
        %1128 = vrot.lane.b32.xlu0 %v1080, 32
        %v1129 = vpop.permute.xlu0 %1128
        %1130 = vrot.lane.b32.xlu0 %v1082, 32
        %v1131 = vpop.permute.xlu0 %1130
        %1132 = vrot.lane.b32.xlu0 %v1084, 32
        %v1133 = vpop.permute.xlu0 %1132
        %v1150 = vadd.f32 %v1032, %v1103
        %v1151 = vadd.f32 %v1033, %v1105
        %v1152 = vadd.f32 %v1034, %v1107
        %v1153 = vadd.f32 %v1035, %v1109
        %v1154 = vadd.f32 %v1036, %v1111
        %v1155 = vadd.f32 %v1037, %v1113
        %v1156 = vadd.f32 %v1038, %v1115
        %v1157 = vadd.f32 %v1039, %v1117
        %v1158 = vadd.f32 %v1040, %v1119
        %v1159 = vadd.f32 %v1041, %v1121
        %v1160 = vadd.f32 %v1042, %v1123
        %v1161 = vadd.f32 %v1043, %v1125
        %v1162 = vadd.f32 %v1044, %v1127
        %v1163 = vadd.f32 %v1045, %v1129
        %v1164 = vadd.f32 %v1046, %v1131
        %v1165 = vadd.f32 %v1047, %v1133
        %v1166 = vxor.u32 %v1150, 2147483648
        %v1167 = vxor.u32 %v1151, 2147483648
        %v1168 = vxor.u32 %v1152, 2147483648
        %v1169 = vxor.u32 %v1153, 2147483648
        %v1170 = vxor.u32 %v1154, 2147483648
        %v1171 = vxor.u32 %v1155, 2147483648
        %v1172 = vxor.u32 %v1156, 2147483648
        %v1173 = vxor.u32 %v1157, 2147483648
        %v1174 = vxor.u32 %v1158, 2147483648
        %v1175 = vxor.u32 %v1159, 2147483648
        %v1176 = vxor.u32 %v1160, 2147483648
        %v1177 = vxor.u32 %v1161, 2147483648
        %v1178 = vxor.u32 %v1162, 2147483648
        %v1179 = vxor.u32 %v1163, 2147483648
        %v1180 = vxor.u32 %v1164, 2147483648
        %v1181 = vxor.u32 %v1165, 2147483648
        %v1182 = vmul.f32 %v1166, 1.442695
        %v1183 = vpow.pop %v1182
        %v1184 = vmul.f32 %v1167, 1.442695
        %v1185 = vpow.pop %v1184
        %v1186 = vmul.f32 %v1168, 1.442695
        %v1187 = vpow.pop %v1186
        %v1188 = vmul.f32 %v1169, 1.442695
        %v1189 = vpow.pop %v1188
        %v1190 = vmul.f32 %v1170, 1.442695
        %v1191 = vpow.pop %v1190
        %v1192 = vmul.f32 %v1171, 1.442695
        %v1193 = vpow.pop %v1192
        %v1194 = vmul.f32 %v1172, 1.442695
        %v1195 = vpow.pop %v1194
        %v1196 = vmul.f32 %v1173, 1.442695
        %v1197 = vpow.pop %v1196
        %v1198 = vmul.f32 %v1174, 1.442695
        %v1199 = vpow.pop %v1198
        %v1200 = vmul.f32 %v1175, 1.442695
        %v1201 = vpow.pop %v1200
        %v1202 = vmul.f32 %v1176, 1.442695
        %v1203 = vpow.pop %v1202
        %v1204 = vmul.f32 %v1177, 1.442695
        %v1205 = vpow.pop %v1204
        %v1206 = vmul.f32 %v1178, 1.442695
        %v1207 = vpow.pop %v1206
        %v1208 = vmul.f32 %v1179, 1.442695
        %v1209 = vpow.pop %v1208
        %v1210 = vmul.f32 %v1180, 1.442695
        %v1211 = vpow.pop %v1210
        %v1212 = vmul.f32 %v1181, 1.442695
        %v1213 = vpow.pop %v1212
        %v1214 = vadd.f32 %v1183, 1.0
        %v1215 = vadd.f32 %v1185, 1.0
        %v1216 = vadd.f32 %v1187, 1.0
        %v1217 = vadd.f32 %v1189, 1.0
        %v1218 = vadd.f32 %v1191, 1.0
        %v1219 = vadd.f32 %v1193, 1.0
        %v1220 = vadd.f32 %v1195, 1.0
        %v1221 = vadd.f32 %v1197, 1.0
        %v1222 = vadd.f32 %v1199, 1.0
        %v1223 = vadd.f32 %v1201, 1.0
        %v1224 = vadd.f32 %v1203, 1.0
        %v1225 = vadd.f32 %v1205, 1.0
        %v1226 = vadd.f32 %v1207, 1.0
        %v1227 = vadd.f32 %v1209, 1.0
        %v1228 = vadd.f32 %v1211, 1.0
        %v1229 = vadd.f32 %v1213, 1.0
        %v1230 = vrcp.pop %v1214
        %v1231 = vmul.f32 %v1214, %v1230
        %v1232 = vsub.f32 1.0, %v1231
        %v1233 = vmul.f32 %v1230, %v1232
        %v1234 = vadd.f32 %v1230, %v1233
        %vm1235 = vweird.f32 %v1214
        %vm1236 = vweird.f32 %v1230
        %vm1237 = vmor %vm1235, %vm1236
        %v1238 = vsel %vm1237, %v1230, %v1234
        %v1239 = vand.u32 2147483647, %v1214
        %vm1240 = vcmp.eq.f32.partialorder %v1239, 8.507059e+37
        %v1241 = vand.u32 %v1214, 2147483648
        %v1242 = vor.u32 1.1754944e-38, %v1241
        %v1243 = vsel %vm1240, %v1242, %v1238
        %v1244 = vmul.f32 1.0, %v1243
        %v1245 = vrcp.pop %v1215
        %v1246 = vmul.f32 %v1215, %v1245
        %v1247 = vsub.f32 1.0, %v1246
        %v1248 = vmul.f32 %v1245, %v1247
        %v1249 = vadd.f32 %v1245, %v1248
        %vm1250 = vweird.f32 %v1215
        %vm1251 = vweird.f32 %v1245
        %vm1252 = vmor %vm1250, %vm1251
        %v1253 = vsel %vm1252, %v1245, %v1249
        %v1254 = vand.u32 2147483647, %v1215
        %vm1255 = vcmp.eq.f32.partialorder %v1254, 8.507059e+37
        %v1256 = vand.u32 %v1215, 2147483648
        %v1257 = vor.u32 1.1754944e-38, %v1256
        %v1258 = vsel %vm1255, %v1257, %v1253
        %v1259 = vmul.f32 1.0, %v1258
        %v1260 = vrcp.pop %v1216
        %v1261 = vmul.f32 %v1216, %v1260
        %v1262 = vsub.f32 1.0, %v1261
        %v1263 = vmul.f32 %v1260, %v1262
        %v1264 = vadd.f32 %v1260, %v1263
        %vm1265 = vweird.f32 %v1216
        %vm1266 = vweird.f32 %v1260
        %vm1267 = vmor %vm1265, %vm1266
        %v1268 = vsel %vm1267, %v1260, %v1264
        %v1269 = vand.u32 2147483647, %v1216
        %vm1270 = vcmp.eq.f32.partialorder %v1269, 8.507059e+37
        %v1271 = vand.u32 %v1216, 2147483648
        %v1272 = vor.u32 1.1754944e-38, %v1271
        %v1273 = vsel %vm1270, %v1272, %v1268
        %v1274 = vmul.f32 1.0, %v1273
        %v1275 = vrcp.pop %v1217
        %v1276 = vmul.f32 %v1217, %v1275
        %v1277 = vsub.f32 1.0, %v1276
        %v1278 = vmul.f32 %v1275, %v1277
        %v1279 = vadd.f32 %v1275, %v1278
        %vm1280 = vweird.f32 %v1217
        %vm1281 = vweird.f32 %v1275
        %vm1282 = vmor %vm1280, %vm1281
        %v1283 = vsel %vm1282, %v1275, %v1279
        %v1284 = vand.u32 2147483647, %v1217
        %vm1285 = vcmp.eq.f32.partialorder %v1284, 8.507059e+37
        %v1286 = vand.u32 %v1217, 2147483648
        %v1287 = vor.u32 1.1754944e-38, %v1286
        %v1288 = vsel %vm1285, %v1287, %v1283
        %v1289 = vmul.f32 1.0, %v1288
        %v1290 = vrcp.pop %v1218
        %v1291 = vmul.f32 %v1218, %v1290
        %v1292 = vsub.f32 1.0, %v1291
        %v1293 = vmul.f32 %v1290, %v1292
        %v1294 = vadd.f32 %v1290, %v1293
        %vm1295 = vweird.f32 %v1218
        %vm1296 = vweird.f32 %v1290
        %vm1297 = vmor %vm1295, %vm1296
        %v1298 = vsel %vm1297, %v1290, %v1294
        %v1299 = vand.u32 2147483647, %v1218
        %vm1300 = vcmp.eq.f32.partialorder %v1299, 8.507059e+37
        %v1301 = vand.u32 %v1218, 2147483648
        %v1302 = vor.u32 1.1754944e-38, %v1301
        %v1303 = vsel %vm1300, %v1302, %v1298
        %v1304 = vmul.f32 1.0, %v1303
        %v1305 = vrcp.pop %v1219
        %v1306 = vmul.f32 %v1219, %v1305
        %v1307 = vsub.f32 1.0, %v1306
        %v1308 = vmul.f32 %v1305, %v1307
        %v1309 = vadd.f32 %v1305, %v1308
        %vm1310 = vweird.f32 %v1219
        %vm1311 = vweird.f32 %v1305
        %vm1312 = vmor %vm1310, %vm1311
        %v1313 = vsel %vm1312, %v1305, %v1309
        %v1314 = vand.u32 2147483647, %v1219
        %vm1315 = vcmp.eq.f32.partialorder %v1314, 8.507059e+37
        %v1316 = vand.u32 %v1219, 2147483648
        %v1317 = vor.u32 1.1754944e-38, %v1316
        %v1318 = vsel %vm1315, %v1317, %v1313
        %v1319 = vmul.f32 1.0, %v1318
        %v1320 = vrcp.pop %v1220
        %v1321 = vmul.f32 %v1220, %v1320
        %v1322 = vsub.f32 1.0, %v1321
        %v1323 = vmul.f32 %v1320, %v1322
        %v1324 = vadd.f32 %v1320, %v1323
        %vm1325 = vweird.f32 %v1220
        %vm1326 = vweird.f32 %v1320
        %vm1327 = vmor %vm1325, %vm1326
        %v1328 = vsel %vm1327, %v1320, %v1324
        %v1329 = vand.u32 2147483647, %v1220
        %vm1330 = vcmp.eq.f32.partialorder %v1329, 8.507059e+37
        %v1331 = vand.u32 %v1220, 2147483648
        %v1332 = vor.u32 1.1754944e-38, %v1331
        %v1333 = vsel %vm1330, %v1332, %v1328
        %v1334 = vmul.f32 1.0, %v1333
        %v1335 = vrcp.pop %v1221
        %v1336 = vmul.f32 %v1221, %v1335
        %v1337 = vsub.f32 1.0, %v1336
        %v1338 = vmul.f32 %v1335, %v1337
        %v1339 = vadd.f32 %v1335, %v1338
        %vm1340 = vweird.f32 %v1221
        %vm1341 = vweird.f32 %v1335
        %vm1342 = vmor %vm1340, %vm1341
        %v1343 = vsel %vm1342, %v1335, %v1339
        %v1344 = vand.u32 2147483647, %v1221
        %vm1345 = vcmp.eq.f32.partialorder %v1344, 8.507059e+37
        %v1346 = vand.u32 %v1221, 2147483648
        %v1347 = vor.u32 1.1754944e-38, %v1346
        %v1348 = vsel %vm1345, %v1347, %v1343
        %v1349 = vmul.f32 1.0, %v1348
        %v1350 = vrcp.pop %v1222
        %v1351 = vmul.f32 %v1222, %v1350
        %v1352 = vsub.f32 1.0, %v1351
        %v1353 = vmul.f32 %v1350, %v1352
        %v1354 = vadd.f32 %v1350, %v1353
        %vm1355 = vweird.f32 %v1222
        %vm1356 = vweird.f32 %v1350
        %vm1357 = vmor %vm1355, %vm1356
        %v1358 = vsel %vm1357, %v1350, %v1354
        %v1359 = vand.u32 2147483647, %v1222
        %vm1360 = vcmp.eq.f32.partialorder %v1359, 8.507059e+37
        %v1361 = vand.u32 %v1222, 2147483648
        %v1362 = vor.u32 1.1754944e-38, %v1361
        %v1363 = vsel %vm1360, %v1362, %v1358
        %v1364 = vmul.f32 1.0, %v1363
        %v1365 = vrcp.pop %v1223
        %v1366 = vmul.f32 %v1223, %v1365
        %v1367 = vsub.f32 1.0, %v1366
        %v1368 = vmul.f32 %v1365, %v1367
        %v1369 = vadd.f32 %v1365, %v1368
        %vm1370 = vweird.f32 %v1223
        %vm1371 = vweird.f32 %v1365
        %vm1372 = vmor %vm1370, %vm1371
        %v1373 = vsel %vm1372, %v1365, %v1369
        %v1374 = vand.u32 2147483647, %v1223
        %vm1375 = vcmp.eq.f32.partialorder %v1374, 8.507059e+37
        %v1376 = vand.u32 %v1223, 2147483648
        %v1377 = vor.u32 1.1754944e-38, %v1376
        %v1378 = vsel %vm1375, %v1377, %v1373
        %v1379 = vmul.f32 1.0, %v1378
        %v1380 = vrcp.pop %v1224
        %v1381 = vmul.f32 %v1224, %v1380
        %v1382 = vsub.f32 1.0, %v1381
        %v1383 = vmul.f32 %v1380, %v1382
        %v1384 = vadd.f32 %v1380, %v1383
        %vm1385 = vweird.f32 %v1224
        %vm1386 = vweird.f32 %v1380
        %vm1387 = vmor %vm1385, %vm1386
        %v1388 = vsel %vm1387, %v1380, %v1384
        %v1389 = vand.u32 2147483647, %v1224
        %vm1390 = vcmp.eq.f32.partialorder %v1389, 8.507059e+37
        %v1391 = vand.u32 %v1224, 2147483648
        %v1392 = vor.u32 1.1754944e-38, %v1391
        %v1393 = vsel %vm1390, %v1392, %v1388
        %v1394 = vmul.f32 1.0, %v1393
        %v1395 = vrcp.pop %v1225
        %v1396 = vmul.f32 %v1225, %v1395
        %v1397 = vsub.f32 1.0, %v1396
        %v1398 = vmul.f32 %v1395, %v1397
        %v1399 = vadd.f32 %v1395, %v1398
        %vm1400 = vweird.f32 %v1225
        %vm1401 = vweird.f32 %v1395
        %vm1402 = vmor %vm1400, %vm1401
        %v1403 = vsel %vm1402, %v1395, %v1399
        %v1404 = vand.u32 2147483647, %v1225
        %vm1405 = vcmp.eq.f32.partialorder %v1404, 8.507059e+37
        %v1406 = vand.u32 %v1225, 2147483648
        %v1407 = vor.u32 1.1754944e-38, %v1406
        %v1408 = vsel %vm1405, %v1407, %v1403
        %v1409 = vmul.f32 1.0, %v1408
        %v1410 = vrcp.pop %v1226
        %v1411 = vmul.f32 %v1226, %v1410
        %v1412 = vsub.f32 1.0, %v1411
        %v1413 = vmul.f32 %v1410, %v1412
        %v1414 = vadd.f32 %v1410, %v1413
        %vm1415 = vweird.f32 %v1226
        %vm1416 = vweird.f32 %v1410
        %vm1417 = vmor %vm1415, %vm1416
        %v1418 = vsel %vm1417, %v1410, %v1414
        %v1419 = vand.u32 2147483647, %v1226
        %vm1420 = vcmp.eq.f32.partialorder %v1419, 8.507059e+37
        %v1421 = vand.u32 %v1226, 2147483648
        %v1422 = vor.u32 1.1754944e-38, %v1421
        %v1423 = vsel %vm1420, %v1422, %v1418
        %v1424 = vmul.f32 1.0, %v1423
        %v1425 = vrcp.pop %v1227
        %v1426 = vmul.f32 %v1227, %v1425
        %v1427 = vsub.f32 1.0, %v1426
        %v1428 = vmul.f32 %v1425, %v1427
        %v1429 = vadd.f32 %v1425, %v1428
        %vm1430 = vweird.f32 %v1227
        %vm1431 = vweird.f32 %v1425
        %vm1432 = vmor %vm1430, %vm1431
        %v1433 = vsel %vm1432, %v1425, %v1429
        %v1434 = vand.u32 2147483647, %v1227
        %vm1435 = vcmp.eq.f32.partialorder %v1434, 8.507059e+37
        %v1436 = vand.u32 %v1227, 2147483648
        %v1437 = vor.u32 1.1754944e-38, %v1436
        %v1438 = vsel %vm1435, %v1437, %v1433
        %v1439 = vmul.f32 1.0, %v1438
        %v1440 = vrcp.pop %v1228
        %v1441 = vmul.f32 %v1228, %v1440
        %v1442 = vsub.f32 1.0, %v1441
        %v1443 = vmul.f32 %v1440, %v1442
        %v1444 = vadd.f32 %v1440, %v1443
        %vm1445 = vweird.f32 %v1228
        %vm1446 = vweird.f32 %v1440
        %vm1447 = vmor %vm1445, %vm1446
        %v1448 = vsel %vm1447, %v1440, %v1444
        %v1449 = vand.u32 2147483647, %v1228
        %vm1450 = vcmp.eq.f32.partialorder %v1449, 8.507059e+37
        %v1451 = vand.u32 %v1228, 2147483648
        %v1452 = vor.u32 1.1754944e-38, %v1451
        %v1453 = vsel %vm1450, %v1452, %v1448
        %v1454 = vmul.f32 1.0, %v1453
        %v1455 = vrcp.pop %v1229
        %v1456 = vmul.f32 %v1229, %v1455
        %v1457 = vsub.f32 1.0, %v1456
        %v1458 = vmul.f32 %v1455, %v1457
        %v1459 = vadd.f32 %v1455, %v1458
        %vm1460 = vweird.f32 %v1229
        %vm1461 = vweird.f32 %v1455
        %vm1462 = vmor %vm1460, %vm1461
        %v1463 = vsel %vm1462, %v1455, %v1459
        %v1464 = vand.u32 2147483647, %v1229
        %vm1465 = vcmp.eq.f32.partialorder %v1464, 8.507059e+37
        %v1466 = vand.u32 %v1229, 2147483648
        %v1467 = vor.u32 1.1754944e-38, %v1466
        %v1468 = vsel %vm1465, %v1467, %v1463
        %v1469 = vmul.f32 1.0, %v1468
        %1486 = vrot.lane.b32.xlu0 %v1055, 32
        %v1487 = vpop.permute.xlu0 %1486
        %1488 = vrot.lane.b32.xlu0 %v1057, 32
        %v1489 = vpop.permute.xlu0 %1488
        %1490 = vrot.lane.b32.xlu0 %v1059, 32
        %v1491 = vpop.permute.xlu0 %1490
        %1492 = vrot.lane.b32.xlu0 %v1061, 32
        %v1493 = vpop.permute.xlu0 %1492
        %1494 = vrot.lane.b32.xlu0 %v1063, 32
        %v1495 = vpop.permute.xlu0 %1494
        %1496 = vrot.lane.b32.xlu0 %v1065, 32
        %v1497 = vpop.permute.xlu0 %1496
        %1498 = vrot.lane.b32.xlu0 %v1067, 32
        %v1499 = vpop.permute.xlu0 %1498
        %1500 = vrot.lane.b32.xlu0 %v1069, 32
        %v1501 = vpop.permute.xlu0 %1500
        %1502 = vrot.lane.b32.xlu0 %v1071, 32
        %v1503 = vpop.permute.xlu0 %1502
        %1504 = vrot.lane.b32.xlu0 %v1073, 32
        %v1505 = vpop.permute.xlu0 %1504
        %1506 = vrot.lane.b32.xlu0 %v1075, 32
        %v1507 = vpop.permute.xlu0 %1506
        %1508 = vrot.lane.b32.xlu0 %v1077, 32
        %v1509 = vpop.permute.xlu0 %1508
        %1510 = vrot.lane.b32.xlu0 %v1079, 32
        %v1511 = vpop.permute.xlu0 %1510
        %1512 = vrot.lane.b32.xlu0 %v1081, 32
        %v1513 = vpop.permute.xlu0 %1512
        %1514 = vrot.lane.b32.xlu0 %v1083, 32
        %v1515 = vpop.permute.xlu0 %1514
        %1516 = vrot.lane.b32.xlu0 %v1085, 32
        %v1517 = vpop.permute.xlu0 %1516
        %v1534 = vadd.f32 %v1032, %v1487
        %v1535 = vadd.f32 %v1033, %v1489
        %v1536 = vadd.f32 %v1034, %v1491
        %v1537 = vadd.f32 %v1035, %v1493
        %v1538 = vadd.f32 %v1036, %v1495
        %v1539 = vadd.f32 %v1037, %v1497
        %v1540 = vadd.f32 %v1038, %v1499
        %v1541 = vadd.f32 %v1039, %v1501
        %v1542 = vadd.f32 %v1040, %v1503
        %v1543 = vadd.f32 %v1041, %v1505
        %v1544 = vadd.f32 %v1042, %v1507
        %v1545 = vadd.f32 %v1043, %v1509
        %v1546 = vadd.f32 %v1044, %v1511
        %v1547 = vadd.f32 %v1045, %v1513
        %v1548 = vadd.f32 %v1046, %v1515
        %v1549 = vadd.f32 %v1047, %v1517
        %v1550 = vxor.u32 %v1534, 2147483648
        %v1551 = vxor.u32 %v1535, 2147483648
        %v1552 = vxor.u32 %v1536, 2147483648
        %v1553 = vxor.u32 %v1537, 2147483648
        %v1554 = vxor.u32 %v1538, 2147483648
        %v1555 = vxor.u32 %v1539, 2147483648
        %v1556 = vxor.u32 %v1540, 2147483648
        %v1557 = vxor.u32 %v1541, 2147483648
        %v1558 = vxor.u32 %v1542, 2147483648
        %v1559 = vxor.u32 %v1543, 2147483648
        %v1560 = vxor.u32 %v1544, 2147483648
        %v1561 = vxor.u32 %v1545, 2147483648
        %v1562 = vxor.u32 %v1546, 2147483648
        %v1563 = vxor.u32 %v1547, 2147483648
        %v1564 = vxor.u32 %v1548, 2147483648
        %v1565 = vxor.u32 %v1549, 2147483648
        %v1566 = vmul.f32 %v1550, 1.442695
        %v1567 = vpow.pop %v1566
        %v1568 = vmul.f32 %v1551, 1.442695
        %v1569 = vpow.pop %v1568
        %v1570 = vmul.f32 %v1552, 1.442695
        %v1571 = vpow.pop %v1570
        %v1572 = vmul.f32 %v1553, 1.442695
        %v1573 = vpow.pop %v1572
        %v1574 = vmul.f32 %v1554, 1.442695
        %v1575 = vpow.pop %v1574
        %v1576 = vmul.f32 %v1555, 1.442695
        %v1577 = vpow.pop %v1576
        %v1578 = vmul.f32 %v1556, 1.442695
        %v1579 = vpow.pop %v1578
        %v1580 = vmul.f32 %v1557, 1.442695
        %v1581 = vpow.pop %v1580
        %v1582 = vmul.f32 %v1558, 1.442695
        %v1583 = vpow.pop %v1582
        %v1584 = vmul.f32 %v1559, 1.442695
        %v1585 = vpow.pop %v1584
        %v1586 = vmul.f32 %v1560, 1.442695
        %v1587 = vpow.pop %v1586
        %v1588 = vmul.f32 %v1561, 1.442695
        %v1589 = vpow.pop %v1588
        %v1590 = vmul.f32 %v1562, 1.442695
        %v1591 = vpow.pop %v1590
        %v1592 = vmul.f32 %v1563, 1.442695
        %v1593 = vpow.pop %v1592
        %v1594 = vmul.f32 %v1564, 1.442695
        %v1595 = vpow.pop %v1594
        %v1596 = vmul.f32 %v1565, 1.442695
        %v1597 = vpow.pop %v1596
        %v1598 = vadd.f32 %v1567, 1.0
        %v1599 = vadd.f32 %v1569, 1.0
        %v1600 = vadd.f32 %v1571, 1.0
        %v1601 = vadd.f32 %v1573, 1.0
        %v1602 = vadd.f32 %v1575, 1.0
        %v1603 = vadd.f32 %v1577, 1.0
        %v1604 = vadd.f32 %v1579, 1.0
        %v1605 = vadd.f32 %v1581, 1.0
        %v1606 = vadd.f32 %v1583, 1.0
        %v1607 = vadd.f32 %v1585, 1.0
        %v1608 = vadd.f32 %v1587, 1.0
        %v1609 = vadd.f32 %v1589, 1.0
        %v1610 = vadd.f32 %v1591, 1.0
        %v1611 = vadd.f32 %v1593, 1.0
        %v1612 = vadd.f32 %v1595, 1.0
        %v1613 = vadd.f32 %v1597, 1.0
        %v1614 = vrcp.pop %v1598
        %v1615 = vmul.f32 %v1598, %v1614
        %v1616 = vsub.f32 1.0, %v1615
        %v1617 = vmul.f32 %v1614, %v1616
        %v1618 = vadd.f32 %v1614, %v1617
        %vm1619 = vweird.f32 %v1598
        %vm1620 = vweird.f32 %v1614
        %vm1621 = vmor %vm1619, %vm1620
        %v1622 = vsel %vm1621, %v1614, %v1618
        %v1623 = vand.u32 2147483647, %v1598
        %vm1624 = vcmp.eq.f32.partialorder %v1623, 8.507059e+37
        %v1625 = vand.u32 %v1598, 2147483648
        %v1626 = vor.u32 1.1754944e-38, %v1625
        %v1627 = vsel %vm1624, %v1626, %v1622
        %v1628 = vmul.f32 1.0, %v1627
        %v1629 = vrcp.pop %v1599
        %v1630 = vmul.f32 %v1599, %v1629
        %v1631 = vsub.f32 1.0, %v1630
        %v1632 = vmul.f32 %v1629, %v1631
        %v1633 = vadd.f32 %v1629, %v1632
        %vm1634 = vweird.f32 %v1599
        %vm1635 = vweird.f32 %v1629
        %vm1636 = vmor %vm1634, %vm1635
        %v1637 = vsel %vm1636, %v1629, %v1633
        %v1638 = vand.u32 2147483647, %v1599
        %vm1639 = vcmp.eq.f32.partialorder %v1638, 8.507059e+37
        %v1640 = vand.u32 %v1599, 2147483648
        %v1641 = vor.u32 1.1754944e-38, %v1640
        %v1642 = vsel %vm1639, %v1641, %v1637
        %v1643 = vmul.f32 1.0, %v1642
        %v1644 = vrcp.pop %v1600
        %v1645 = vmul.f32 %v1600, %v1644
        %v1646 = vsub.f32 1.0, %v1645
        %v1647 = vmul.f32 %v1644, %v1646
        %v1648 = vadd.f32 %v1644, %v1647
        %vm1649 = vweird.f32 %v1600
        %vm1650 = vweird.f32 %v1644
        %vm1651 = vmor %vm1649, %vm1650
        %v1652 = vsel %vm1651, %v1644, %v1648
        %v1653 = vand.u32 2147483647, %v1600
        %vm1654 = vcmp.eq.f32.partialorder %v1653, 8.507059e+37
        %v1655 = vand.u32 %v1600, 2147483648
        %v1656 = vor.u32 1.1754944e-38, %v1655
        %v1657 = vsel %vm1654, %v1656, %v1652
        %v1658 = vmul.f32 1.0, %v1657
        %v1659 = vrcp.pop %v1601
        %v1660 = vmul.f32 %v1601, %v1659
        %v1661 = vsub.f32 1.0, %v1660
        %v1662 = vmul.f32 %v1659, %v1661
        %v1663 = vadd.f32 %v1659, %v1662
        %vm1664 = vweird.f32 %v1601
        %vm1665 = vweird.f32 %v1659
        %vm1666 = vmor %vm1664, %vm1665
        %v1667 = vsel %vm1666, %v1659, %v1663
        %v1668 = vand.u32 2147483647, %v1601
        %vm1669 = vcmp.eq.f32.partialorder %v1668, 8.507059e+37
        %v1670 = vand.u32 %v1601, 2147483648
        %v1671 = vor.u32 1.1754944e-38, %v1670
        %v1672 = vsel %vm1669, %v1671, %v1667
        %v1673 = vmul.f32 1.0, %v1672
        %v1674 = vrcp.pop %v1602
        %v1675 = vmul.f32 %v1602, %v1674
        %v1676 = vsub.f32 1.0, %v1675
        %v1677 = vmul.f32 %v1674, %v1676
        %v1678 = vadd.f32 %v1674, %v1677
        %vm1679 = vweird.f32 %v1602
        %vm1680 = vweird.f32 %v1674
        %vm1681 = vmor %vm1679, %vm1680
        %v1682 = vsel %vm1681, %v1674, %v1678
        %v1683 = vand.u32 2147483647, %v1602
        %vm1684 = vcmp.eq.f32.partialorder %v1683, 8.507059e+37
        %v1685 = vand.u32 %v1602, 2147483648
        %v1686 = vor.u32 1.1754944e-38, %v1685
        %v1687 = vsel %vm1684, %v1686, %v1682
        %v1688 = vmul.f32 1.0, %v1687
        %v1689 = vrcp.pop %v1603
        %v1690 = vmul.f32 %v1603, %v1689
        %v1691 = vsub.f32 1.0, %v1690
        %v1692 = vmul.f32 %v1689, %v1691
        %v1693 = vadd.f32 %v1689, %v1692
        %vm1694 = vweird.f32 %v1603
        %vm1695 = vweird.f32 %v1689
        %vm1696 = vmor %vm1694, %vm1695
        %v1697 = vsel %vm1696, %v1689, %v1693
        %v1698 = vand.u32 2147483647, %v1603
        %vm1699 = vcmp.eq.f32.partialorder %v1698, 8.507059e+37
        %v1700 = vand.u32 %v1603, 2147483648
        %v1701 = vor.u32 1.1754944e-38, %v1700
        %v1702 = vsel %vm1699, %v1701, %v1697
        %v1703 = vmul.f32 1.0, %v1702
        %v1704 = vrcp.pop %v1604
        %v1705 = vmul.f32 %v1604, %v1704
        %v1706 = vsub.f32 1.0, %v1705
        %v1707 = vmul.f32 %v1704, %v1706
        %v1708 = vadd.f32 %v1704, %v1707
        %vm1709 = vweird.f32 %v1604
        %vm1710 = vweird.f32 %v1704
        %vm1711 = vmor %vm1709, %vm1710
        %v1712 = vsel %vm1711, %v1704, %v1708
        %v1713 = vand.u32 2147483647, %v1604
        %vm1714 = vcmp.eq.f32.partialorder %v1713, 8.507059e+37
        %v1715 = vand.u32 %v1604, 2147483648
        %v1716 = vor.u32 1.1754944e-38, %v1715
        %v1717 = vsel %vm1714, %v1716, %v1712
        %v1718 = vmul.f32 1.0, %v1717
        %v1719 = vrcp.pop %v1605
        %v1720 = vmul.f32 %v1605, %v1719
        %v1721 = vsub.f32 1.0, %v1720
        %v1722 = vmul.f32 %v1719, %v1721
        %v1723 = vadd.f32 %v1719, %v1722
        %vm1724 = vweird.f32 %v1605
        %vm1725 = vweird.f32 %v1719
        %vm1726 = vmor %vm1724, %vm1725
        %v1727 = vsel %vm1726, %v1719, %v1723
        %v1728 = vand.u32 2147483647, %v1605
        %vm1729 = vcmp.eq.f32.partialorder %v1728, 8.507059e+37
        %v1730 = vand.u32 %v1605, 2147483648
        %v1731 = vor.u32 1.1754944e-38, %v1730
        %v1732 = vsel %vm1729, %v1731, %v1727
        %v1733 = vmul.f32 1.0, %v1732
        %v1734 = vrcp.pop %v1606
        %v1735 = vmul.f32 %v1606, %v1734
        %v1736 = vsub.f32 1.0, %v1735
        %v1737 = vmul.f32 %v1734, %v1736
        %v1738 = vadd.f32 %v1734, %v1737
        %vm1739 = vweird.f32 %v1606
        %vm1740 = vweird.f32 %v1734
        %vm1741 = vmor %vm1739, %vm1740
        %v1742 = vsel %vm1741, %v1734, %v1738
        %v1743 = vand.u32 2147483647, %v1606
        %vm1744 = vcmp.eq.f32.partialorder %v1743, 8.507059e+37
        %v1745 = vand.u32 %v1606, 2147483648
        %v1746 = vor.u32 1.1754944e-38, %v1745
        %v1747 = vsel %vm1744, %v1746, %v1742
        %v1748 = vmul.f32 1.0, %v1747
        %v1749 = vrcp.pop %v1607
        %v1750 = vmul.f32 %v1607, %v1749
        %v1751 = vsub.f32 1.0, %v1750
        %v1752 = vmul.f32 %v1749, %v1751
        %v1753 = vadd.f32 %v1749, %v1752
        %vm1754 = vweird.f32 %v1607
        %vm1755 = vweird.f32 %v1749
        %vm1756 = vmor %vm1754, %vm1755
        %v1757 = vsel %vm1756, %v1749, %v1753
        %v1758 = vand.u32 2147483647, %v1607
        %vm1759 = vcmp.eq.f32.partialorder %v1758, 8.507059e+37
        %v1760 = vand.u32 %v1607, 2147483648
        %v1761 = vor.u32 1.1754944e-38, %v1760
        %v1762 = vsel %vm1759, %v1761, %v1757
        %v1763 = vmul.f32 1.0, %v1762
        %v1764 = vrcp.pop %v1608
        %v1765 = vmul.f32 %v1608, %v1764
        %v1766 = vsub.f32 1.0, %v1765
        %v1767 = vmul.f32 %v1764, %v1766
        %v1768 = vadd.f32 %v1764, %v1767
        %vm1769 = vweird.f32 %v1608
        %vm1770 = vweird.f32 %v1764
        %vm1771 = vmor %vm1769, %vm1770
        %v1772 = vsel %vm1771, %v1764, %v1768
        %v1773 = vand.u32 2147483647, %v1608
        %vm1774 = vcmp.eq.f32.partialorder %v1773, 8.507059e+37
        %v1775 = vand.u32 %v1608, 2147483648
        %v1776 = vor.u32 1.1754944e-38, %v1775
        %v1777 = vsel %vm1774, %v1776, %v1772
        %v1778 = vmul.f32 1.0, %v1777
        %v1779 = vrcp.pop %v1609
        %v1780 = vmul.f32 %v1609, %v1779
        %v1781 = vsub.f32 1.0, %v1780
        %v1782 = vmul.f32 %v1779, %v1781
        %v1783 = vadd.f32 %v1779, %v1782
        %vm1784 = vweird.f32 %v1609
        %vm1785 = vweird.f32 %v1779
        %vm1786 = vmor %vm1784, %vm1785
        %v1787 = vsel %vm1786, %v1779, %v1783
        %v1788 = vand.u32 2147483647, %v1609
        %vm1789 = vcmp.eq.f32.partialorder %v1788, 8.507059e+37
        %v1790 = vand.u32 %v1609, 2147483648
        %v1791 = vor.u32 1.1754944e-38, %v1790
        %v1792 = vsel %vm1789, %v1791, %v1787
        %v1793 = vmul.f32 1.0, %v1792
        %v1794 = vrcp.pop %v1610
        %v1795 = vmul.f32 %v1610, %v1794
        %v1796 = vsub.f32 1.0, %v1795
        %v1797 = vmul.f32 %v1794, %v1796
        %v1798 = vadd.f32 %v1794, %v1797
        %vm1799 = vweird.f32 %v1610
        %vm1800 = vweird.f32 %v1794
        %vm1801 = vmor %vm1799, %vm1800
        %v1802 = vsel %vm1801, %v1794, %v1798
        %v1803 = vand.u32 2147483647, %v1610
        %vm1804 = vcmp.eq.f32.partialorder %v1803, 8.507059e+37
        %v1805 = vand.u32 %v1610, 2147483648
        %v1806 = vor.u32 1.1754944e-38, %v1805
        %v1807 = vsel %vm1804, %v1806, %v1802
        %v1808 = vmul.f32 1.0, %v1807
        %v1809 = vrcp.pop %v1611
        %v1810 = vmul.f32 %v1611, %v1809
        %v1811 = vsub.f32 1.0, %v1810
        %v1812 = vmul.f32 %v1809, %v1811
        %v1813 = vadd.f32 %v1809, %v1812
        %vm1814 = vweird.f32 %v1611
        %vm1815 = vweird.f32 %v1809
        %vm1816 = vmor %vm1814, %vm1815
        %v1817 = vsel %vm1816, %v1809, %v1813
        %v1818 = vand.u32 2147483647, %v1611
        %vm1819 = vcmp.eq.f32.partialorder %v1818, 8.507059e+37
        %v1820 = vand.u32 %v1611, 2147483648
        %v1821 = vor.u32 1.1754944e-38, %v1820
        %v1822 = vsel %vm1819, %v1821, %v1817
        %v1823 = vmul.f32 1.0, %v1822
        %v1824 = vrcp.pop %v1612
        %v1825 = vmul.f32 %v1612, %v1824
        %v1826 = vsub.f32 1.0, %v1825
        %v1827 = vmul.f32 %v1824, %v1826
        %v1828 = vadd.f32 %v1824, %v1827
        %vm1829 = vweird.f32 %v1612
        %vm1830 = vweird.f32 %v1824
        %vm1831 = vmor %vm1829, %vm1830
        %v1832 = vsel %vm1831, %v1824, %v1828
        %v1833 = vand.u32 2147483647, %v1612
        %vm1834 = vcmp.eq.f32.partialorder %v1833, 8.507059e+37
        %v1835 = vand.u32 %v1612, 2147483648
        %v1836 = vor.u32 1.1754944e-38, %v1835
        %v1837 = vsel %vm1834, %v1836, %v1832
        %v1838 = vmul.f32 1.0, %v1837
        %v1839 = vrcp.pop %v1613
        %v1840 = vmul.f32 %v1613, %v1839
        %v1841 = vsub.f32 1.0, %v1840
        %v1842 = vmul.f32 %v1839, %v1841
        %v1843 = vadd.f32 %v1839, %v1842
        %vm1844 = vweird.f32 %v1613
        %vm1845 = vweird.f32 %v1839
        %vm1846 = vmor %vm1844, %vm1845
        %v1847 = vsel %vm1846, %v1839, %v1843
        %v1848 = vand.u32 2147483647, %v1613
        %vm1849 = vcmp.eq.f32.partialorder %v1848, 8.507059e+37
        %v1850 = vand.u32 %v1613, 2147483648
        %v1851 = vor.u32 1.1754944e-38, %v1850
        %v1852 = vsel %vm1849, %v1851, %v1847
        %v1853 = vmul.f32 1.0, %v1852
        %1854 = vst.msk [vmem:[%s366] sm:$0xff] %vm961, %v1244
        %1855 = vst.msk [vmem:[%s366 + $0x8] sm:$0xff] %vm961, %v1259
        %1856 = vst.msk [vmem:[%s366 + $0x10] sm:$0xff] %vm961, %v1274
        %1857 = vst.msk [vmem:[%s366 + $0x18] sm:$0xff] %vm961, %v1289
        %1858 = vst.msk [vmem:[%s366 + $0x20] sm:$0xff] %vm961, %v1304
        %1859 = vst.msk [vmem:[%s366 + $0x28] sm:$0xff] %vm961, %v1319
        %1860 = vst.msk [vmem:[%s366 + $0x30] sm:$0xff] %vm961, %v1334
        %1861 = vst.msk [vmem:[%s366 + $0x38] sm:$0xff] %vm961, %v1349
        %1862 = vst.msk [vmem:[%s366 + $0x40] sm:$0xff] %vm961, %v1364
        %1863 = vst.msk [vmem:[%s366 + $0x48] sm:$0xff] %vm961, %v1379
        %1864 = vst.msk [vmem:[%s366 + $0x50] sm:$0xff] %vm961, %v1394
        %1865 = vst.msk [vmem:[%s366 + $0x58] sm:$0xff] %vm961, %v1409
        %1866 = vst.msk [vmem:[%s366 + $0x60] sm:$0xff] %vm961, %v1424
        %1867 = vst.msk [vmem:[%s366 + $0x68] sm:$0xff] %vm961, %v1439
        %1868 = vst.msk [vmem:[%s366 + $0x70] sm:$0xff] %vm961, %v1454
        %1869 = vst.msk [vmem:[%s366 + $0x78] sm:$0xff] %vm961, %v1469
        %1886 = vrot.lane.b32.xlu0 %v1032, 96
        %v1887 = vpop.permute.xlu0 %1886
        %1888 = vrot.lane.b32.xlu0 %v1033, 96
        %v1889 = vpop.permute.xlu0 %1888
        %1890 = vrot.lane.b32.xlu0 %v1034, 96
        %v1891 = vpop.permute.xlu0 %1890
        %1892 = vrot.lane.b32.xlu0 %v1035, 96
        %v1893 = vpop.permute.xlu0 %1892
        %1894 = vrot.lane.b32.xlu0 %v1036, 96
        %v1895 = vpop.permute.xlu0 %1894
        %1896 = vrot.lane.b32.xlu0 %v1037, 96
        %v1897 = vpop.permute.xlu0 %1896
        %1898 = vrot.lane.b32.xlu0 %v1038, 96
        %v1899 = vpop.permute.xlu0 %1898
        %1900 = vrot.lane.b32.xlu0 %v1039, 96
        %v1901 = vpop.permute.xlu0 %1900
        %1902 = vrot.lane.b32.xlu0 %v1040, 96
        %v1903 = vpop.permute.xlu0 %1902
        %1904 = vrot.lane.b32.xlu0 %v1041, 96
        %v1905 = vpop.permute.xlu0 %1904
        %1906 = vrot.lane.b32.xlu0 %v1042, 96
        %v1907 = vpop.permute.xlu0 %1906
        %1908 = vrot.lane.b32.xlu0 %v1043, 96
        %v1909 = vpop.permute.xlu0 %1908
        %1910 = vrot.lane.b32.xlu0 %v1044, 96
        %v1911 = vpop.permute.xlu0 %1910
        %1912 = vrot.lane.b32.xlu0 %v1045, 96
        %v1913 = vpop.permute.xlu0 %1912
        %1914 = vrot.lane.b32.xlu0 %v1046, 96
        %v1915 = vpop.permute.xlu0 %1914
        %1916 = vrot.lane.b32.xlu0 %v1047, 96
        %v1917 = vpop.permute.xlu0 %1916
        %vm1934 = vcmask 523520
        %1935 = vst.msk [vmem:[%s366] sm:$0xff] %vm1934, %v1887
        %1936 = vst.msk [vmem:[%s366 + $0x8] sm:$0xff] %vm1934, %v1889
        %1937 = vst.msk [vmem:[%s366 + $0x10] sm:$0xff] %vm1934, %v1891
        %1938 = vst.msk [vmem:[%s366 + $0x18] sm:$0xff] %vm1934, %v1893
        %1939 = vst.msk [vmem:[%s366 + $0x20] sm:$0xff] %vm1934, %v1895
        %1940 = vst.msk [vmem:[%s366 + $0x28] sm:$0xff] %vm1934, %v1897
        %1941 = vst.msk [vmem:[%s366 + $0x30] sm:$0xff] %vm1934, %v1899
        %1942 = vst.msk [vmem:[%s366 + $0x38] sm:$0xff] %vm1934, %v1901
        %1943 = vst.msk [vmem:[%s366 + $0x40] sm:$0xff] %vm1934, %v1903
        %1944 = vst.msk [vmem:[%s366 + $0x48] sm:$0xff] %vm1934, %v1905
        %1945 = vst.msk [vmem:[%s366 + $0x50] sm:$0xff] %vm1934, %v1907
        %1946 = vst.msk [vmem:[%s366 + $0x58] sm:$0xff] %vm1934, %v1909
        %1947 = vst.msk [vmem:[%s366 + $0x60] sm:$0xff] %vm1934, %v1911
        %1948 = vst.msk [vmem:[%s366 + $0x68] sm:$0xff] %vm1934, %v1913
        %1949 = vst.msk [vmem:[%s366 + $0x70] sm:$0xff] %vm1934, %v1915
        %1950 = vst.msk [vmem:[%s366 + $0x78] sm:$0xff] %vm1934, %v1917
        %v1951 = vld [vmem:[%s360] sm:$0xff]
        %v1952 = vld [vmem:[%s360 + $0x8] sm:$0xff]
        %v1953 = vld [vmem:[%s360 + $0x10] sm:$0xff]
        %v1954 = vld [vmem:[%s360 + $0x18] sm:$0xff]
        %v1955 = vld [vmem:[%s360 + $0x20] sm:$0xff]
        %v1956 = vld [vmem:[%s360 + $0x28] sm:$0xff]
        %v1957 = vld [vmem:[%s360 + $0x30] sm:$0xff]
        %v1958 = vld [vmem:[%s360 + $0x38] sm:$0xff]
        %v1959 = vld [vmem:[%s360 + $0x40] sm:$0xff]
        %v1960 = vld [vmem:[%s360 + $0x48] sm:$0xff]
        %v1961 = vld [vmem:[%s360 + $0x50] sm:$0xff]
        %v1962 = vld [vmem:[%s360 + $0x58] sm:$0xff]
        %v1963 = vld [vmem:[%s360 + $0x60] sm:$0xff]
        %v1964 = vld [vmem:[%s360 + $0x68] sm:$0xff]
        %v1965 = vld [vmem:[%s360 + $0x70] sm:$0xff]
        %v1966 = vld [vmem:[%s360 + $0x78] sm:$0xff]
        %1983 = vrot.lane.b32.xlu0 %v1951, 32
        %v1984 = vpop.permute.xlu0 %1983
        %1985 = vrot.lane.b32.xlu0 %v1952, 32
        %v1986 = vpop.permute.xlu0 %1985
        %1987 = vrot.lane.b32.xlu0 %v1953, 32
        %v1988 = vpop.permute.xlu0 %1987
        %1989 = vrot.lane.b32.xlu0 %v1954, 32
        %v1990 = vpop.permute.xlu0 %1989
        %1991 = vrot.lane.b32.xlu0 %v1955, 32
        %v1992 = vpop.permute.xlu0 %1991
        %1993 = vrot.lane.b32.xlu0 %v1956, 32
        %v1994 = vpop.permute.xlu0 %1993
        %1995 = vrot.lane.b32.xlu0 %v1957, 32
        %v1996 = vpop.permute.xlu0 %1995
        %1997 = vrot.lane.b32.xlu0 %v1958, 32
        %v1998 = vpop.permute.xlu0 %1997
        %1999 = vrot.lane.b32.xlu0 %v1959, 32
        %v2000 = vpop.permute.xlu0 %1999
        %2001 = vrot.lane.b32.xlu0 %v1960, 32
        %v2002 = vpop.permute.xlu0 %2001
        %2003 = vrot.lane.b32.xlu0 %v1961, 32
        %v2004 = vpop.permute.xlu0 %2003
        %2005 = vrot.lane.b32.xlu0 %v1962, 32
        %v2006 = vpop.permute.xlu0 %2005
        %2007 = vrot.lane.b32.xlu0 %v1963, 32
        %v2008 = vpop.permute.xlu0 %2007
        %2009 = vrot.lane.b32.xlu0 %v1964, 32
        %v2010 = vpop.permute.xlu0 %2009
        %2011 = vrot.lane.b32.xlu0 %v1965, 32
        %v2012 = vpop.permute.xlu0 %2011
        %2013 = vrot.lane.b32.xlu0 %v1966, 32
        %v2014 = vpop.permute.xlu0 %2013
        %v2031 = vmul.f32 %v1628, %v1984
        %v2032 = vmul.f32 %v1643, %v1986
        %v2033 = vmul.f32 %v1658, %v1988
        %v2034 = vmul.f32 %v1673, %v1990
        %v2035 = vmul.f32 %v1688, %v1992
        %v2036 = vmul.f32 %v1703, %v1994
        %v2037 = vmul.f32 %v1718, %v1996
        %v2038 = vmul.f32 %v1733, %v1998
        %v2039 = vmul.f32 %v1748, %v2000
        %v2040 = vmul.f32 %v1763, %v2002
        %v2041 = vmul.f32 %v1778, %v2004
        %v2042 = vmul.f32 %v1793, %v2006
        %v2043 = vmul.f32 %v1808, %v2008
        %v2044 = vmul.f32 %v1823, %v2010
        %v2045 = vmul.f32 %v1838, %v2012
        %v2046 = vmul.f32 %v1853, %v2014
        %v2047 = vpack.c.bf16 %v2032, %v2031
        %v2048 = vpack.c.bf16 %v2034, %v2033
        %v2049 = vpack.c.bf16 %v2036, %v2035
        %v2050 = vpack.c.bf16 %v2038, %v2037
        %v2051 = vpack.c.bf16 %v2040, %v2039
        %v2052 = vpack.c.bf16 %v2042, %v2041
        %v2053 = vpack.c.bf16 %v2044, %v2043
        %v2054 = vpack.c.bf16 %v2046, %v2045
        %v2055 = vld [vmem:[%s5] sm:$0xf]
        %v2056 = vld [vmem:[%s5 + $0x4] sm:$0xf]
        %v2057 = vld [vmem:[%s5 + $0x8] sm:$0xf]
        %v2058 = vld [vmem:[%s5 + $0xc] sm:$0xf]
        %2067 = vrot.lane.b32.xlu0 %v2047, 96
        %v2068 = vpop.permute.xlu0 %2067
        %2069 = vrot.lane.b32.xlu0 %v2048, 96
        %v2070 = vpop.permute.xlu0 %2069
        %2071 = vrot.lane.b32.xlu0 %v2049, 96
        %v2072 = vpop.permute.xlu0 %2071
        %2073 = vrot.lane.b32.xlu0 %v2050, 96
        %v2074 = vpop.permute.xlu0 %2073
        %2075 = vrot.lane.b32.xlu0 %v2051, 96
        %v2076 = vpop.permute.xlu0 %2075
        %2077 = vrot.lane.b32.xlu0 %v2052, 96
        %v2078 = vpop.permute.xlu0 %2077
        %2079 = vrot.lane.b32.xlu0 %v2053, 96
        %v2080 = vpop.permute.xlu0 %2079
        %2081 = vrot.lane.b32.xlu0 %v2054, 96
        %v2082 = vpop.permute.xlu0 %2081
        %v2087 = vunpack.c.l.b16 %v2055
        %v2088 = vunpack.c.l.b16 %v2056
        %v2089 = vunpack.c.l.b16 %v2057
        %v2090 = vunpack.c.l.b16 %v2058
        %v2091 = vpack.c.b16 %v2088, %v2087
        %v2092 = vpack.c.b16 %v2090, %v2089
        %v2096 = vsel %vm961, %v2068, 0
        %v2099 = vsel %vm961, %v2070, 0
        %v2102 = vsel %vm961, %v2072, 0
        %v2105 = vsel %vm961, %v2074, 0
        %v2108 = vsel %vm961, %v2076, 0
        %v2111 = vsel %vm961, %v2078, 0
        %v2114 = vsel %vm961, %v2080, 0
        %v2117 = vsel %vm961, %v2082, 0
        %2119 = vmatpush.bf16.msra.mxu0 0
        %2120 = vmatpush.bf16.msra.mxu0 0
        %2121 = vmatpush.bf16.msra.mxu0 0
        %2122 = vmatpush.bf16.msra.mxu0 0
        %2123 = vmatpush.bf16.msra.mxu0 0
        %2124 = vmatpush.bf16.msra.mxu0 0
        %2125 = vmatpush.bf16.msra.mxu0 %v2092
        %2126 = vmatpush.bf16.msra.mxu0 %v2091
        %2127 = vmatmul.bf16.gmra.mxu0 %v2096
        %v2128 = vpop.f32.mrf.mxu0
        %v2129 = vadd.f32 0.0, %v2128
        %v2130 = vpop.f32.mrf.mxu0
        %v2131 = vadd.f32 0.0, %v2130
        %2132 = vmatmul.bf16.gmra.mxu0 %v2099
        %v2133 = vpop.f32.mrf.mxu0
        %v2134 = vadd.f32 0.0, %v2133
        %v2135 = vpop.f32.mrf.mxu0
        %v2136 = vadd.f32 0.0, %v2135
        %2137 = vmatmul.bf16.gmra.mxu0 %v2102
        %v2138 = vpop.f32.mrf.mxu0
        %v2139 = vadd.f32 0.0, %v2138
        %v2140 = vpop.f32.mrf.mxu0
        %v2141 = vadd.f32 0.0, %v2140
        %2142 = vmatmul.bf16.gmra.mxu0 %v2105
        %v2143 = vpop.f32.mrf.mxu0
        %v2144 = vadd.f32 0.0, %v2143
        %v2145 = vpop.f32.mrf.mxu0
        %v2146 = vadd.f32 0.0, %v2145
        %2147 = vmatmul.bf16.gmra.mxu0 %v2108
        %v2148 = vpop.f32.mrf.mxu0
        %v2149 = vadd.f32 0.0, %v2148
        %v2150 = vpop.f32.mrf.mxu0
        %v2151 = vadd.f32 0.0, %v2150
        %2152 = vmatmul.bf16.gmra.mxu0 %v2111
        %v2153 = vpop.f32.mrf.mxu0
        %v2154 = vadd.f32 0.0, %v2153
        %v2155 = vpop.f32.mrf.mxu0
        %v2156 = vadd.f32 0.0, %v2155
        %2157 = vmatmul.bf16.gmra.mxu0 %v2114
        %v2158 = vpop.f32.mrf.mxu0
        %v2159 = vadd.f32 0.0, %v2158
        %v2160 = vpop.f32.mrf.mxu0
        %v2161 = vadd.f32 0.0, %v2160
        %2162 = vmatmul.bf16.gmra.mxu0 %v2117
        %v2163 = vpop.f32.mrf.mxu0
        %v2164 = vadd.f32 0.0, %v2163
        %v2165 = vpop.f32.mrf.mxu0
        %v2166 = vadd.f32 0.0, %v2165
        %2167 = vdwg.mxu0
        %v2168 = vpack.c.bf16 %v2129, %v2129
        %v2169 = vpack.c.bf16 %v2131, %v2131
        %v2170 = vpack.c.bf16 %v2134, %v2134
        %v2171 = vpack.c.bf16 %v2136, %v2136
        %v2172 = vpack.c.bf16 %v2139, %v2139
        %v2173 = vpack.c.bf16 %v2141, %v2141
        %v2174 = vpack.c.bf16 %v2144, %v2144
        %v2175 = vpack.c.bf16 %v2146, %v2146
        %v2176 = vpack.c.bf16 %v2149, %v2149
        %v2177 = vpack.c.bf16 %v2151, %v2151
        %v2178 = vpack.c.bf16 %v2154, %v2154
        %v2179 = vpack.c.bf16 %v2156, %v2156
        %v2180 = vpack.c.bf16 %v2159, %v2159
        %v2181 = vpack.c.bf16 %v2161, %v2161
        %v2182 = vpack.c.bf16 %v2164, %v2164
        %v2183 = vpack.c.bf16 %v2166, %v2166
        %vm2184 = vcmask 257024
        %2185 = vst.msk [vmem:[%s372] sm:$0xf] %vm2184, %v2168
        %2186 = vst.msk [vmem:[%s372 + $0x4] sm:$0xf] %vm2184, %v2169
        %2187 = vst.msk [vmem:[%s372 + $0x8] sm:$0xf] %vm2184, %v2170
        %2188 = vst.msk [vmem:[%s372 + $0xc] sm:$0xf] %vm2184, %v2171
        %2189 = vst.msk [vmem:[%s372 + $0x10] sm:$0xf] %vm2184, %v2172
        %2190 = vst.msk [vmem:[%s372 + $0x14] sm:$0xf] %vm2184, %v2173
        %2191 = vst.msk [vmem:[%s372 + $0x18] sm:$0xf] %vm2184, %v2174
        %2192 = vst.msk [vmem:[%s372 + $0x1c] sm:$0xf] %vm2184, %v2175
        %2193 = vst.msk [vmem:[%s372 + $0x20] sm:$0xf] %vm2184, %v2176
        %2194 = vst.msk [vmem:[%s372 + $0x24] sm:$0xf] %vm2184, %v2177
        %2195 = vst.msk [vmem:[%s372 + $0x28] sm:$0xf] %vm2184, %v2178
        %2196 = vst.msk [vmem:[%s372 + $0x2c] sm:$0xf] %vm2184, %v2179
        %2197 = vst.msk [vmem:[%s372 + $0x30] sm:$0xf] %vm2184, %v2180
        %2198 = vst.msk [vmem:[%s372 + $0x34] sm:$0xf] %vm2184, %v2181
        %2199 = vst.msk [vmem:[%s372 + $0x38] sm:$0xf] %vm2184, %v2182
        %2200 = vst.msk [vmem:[%s372 + $0x3c] sm:$0xf] %vm2184, %v2183
      $region52: #{generative_step.10} parent=43 // pred_fallthru
        _
      %s2201 = smul.u32 16, %s23
      %p2202 = scmp.lt.s32.totalorder %s2201, 31
      %s2203 = scalar_select %p2202, %s2201, 31
      %s2204 = smul.addr %s2203, 8
      %s2205 = scalar_lea.vmem %s6, %s2204
      %s2206 = smul.u32 16, %s23
      %p2207 = scmp.lt.s32.totalorder %s2206, 31
      %s2208 = scalar_select %p2207, %s2206, 31
      %s2209 = smul.addr %s2208, 4
      %s2210 = scalar_lea.vmem %s7, %s2209
      // Predicated region
      $region53: #{generative_step.10} parent=43 // pred_check
        %p2211 = pneg %p192
      $region54: #{generative_step.10} parent=43 // pred_check_branch
        %2213 = sbr.rel (%p2211) target = $region56
      $region55: #{generative_step.10} parent=43 // pred_region
        %s2214 = smul.u32 16, %s23
      $region56: #{generative_step.10} parent=43 // pred_fallthru
        _
      // Predicated region
      $region57: #{generative_step.10} parent=43 // pred_check
        %p2215 = pneg %p218
      $region58: #{generative_step.10} parent=43 // pred_check_branch
        %2217 = sbr.rel (%p2215) target = $region60
      $region59: #{generative_step.10} parent=43 // pred_region
        %s2218 = smul.u32 16, %s23
      $region60: #{generative_step.10} parent=43 // pred_fallthru
        _
    $region44: #{generative_step.10} parent=5 // pred_fallthru
      _
    %p2219 = scmp.le.s32.totalorder 2, %s14
    // Predicated region
    $region61: #{generative_step.10} parent=5 // pred_check
      %p2220 = pneg %p2219
    $region62: #{generative_step.10} parent=5 // pred_check_branch
      %2222 = sbr.rel (%p2220) target = $region64
    $region63: #{generative_step.10} parent=5 // pred_region
      %s2223 = ssub.s32 %s14, 2
      // Predicated region
      $region65: #{generative_step.10} parent=63 // pred_check
        %p2224 = pneg %p198
      $region66: #{generative_step.10} parent=63 // pred_check_branch
        %2226 = sbr.rel (%p2224) target = $region68
      $region67: #{generative_step.10} parent=63 // pred_region
        %s2227 = smul.u32 16, %s25
        %p2228 = scmp.lt.s32.totalorder %s2227, 31
        %s2229 = scalar_select %p2228, %s2227, 31
        %s2230 = smul.addr %s2229, 8
        %s2231 = scalar_lea.vmem %s6, %s2230
      $region68: #{generative_step.10} parent=63 // pred_fallthru
        _
      // Predicated region
      $region69: #{generative_step.10} parent=63 // pred_check
        %p2232 = pneg %p224
      $region70: #{generative_step.10} parent=63 // pred_check_branch
        %2234 = sbr.rel (%p2232) target = $region72
      $region71: #{generative_step.10} parent=63 // pred_region
        %s2235 = smul.u32 16, %s25
        %p2236 = scmp.lt.s32.totalorder %s2235, 31
        %s2237 = scalar_select %p2236, %s2235, 31
        %s2238 = smul.addr %s2237, 4
        %s2239 = scalar_lea.vmem %s7, %s2238
      $region72: #{generative_step.10} parent=63 // pred_fallthru
        _
    $region64: #{generative_step.10} parent=5 // pred_fallthru
      _
  $region6: #{generative_step.10} parent=0 // loop_footer
    %s18 = sadd.s32 1, %s14
  $region7: #{generative_step.10} parent=0 // loop_footer_branch
    %13 = sbr.rel target = $region3
  $region8: #{generative_step.10} parent=0 // loop_exit
    _

// kernel: generative_step.11
$region0: #{generative_step.11}
  #allocation0 [shape = 'u32[]', space=smem, size = 0x4, offset = 0x4, fixed_abs, tag = 'smem constant byte address 0x4 - core index']
  #allocation1 [shape = 'u32[72,128]{1,0:T(1,128)}', space=vmem, size = 0x9000, scoped, tag = 'internal scratch']
  #allocation2 [shape = 'f32[128,32]{1,0:T(8,128)}', space=vmem, size = 0x10000, scoped, tag = 'scratch operand']
  %s0 = inlined_call_operand.vmem [shape: bf16[256,256], index: 0, kind: input, shape index: {}]
  %s1 = inlined_call_operand.vmem [shape: bf16[256,32], index: 1, kind: input, shape index: {}]
  %s2 = inlined_call_operand.vmem [shape: f32[1,32], index: 2, kind: input, shape index: {}]
  %s3 = inlined_call_operand.vmem [shape: f32[256,64], index: 3, kind: input, shape index: {}]
  %s4 = inlined_call_operand.vmem [shape: f32[256,32], index: 4, kind: input, shape index: {}]
  %s5 = inlined_call_operand.vmem [shape: bf16[32,96], index: 5, kind: input, shape index: {}]
  %s6 = inlined_call_operand.vmem [shape: bf16[256,64], index: 6, kind: input, shape index: {}]
  %s7 = inlined_call_operand.vmem [shape: f32[256,32], index: 7, kind: output, shape index: {0}]
  %s8 = inlined_call_operand.vmem [shape: bf16[256,160], index: 8, kind: output, shape index: {1}]
  %9 = xla_tuple %s7, %s8
  %s10 = sld [smem:[#allocation0]]
  $region77: #{generative_step.11} parent=0
    _
  %s12 = ssub.s32 1, %s10
  %s13 = scalar_select 0, %s12, %s10
  loop: start=0, step=1, limit=4
  $region2: #{generative_step.11} parent=0 // loop_pre_header
    _
  $region3: #{generative_step.11} parent=0 // loop_header
    %s15 = sphi 0, %s19
    %p16 = scmp.ge.s32.totalorder %s15, 4
    %s22 = sphi 0, %s34
    %s23 = sphi 0, %s30
    %s24 = sphi 0, %s22
    %s25 = sphi 0, %s23
    %s26 = sphi 0, %s24
    %s27 = sphi 0, %s25
    %s39 = sphi 0, %s41
    %s42 = sphi 0, %s39
    %s43 = sphi 0, %s42
    %s59 = sphi 0, %s43
    %s65 = sphi 0, %s67
    %s68 = sphi 0, %s65
    %s69 = sphi 0, %s68
    %s85 = sphi 0, %s69
    %s89 = sphi 0, %s89
    %s91 = sphi 0, %s89
    %s92 = sphi 0, %s91
    %s106 = sphi 0, %s92
    %s112 = sphi 0, %s114
    %s115 = sphi 0, %s112
    %s116 = sphi 0, %s115
    %s132 = sphi 0, %s116
    %s138 = sphi 0, %s140
    %s141 = sphi 0, %s138
    %s142 = sphi 0, %s141
    %s158 = sphi 0, %s142
    %s162 = sphi 0, %s162
    %s164 = sphi 0, %s162
    %s165 = sphi 0, %s164
    %s179 = sphi 0, %s165
    %s185 = sphi 0, %s187
    %s188 = sphi 0, %s185
    %s189 = sphi 0, %s188
    %s205 = sphi 0, %s189
    %s211 = sphi 0, %s213
    %s214 = sphi 0, %s211
    %s215 = sphi 0, %s214
    %s231 = sphi 0, %s215
    %s237 = sphi 0, %s239
    %s240 = sphi 0, %s237
    %s241 = sphi 0, %s240
    %s257 = sphi 0, %s241
  $region4: #{generative_step.11} parent=0 // loop_header_branch
    %18 = sbr.rel (%p16) target = $region8
  $region5: #{generative_step.11} parent=0 // loop_body
    %s20 = ssub.s32 %s15, 1
    %s21 = ssub.s32 %s15, 2
    %s28 = sadd.s32 1, %s23
    %p29 = scmp.ge.s32.totalorder %s28, 1
    %s30 = scalar_select %p29, 0, %s28
    %s31 = sadd.s32 1, %s22
    %s32 = scalar_select %p29, %s31, %s22
    %p33 = scmp.ge.s32.totalorder %s32, 2
    %s34 = scalar_select %p33, 0, %s32
    %s35 = ssub.s32 %s22, %s34
    %s36 = ssub.s32 %s23, %s30
    %s37 = sor.u32 %s35, %s36
    %p38 = scmp.eq.s32.totalorder %s37, 0
    %s40 = sadd.s32 %s39, 1
    %s41 = scalar_select %p38, %s39, %s40
    %p44 = pneg %p38
    %p45 = scmp.eq.s32.totalorder %s15, 1
    %p46 = por %p44, %p45
    %p47 = scmp.ne.s32.totalorder %s39, %s42
    %p48 = scmp.eq.s32.totalorder %s15, 0
    %p49 = por %p47, %p48
    %p50 = scmp.ne.s32.totalorder %s39, %s42
    %p51 = scmp.eq.s32.totalorder %s20, 1
    %p52 = por %p50, %p51
    %p53 = scmp.ne.s32.totalorder %s42, %s43
    %p54 = scmp.eq.s32.totalorder %s20, 0
    %p55 = por %p53, %p54
    %p56 = scmp.ne.s32.totalorder %s42, %s43
    %p57 = scmp.eq.s32.totalorder %s21, 1
    %p58 = por %p56, %p57
    %p60 = scmp.ne.s32.totalorder %s43, %s59
    %p61 = scmp.eq.s32.totalorder %s21, 0
    %p62 = por %p60, %p61
    %s63 = ssub.s32 %s23, %s30
    %p64 = scmp.eq.s32.totalorder %s63, 0
    %s66 = sadd.s32 %s65, 1
    %s67 = scalar_select %p64, %s65, %s66
    %p70 = pneg %p64
    %p71 = scmp.eq.s32.totalorder %s15, 1
    %p72 = por %p70, %p71
    %p73 = scmp.ne.s32.totalorder %s65, %s68
    %p74 = scmp.eq.s32.totalorder %s15, 0
    %p75 = por %p73, %p74
    %p76 = scmp.ne.s32.totalorder %s65, %s68
    %p77 = scmp.eq.s32.totalorder %s20, 1
    %p78 = por %p76, %p77
    %p79 = scmp.ne.s32.totalorder %s68, %s69
    %p80 = scmp.eq.s32.totalorder %s20, 0
    %p81 = por %p79, %p80
    %p82 = scmp.ne.s32.totalorder %s68, %s69
    %p83 = scmp.eq.s32.totalorder %s21, 1
    %p84 = por %p82, %p83
    %p86 = scmp.ne.s32.totalorder %s69, %s85
    %p87 = scmp.eq.s32.totalorder %s21, 0
    %p88 = por %p86, %p87
    %s90 = sadd.s32 %s89, 1
    %p93 = scmp.eq.s32.totalorder %s15, 1
    %p94 = scmp.ne.s32.totalorder %s89, %s91
    %p95 = scmp.eq.s32.totalorder %s15, 0
    %p96 = por %p94, %p95
    %p97 = scmp.ne.s32.totalorder %s89, %s91
    %p98 = scmp.eq.s32.totalorder %s20, 1
    %p99 = por %p97, %p98
    %p100 = scmp.ne.s32.totalorder %s91, %s92
    %p101 = scmp.eq.s32.totalorder %s20, 0
    %p102 = por %p100, %p101
    %p103 = scmp.ne.s32.totalorder %s91, %s92
    %p104 = scmp.eq.s32.totalorder %s21, 1
    %p105 = por %p103, %p104
    %p107 = scmp.ne.s32.totalorder %s92, %s106
    %p108 = scmp.eq.s32.totalorder %s21, 0
    %p109 = por %p107, %p108
    %s110 = ssub.s32 %s22, %s34
    %p111 = scmp.eq.s32.totalorder %s110, 0
    %s113 = sadd.s32 %s112, 1
    %s114 = scalar_select %p111, %s112, %s113
    %p117 = pneg %p111
    %p118 = scmp.eq.s32.totalorder %s15, 1
    %p119 = por %p117, %p118
    %p120 = scmp.ne.s32.totalorder %s112, %s115
    %p121 = scmp.eq.s32.totalorder %s15, 0
    %p122 = por %p120, %p121
    %p123 = scmp.ne.s32.totalorder %s112, %s115
    %p124 = scmp.eq.s32.totalorder %s20, 1
    %p125 = por %p123, %p124
    %p126 = scmp.ne.s32.totalorder %s115, %s116
    %p127 = scmp.eq.s32.totalorder %s20, 0
    %p128 = por %p126, %p127
    %p129 = scmp.ne.s32.totalorder %s115, %s116
    %p130 = scmp.eq.s32.totalorder %s21, 1
    %p131 = por %p129, %p130
    %p133 = scmp.ne.s32.totalorder %s116, %s132
    %p134 = scmp.eq.s32.totalorder %s21, 0
    %p135 = por %p133, %p134
    %s136 = ssub.s32 %s22, %s34
    %p137 = scmp.eq.s32.totalorder %s136, 0
    %s139 = sadd.s32 %s138, 1
    %s140 = scalar_select %p137, %s138, %s139
    %p143 = pneg %p137
    %p144 = scmp.eq.s32.totalorder %s15, 1
    %p145 = por %p143, %p144
    %p146 = scmp.ne.s32.totalorder %s138, %s141
    %p147 = scmp.eq.s32.totalorder %s15, 0
    %p148 = por %p146, %p147
    %p149 = scmp.ne.s32.totalorder %s138, %s141
    %p150 = scmp.eq.s32.totalorder %s20, 1
    %p151 = por %p149, %p150
    %p152 = scmp.ne.s32.totalorder %s141, %s142
    %p153 = scmp.eq.s32.totalorder %s20, 0
    %p154 = por %p152, %p153
    %p155 = scmp.ne.s32.totalorder %s141, %s142
    %p156 = scmp.eq.s32.totalorder %s21, 1
    %p157 = por %p155, %p156
    %p159 = scmp.ne.s32.totalorder %s142, %s158
    %p160 = scmp.eq.s32.totalorder %s21, 0
    %p161 = por %p159, %p160
    %s163 = sadd.s32 %s162, 1
    %p166 = scmp.eq.s32.totalorder %s15, 1
    %p167 = scmp.ne.s32.totalorder %s162, %s164
    %p168 = scmp.eq.s32.totalorder %s15, 0
    %p169 = por %p167, %p168
    %p170 = scmp.ne.s32.totalorder %s162, %s164
    %p171 = scmp.eq.s32.totalorder %s20, 1
    %p172 = por %p170, %p171
    %p173 = scmp.ne.s32.totalorder %s164, %s165
    %p174 = scmp.eq.s32.totalorder %s20, 0
    %p175 = por %p173, %p174
    %p176 = scmp.ne.s32.totalorder %s164, %s165
    %p177 = scmp.eq.s32.totalorder %s21, 1
    %p178 = por %p176, %p177
    %p180 = scmp.ne.s32.totalorder %s165, %s179
    %p181 = scmp.eq.s32.totalorder %s21, 0
    %p182 = por %p180, %p181
    %s183 = ssub.s32 %s22, %s34
    %p184 = scmp.eq.s32.totalorder %s183, 0
    %s186 = sadd.s32 %s185, 1
    %s187 = scalar_select %p184, %s185, %s186
    %p190 = pneg %p184
    %p191 = scmp.eq.s32.totalorder %s15, 1
    %p192 = por %p190, %p191
    %p193 = scmp.ne.s32.totalorder %s185, %s188
    %p194 = scmp.eq.s32.totalorder %s15, 0
    %p195 = por %p193, %p194
    %p196 = scmp.ne.s32.totalorder %s185, %s188
    %p197 = scmp.eq.s32.totalorder %s20, 1
    %p198 = por %p196, %p197
    %p199 = scmp.ne.s32.totalorder %s188, %s189
    %p200 = scmp.eq.s32.totalorder %s20, 0
    %p201 = por %p199, %p200
    %p202 = scmp.ne.s32.totalorder %s188, %s189
    %p203 = scmp.eq.s32.totalorder %s21, 1
    %p204 = por %p202, %p203
    %p206 = scmp.ne.s32.totalorder %s189, %s205
    %p207 = scmp.eq.s32.totalorder %s21, 0
    %p208 = por %p206, %p207
    %s209 = ssub.s32 %s22, %s34
    %p210 = scmp.eq.s32.totalorder %s209, 0
    %s212 = sadd.s32 %s211, 1
    %s213 = scalar_select %p210, %s211, %s212
    %p216 = pneg %p210
    %p217 = scmp.eq.s32.totalorder %s15, 1
    %p218 = por %p216, %p217
    %p219 = scmp.ne.s32.totalorder %s211, %s214
    %p220 = scmp.eq.s32.totalorder %s15, 0
    %p221 = por %p219, %p220
    %p222 = scmp.ne.s32.totalorder %s211, %s214
    %p223 = scmp.eq.s32.totalorder %s20, 1
    %p224 = por %p222, %p223
    %p225 = scmp.ne.s32.totalorder %s214, %s215
    %p226 = scmp.eq.s32.totalorder %s20, 0
    %p227 = por %p225, %p226
    %p228 = scmp.ne.s32.totalorder %s214, %s215
    %p229 = scmp.eq.s32.totalorder %s21, 1
    %p230 = por %p228, %p229
    %p232 = scmp.ne.s32.totalorder %s215, %s231
    %p233 = scmp.eq.s32.totalorder %s21, 0
    %p234 = por %p232, %p233
    %s235 = ssub.s32 %s22, %s34
    %p236 = scmp.eq.s32.totalorder %s235, 0
    %s238 = sadd.s32 %s237, 1
    %s239 = scalar_select %p236, %s237, %s238
    %p242 = pneg %p236
    %p243 = scmp.eq.s32.totalorder %s15, 1
    %p244 = por %p242, %p243
    %p245 = scmp.ne.s32.totalorder %s237, %s240
    %p246 = scmp.eq.s32.totalorder %s15, 0
    %p247 = por %p245, %p246
    %p248 = scmp.ne.s32.totalorder %s237, %s240
    %p249 = scmp.eq.s32.totalorder %s20, 1
    %p250 = por %p248, %p249
    %p251 = scmp.ne.s32.totalorder %s240, %s241
    %p252 = scmp.eq.s32.totalorder %s20, 0
    %p253 = por %p251, %p252
    %p254 = scmp.ne.s32.totalorder %s240, %s241
    %p255 = scmp.eq.s32.totalorder %s21, 1
    %p256 = por %p254, %p255
    %p258 = scmp.ne.s32.totalorder %s241, %s257
    %p259 = scmp.eq.s32.totalorder %s21, 0
    %p260 = por %p258, %p259
    %p261 = scmp.le.s32.totalorder 1, %s15
    %p262 = scmp.lt.s32.totalorder %s15, 3
    %p263 = pnand %p261, %p262
    %p264 = pneg %p263
    // Predicated region
    $region9: #{generative_step.11} parent=5 // pred_check
      _
    $region10: #{generative_step.11} parent=5 // pred_check_branch
      %266 = sbr.rel (%p263) target = $region12
    $region11: #{generative_step.11} parent=5 // pred_region
      %s267 = ssub.s32 %s15, 1
      // Predicated region
      $region13: #{generative_step.11} parent=11 // pred_check
        %p268 = pneg %p81
      $region14: #{generative_step.11} parent=11 // pred_check_branch
        %270 = sbr.rel (%p268) target = $region16
      $region15: #{generative_step.11} parent=11 // pred_region
        %s271 = smul.u32 32, %s25
        %p272 = scmp.lt.s32.totalorder %s271, 31
        %s273 = scalar_select %p272, %s271, 31
        %s274 = smul.addr %s273, 4
        %s275 = scalar_lea.vmem %s1, %s274
        %s276 = smul.u32 32, %s25
      $region16: #{generative_step.11} parent=11 // pred_fallthru
        _
      // Predicated region
      $region17: #{generative_step.11} parent=11 // pred_check
        %p277 = pneg %p102
      $region18: #{generative_step.11} parent=11 // pred_check_branch
        %279 = sbr.rel (%p277) target = $region20
      $region19: #{generative_step.11} parent=11 // pred_region
        _
      $region20: #{generative_step.11} parent=11 // pred_fallthru
        _
      // Predicated region
      $region21: #{generative_step.11} parent=11 // pred_check
        %p280 = pneg %p175
      $region22: #{generative_step.11} parent=11 // pred_check_branch
        %282 = sbr.rel (%p280) target = $region24
      $region23: #{generative_step.11} parent=11 // pred_region
        _
      $region24: #{generative_step.11} parent=11 // pred_fallthru
        _
    $region12: #{generative_step.11} parent=5 // pred_fallthru
      _
    %p283 = scmp.lt.s32.totalorder %s15, 2
    // Predicated region
    $region25: #{generative_step.11} parent=5 // pred_check
      %p284 = pneg %p283
    $region26: #{generative_step.11} parent=5 // pred_check_branch
      %286 = sbr.rel (%p284) target = $region28
    $region27: #{generative_step.11} parent=5 // pred_region
      // Predicated region
      $region29: #{generative_step.11} parent=27 // pred_check
        %p287 = pneg %p49
      $region30: #{generative_step.11} parent=27 // pred_check_branch
        %289 = sbr.rel (%p287) target = $region32
      $region31: #{generative_step.11} parent=27 // pred_region
        %s290 = smul.u32 16, %s22
        %s291 = smul.u32 2, %s23
        %p292 = scmp.lt.s32.totalorder %s290, 31
        %s293 = scalar_select %p292, %s290, 31
        %p294 = scmp.lt.s32.totalorder %s291, 1
        %s295 = scalar_select %p294, %s291, 1
        %s296 = smul.addr %s293, 2
        %s297 = sadd.s32 %s295, %s296
        %s298 = smul.addr %s297, 4
        %s299 = scalar_lea.vmem %s0, %s298
        %s300 = smul.u32 16, %s22
        %s301 = smul.u32 2, %s23
      $region32: #{generative_step.11} parent=27 // pred_fallthru
        _
      // Predicated region
      $region33: #{generative_step.11} parent=27 // pred_check
        %p302 = pneg %p122
      $region34: #{generative_step.11} parent=27 // pred_check_branch
        %304 = sbr.rel (%p302) target = $region36
      $region35: #{generative_step.11} parent=27 // pred_region
        %s305 = smul.u32 16, %s22
        %p306 = scmp.lt.s32.totalorder %s305, 31
        %s307 = scalar_select %p306, %s305, 31
        %s308 = smul.addr %s307, 8
        %s309 = scalar_lea.vmem %s3, %s308
        %s310 = smul.u32 16, %s22
      $region36: #{generative_step.11} parent=27 // pred_fallthru
        _
      // Predicated region
      $region37: #{generative_step.11} parent=27 // pred_check
        %p311 = pneg %p148
      $region38: #{generative_step.11} parent=27 // pred_check_branch
        %313 = sbr.rel (%p311) target = $region40
      $region39: #{generative_step.11} parent=27 // pred_region
        %s314 = smul.u32 16, %s22
        %p315 = scmp.lt.s32.totalorder %s314, 31
        %s316 = scalar_select %p315, %s314, 31
        %s317 = smul.addr %s316, 8
        %s318 = scalar_lea.vmem %s4, %s317
        %s319 = smul.u32 16, %s22
      $region40: #{generative_step.11} parent=27 // pred_fallthru
        _
      // Predicated region
      $region41: #{generative_step.11} parent=27 // pred_check
        %p320 = pneg %p195
      $region42: #{generative_step.11} parent=27 // pred_check_branch
        %322 = sbr.rel (%p320) target = $region44
      $region43: #{generative_step.11} parent=27 // pred_region
        %s323 = smul.u32 16, %s22
        %p324 = scmp.lt.s32.totalorder %s323, 31
        %s325 = scalar_select %p324, %s323, 31
        %s326 = smul.addr %s325, 4
        %s327 = scalar_lea.vmem %s6, %s326
        %s328 = smul.u32 16, %s22
      $region44: #{generative_step.11} parent=27 // pred_fallthru
        _
    $region28: #{generative_step.11} parent=5 // pred_fallthru
      _
    %p329 = scmp.le.s32.totalorder 1, %s15
    %p330 = scmp.lt.s32.totalorder %s15, 3
    %p331 = pnand %p329, %p330
    %p332 = pneg %p331
    // Predicated region
    $region45: #{generative_step.11} parent=5 // pred_check
      _
    $region46: #{generative_step.11} parent=5 // pred_check_branch
      %334 = sbr.rel (%p331) target = $region48
    $region47: #{generative_step.11} parent=5 // pred_region
      %s335 = ssub.s32 %s15, 1
      %s336 = smul.u32 16, %s24
      %s337 = smul.u32 2, %s25
      %p338 = scmp.lt.s32.totalorder %s336, 31
      %s339 = scalar_select %p338, %s336, 31
      %p340 = scmp.lt.s32.totalorder %s337, 1
      %s341 = scalar_select %p340, %s337, 1
      %s342 = smul.addr %s339, 2
      %s343 = sadd.s32 %s341, %s342
      %s344 = smul.addr %s343, 4
      %s345 = scalar_lea.vmem %s0, %s344
      %p346 = pneg %p55
      %p347 = pneg %p52
      %s348 = smul.u32 32, %s25
      %p349 = scmp.lt.s32.totalorder %s348, 31
      %s350 = scalar_select %p349, %s348, 31
      %s351 = smul.addr %s350, 4
      %s352 = scalar_lea.vmem %s1, %s351
      %p353 = pneg %p81
      %p354 = pneg %p78
      %p355 = pneg %p102
      %p356 = pneg %p99
      %s357 = smul.u32 16, %s24
      %p358 = scmp.lt.s32.totalorder %s357, 31
      %s359 = scalar_select %p358, %s357, 31
      %s360 = smul.addr %s359, 8
      %s361 = scalar_lea.vmem %s3, %s360
      %p362 = pneg %p128
      %p363 = pneg %p125
      %s364 = smul.u32 16, %s24
      %p365 = scmp.lt.s32.totalorder %s364, 31
      %s366 = scalar_select %p365, %s364, 31
      %s367 = smul.addr %s366, 8
      %s368 = scalar_lea.vmem %s4, %s367
      %p369 = pneg %p154
      %p370 = pneg %p151
      %p371 = pneg %p175
      %p372 = pneg %p172
      %s373 = smul.u32 16, %s24
      %p374 = scmp.lt.s32.totalorder %s373, 31
      %s375 = scalar_select %p374, %s373, 31
      %s376 = smul.addr %s375, 4
      %s377 = scalar_lea.vmem %s6, %s376
      %p378 = pneg %p201
      %p379 = pneg %p198
      %p380 = pneg %p227
      %p381 = pneg %p224
      %s382 = smul.u32 16, %s24
      %p383 = scmp.lt.s32.totalorder %s382, 31
      %s384 = scalar_select %p383, %s382, 31
      %s385 = smul.addr %s384, 8
      %s386 = scalar_lea.vmem %s7, %s385
      %p387 = pneg %p253
      %p388 = pneg %p250
      %s389 = smul.u32 16, %s24
      %p390 = scmp.lt.s32.totalorder %s389, 31
      %s391 = scalar_select %p390, %s389, 31
      %s392 = smul.addr %s391, 2
      %s393 = smul.addr %s392, 4
      %s394 = scalar_lea.vmem %s8, %s393
      %s395 = smul.u32 16, %s24
      %s396 = smul.u32 2, %s25
      %p397 = scmp.lt.s32.totalorder %s395, 31
      %s398 = scalar_select %p397, %s395, 31
      %p399 = scmp.lt.s32.totalorder %s396, 1
      %s400 = scalar_select %p399, %s396, 1
      %s401 = smul.addr %s398, 2
      %s402 = sadd.s32 %s400, %s401
      %s403 = smul.addr %s402, 4
      %s404 = scalar_lea.vmem %s0, %s403
      %s405 = smul.u32 16, %s24
      %s406 = smul.u32 2, %s25
      %s407 = smul.u32 32, %s25
      %p408 = scmp.lt.s32.totalorder %s407, 31
      %s409 = scalar_select %p408, %s407, 31
      %s410 = smul.addr %s409, 4
      %s411 = scalar_lea.vmem %s1, %s410
      %s412 = smul.u32 32, %s25
      %s413 = smul.u32 16, %s24
      %p414 = scmp.lt.s32.totalorder %s413, 31
      %s415 = scalar_select %p414, %s413, 31
      %s416 = smul.addr %s415, 8
      %s417 = scalar_lea.vmem %s3, %s416
      %s418 = smul.u32 16, %s24
      %s419 = smul.u32 16, %s24
      %p420 = scmp.lt.s32.totalorder %s419, 31
      %s421 = scalar_select %p420, %s419, 31
      %s422 = smul.addr %s421, 8
      %s423 = scalar_lea.vmem %s4, %s422
      %s424 = smul.u32 16, %s24
      %s425 = smul.u32 16, %s24
      %p426 = scmp.lt.s32.totalorder %s425, 31
      %s427 = scalar_select %p426, %s425, 31
      %s428 = smul.addr %s427, 4
      %s429 = scalar_lea.vmem %s6, %s428
      %s430 = smul.u32 16, %s24
      %s431 = smul.u32 16, %s24
      %p432 = scmp.lt.s32.totalorder %s431, 31
      %s433 = scalar_select %p432, %s431, 31
      %s434 = smul.addr %s433, 8
      %s435 = scalar_lea.vmem %s7, %s434
      %s436 = smul.u32 16, %s24
      %s437 = smul.u32 16, %s24
      %p438 = scmp.lt.s32.totalorder %s437, 31
      %s439 = scalar_select %p438, %s437, 31
      %s440 = smul.addr %s439, 2
      %s441 = smul.addr %s440, 4
      %s442 = scalar_lea.vmem %s8, %s441
      %s443 = smul.u32 16, %s24
      %p445 = scmp.eq.s32.totalorder %s25, 0
      // Predicated region
      $region49: #{generative_step.11} parent=47 // pred_check
        %p446 = pneg %p445
      $region50: #{generative_step.11} parent=47 // pred_check_branch
        %448 = sbr.rel (%p446) target = $region52
      $region51: #{generative_step.11} parent=47 // pred_region
        %vm449 = vcmask 261120
        %450 = vst.msk [vmem:[#allocation2] sm:$0xff] %vm449, 0.0
        %451 = vst.msk [vmem:[#allocation2 + $0x8] sm:$0xff] %vm449, 0.0
        %452 = vst.msk [vmem:[#allocation2 + $0x10] sm:$0xff] %vm449, 0.0
        %453 = vst.msk [vmem:[#allocation2 + $0x18] sm:$0xff] %vm449, 0.0
        %454 = vst.msk [vmem:[#allocation2 + $0x20] sm:$0xff] %vm449, 0.0
        %455 = vst.msk [vmem:[#allocation2 + $0x28] sm:$0xff] %vm449, 0.0
        %456 = vst.msk [vmem:[#allocation2 + $0x30] sm:$0xff] %vm449, 0.0
        %457 = vst.msk [vmem:[#allocation2 + $0x38] sm:$0xff] %vm449, 0.0
        %458 = vst.msk [vmem:[#allocation2 + $0x40] sm:$0xff] %vm449, 0.0
        %459 = vst.msk [vmem:[#allocation2 + $0x48] sm:$0xff] %vm449, 0.0
        %460 = vst.msk [vmem:[#allocation2 + $0x50] sm:$0xff] %vm449, 0.0
        %461 = vst.msk [vmem:[#allocation2 + $0x58] sm:$0xff] %vm449, 0.0
        %462 = vst.msk [vmem:[#allocation2 + $0x60] sm:$0xff] %vm449, 0.0
        %463 = vst.msk [vmem:[#allocation2 + $0x68] sm:$0xff] %vm449, 0.0
        %464 = vst.msk [vmem:[#allocation2 + $0x70] sm:$0xff] %vm449, 0.0
        %465 = vst.msk [vmem:[#allocation2 + $0x78] sm:$0xff] %vm449, 0.0
      $region52: #{generative_step.11} parent=47 // pred_fallthru
        _
      %v466 = vld [vmem:[#allocation2] sm:$0xff]
      %v467 = vld [vmem:[#allocation2 + $0x8] sm:$0xff]
      %v468 = vld [vmem:[#allocation2 + $0x10] sm:$0xff]
      %v469 = vld [vmem:[#allocation2 + $0x18] sm:$0xff]
      %v470 = vld [vmem:[#allocation2 + $0x20] sm:$0xff]
      %v471 = vld [vmem:[#allocation2 + $0x28] sm:$0xff]
      %v472 = vld [vmem:[#allocation2 + $0x30] sm:$0xff]
      %v473 = vld [vmem:[#allocation2 + $0x38] sm:$0xff]
      %v474 = vld [vmem:[#allocation2 + $0x40] sm:$0xff]
      %v475 = vld [vmem:[#allocation2 + $0x48] sm:$0xff]
      %v476 = vld [vmem:[#allocation2 + $0x50] sm:$0xff]
      %v477 = vld [vmem:[#allocation2 + $0x58] sm:$0xff]
      %v478 = vld [vmem:[#allocation2 + $0x60] sm:$0xff]
      %v479 = vld [vmem:[#allocation2 + $0x68] sm:$0xff]
      %v480 = vld [vmem:[#allocation2 + $0x70] sm:$0xff]
      %v481 = vld [vmem:[#allocation2 + $0x78] sm:$0xff]
      %v482 = vld [vmem:[%s404] sm:$0xff]
      %v483 = vld [vmem:[%s404 + $0x8] sm:$0xff]
      %v484 = vld [vmem:[%s404 + $0x10] sm:$0xff]
      %v485 = vld [vmem:[%s404 + $0x18] sm:$0xff]
      %v486 = vld [vmem:[%s404 + $0x20] sm:$0xff]
      %v487 = vld [vmem:[%s404 + $0x28] sm:$0xff]
      %v488 = vld [vmem:[%s404 + $0x30] sm:$0xff]
      %v489 = vld [vmem:[%s404 + $0x38] sm:$0xff]
      %v490 = vld [vmem:[%s404 + $0x40] sm:$0xff]
      %v491 = vld [vmem:[%s404 + $0x48] sm:$0xff]
      %v492 = vld [vmem:[%s404 + $0x50] sm:$0xff]
      %v493 = vld [vmem:[%s404 + $0x58] sm:$0xff]
      %v494 = vld [vmem:[%s404 + $0x60] sm:$0xff]
      %v495 = vld [vmem:[%s404 + $0x68] sm:$0xff]
      %v496 = vld [vmem:[%s404 + $0x70] sm:$0xff]
      %v497 = vld [vmem:[%s404 + $0x78] sm:$0xff]
      %v498 = vld [vmem:[%s411] sm:$0xf]
      %v499 = vld [vmem:[%s411 + $0x4] sm:$0xf]
      %v500 = vld [vmem:[%s411 + $0x8] sm:$0xf]
      %v501 = vld [vmem:[%s411 + $0xc] sm:$0xf]
      %v502 = vld [vmem:[%s411 + $0x10] sm:$0xf]
      %v503 = vld [vmem:[%s411 + $0x14] sm:$0xf]
      %v504 = vld [vmem:[%s411 + $0x18] sm:$0xf]
      %v505 = vld [vmem:[%s411 + $0x1c] sm:$0xf]
      %v506 = vld [vmem:[%s411 + $0x20] sm:$0xf]
      %v507 = vld [vmem:[%s411 + $0x24] sm:$0xf]
      %v508 = vld [vmem:[%s411 + $0x28] sm:$0xf]
      %v509 = vld [vmem:[%s411 + $0x2c] sm:$0xf]
      %v510 = vld [vmem:[%s411 + $0x30] sm:$0xf]
      %v511 = vld [vmem:[%s411 + $0x34] sm:$0xf]
      %v512 = vld [vmem:[%s411 + $0x38] sm:$0xf]
      %v513 = vld [vmem:[%s411 + $0x3c] sm:$0xf]
      %v514 = vld [vmem:[%s411 + $0x40] sm:$0xf]
      %v515 = vld [vmem:[%s411 + $0x44] sm:$0xf]
      %v516 = vld [vmem:[%s411 + $0x48] sm:$0xf]
      %v517 = vld [vmem:[%s411 + $0x4c] sm:$0xf]
      %v518 = vld [vmem:[%s411 + $0x50] sm:$0xf]
      %v519 = vld [vmem:[%s411 + $0x54] sm:$0xf]
      %v520 = vld [vmem:[%s411 + $0x58] sm:$0xf]
      %v521 = vld [vmem:[%s411 + $0x5c] sm:$0xf]
      %v522 = vld [vmem:[%s411 + $0x60] sm:$0xf]
      %v523 = vld [vmem:[%s411 + $0x64] sm:$0xf]
      %v524 = vld [vmem:[%s411 + $0x68] sm:$0xf]
      %v525 = vld [vmem:[%s411 + $0x6c] sm:$0xf]
      %v526 = vld [vmem:[%s411 + $0x70] sm:$0xf]
      %v527 = vld [vmem:[%s411 + $0x74] sm:$0xf]
      %v528 = vld [vmem:[%s411 + $0x78] sm:$0xf]
      %v529 = vld [vmem:[%s411 + $0x7c] sm:$0xf]
      %v546 = vunpack.c.l.b16 %v482
      %v547 = vunpack.c.h.b16 %v482
      %v548 = vunpack.c.l.b16 %v483
      %v549 = vunpack.c.h.b16 %v483
      %v550 = vunpack.c.l.b16 %v484
      %v551 = vunpack.c.h.b16 %v484
      %v552 = vunpack.c.l.b16 %v485
      %v553 = vunpack.c.h.b16 %v485
      %v554 = vunpack.c.l.b16 %v486
      %v555 = vunpack.c.h.b16 %v486
      %v556 = vunpack.c.l.b16 %v487
      %v557 = vunpack.c.h.b16 %v487
      %v558 = vunpack.c.l.b16 %v488
      %v559 = vunpack.c.h.b16 %v488
      %v560 = vunpack.c.l.b16 %v489
      %v561 = vunpack.c.h.b16 %v489
      %v562 = vunpack.c.l.b16 %v490
      %v563 = vunpack.c.h.b16 %v490
      %v564 = vunpack.c.l.b16 %v491
      %v565 = vunpack.c.h.b16 %v491
      %v566 = vunpack.c.l.b16 %v492
      %v567 = vunpack.c.h.b16 %v492
      %v568 = vunpack.c.l.b16 %v493
      %v569 = vunpack.c.h.b16 %v493
      %v570 = vunpack.c.l.b16 %v494
      %v571 = vunpack.c.h.b16 %v494
      %v572 = vunpack.c.l.b16 %v495
      %v573 = vunpack.c.h.b16 %v495
      %v574 = vunpack.c.l.b16 %v496
      %v575 = vunpack.c.h.b16 %v496
      %v576 = vunpack.c.l.b16 %v497
      %v577 = vunpack.c.h.b16 %v497
      %v578 = vpack.c.b16 %v548, %v546
      %v579 = vpack.c.b16 %v549, %v547
      %v580 = vpack.c.b16 %v552, %v550
      %v581 = vpack.c.b16 %v553, %v551
      %v582 = vpack.c.b16 %v556, %v554
      %v583 = vpack.c.b16 %v557, %v555
      %v584 = vpack.c.b16 %v560, %v558
      %v585 = vpack.c.b16 %v561, %v559
      %v586 = vpack.c.b16 %v564, %v562
      %v587 = vpack.c.b16 %v565, %v563
      %v588 = vpack.c.b16 %v568, %v566
      %v589 = vpack.c.b16 %v569, %v567
      %v590 = vpack.c.b16 %v572, %v570
      %v591 = vpack.c.b16 %v573, %v571
      %v592 = vpack.c.b16 %v576, %v574
      %v593 = vpack.c.b16 %v577, %v575
      %v642 = vunpack.c.l.b16 %v498
      %v643 = vunpack.c.l.b16 %v499
      %v644 = vunpack.c.l.b16 %v500
      %v645 = vunpack.c.l.b16 %v501
      %v646 = vunpack.c.l.b16 %v502
      %v647 = vunpack.c.l.b16 %v503
      %v648 = vunpack.c.l.b16 %v504
      %v649 = vunpack.c.l.b16 %v505
      %v650 = vunpack.c.l.b16 %v506
      %v651 = vunpack.c.l.b16 %v507
      %v652 = vunpack.c.l.b16 %v508
      %v653 = vunpack.c.l.b16 %v509
      %v654 = vunpack.c.l.b16 %v510
      %v655 = vunpack.c.l.b16 %v511
      %v656 = vunpack.c.l.b16 %v512
      %v657 = vunpack.c.l.b16 %v513
      %v658 = vunpack.c.l.b16 %v514
      %v659 = vunpack.c.l.b16 %v515
      %v660 = vunpack.c.l.b16 %v516
      %v661 = vunpack.c.l.b16 %v517
      %v662 = vunpack.c.l.b16 %v518
      %v663 = vunpack.c.l.b16 %v519
      %v664 = vunpack.c.l.b16 %v520
      %v665 = vunpack.c.l.b16 %v521
      %v666 = vunpack.c.l.b16 %v522
      %v667 = vunpack.c.l.b16 %v523
      %v668 = vunpack.c.l.b16 %v524
      %v669 = vunpack.c.l.b16 %v525
      %v670 = vunpack.c.l.b16 %v526
      %v671 = vunpack.c.l.b16 %v527
      %v672 = vunpack.c.l.b16 %v528
      %v673 = vunpack.c.l.b16 %v529
      %v674 = vpack.c.b16 %v643, %v642
      %v675 = vpack.c.b16 %v645, %v644
      %v676 = vpack.c.b16 %v647, %v646
      %v677 = vpack.c.b16 %v649, %v648
      %v678 = vpack.c.b16 %v651, %v650
      %v679 = vpack.c.b16 %v653, %v652
      %v680 = vpack.c.b16 %v655, %v654
      %v681 = vpack.c.b16 %v657, %v656
      %v682 = vpack.c.b16 %v659, %v658
      %v683 = vpack.c.b16 %v661, %v660
      %v684 = vpack.c.b16 %v663, %v662
      %v685 = vpack.c.b16 %v665, %v664
      %v686 = vpack.c.b16 %v667, %v666
      %v687 = vpack.c.b16 %v669, %v668
      %v688 = vpack.c.b16 %v671, %v670
      %v689 = vpack.c.b16 %v673, %v672
      %706 = vmatpush.bf16.msra.mxu0 %v681
      %707 = vmatpush.bf16.msra.mxu0 %v680
      %708 = vmatpush.bf16.msra.mxu0 %v679
      %709 = vmatpush.bf16.msra.mxu0 %v678
      %710 = vmatpush.bf16.msra.mxu0 %v677
      %711 = vmatpush.bf16.msra.mxu0 %v676
      %712 = vmatpush.bf16.msra.mxu0 %v675
      %713 = vmatpush.bf16.msra.mxu0 %v674
      %714 = vmatmul.bf16.gmra.mxu0 %v578
      %v715 = vpop.f32.mrf.mxu0
      %v716 = vadd.f32 0.0, %v715
      %v717 = vpop.f32.mrf.mxu0
      %v718 = vadd.f32 0.0, %v717
      %719 = vmatmul.bf16.gmra.mxu0 %v580
      %v720 = vpop.f32.mrf.mxu0
      %v721 = vadd.f32 0.0, %v720
      %v722 = vpop.f32.mrf.mxu0
      %v723 = vadd.f32 0.0, %v722
      %724 = vmatmul.bf16.gmra.mxu0 %v582
      %v725 = vpop.f32.mrf.mxu0
      %v726 = vadd.f32 0.0, %v725
      %v727 = vpop.f32.mrf.mxu0
      %v728 = vadd.f32 0.0, %v727
      %729 = vmatmul.bf16.gmra.mxu0 %v584
      %v730 = vpop.f32.mrf.mxu0
      %v731 = vadd.f32 0.0, %v730
      %v732 = vpop.f32.mrf.mxu0
      %v733 = vadd.f32 0.0, %v732
      %734 = vmatmul.bf16.gmra.mxu0 %v586
      %v735 = vpop.f32.mrf.mxu0
      %v736 = vadd.f32 0.0, %v735
      %v737 = vpop.f32.mrf.mxu0
      %v738 = vadd.f32 0.0, %v737
      %739 = vmatmul.bf16.gmra.mxu0 %v588
      %v740 = vpop.f32.mrf.mxu0
      %v741 = vadd.f32 0.0, %v740
      %v742 = vpop.f32.mrf.mxu0
      %v743 = vadd.f32 0.0, %v742
      %744 = vmatmul.bf16.gmra.mxu0 %v590
      %v745 = vpop.f32.mrf.mxu0
      %v746 = vadd.f32 0.0, %v745
      %v747 = vpop.f32.mrf.mxu0
      %v748 = vadd.f32 0.0, %v747
      %749 = vmatmul.bf16.gmra.mxu0 %v592
      %v750 = vpop.f32.mrf.mxu0
      %v751 = vadd.f32 0.0, %v750
      %v752 = vpop.f32.mrf.mxu0
      %v753 = vadd.f32 0.0, %v752
      %754 = vdwg.mxu0
      %755 = vmatpush.bf16.msra.mxu0 %v689
      %756 = vmatpush.bf16.msra.mxu0 %v688
      %757 = vmatpush.bf16.msra.mxu0 %v687
      %758 = vmatpush.bf16.msra.mxu0 %v686
      %759 = vmatpush.bf16.msra.mxu0 %v685
      %760 = vmatpush.bf16.msra.mxu0 %v684
      %761 = vmatpush.bf16.msra.mxu0 %v683
      %762 = vmatpush.bf16.msra.mxu0 %v682
      %763 = vmatmul.bf16.gmra.mxu0 %v579
      %v764 = vpop.f32.mrf.mxu0
      %v765 = vadd.f32 %v716, %v764
      %v766 = vpop.f32.mrf.mxu0
      %v767 = vadd.f32 %v718, %v766
      %768 = vmatmul.bf16.gmra.mxu0 %v581
      %v769 = vpop.f32.mrf.mxu0
      %v770 = vadd.f32 %v721, %v769
      %v771 = vpop.f32.mrf.mxu0
      %v772 = vadd.f32 %v723, %v771
      %773 = vmatmul.bf16.gmra.mxu0 %v583
      %v774 = vpop.f32.mrf.mxu0
      %v775 = vadd.f32 %v726, %v774
      %v776 = vpop.f32.mrf.mxu0
      %v777 = vadd.f32 %v728, %v776
      %778 = vmatmul.bf16.gmra.mxu0 %v585
      %v779 = vpop.f32.mrf.mxu0
      %v780 = vadd.f32 %v731, %v779
      %v781 = vpop.f32.mrf.mxu0
      %v782 = vadd.f32 %v733, %v781
      %783 = vmatmul.bf16.gmra.mxu0 %v587
      %v784 = vpop.f32.mrf.mxu0
      %v785 = vadd.f32 %v736, %v784
      %v786 = vpop.f32.mrf.mxu0
      %v787 = vadd.f32 %v738, %v786
      %788 = vmatmul.bf16.gmra.mxu0 %v589
      %v789 = vpop.f32.mrf.mxu0
      %v790 = vadd.f32 %v741, %v789
      %v791 = vpop.f32.mrf.mxu0
      %v792 = vadd.f32 %v743, %v791
      %793 = vmatmul.bf16.gmra.mxu0 %v591
      %v794 = vpop.f32.mrf.mxu0
      %v795 = vadd.f32 %v746, %v794
      %v796 = vpop.f32.mrf.mxu0
      %v797 = vadd.f32 %v748, %v796
      %798 = vmatmul.bf16.gmra.mxu0 %v593
      %v799 = vpop.f32.mrf.mxu0
      %v800 = vadd.f32 %v751, %v799
      %v801 = vpop.f32.mrf.mxu0
      %v802 = vadd.f32 %v753, %v801
      %803 = vdwg.mxu0
      %v804 = vadd.f32 %v466, %v765
      %v805 = vadd.f32 %v467, %v767
      %v806 = vadd.f32 %v468, %v770
      %v807 = vadd.f32 %v469, %v772
      %v808 = vadd.f32 %v470, %v775
      %v809 = vadd.f32 %v471, %v777
      %v810 = vadd.f32 %v472, %v780
      %v811 = vadd.f32 %v473, %v782
      %v812 = vadd.f32 %v474, %v785
      %v813 = vadd.f32 %v475, %v787
      %v814 = vadd.f32 %v476, %v790
      %v815 = vadd.f32 %v477, %v792
      %v816 = vadd.f32 %v478, %v795
      %v817 = vadd.f32 %v479, %v797
      %v818 = vadd.f32 %v480, %v800
      %v819 = vadd.f32 %v481, %v802
      %vm820 = vcmask 261120
      %821 = vst.msk [vmem:[#allocation2] sm:$0xff] %vm820, %v804
      %822 = vst.msk [vmem:[#allocation2 + $0x8] sm:$0xff] %vm820, %v805
      %823 = vst.msk [vmem:[#allocation2 + $0x10] sm:$0xff] %vm820, %v806
      %824 = vst.msk [vmem:[#allocation2 + $0x18] sm:$0xff] %vm820, %v807
      %825 = vst.msk [vmem:[#allocation2 + $0x20] sm:$0xff] %vm820, %v808
      %826 = vst.msk [vmem:[#allocation2 + $0x28] sm:$0xff] %vm820, %v809
      %827 = vst.msk [vmem:[#allocation2 + $0x30] sm:$0xff] %vm820, %v810
      %828 = vst.msk [vmem:[#allocation2 + $0x38] sm:$0xff] %vm820, %v811
      %829 = vst.msk [vmem:[#allocation2 + $0x40] sm:$0xff] %vm820, %v812
      %830 = vst.msk [vmem:[#allocation2 + $0x48] sm:$0xff] %vm820, %v813
      %831 = vst.msk [vmem:[#allocation2 + $0x50] sm:$0xff] %vm820, %v814
      %832 = vst.msk [vmem:[#allocation2 + $0x58] sm:$0xff] %vm820, %v815
      %833 = vst.msk [vmem:[#allocation2 + $0x60] sm:$0xff] %vm820, %v816
      %834 = vst.msk [vmem:[#allocation2 + $0x68] sm:$0xff] %vm820, %v817
      %835 = vst.msk [vmem:[#allocation2 + $0x70] sm:$0xff] %vm820, %v818
      %836 = vst.msk [vmem:[#allocation2 + $0x78] sm:$0xff] %vm820, %v819
      // Predicated region
      $region53: #{generative_step.11} parent=47 // pred_check
        %p837 = pneg %p445
      $region54: #{generative_step.11} parent=47 // pred_check_branch
        %839 = sbr.rel (%p837) target = $region56
      $region55: #{generative_step.11} parent=47 // pred_region
        %v840 = vld [vmem:[%s417] sm:$0xff]
        %v841 = vld [vmem:[%s417 + $0x8] sm:$0xff]
        %v842 = vld [vmem:[%s417 + $0x10] sm:$0xff]
        %v843 = vld [vmem:[%s417 + $0x18] sm:$0xff]
        %v844 = vld [vmem:[%s417 + $0x20] sm:$0xff]
        %v845 = vld [vmem:[%s417 + $0x28] sm:$0xff]
        %v846 = vld [vmem:[%s417 + $0x30] sm:$0xff]
        %v847 = vld [vmem:[%s417 + $0x38] sm:$0xff]
        %v848 = vld [vmem:[%s417 + $0x40] sm:$0xff]
        %v849 = vld [vmem:[%s417 + $0x48] sm:$0xff]
        %v850 = vld [vmem:[%s417 + $0x50] sm:$0xff]
        %v851 = vld [vmem:[%s417 + $0x58] sm:$0xff]
        %v852 = vld [vmem:[%s417 + $0x60] sm:$0xff]
        %v853 = vld [vmem:[%s417 + $0x68] sm:$0xff]
        %v854 = vld [vmem:[%s417 + $0x70] sm:$0xff]
        %v855 = vld [vmem:[%s417 + $0x78] sm:$0xff]
        %v856 = vld [vmem:[#allocation2] sm:$0xff]
        %v857 = vld [vmem:[#allocation2 + $0x8] sm:$0xff]
        %v858 = vld [vmem:[#allocation2 + $0x10] sm:$0xff]
        %v859 = vld [vmem:[#allocation2 + $0x18] sm:$0xff]
        %v860 = vld [vmem:[#allocation2 + $0x20] sm:$0xff]
        %v861 = vld [vmem:[#allocation2 + $0x28] sm:$0xff]
        %v862 = vld [vmem:[#allocation2 + $0x30] sm:$0xff]
        %v863 = vld [vmem:[#allocation2 + $0x38] sm:$0xff]
        %v864 = vld [vmem:[#allocation2 + $0x40] sm:$0xff]
        %v865 = vld [vmem:[#allocation2 + $0x48] sm:$0xff]
        %v866 = vld [vmem:[#allocation2 + $0x50] sm:$0xff]
        %v867 = vld [vmem:[#allocation2 + $0x58] sm:$0xff]
        %v868 = vld [vmem:[#allocation2 + $0x60] sm:$0xff]
        %v869 = vld [vmem:[#allocation2 + $0x68] sm:$0xff]
        %v870 = vld [vmem:[#allocation2 + $0x70] sm:$0xff]
        %v871 = vld [vmem:[#allocation2 + $0x78] sm:$0xff]
        %888 = vrot.lane.b32.xlu0 %v856, 32
        %v889 = vpop.permute.xlu0 %888
        %890 = vrot.lane.b32.xlu0 %v857, 32
        %v891 = vpop.permute.xlu0 %890
        %892 = vrot.lane.b32.xlu0 %v858, 32
        %v893 = vpop.permute.xlu0 %892
        %894 = vrot.lane.b32.xlu0 %v859, 32
        %v895 = vpop.permute.xlu0 %894
        %896 = vrot.lane.b32.xlu0 %v860, 32
        %v897 = vpop.permute.xlu0 %896
        %898 = vrot.lane.b32.xlu0 %v861, 32
        %v899 = vpop.permute.xlu0 %898
        %900 = vrot.lane.b32.xlu0 %v862, 32
        %v901 = vpop.permute.xlu0 %900
        %902 = vrot.lane.b32.xlu0 %v863, 32
        %v903 = vpop.permute.xlu0 %902
        %904 = vrot.lane.b32.xlu0 %v864, 32
        %v905 = vpop.permute.xlu0 %904
        %906 = vrot.lane.b32.xlu0 %v865, 32
        %v907 = vpop.permute.xlu0 %906
        %908 = vrot.lane.b32.xlu0 %v866, 32
        %v909 = vpop.permute.xlu0 %908
        %910 = vrot.lane.b32.xlu0 %v867, 32
        %v911 = vpop.permute.xlu0 %910
        %912 = vrot.lane.b32.xlu0 %v868, 32
        %v913 = vpop.permute.xlu0 %912
        %914 = vrot.lane.b32.xlu0 %v869, 32
        %v915 = vpop.permute.xlu0 %914
        %916 = vrot.lane.b32.xlu0 %v870, 32
        %v917 = vpop.permute.xlu0 %916
        %918 = vrot.lane.b32.xlu0 %v871, 32
        %v919 = vpop.permute.xlu0 %918
        %v936 = vadd.f32 %v840, %v889
        %v937 = vadd.f32 %v841, %v891
        %v938 = vadd.f32 %v842, %v893
        %v939 = vadd.f32 %v843, %v895
        %v940 = vadd.f32 %v844, %v897
        %v941 = vadd.f32 %v845, %v899
        %v942 = vadd.f32 %v846, %v901
        %v943 = vadd.f32 %v847, %v903
        %v944 = vadd.f32 %v848, %v905
        %v945 = vadd.f32 %v849, %v907
        %v946 = vadd.f32 %v850, %v909
        %v947 = vadd.f32 %v851, %v911
        %v948 = vadd.f32 %v852, %v913
        %v949 = vadd.f32 %v853, %v915
        %v950 = vadd.f32 %v854, %v917
        %v951 = vadd.f32 %v855, %v919
        %v952 = vld [vmem:[%s2] sm:$0x1]
        %v954 = vperm.slane %v952, 0
        %955 = vrot.lane.b32.xlu0 %v954, 32
        %v956 = vpop.permute.xlu0 %955
        %v958 = vadd.f32 %v936, %v956
        %v959 = vadd.f32 %v937, %v956
        %v960 = vadd.f32 %v938, %v956
        %v961 = vadd.f32 %v939, %v956
        %v962 = vadd.f32 %v940, %v956
        %v963 = vadd.f32 %v941, %v956
        %v964 = vadd.f32 %v942, %v956
        %v965 = vadd.f32 %v943, %v956
        %v966 = vadd.f32 %v944, %v956
        %v967 = vadd.f32 %v945, %v956
        %v968 = vadd.f32 %v946, %v956
        %v969 = vadd.f32 %v947, %v956
        %v970 = vadd.f32 %v948, %v956
        %v971 = vadd.f32 %v949, %v956
        %v972 = vadd.f32 %v950, %v956
        %v973 = vadd.f32 %v951, %v956
        %v974 = vtanh.pop %v958
        %v975 = vtanh.pop %v959
        %v976 = vtanh.pop %v960
        %v977 = vtanh.pop %v961
        %v978 = vtanh.pop %v962
        %v979 = vtanh.pop %v963
        %v980 = vtanh.pop %v964
        %v981 = vtanh.pop %v965
        %v982 = vtanh.pop %v966
        %v983 = vtanh.pop %v967
        %v984 = vtanh.pop %v968
        %v985 = vtanh.pop %v969
        %v986 = vtanh.pop %v970
        %v987 = vtanh.pop %v971
        %v988 = vtanh.pop %v972
        %v989 = vtanh.pop %v973
        %v990 = vld [vmem:[%s423] sm:$0xff]
        %v991 = vld [vmem:[%s423 + $0x8] sm:$0xff]
        %v992 = vld [vmem:[%s423 + $0x10] sm:$0xff]
        %v993 = vld [vmem:[%s423 + $0x18] sm:$0xff]
        %v994 = vld [vmem:[%s423 + $0x20] sm:$0xff]
        %v995 = vld [vmem:[%s423 + $0x28] sm:$0xff]
        %v996 = vld [vmem:[%s423 + $0x30] sm:$0xff]
        %v997 = vld [vmem:[%s423 + $0x38] sm:$0xff]
        %v998 = vld [vmem:[%s423 + $0x40] sm:$0xff]
        %v999 = vld [vmem:[%s423 + $0x48] sm:$0xff]
        %v1000 = vld [vmem:[%s423 + $0x50] sm:$0xff]
        %v1001 = vld [vmem:[%s423 + $0x58] sm:$0xff]
        %v1002 = vld [vmem:[%s423 + $0x60] sm:$0xff]
        %v1003 = vld [vmem:[%s423 + $0x68] sm:$0xff]
        %v1004 = vld [vmem:[%s423 + $0x70] sm:$0xff]
        %v1005 = vld [vmem:[%s423 + $0x78] sm:$0xff]
        %v1006 = vmul.f32 %v840, %v990
        %v1007 = vmul.f32 %v841, %v991
        %v1008 = vmul.f32 %v842, %v992
        %v1009 = vmul.f32 %v843, %v993
        %v1010 = vmul.f32 %v844, %v994
        %v1011 = vmul.f32 %v845, %v995
        %v1012 = vmul.f32 %v846, %v996
        %v1013 = vmul.f32 %v847, %v997
        %v1014 = vmul.f32 %v848, %v998
        %v1015 = vmul.f32 %v849, %v999
        %v1016 = vmul.f32 %v850, %v1000
        %v1017 = vmul.f32 %v851, %v1001
        %v1018 = vmul.f32 %v852, %v1002
        %v1019 = vmul.f32 %v853, %v1003
        %v1020 = vmul.f32 %v854, %v1004
        %v1021 = vmul.f32 %v855, %v1005
        %v1022 = vsub.f32 1.0, %v840
        %v1023 = vsub.f32 1.0, %v841
        %v1024 = vsub.f32 1.0, %v842
        %v1025 = vsub.f32 1.0, %v843
        %v1026 = vsub.f32 1.0, %v844
        %v1027 = vsub.f32 1.0, %v845
        %v1028 = vsub.f32 1.0, %v846
        %v1029 = vsub.f32 1.0, %v847
        %v1030 = vsub.f32 1.0, %v848
        %v1031 = vsub.f32 1.0, %v849
        %v1032 = vsub.f32 1.0, %v850
        %v1033 = vsub.f32 1.0, %v851
        %v1034 = vsub.f32 1.0, %v852
        %v1035 = vsub.f32 1.0, %v853
        %v1036 = vsub.f32 1.0, %v854
        %v1037 = vsub.f32 1.0, %v855
        %1054 = vrot.lane.b32.xlu0 %v974, 96
        %v1055 = vpop.permute.xlu0 %1054
        %1056 = vrot.lane.b32.xlu0 %v975, 96
        %v1057 = vpop.permute.xlu0 %1056
        %1058 = vrot.lane.b32.xlu0 %v976, 96
        %v1059 = vpop.permute.xlu0 %1058
        %1060 = vrot.lane.b32.xlu0 %v977, 96
        %v1061 = vpop.permute.xlu0 %1060
        %1062 = vrot.lane.b32.xlu0 %v978, 96
        %v1063 = vpop.permute.xlu0 %1062
        %1064 = vrot.lane.b32.xlu0 %v979, 96
        %v1065 = vpop.permute.xlu0 %1064
        %1066 = vrot.lane.b32.xlu0 %v980, 96
        %v1067 = vpop.permute.xlu0 %1066
        %1068 = vrot.lane.b32.xlu0 %v981, 96
        %v1069 = vpop.permute.xlu0 %1068
        %1070 = vrot.lane.b32.xlu0 %v982, 96
        %v1071 = vpop.permute.xlu0 %1070
        %1072 = vrot.lane.b32.xlu0 %v983, 96
        %v1073 = vpop.permute.xlu0 %1072
        %1074 = vrot.lane.b32.xlu0 %v984, 96
        %v1075 = vpop.permute.xlu0 %1074
        %1076 = vrot.lane.b32.xlu0 %v985, 96
        %v1077 = vpop.permute.xlu0 %1076
        %1078 = vrot.lane.b32.xlu0 %v986, 96
        %v1079 = vpop.permute.xlu0 %1078
        %1080 = vrot.lane.b32.xlu0 %v987, 96
        %v1081 = vpop.permute.xlu0 %1080
        %1082 = vrot.lane.b32.xlu0 %v988, 96
        %v1083 = vpop.permute.xlu0 %1082
        %1084 = vrot.lane.b32.xlu0 %v989, 96
        %v1085 = vpop.permute.xlu0 %1084
        %v1102 = vmul.f32 %v1022, %v1055
        %v1103 = vmul.f32 %v1023, %v1057
        %v1104 = vmul.f32 %v1024, %v1059
        %v1105 = vmul.f32 %v1025, %v1061
        %v1106 = vmul.f32 %v1026, %v1063
        %v1107 = vmul.f32 %v1027, %v1065
        %v1108 = vmul.f32 %v1028, %v1067
        %v1109 = vmul.f32 %v1029, %v1069
        %v1110 = vmul.f32 %v1030, %v1071
        %v1111 = vmul.f32 %v1031, %v1073
        %v1112 = vmul.f32 %v1032, %v1075
        %v1113 = vmul.f32 %v1033, %v1077
        %v1114 = vmul.f32 %v1034, %v1079
        %v1115 = vmul.f32 %v1035, %v1081
        %v1116 = vmul.f32 %v1036, %v1083
        %v1117 = vmul.f32 %v1037, %v1085
        %v1118 = vadd.f32 %v1006, %v1102
        %v1119 = vadd.f32 %v1007, %v1103
        %v1120 = vadd.f32 %v1008, %v1104
        %v1121 = vadd.f32 %v1009, %v1105
        %v1122 = vadd.f32 %v1010, %v1106
        %v1123 = vadd.f32 %v1011, %v1107
        %v1124 = vadd.f32 %v1012, %v1108
        %v1125 = vadd.f32 %v1013, %v1109
        %v1126 = vadd.f32 %v1014, %v1110
        %v1127 = vadd.f32 %v1015, %v1111
        %v1128 = vadd.f32 %v1016, %v1112
        %v1129 = vadd.f32 %v1017, %v1113
        %v1130 = vadd.f32 %v1018, %v1114
        %v1131 = vadd.f32 %v1019, %v1115
        %v1132 = vadd.f32 %v1020, %v1116
        %v1133 = vadd.f32 %v1021, %v1117
        %1134 = vst.msk [vmem:[%s435] sm:$0xff] %vm820, %v1118
        %1135 = vst.msk [vmem:[%s435 + $0x8] sm:$0xff] %vm820, %v1119
        %1136 = vst.msk [vmem:[%s435 + $0x10] sm:$0xff] %vm820, %v1120
        %1137 = vst.msk [vmem:[%s435 + $0x18] sm:$0xff] %vm820, %v1121
        %1138 = vst.msk [vmem:[%s435 + $0x20] sm:$0xff] %vm820, %v1122
        %1139 = vst.msk [vmem:[%s435 + $0x28] sm:$0xff] %vm820, %v1123
        %1140 = vst.msk [vmem:[%s435 + $0x30] sm:$0xff] %vm820, %v1124
        %1141 = vst.msk [vmem:[%s435 + $0x38] sm:$0xff] %vm820, %v1125
        %1142 = vst.msk [vmem:[%s435 + $0x40] sm:$0xff] %vm820, %v1126
        %1143 = vst.msk [vmem:[%s435 + $0x48] sm:$0xff] %vm820, %v1127
        %1144 = vst.msk [vmem:[%s435 + $0x50] sm:$0xff] %vm820, %v1128
        %1145 = vst.msk [vmem:[%s435 + $0x58] sm:$0xff] %vm820, %v1129
        %1146 = vst.msk [vmem:[%s435 + $0x60] sm:$0xff] %vm820, %v1130
        %1147 = vst.msk [vmem:[%s435 + $0x68] sm:$0xff] %vm820, %v1131
        %1148 = vst.msk [vmem:[%s435 + $0x70] sm:$0xff] %vm820, %v1132
        %1149 = vst.msk [vmem:[%s435 + $0x78] sm:$0xff] %vm820, %v1133
        %v1150 = vpack.c.bf16 %v1119, %v1118
        %v1151 = vpack.c.bf16 %v1121, %v1120
        %v1152 = vpack.c.bf16 %v1123, %v1122
        %v1153 = vpack.c.bf16 %v1125, %v1124
        %v1154 = vpack.c.bf16 %v1127, %v1126
        %v1155 = vpack.c.bf16 %v1129, %v1128
        %v1156 = vpack.c.bf16 %v1131, %v1130
        %v1157 = vpack.c.bf16 %v1133, %v1132
        %v1158 = vld [vmem:[%s5] sm:$0xf]
        %v1159 = vld [vmem:[%s5 + $0x4] sm:$0xf]
        %v1160 = vld [vmem:[%s5 + $0x8] sm:$0xf]
        %v1161 = vld [vmem:[%s5 + $0xc] sm:$0xf]
        %v1166 = vunpack.c.l.b16 %v1158
        %v1167 = vunpack.c.l.b16 %v1159
        %v1168 = vunpack.c.l.b16 %v1160
        %v1169 = vunpack.c.l.b16 %v1161
        %v1170 = vpack.c.b16 %v1167, %v1166
        %v1171 = vpack.c.b16 %v1169, %v1168
        %v1175 = vsel %vm820, %v1150, 0
        %v1178 = vsel %vm820, %v1151, 0
        %v1181 = vsel %vm820, %v1152, 0
        %v1184 = vsel %vm820, %v1153, 0
        %v1187 = vsel %vm820, %v1154, 0
        %v1190 = vsel %vm820, %v1155, 0
        %v1193 = vsel %vm820, %v1156, 0
        %v1196 = vsel %vm820, %v1157, 0
        %1198 = vmatpush.bf16.msra.mxu0 0
        %1199 = vmatpush.bf16.msra.mxu0 0
        %1200 = vmatpush.bf16.msra.mxu0 0
        %1201 = vmatpush.bf16.msra.mxu0 0
        %1202 = vmatpush.bf16.msra.mxu0 0
        %1203 = vmatpush.bf16.msra.mxu0 0
        %1204 = vmatpush.bf16.msra.mxu0 %v1171
        %1205 = vmatpush.bf16.msra.mxu0 %v1170
        %1206 = vmatmul.bf16.gmra.mxu0 %v1175
        %v1207 = vpop.f32.mrf.mxu0
        %v1208 = vadd.f32 0.0, %v1207
        %v1209 = vpop.f32.mrf.mxu0
        %v1210 = vadd.f32 0.0, %v1209
        %1211 = vmatmul.bf16.gmra.mxu0 %v1178
        %v1212 = vpop.f32.mrf.mxu0
        %v1213 = vadd.f32 0.0, %v1212
        %v1214 = vpop.f32.mrf.mxu0
        %v1215 = vadd.f32 0.0, %v1214
        %1216 = vmatmul.bf16.gmra.mxu0 %v1181
        %v1217 = vpop.f32.mrf.mxu0
        %v1218 = vadd.f32 0.0, %v1217
        %v1219 = vpop.f32.mrf.mxu0
        %v1220 = vadd.f32 0.0, %v1219
        %1221 = vmatmul.bf16.gmra.mxu0 %v1184
        %v1222 = vpop.f32.mrf.mxu0
        %v1223 = vadd.f32 0.0, %v1222
        %v1224 = vpop.f32.mrf.mxu0
        %v1225 = vadd.f32 0.0, %v1224
        %1226 = vmatmul.bf16.gmra.mxu0 %v1187
        %v1227 = vpop.f32.mrf.mxu0
        %v1228 = vadd.f32 0.0, %v1227
        %v1229 = vpop.f32.mrf.mxu0
        %v1230 = vadd.f32 0.0, %v1229
        %1231 = vmatmul.bf16.gmra.mxu0 %v1190
        %v1232 = vpop.f32.mrf.mxu0
        %v1233 = vadd.f32 0.0, %v1232
        %v1234 = vpop.f32.mrf.mxu0
        %v1235 = vadd.f32 0.0, %v1234
        %1236 = vmatmul.bf16.gmra.mxu0 %v1193
        %v1237 = vpop.f32.mrf.mxu0
        %v1238 = vadd.f32 0.0, %v1237
        %v1239 = vpop.f32.mrf.mxu0
        %v1240 = vadd.f32 0.0, %v1239
        %1241 = vmatmul.bf16.gmra.mxu0 %v1196
        %v1242 = vpop.f32.mrf.mxu0
        %v1243 = vadd.f32 0.0, %v1242
        %v1244 = vpop.f32.mrf.mxu0
        %v1245 = vadd.f32 0.0, %v1244
        %1246 = vdwg.mxu0
        %v1247 = vpack.c.bf16 %v1208, %v1208
        %v1248 = vpack.c.bf16 %v1210, %v1210
        %v1249 = vpack.c.bf16 %v1213, %v1213
        %v1250 = vpack.c.bf16 %v1215, %v1215
        %v1251 = vpack.c.bf16 %v1218, %v1218
        %v1252 = vpack.c.bf16 %v1220, %v1220
        %v1253 = vpack.c.bf16 %v1223, %v1223
        %v1254 = vpack.c.bf16 %v1225, %v1225
        %v1255 = vpack.c.bf16 %v1228, %v1228
        %v1256 = vpack.c.bf16 %v1230, %v1230
        %v1257 = vpack.c.bf16 %v1233, %v1233
        %v1258 = vpack.c.bf16 %v1235, %v1235
        %v1259 = vpack.c.bf16 %v1238, %v1238
        %v1260 = vpack.c.bf16 %v1240, %v1240
        %v1261 = vpack.c.bf16 %v1243, %v1243
        %v1262 = vpack.c.bf16 %v1245, %v1245
        %vm1263 = vcmask 781312
        %1264 = vst.msk [vmem:[%s442] sm:$0xf] %vm1263, %v1247
        %1265 = vst.msk [vmem:[%s442 + $0x8] sm:$0xf] %vm1263, %v1248
        %1266 = vst.msk [vmem:[%s442 + $0x10] sm:$0xf] %vm1263, %v1249
        %1267 = vst.msk [vmem:[%s442 + $0x18] sm:$0xf] %vm1263, %v1250
        %1268 = vst.msk [vmem:[%s442 + $0x20] sm:$0xf] %vm1263, %v1251
        %1269 = vst.msk [vmem:[%s442 + $0x28] sm:$0xf] %vm1263, %v1252
        %1270 = vst.msk [vmem:[%s442 + $0x30] sm:$0xf] %vm1263, %v1253
        %1271 = vst.msk [vmem:[%s442 + $0x38] sm:$0xf] %vm1263, %v1254
        %1272 = vst.msk [vmem:[%s442 + $0x40] sm:$0xf] %vm1263, %v1255
        %1273 = vst.msk [vmem:[%s442 + $0x48] sm:$0xf] %vm1263, %v1256
        %1274 = vst.msk [vmem:[%s442 + $0x50] sm:$0xf] %vm1263, %v1257
        %1275 = vst.msk [vmem:[%s442 + $0x58] sm:$0xf] %vm1263, %v1258
        %1276 = vst.msk [vmem:[%s442 + $0x60] sm:$0xf] %vm1263, %v1259
        %1277 = vst.msk [vmem:[%s442 + $0x68] sm:$0xf] %vm1263, %v1260
        %1278 = vst.msk [vmem:[%s442 + $0x70] sm:$0xf] %vm1263, %v1261
        %1279 = vst.msk [vmem:[%s442 + $0x78] sm:$0xf] %vm1263, %v1262
        %v1280 = vld [vmem:[%s429] sm:$0xf]
        %v1281 = vld [vmem:[%s429 + $0x4] sm:$0xf]
        %v1282 = vld [vmem:[%s429 + $0x8] sm:$0xf]
        %v1283 = vld [vmem:[%s429 + $0xc] sm:$0xf]
        %v1284 = vld [vmem:[%s429 + $0x10] sm:$0xf]
        %v1285 = vld [vmem:[%s429 + $0x14] sm:$0xf]
        %v1286 = vld [vmem:[%s429 + $0x18] sm:$0xf]
        %v1287 = vld [vmem:[%s429 + $0x1c] sm:$0xf]
        %v1288 = vld [vmem:[%s429 + $0x20] sm:$0xf]
        %v1289 = vld [vmem:[%s429 + $0x24] sm:$0xf]
        %v1290 = vld [vmem:[%s429 + $0x28] sm:$0xf]
        %v1291 = vld [vmem:[%s429 + $0x2c] sm:$0xf]
        %v1292 = vld [vmem:[%s429 + $0x30] sm:$0xf]
        %v1293 = vld [vmem:[%s429 + $0x34] sm:$0xf]
        %v1294 = vld [vmem:[%s429 + $0x38] sm:$0xf]
        %v1295 = vld [vmem:[%s429 + $0x3c] sm:$0xf]
        %1312 = vrot.lane.b32.xlu0 %v1280, 96
        %v1313 = vpop.permute.xlu0 %1312
        %1314 = vrot.lane.b32.xlu0 %v1281, 96
        %v1315 = vpop.permute.xlu0 %1314
        %1316 = vrot.lane.b32.xlu0 %v1282, 96
        %v1317 = vpop.permute.xlu0 %1316
        %1318 = vrot.lane.b32.xlu0 %v1283, 96
        %v1319 = vpop.permute.xlu0 %1318
        %1320 = vrot.lane.b32.xlu0 %v1284, 96
        %v1321 = vpop.permute.xlu0 %1320
        %1322 = vrot.lane.b32.xlu0 %v1285, 96
        %v1323 = vpop.permute.xlu0 %1322
        %1324 = vrot.lane.b32.xlu0 %v1286, 96
        %v1325 = vpop.permute.xlu0 %1324
        %1326 = vrot.lane.b32.xlu0 %v1287, 96
        %v1327 = vpop.permute.xlu0 %1326
        %1328 = vrot.lane.b32.xlu0 %v1288, 96
        %v1329 = vpop.permute.xlu0 %1328
        %1330 = vrot.lane.b32.xlu0 %v1289, 96
        %v1331 = vpop.permute.xlu0 %1330
        %1332 = vrot.lane.b32.xlu0 %v1290, 96
        %v1333 = vpop.permute.xlu0 %1332
        %1334 = vrot.lane.b32.xlu0 %v1291, 96
        %v1335 = vpop.permute.xlu0 %1334
        %1336 = vrot.lane.b32.xlu0 %v1292, 96
        %v1337 = vpop.permute.xlu0 %1336
        %1338 = vrot.lane.b32.xlu0 %v1293, 96
        %v1339 = vpop.permute.xlu0 %1338
        %1340 = vrot.lane.b32.xlu0 %v1294, 96
        %v1341 = vpop.permute.xlu0 %1340
        %1342 = vrot.lane.b32.xlu0 %v1295, 96
        %v1343 = vpop.permute.xlu0 %1342
        %v1344 = vrot.slane %v1313, 4
        %v1345 = vrot.slane %v1315, 4
        %v1346 = vrot.slane %v1317, 4
        %v1347 = vrot.slane %v1319, 4
        %v1348 = vrot.slane %v1321, 4
        %v1349 = vrot.slane %v1323, 4
        %v1350 = vrot.slane %v1325, 4
        %v1351 = vrot.slane %v1327, 4
        %v1352 = vrot.slane %v1329, 4
        %v1353 = vrot.slane %v1331, 4
        %v1354 = vrot.slane %v1333, 4
        %v1355 = vrot.slane %v1335, 4
        %v1356 = vrot.slane %v1337, 4
        %v1357 = vrot.slane %v1339, 4
        %v1358 = vrot.slane %v1341, 4
        %v1359 = vrot.slane %v1343, 4
        %vm1360 = vcmask 785408
        %v1361 = vsel %vm1360, %v1344, %v1313
        %v1362 = vsel %vm1360, %v1345, %v1315
        %v1363 = vsel %vm1360, %v1346, %v1317
        %v1364 = vsel %vm1360, %v1347, %v1319
        %v1365 = vsel %vm1360, %v1348, %v1321
        %v1366 = vsel %vm1360, %v1349, %v1323
        %v1367 = vsel %vm1360, %v1350, %v1325
        %v1368 = vsel %vm1360, %v1351, %v1327
        %v1369 = vsel %vm1360, %v1352, %v1329
        %v1370 = vsel %vm1360, %v1353, %v1331
        %v1371 = vsel %vm1360, %v1354, %v1333
        %v1372 = vsel %vm1360, %v1355, %v1335
        %v1373 = vsel %vm1360, %v1356, %v1337
        %v1374 = vsel %vm1360, %v1357, %v1339
        %v1375 = vsel %vm1360, %v1358, %v1341
        %v1376 = vsel %vm1360, %v1359, %v1343
        %vm1393 = vcmask 1044224
        %vm1394 = vcmask 261124
        %vm1395 = vmor %vm1394, %vm1393
        %1396 = vst.msk [vmem:[%s442] sm:$0xff] %vm1395, %v1361
        %1397 = vst.msk [vmem:[%s442 + $0x8] sm:$0xff] %vm1395, %v1362
        %1398 = vst.msk [vmem:[%s442 + $0x10] sm:$0xff] %vm1395, %v1363
        %1399 = vst.msk [vmem:[%s442 + $0x18] sm:$0xff] %vm1395, %v1364
        %1400 = vst.msk [vmem:[%s442 + $0x20] sm:$0xff] %vm1395, %v1365
        %1401 = vst.msk [vmem:[%s442 + $0x28] sm:$0xff] %vm1395, %v1366
        %1402 = vst.msk [vmem:[%s442 + $0x30] sm:$0xff] %vm1395, %v1367
        %1403 = vst.msk [vmem:[%s442 + $0x38] sm:$0xff] %vm1395, %v1368
        %1404 = vst.msk [vmem:[%s442 + $0x40] sm:$0xff] %vm1395, %v1369
        %1405 = vst.msk [vmem:[%s442 + $0x48] sm:$0xff] %vm1395, %v1370
        %1406 = vst.msk [vmem:[%s442 + $0x50] sm:$0xff] %vm1395, %v1371
        %1407 = vst.msk [vmem:[%s442 + $0x58] sm:$0xff] %vm1395, %v1372
        %1408 = vst.msk [vmem:[%s442 + $0x60] sm:$0xff] %vm1395, %v1373
        %1409 = vst.msk [vmem:[%s442 + $0x68] sm:$0xff] %vm1395, %v1374
        %1410 = vst.msk [vmem:[%s442 + $0x70] sm:$0xff] %vm1395, %v1375
        %1411 = vst.msk [vmem:[%s442 + $0x78] sm:$0xff] %vm1395, %v1376
      $region56: #{generative_step.11} parent=47 // pred_fallthru
        _
      %s1412 = smul.u32 16, %s24
      %p1413 = scmp.lt.s32.totalorder %s1412, 31
      %s1414 = scalar_select %p1413, %s1412, 31
      %s1415 = smul.addr %s1414, 8
      %s1416 = scalar_lea.vmem %s7, %s1415
      %s1417 = smul.u32 16, %s24
      %p1418 = scmp.lt.s32.totalorder %s1417, 31
      %s1419 = scalar_select %p1418, %s1417, 31
      %s1420 = smul.addr %s1419, 2
      %s1421 = smul.addr %s1420, 4
      %s1422 = scalar_lea.vmem %s8, %s1421
      // Predicated region
      $region57: #{generative_step.11} parent=47 // pred_check
        %p1423 = pneg %p224
      $region58: #{generative_step.11} parent=47 // pred_check_branch
        %1425 = sbr.rel (%p1423) target = $region60
      $region59: #{generative_step.11} parent=47 // pred_region
        %s1426 = smul.u32 16, %s24
      $region60: #{generative_step.11} parent=47 // pred_fallthru
        _
      // Predicated region
      $region61: #{generative_step.11} parent=47 // pred_check
        %p1427 = pneg %p250
      $region62: #{generative_step.11} parent=47 // pred_check_branch
        %1429 = sbr.rel (%p1427) target = $region64
      $region63: #{generative_step.11} parent=47 // pred_region
        %s1430 = smul.u32 16, %s24
      $region64: #{generative_step.11} parent=47 // pred_fallthru
        _
    $region48: #{generative_step.11} parent=5 // pred_fallthru
      _
    %p1431 = scmp.le.s32.totalorder 2, %s15
    // Predicated region
    $region65: #{generative_step.11} parent=5 // pred_check
      %p1432 = pneg %p1431
    $region66: #{generative_step.11} parent=5 // pred_check_branch
      %1434 = sbr.rel (%p1432) target = $region68
    $region67: #{generative_step.11} parent=5 // pred_region
      %s1435 = ssub.s32 %s15, 2
      // Predicated region
      $region69: #{generative_step.11} parent=67 // pred_check
        %p1436 = pneg %p230
      $region70: #{generative_step.11} parent=67 // pred_check_branch
        %1438 = sbr.rel (%p1436) target = $region72
      $region71: #{generative_step.11} parent=67 // pred_region
        %s1439 = smul.u32 16, %s26
        %p1440 = scmp.lt.s32.totalorder %s1439, 31
        %s1441 = scalar_select %p1440, %s1439, 31
        %s1442 = smul.addr %s1441, 8
        %s1443 = scalar_lea.vmem %s7, %s1442
      $region72: #{generative_step.11} parent=67 // pred_fallthru
        _
      // Predicated region
      $region73: #{generative_step.11} parent=67 // pred_check
        %p1444 = pneg %p256
      $region74: #{generative_step.11} parent=67 // pred_check_branch
        %1446 = sbr.rel (%p1444) target = $region76
      $region75: #{generative_step.11} parent=67 // pred_region
        %s1447 = smul.u32 16, %s26
        %p1448 = scmp.lt.s32.totalorder %s1447, 31
        %s1449 = scalar_select %p1448, %s1447, 31
        %s1450 = smul.addr %s1449, 2
        %s1451 = smul.addr %s1450, 4
        %s1452 = scalar_lea.vmem %s8, %s1451
      $region76: #{generative_step.11} parent=67 // pred_fallthru
        _
    $region68: #{generative_step.11} parent=5 // pred_fallthru
      _
  $region6: #{generative_step.11} parent=0 // loop_footer
    %s19 = sadd.s32 1, %s15
  $region7: #{generative_step.11} parent=0 // loop_footer_branch
    %14 = sbr.rel target = $region3
  $region8: #{generative_step.11} parent=0 // loop_exit
    _

// kernel: generative_step.13
$region0: #{generative_step.13}
  #allocation0 [shape = 'u32[]', space=smem, size = 0x4, offset = 0x4, fixed_abs, tag = 'smem constant byte address 0x4 - core index']
  #allocation1 [shape = 'u32[72,128]{1,0:T(1,128)}', space=vmem, size = 0x9000, scoped, tag = 'internal scratch']
  #allocation2 [shape = 'f32[128,32]{1,0:T(8,128)}', space=vmem, size = 0x10000, scoped, tag = 'scratch operand']
  %s0 = inlined_call_operand.vmem [shape: bf16[256,256], index: 0, kind: input, shape index: {}]
  %s1 = inlined_call_operand.vmem [shape: bf16[256,32], index: 1, kind: input, shape index: {}]
  %s2 = inlined_call_operand.vmem [shape: f32[1,32], index: 2, kind: input, shape index: {}]
  %s3 = inlined_call_operand.vmem [shape: f32[256,64], index: 3, kind: input, shape index: {}]
  %s4 = inlined_call_operand.vmem [shape: f32[256,32], index: 4, kind: input, shape index: {}]
  %s5 = inlined_call_operand.vmem [shape: f32[256,32], index: 5, kind: output, shape index: {}]
  %s6 = sld [smem:[#allocation0]]
  $region61: #{generative_step.13} parent=0
    _
  %s8 = ssub.s32 1, %s6
  %s9 = scalar_select 0, %s8, %s6
  loop: start=0, step=1, limit=4
  $region2: #{generative_step.13} parent=0 // loop_pre_header
    _
  $region3: #{generative_step.13} parent=0 // loop_header
    %s11 = sphi 0, %s15
    %p12 = scmp.ge.s32.totalorder %s11, 4
    %s18 = sphi 0, %s30
    %s19 = sphi 0, %s26
    %s20 = sphi 0, %s18
    %s21 = sphi 0, %s19
    %s22 = sphi 0, %s20
    %s23 = sphi 0, %s21
    %s35 = sphi 0, %s37
    %s38 = sphi 0, %s35
    %s39 = sphi 0, %s38
    %s55 = sphi 0, %s39
    %s61 = sphi 0, %s63
    %s64 = sphi 0, %s61
    %s65 = sphi 0, %s64
    %s81 = sphi 0, %s65
    %s85 = sphi 0, %s85
    %s87 = sphi 0, %s85
    %s88 = sphi 0, %s87
    %s102 = sphi 0, %s88
    %s108 = sphi 0, %s110
    %s111 = sphi 0, %s108
    %s112 = sphi 0, %s111
    %s128 = sphi 0, %s112
    %s134 = sphi 0, %s136
    %s137 = sphi 0, %s134
    %s138 = sphi 0, %s137
    %s154 = sphi 0, %s138
    %s160 = sphi 0, %s162
    %s163 = sphi 0, %s160
    %s164 = sphi 0, %s163
    %s180 = sphi 0, %s164
  $region4: #{generative_step.13} parent=0 // loop_header_branch
    %14 = sbr.rel (%p12) target = $region8
  $region5: #{generative_step.13} parent=0 // loop_body
    %s16 = ssub.s32 %s11, 1
    %s17 = ssub.s32 %s11, 2
    %s24 = sadd.s32 1, %s19
    %p25 = scmp.ge.s32.totalorder %s24, 1
    %s26 = scalar_select %p25, 0, %s24
    %s27 = sadd.s32 1, %s18
    %s28 = scalar_select %p25, %s27, %s18
    %p29 = scmp.ge.s32.totalorder %s28, 2
    %s30 = scalar_select %p29, 0, %s28
    %s31 = ssub.s32 %s18, %s30
    %s32 = ssub.s32 %s19, %s26
    %s33 = sor.u32 %s31, %s32
    %p34 = scmp.eq.s32.totalorder %s33, 0
    %s36 = sadd.s32 %s35, 1
    %s37 = scalar_select %p34, %s35, %s36
    %p40 = pneg %p34
    %p41 = scmp.eq.s32.totalorder %s11, 1
    %p42 = por %p40, %p41
    %p43 = scmp.ne.s32.totalorder %s35, %s38
    %p44 = scmp.eq.s32.totalorder %s11, 0
    %p45 = por %p43, %p44
    %p46 = scmp.ne.s32.totalorder %s35, %s38
    %p47 = scmp.eq.s32.totalorder %s16, 1
    %p48 = por %p46, %p47
    %p49 = scmp.ne.s32.totalorder %s38, %s39
    %p50 = scmp.eq.s32.totalorder %s16, 0
    %p51 = por %p49, %p50
    %p52 = scmp.ne.s32.totalorder %s38, %s39
    %p53 = scmp.eq.s32.totalorder %s17, 1
    %p54 = por %p52, %p53
    %p56 = scmp.ne.s32.totalorder %s39, %s55
    %p57 = scmp.eq.s32.totalorder %s17, 0
    %p58 = por %p56, %p57
    %s59 = ssub.s32 %s19, %s26
    %p60 = scmp.eq.s32.totalorder %s59, 0
    %s62 = sadd.s32 %s61, 1
    %s63 = scalar_select %p60, %s61, %s62
    %p66 = pneg %p60
    %p67 = scmp.eq.s32.totalorder %s11, 1
    %p68 = por %p66, %p67
    %p69 = scmp.ne.s32.totalorder %s61, %s64
    %p70 = scmp.eq.s32.totalorder %s11, 0
    %p71 = por %p69, %p70
    %p72 = scmp.ne.s32.totalorder %s61, %s64
    %p73 = scmp.eq.s32.totalorder %s16, 1
    %p74 = por %p72, %p73
    %p75 = scmp.ne.s32.totalorder %s64, %s65
    %p76 = scmp.eq.s32.totalorder %s16, 0
    %p77 = por %p75, %p76
    %p78 = scmp.ne.s32.totalorder %s64, %s65
    %p79 = scmp.eq.s32.totalorder %s17, 1
    %p80 = por %p78, %p79
    %p82 = scmp.ne.s32.totalorder %s65, %s81
    %p83 = scmp.eq.s32.totalorder %s17, 0
    %p84 = por %p82, %p83
    %s86 = sadd.s32 %s85, 1
    %p89 = scmp.eq.s32.totalorder %s11, 1
    %p90 = scmp.ne.s32.totalorder %s85, %s87
    %p91 = scmp.eq.s32.totalorder %s11, 0
    %p92 = por %p90, %p91
    %p93 = scmp.ne.s32.totalorder %s85, %s87
    %p94 = scmp.eq.s32.totalorder %s16, 1
    %p95 = por %p93, %p94
    %p96 = scmp.ne.s32.totalorder %s87, %s88
    %p97 = scmp.eq.s32.totalorder %s16, 0
    %p98 = por %p96, %p97
    %p99 = scmp.ne.s32.totalorder %s87, %s88
    %p100 = scmp.eq.s32.totalorder %s17, 1
    %p101 = por %p99, %p100
    %p103 = scmp.ne.s32.totalorder %s88, %s102
    %p104 = scmp.eq.s32.totalorder %s17, 0
    %p105 = por %p103, %p104
    %s106 = ssub.s32 %s18, %s30
    %p107 = scmp.eq.s32.totalorder %s106, 0
    %s109 = sadd.s32 %s108, 1
    %s110 = scalar_select %p107, %s108, %s109
    %p113 = pneg %p107
    %p114 = scmp.eq.s32.totalorder %s11, 1
    %p115 = por %p113, %p114
    %p116 = scmp.ne.s32.totalorder %s108, %s111
    %p117 = scmp.eq.s32.totalorder %s11, 0
    %p118 = por %p116, %p117
    %p119 = scmp.ne.s32.totalorder %s108, %s111
    %p120 = scmp.eq.s32.totalorder %s16, 1
    %p121 = por %p119, %p120
    %p122 = scmp.ne.s32.totalorder %s111, %s112
    %p123 = scmp.eq.s32.totalorder %s16, 0
    %p124 = por %p122, %p123
    %p125 = scmp.ne.s32.totalorder %s111, %s112
    %p126 = scmp.eq.s32.totalorder %s17, 1
    %p127 = por %p125, %p126
    %p129 = scmp.ne.s32.totalorder %s112, %s128
    %p130 = scmp.eq.s32.totalorder %s17, 0
    %p131 = por %p129, %p130
    %s132 = ssub.s32 %s18, %s30
    %p133 = scmp.eq.s32.totalorder %s132, 0
    %s135 = sadd.s32 %s134, 1
    %s136 = scalar_select %p133, %s134, %s135
    %p139 = pneg %p133
    %p140 = scmp.eq.s32.totalorder %s11, 1
    %p141 = por %p139, %p140
    %p142 = scmp.ne.s32.totalorder %s134, %s137
    %p143 = scmp.eq.s32.totalorder %s11, 0
    %p144 = por %p142, %p143
    %p145 = scmp.ne.s32.totalorder %s134, %s137
    %p146 = scmp.eq.s32.totalorder %s16, 1
    %p147 = por %p145, %p146
    %p148 = scmp.ne.s32.totalorder %s137, %s138
    %p149 = scmp.eq.s32.totalorder %s16, 0
    %p150 = por %p148, %p149
    %p151 = scmp.ne.s32.totalorder %s137, %s138
    %p152 = scmp.eq.s32.totalorder %s17, 1
    %p153 = por %p151, %p152
    %p155 = scmp.ne.s32.totalorder %s138, %s154
    %p156 = scmp.eq.s32.totalorder %s17, 0
    %p157 = por %p155, %p156
    %s158 = ssub.s32 %s18, %s30
    %p159 = scmp.eq.s32.totalorder %s158, 0
    %s161 = sadd.s32 %s160, 1
    %s162 = scalar_select %p159, %s160, %s161
    %p165 = pneg %p159
    %p166 = scmp.eq.s32.totalorder %s11, 1
    %p167 = por %p165, %p166
    %p168 = scmp.ne.s32.totalorder %s160, %s163
    %p169 = scmp.eq.s32.totalorder %s11, 0
    %p170 = por %p168, %p169
    %p171 = scmp.ne.s32.totalorder %s160, %s163
    %p172 = scmp.eq.s32.totalorder %s16, 1
    %p173 = por %p171, %p172
    %p174 = scmp.ne.s32.totalorder %s163, %s164
    %p175 = scmp.eq.s32.totalorder %s16, 0
    %p176 = por %p174, %p175
    %p177 = scmp.ne.s32.totalorder %s163, %s164
    %p178 = scmp.eq.s32.totalorder %s17, 1
    %p179 = por %p177, %p178
    %p181 = scmp.ne.s32.totalorder %s164, %s180
    %p182 = scmp.eq.s32.totalorder %s17, 0
    %p183 = por %p181, %p182
    %p184 = scmp.le.s32.totalorder 1, %s11
    %p185 = scmp.lt.s32.totalorder %s11, 3
    %p186 = pnand %p184, %p185
    %p187 = pneg %p186
    // Predicated region
    $region9: #{generative_step.13} parent=5 // pred_check
      _
    $region10: #{generative_step.13} parent=5 // pred_check_branch
      %189 = sbr.rel (%p186) target = $region12
    $region11: #{generative_step.13} parent=5 // pred_region
      %s190 = ssub.s32 %s11, 1
      // Predicated region
      $region13: #{generative_step.13} parent=11 // pred_check
        %p191 = pneg %p77
      $region14: #{generative_step.13} parent=11 // pred_check_branch
        %193 = sbr.rel (%p191) target = $region16
      $region15: #{generative_step.13} parent=11 // pred_region
        %s194 = smul.u32 32, %s21
        %p195 = scmp.lt.s32.totalorder %s194, 31
        %s196 = scalar_select %p195, %s194, 31
        %s197 = smul.addr %s196, 4
        %s198 = scalar_lea.vmem %s1, %s197
        %s199 = smul.u32 32, %s21
      $region16: #{generative_step.13} parent=11 // pred_fallthru
        _
      // Predicated region
      $region17: #{generative_step.13} parent=11 // pred_check
        %p200 = pneg %p98
      $region18: #{generative_step.13} parent=11 // pred_check_branch
        %202 = sbr.rel (%p200) target = $region20
      $region19: #{generative_step.13} parent=11 // pred_region
        _
      $region20: #{generative_step.13} parent=11 // pred_fallthru
        _
    $region12: #{generative_step.13} parent=5 // pred_fallthru
      _
    %p203 = scmp.lt.s32.totalorder %s11, 2
    // Predicated region
    $region21: #{generative_step.13} parent=5 // pred_check
      %p204 = pneg %p203
    $region22: #{generative_step.13} parent=5 // pred_check_branch
      %206 = sbr.rel (%p204) target = $region24
    $region23: #{generative_step.13} parent=5 // pred_region
      // Predicated region
      $region25: #{generative_step.13} parent=23 // pred_check
        %p207 = pneg %p45
      $region26: #{generative_step.13} parent=23 // pred_check_branch
        %209 = sbr.rel (%p207) target = $region28
      $region27: #{generative_step.13} parent=23 // pred_region
        %s210 = smul.u32 16, %s18
        %s211 = smul.u32 2, %s19
        %p212 = scmp.lt.s32.totalorder %s210, 31
        %s213 = scalar_select %p212, %s210, 31
        %p214 = scmp.lt.s32.totalorder %s211, 1
        %s215 = scalar_select %p214, %s211, 1
        %s216 = smul.addr %s213, 2
        %s217 = sadd.s32 %s215, %s216
        %s218 = smul.addr %s217, 4
        %s219 = scalar_lea.vmem %s0, %s218
        %s220 = smul.u32 16, %s18
        %s221 = smul.u32 2, %s19
      $region28: #{generative_step.13} parent=23 // pred_fallthru
        _
      // Predicated region
      $region29: #{generative_step.13} parent=23 // pred_check
        %p222 = pneg %p118
      $region30: #{generative_step.13} parent=23 // pred_check_branch
        %224 = sbr.rel (%p222) target = $region32
      $region31: #{generative_step.13} parent=23 // pred_region
        %s225 = smul.u32 16, %s18
        %p226 = scmp.lt.s32.totalorder %s225, 31
        %s227 = scalar_select %p226, %s225, 31
        %s228 = smul.addr %s227, 8
        %s229 = scalar_lea.vmem %s3, %s228
        %s230 = smul.u32 16, %s18
      $region32: #{generative_step.13} parent=23 // pred_fallthru
        _
      // Predicated region
      $region33: #{generative_step.13} parent=23 // pred_check
        %p231 = pneg %p144
      $region34: #{generative_step.13} parent=23 // pred_check_branch
        %233 = sbr.rel (%p231) target = $region36
      $region35: #{generative_step.13} parent=23 // pred_region
        %s234 = smul.u32 16, %s18
        %p235 = scmp.lt.s32.totalorder %s234, 31
        %s236 = scalar_select %p235, %s234, 31
        %s237 = smul.addr %s236, 8
        %s238 = scalar_lea.vmem %s4, %s237
        %s239 = smul.u32 16, %s18
      $region36: #{generative_step.13} parent=23 // pred_fallthru
        _
    $region24: #{generative_step.13} parent=5 // pred_fallthru
      _
    %p240 = scmp.le.s32.totalorder 1, %s11
    %p241 = scmp.lt.s32.totalorder %s11, 3
    %p242 = pnand %p240, %p241
    %p243 = pneg %p242
    // Predicated region
    $region37: #{generative_step.13} parent=5 // pred_check
      _
    $region38: #{generative_step.13} parent=5 // pred_check_branch
      %245 = sbr.rel (%p242) target = $region40
    $region39: #{generative_step.13} parent=5 // pred_region
      %s246 = ssub.s32 %s11, 1
      %s247 = smul.u32 16, %s20
      %s248 = smul.u32 2, %s21
      %p249 = scmp.lt.s32.totalorder %s247, 31
      %s250 = scalar_select %p249, %s247, 31
      %p251 = scmp.lt.s32.totalorder %s248, 1
      %s252 = scalar_select %p251, %s248, 1
      %s253 = smul.addr %s250, 2
      %s254 = sadd.s32 %s252, %s253
      %s255 = smul.addr %s254, 4
      %s256 = scalar_lea.vmem %s0, %s255
      %p257 = pneg %p51
      %p258 = pneg %p48
      %s259 = smul.u32 32, %s21
      %p260 = scmp.lt.s32.totalorder %s259, 31
      %s261 = scalar_select %p260, %s259, 31
      %s262 = smul.addr %s261, 4
      %s263 = scalar_lea.vmem %s1, %s262
      %p264 = pneg %p77
      %p265 = pneg %p74
      %p266 = pneg %p98
      %p267 = pneg %p95
      %s268 = smul.u32 16, %s20
      %p269 = scmp.lt.s32.totalorder %s268, 31
      %s270 = scalar_select %p269, %s268, 31
      %s271 = smul.addr %s270, 8
      %s272 = scalar_lea.vmem %s3, %s271
      %p273 = pneg %p124
      %p274 = pneg %p121
      %s275 = smul.u32 16, %s20
      %p276 = scmp.lt.s32.totalorder %s275, 31
      %s277 = scalar_select %p276, %s275, 31
      %s278 = smul.addr %s277, 8
      %s279 = scalar_lea.vmem %s4, %s278
      %p280 = pneg %p150
      %p281 = pneg %p147
      %p282 = pneg %p176
      %p283 = pneg %p173
      %s284 = smul.u32 16, %s20
      %p285 = scmp.lt.s32.totalorder %s284, 31
      %s286 = scalar_select %p285, %s284, 31
      %s287 = smul.addr %s286, 8
      %s288 = scalar_lea.vmem %s5, %s287
      %s289 = smul.u32 16, %s20
      %s290 = smul.u32 2, %s21
      %p291 = scmp.lt.s32.totalorder %s289, 31
      %s292 = scalar_select %p291, %s289, 31
      %p293 = scmp.lt.s32.totalorder %s290, 1
      %s294 = scalar_select %p293, %s290, 1
      %s295 = smul.addr %s292, 2
      %s296 = sadd.s32 %s294, %s295
      %s297 = smul.addr %s296, 4
      %s298 = scalar_lea.vmem %s0, %s297
      %s299 = smul.u32 16, %s20
      %s300 = smul.u32 2, %s21
      %s301 = smul.u32 32, %s21
      %p302 = scmp.lt.s32.totalorder %s301, 31
      %s303 = scalar_select %p302, %s301, 31
      %s304 = smul.addr %s303, 4
      %s305 = scalar_lea.vmem %s1, %s304
      %s306 = smul.u32 32, %s21
      %s307 = smul.u32 16, %s20
      %p308 = scmp.lt.s32.totalorder %s307, 31
      %s309 = scalar_select %p308, %s307, 31
      %s310 = smul.addr %s309, 8
      %s311 = scalar_lea.vmem %s3, %s310
      %s312 = smul.u32 16, %s20
      %s313 = smul.u32 16, %s20
      %p314 = scmp.lt.s32.totalorder %s313, 31
      %s315 = scalar_select %p314, %s313, 31
      %s316 = smul.addr %s315, 8
      %s317 = scalar_lea.vmem %s4, %s316
      %s318 = smul.u32 16, %s20
      %s319 = smul.u32 16, %s20
      %p320 = scmp.lt.s32.totalorder %s319, 31
      %s321 = scalar_select %p320, %s319, 31
      %s322 = smul.addr %s321, 8
      %s323 = scalar_lea.vmem %s5, %s322
      %s324 = smul.u32 16, %s20
      %p325 = scmp.eq.s32.totalorder %s21, 0
      // Predicated region
      $region41: #{generative_step.13} parent=39 // pred_check
        %p326 = pneg %p325
      $region42: #{generative_step.13} parent=39 // pred_check_branch
        %328 = sbr.rel (%p326) target = $region44
      $region43: #{generative_step.13} parent=39 // pred_region
        %vm329 = vcmask 261120
        %330 = vst.msk [vmem:[#allocation2] sm:$0xff] %vm329, 0.0
        %331 = vst.msk [vmem:[#allocation2 + $0x8] sm:$0xff] %vm329, 0.0
        %332 = vst.msk [vmem:[#allocation2 + $0x10] sm:$0xff] %vm329, 0.0
        %333 = vst.msk [vmem:[#allocation2 + $0x18] sm:$0xff] %vm329, 0.0
        %334 = vst.msk [vmem:[#allocation2 + $0x20] sm:$0xff] %vm329, 0.0
        %335 = vst.msk [vmem:[#allocation2 + $0x28] sm:$0xff] %vm329, 0.0
        %336 = vst.msk [vmem:[#allocation2 + $0x30] sm:$0xff] %vm329, 0.0
        %337 = vst.msk [vmem:[#allocation2 + $0x38] sm:$0xff] %vm329, 0.0
        %338 = vst.msk [vmem:[#allocation2 + $0x40] sm:$0xff] %vm329, 0.0
        %339 = vst.msk [vmem:[#allocation2 + $0x48] sm:$0xff] %vm329, 0.0
        %340 = vst.msk [vmem:[#allocation2 + $0x50] sm:$0xff] %vm329, 0.0
        %341 = vst.msk [vmem:[#allocation2 + $0x58] sm:$0xff] %vm329, 0.0
        %342 = vst.msk [vmem:[#allocation2 + $0x60] sm:$0xff] %vm329, 0.0
        %343 = vst.msk [vmem:[#allocation2 + $0x68] sm:$0xff] %vm329, 0.0
        %344 = vst.msk [vmem:[#allocation2 + $0x70] sm:$0xff] %vm329, 0.0
        %345 = vst.msk [vmem:[#allocation2 + $0x78] sm:$0xff] %vm329, 0.0
      $region44: #{generative_step.13} parent=39 // pred_fallthru
        _
      %v346 = vld [vmem:[#allocation2] sm:$0xff]
      %v347 = vld [vmem:[#allocation2 + $0x8] sm:$0xff]
      %v348 = vld [vmem:[#allocation2 + $0x10] sm:$0xff]
      %v349 = vld [vmem:[#allocation2 + $0x18] sm:$0xff]
      %v350 = vld [vmem:[#allocation2 + $0x20] sm:$0xff]
      %v351 = vld [vmem:[#allocation2 + $0x28] sm:$0xff]
      %v352 = vld [vmem:[#allocation2 + $0x30] sm:$0xff]
      %v353 = vld [vmem:[#allocation2 + $0x38] sm:$0xff]
      %v354 = vld [vmem:[#allocation2 + $0x40] sm:$0xff]
      %v355 = vld [vmem:[#allocation2 + $0x48] sm:$0xff]
      %v356 = vld [vmem:[#allocation2 + $0x50] sm:$0xff]
      %v357 = vld [vmem:[#allocation2 + $0x58] sm:$0xff]
      %v358 = vld [vmem:[#allocation2 + $0x60] sm:$0xff]
      %v359 = vld [vmem:[#allocation2 + $0x68] sm:$0xff]
      %v360 = vld [vmem:[#allocation2 + $0x70] sm:$0xff]
      %v361 = vld [vmem:[#allocation2 + $0x78] sm:$0xff]
      %v362 = vld [vmem:[%s298] sm:$0xff]
      %v363 = vld [vmem:[%s298 + $0x8] sm:$0xff]
      %v364 = vld [vmem:[%s298 + $0x10] sm:$0xff]
      %v365 = vld [vmem:[%s298 + $0x18] sm:$0xff]
      %v366 = vld [vmem:[%s298 + $0x20] sm:$0xff]
      %v367 = vld [vmem:[%s298 + $0x28] sm:$0xff]
      %v368 = vld [vmem:[%s298 + $0x30] sm:$0xff]
      %v369 = vld [vmem:[%s298 + $0x38] sm:$0xff]
      %v370 = vld [vmem:[%s298 + $0x40] sm:$0xff]
      %v371 = vld [vmem:[%s298 + $0x48] sm:$0xff]
      %v372 = vld [vmem:[%s298 + $0x50] sm:$0xff]
      %v373 = vld [vmem:[%s298 + $0x58] sm:$0xff]
      %v374 = vld [vmem:[%s298 + $0x60] sm:$0xff]
      %v375 = vld [vmem:[%s298 + $0x68] sm:$0xff]
      %v376 = vld [vmem:[%s298 + $0x70] sm:$0xff]
      %v377 = vld [vmem:[%s298 + $0x78] sm:$0xff]
      %v378 = vld [vmem:[%s305] sm:$0xf]
      %v379 = vld [vmem:[%s305 + $0x4] sm:$0xf]
      %v380 = vld [vmem:[%s305 + $0x8] sm:$0xf]
      %v381 = vld [vmem:[%s305 + $0xc] sm:$0xf]
      %v382 = vld [vmem:[%s305 + $0x10] sm:$0xf]
      %v383 = vld [vmem:[%s305 + $0x14] sm:$0xf]
      %v384 = vld [vmem:[%s305 + $0x18] sm:$0xf]
      %v385 = vld [vmem:[%s305 + $0x1c] sm:$0xf]
      %v386 = vld [vmem:[%s305 + $0x20] sm:$0xf]
      %v387 = vld [vmem:[%s305 + $0x24] sm:$0xf]
      %v388 = vld [vmem:[%s305 + $0x28] sm:$0xf]
      %v389 = vld [vmem:[%s305 + $0x2c] sm:$0xf]
      %v390 = vld [vmem:[%s305 + $0x30] sm:$0xf]
      %v391 = vld [vmem:[%s305 + $0x34] sm:$0xf]
      %v392 = vld [vmem:[%s305 + $0x38] sm:$0xf]
      %v393 = vld [vmem:[%s305 + $0x3c] sm:$0xf]
      %v394 = vld [vmem:[%s305 + $0x40] sm:$0xf]
      %v395 = vld [vmem:[%s305 + $0x44] sm:$0xf]
      %v396 = vld [vmem:[%s305 + $0x48] sm:$0xf]
      %v397 = vld [vmem:[%s305 + $0x4c] sm:$0xf]
      %v398 = vld [vmem:[%s305 + $0x50] sm:$0xf]
      %v399 = vld [vmem:[%s305 + $0x54] sm:$0xf]
      %v400 = vld [vmem:[%s305 + $0x58] sm:$0xf]
      %v401 = vld [vmem:[%s305 + $0x5c] sm:$0xf]
      %v402 = vld [vmem:[%s305 + $0x60] sm:$0xf]
      %v403 = vld [vmem:[%s305 + $0x64] sm:$0xf]
      %v404 = vld [vmem:[%s305 + $0x68] sm:$0xf]
      %v405 = vld [vmem:[%s305 + $0x6c] sm:$0xf]
      %v406 = vld [vmem:[%s305 + $0x70] sm:$0xf]
      %v407 = vld [vmem:[%s305 + $0x74] sm:$0xf]
      %v408 = vld [vmem:[%s305 + $0x78] sm:$0xf]
      %v409 = vld [vmem:[%s305 + $0x7c] sm:$0xf]
      %v426 = vunpack.c.l.b16 %v362
      %v427 = vunpack.c.h.b16 %v362
      %v428 = vunpack.c.l.b16 %v363
      %v429 = vunpack.c.h.b16 %v363
      %v430 = vunpack.c.l.b16 %v364
      %v431 = vunpack.c.h.b16 %v364
      %v432 = vunpack.c.l.b16 %v365
      %v433 = vunpack.c.h.b16 %v365
      %v434 = vunpack.c.l.b16 %v366
      %v435 = vunpack.c.h.b16 %v366
      %v436 = vunpack.c.l.b16 %v367
      %v437 = vunpack.c.h.b16 %v367
      %v438 = vunpack.c.l.b16 %v368
      %v439 = vunpack.c.h.b16 %v368
      %v440 = vunpack.c.l.b16 %v369
      %v441 = vunpack.c.h.b16 %v369
      %v442 = vunpack.c.l.b16 %v370
      %v443 = vunpack.c.h.b16 %v370
      %v444 = vunpack.c.l.b16 %v371
      %v445 = vunpack.c.h.b16 %v371
      %v446 = vunpack.c.l.b16 %v372
      %v447 = vunpack.c.h.b16 %v372
      %v448 = vunpack.c.l.b16 %v373
      %v449 = vunpack.c.h.b16 %v373
      %v450 = vunpack.c.l.b16 %v374
      %v451 = vunpack.c.h.b16 %v374
      %v452 = vunpack.c.l.b16 %v375
      %v453 = vunpack.c.h.b16 %v375
      %v454 = vunpack.c.l.b16 %v376
      %v455 = vunpack.c.h.b16 %v376
      %v456 = vunpack.c.l.b16 %v377
      %v457 = vunpack.c.h.b16 %v377
      %v458 = vpack.c.b16 %v428, %v426
      %v459 = vpack.c.b16 %v429, %v427
      %v460 = vpack.c.b16 %v432, %v430
      %v461 = vpack.c.b16 %v433, %v431
      %v462 = vpack.c.b16 %v436, %v434
      %v463 = vpack.c.b16 %v437, %v435
      %v464 = vpack.c.b16 %v440, %v438
      %v465 = vpack.c.b16 %v441, %v439
      %v466 = vpack.c.b16 %v444, %v442
      %v467 = vpack.c.b16 %v445, %v443
      %v468 = vpack.c.b16 %v448, %v446
      %v469 = vpack.c.b16 %v449, %v447
      %v470 = vpack.c.b16 %v452, %v450
      %v471 = vpack.c.b16 %v453, %v451
      %v472 = vpack.c.b16 %v456, %v454
      %v473 = vpack.c.b16 %v457, %v455
      %v522 = vunpack.c.l.b16 %v378
      %v523 = vunpack.c.l.b16 %v379
      %v524 = vunpack.c.l.b16 %v380
      %v525 = vunpack.c.l.b16 %v381
      %v526 = vunpack.c.l.b16 %v382
      %v527 = vunpack.c.l.b16 %v383
      %v528 = vunpack.c.l.b16 %v384
      %v529 = vunpack.c.l.b16 %v385
      %v530 = vunpack.c.l.b16 %v386
      %v531 = vunpack.c.l.b16 %v387
      %v532 = vunpack.c.l.b16 %v388
      %v533 = vunpack.c.l.b16 %v389
      %v534 = vunpack.c.l.b16 %v390
      %v535 = vunpack.c.l.b16 %v391
      %v536 = vunpack.c.l.b16 %v392
      %v537 = vunpack.c.l.b16 %v393
      %v538 = vunpack.c.l.b16 %v394
      %v539 = vunpack.c.l.b16 %v395
      %v540 = vunpack.c.l.b16 %v396
      %v541 = vunpack.c.l.b16 %v397
      %v542 = vunpack.c.l.b16 %v398
      %v543 = vunpack.c.l.b16 %v399
      %v544 = vunpack.c.l.b16 %v400
      %v545 = vunpack.c.l.b16 %v401
      %v546 = vunpack.c.l.b16 %v402
      %v547 = vunpack.c.l.b16 %v403
      %v548 = vunpack.c.l.b16 %v404
      %v549 = vunpack.c.l.b16 %v405
      %v550 = vunpack.c.l.b16 %v406
      %v551 = vunpack.c.l.b16 %v407
      %v552 = vunpack.c.l.b16 %v408
      %v553 = vunpack.c.l.b16 %v409
      %v554 = vpack.c.b16 %v523, %v522
      %v555 = vpack.c.b16 %v525, %v524
      %v556 = vpack.c.b16 %v527, %v526
      %v557 = vpack.c.b16 %v529, %v528
      %v558 = vpack.c.b16 %v531, %v530
      %v559 = vpack.c.b16 %v533, %v532
      %v560 = vpack.c.b16 %v535, %v534
      %v561 = vpack.c.b16 %v537, %v536
      %v562 = vpack.c.b16 %v539, %v538
      %v563 = vpack.c.b16 %v541, %v540
      %v564 = vpack.c.b16 %v543, %v542
      %v565 = vpack.c.b16 %v545, %v544
      %v566 = vpack.c.b16 %v547, %v546
      %v567 = vpack.c.b16 %v549, %v548
      %v568 = vpack.c.b16 %v551, %v550
      %v569 = vpack.c.b16 %v553, %v552
      %586 = vmatpush.bf16.msra.mxu0 %v561
      %587 = vmatpush.bf16.msra.mxu0 %v560
      %588 = vmatpush.bf16.msra.mxu0 %v559
      %589 = vmatpush.bf16.msra.mxu0 %v558
      %590 = vmatpush.bf16.msra.mxu0 %v557
      %591 = vmatpush.bf16.msra.mxu0 %v556
      %592 = vmatpush.bf16.msra.mxu0 %v555
      %593 = vmatpush.bf16.msra.mxu0 %v554
      %594 = vmatmul.bf16.gmra.mxu0 %v458
      %v595 = vpop.f32.mrf.mxu0
      %v596 = vadd.f32 0.0, %v595
      %v597 = vpop.f32.mrf.mxu0
      %v598 = vadd.f32 0.0, %v597
      %599 = vmatmul.bf16.gmra.mxu0 %v460
      %v600 = vpop.f32.mrf.mxu0
      %v601 = vadd.f32 0.0, %v600
      %v602 = vpop.f32.mrf.mxu0
      %v603 = vadd.f32 0.0, %v602
      %604 = vmatmul.bf16.gmra.mxu0 %v462
      %v605 = vpop.f32.mrf.mxu0
      %v606 = vadd.f32 0.0, %v605
      %v607 = vpop.f32.mrf.mxu0
      %v608 = vadd.f32 0.0, %v607
      %609 = vmatmul.bf16.gmra.mxu0 %v464
      %v610 = vpop.f32.mrf.mxu0
      %v611 = vadd.f32 0.0, %v610
      %v612 = vpop.f32.mrf.mxu0
      %v613 = vadd.f32 0.0, %v612
      %614 = vmatmul.bf16.gmra.mxu0 %v466
      %v615 = vpop.f32.mrf.mxu0
      %v616 = vadd.f32 0.0, %v615
      %v617 = vpop.f32.mrf.mxu0
      %v618 = vadd.f32 0.0, %v617
      %619 = vmatmul.bf16.gmra.mxu0 %v468
      %v620 = vpop.f32.mrf.mxu0
      %v621 = vadd.f32 0.0, %v620
      %v622 = vpop.f32.mrf.mxu0
      %v623 = vadd.f32 0.0, %v622
      %624 = vmatmul.bf16.gmra.mxu0 %v470
      %v625 = vpop.f32.mrf.mxu0
      %v626 = vadd.f32 0.0, %v625
      %v627 = vpop.f32.mrf.mxu0
      %v628 = vadd.f32 0.0, %v627
      %629 = vmatmul.bf16.gmra.mxu0 %v472
      %v630 = vpop.f32.mrf.mxu0
      %v631 = vadd.f32 0.0, %v630
      %v632 = vpop.f32.mrf.mxu0
      %v633 = vadd.f32 0.0, %v632
      %634 = vdwg.mxu0
      %635 = vmatpush.bf16.msra.mxu0 %v569
      %636 = vmatpush.bf16.msra.mxu0 %v568
      %637 = vmatpush.bf16.msra.mxu0 %v567
      %638 = vmatpush.bf16.msra.mxu0 %v566
      %639 = vmatpush.bf16.msra.mxu0 %v565
      %640 = vmatpush.bf16.msra.mxu0 %v564
      %641 = vmatpush.bf16.msra.mxu0 %v563
      %642 = vmatpush.bf16.msra.mxu0 %v562
      %643 = vmatmul.bf16.gmra.mxu0 %v459
      %v644 = vpop.f32.mrf.mxu0
      %v645 = vadd.f32 %v596, %v644
      %v646 = vpop.f32.mrf.mxu0
      %v647 = vadd.f32 %v598, %v646
      %648 = vmatmul.bf16.gmra.mxu0 %v461
      %v649 = vpop.f32.mrf.mxu0
      %v650 = vadd.f32 %v601, %v649
      %v651 = vpop.f32.mrf.mxu0
      %v652 = vadd.f32 %v603, %v651
      %653 = vmatmul.bf16.gmra.mxu0 %v463
      %v654 = vpop.f32.mrf.mxu0
      %v655 = vadd.f32 %v606, %v654
      %v656 = vpop.f32.mrf.mxu0
      %v657 = vadd.f32 %v608, %v656
      %658 = vmatmul.bf16.gmra.mxu0 %v465
      %v659 = vpop.f32.mrf.mxu0
      %v660 = vadd.f32 %v611, %v659
      %v661 = vpop.f32.mrf.mxu0
      %v662 = vadd.f32 %v613, %v661
      %663 = vmatmul.bf16.gmra.mxu0 %v467
      %v664 = vpop.f32.mrf.mxu0
      %v665 = vadd.f32 %v616, %v664
      %v666 = vpop.f32.mrf.mxu0
      %v667 = vadd.f32 %v618, %v666
      %668 = vmatmul.bf16.gmra.mxu0 %v469
      %v669 = vpop.f32.mrf.mxu0
      %v670 = vadd.f32 %v621, %v669
      %v671 = vpop.f32.mrf.mxu0
      %v672 = vadd.f32 %v623, %v671
      %673 = vmatmul.bf16.gmra.mxu0 %v471
      %v674 = vpop.f32.mrf.mxu0
      %v675 = vadd.f32 %v626, %v674
      %v676 = vpop.f32.mrf.mxu0
      %v677 = vadd.f32 %v628, %v676
      %678 = vmatmul.bf16.gmra.mxu0 %v473
      %v679 = vpop.f32.mrf.mxu0
      %v680 = vadd.f32 %v631, %v679
      %v681 = vpop.f32.mrf.mxu0
      %v682 = vadd.f32 %v633, %v681
      %683 = vdwg.mxu0
      %v684 = vadd.f32 %v346, %v645
      %v685 = vadd.f32 %v347, %v647
      %v686 = vadd.f32 %v348, %v650
      %v687 = vadd.f32 %v349, %v652
      %v688 = vadd.f32 %v350, %v655
      %v689 = vadd.f32 %v351, %v657
      %v690 = vadd.f32 %v352, %v660
      %v691 = vadd.f32 %v353, %v662
      %v692 = vadd.f32 %v354, %v665
      %v693 = vadd.f32 %v355, %v667
      %v694 = vadd.f32 %v356, %v670
      %v695 = vadd.f32 %v357, %v672
      %v696 = vadd.f32 %v358, %v675
      %v697 = vadd.f32 %v359, %v677
      %v698 = vadd.f32 %v360, %v680
      %v699 = vadd.f32 %v361, %v682
      %vm700 = vcmask 261120
      %701 = vst.msk [vmem:[#allocation2] sm:$0xff] %vm700, %v684
      %702 = vst.msk [vmem:[#allocation2 + $0x8] sm:$0xff] %vm700, %v685
      %703 = vst.msk [vmem:[#allocation2 + $0x10] sm:$0xff] %vm700, %v686
      %704 = vst.msk [vmem:[#allocation2 + $0x18] sm:$0xff] %vm700, %v687
      %705 = vst.msk [vmem:[#allocation2 + $0x20] sm:$0xff] %vm700, %v688
      %706 = vst.msk [vmem:[#allocation2 + $0x28] sm:$0xff] %vm700, %v689
      %707 = vst.msk [vmem:[#allocation2 + $0x30] sm:$0xff] %vm700, %v690
      %708 = vst.msk [vmem:[#allocation2 + $0x38] sm:$0xff] %vm700, %v691
      %709 = vst.msk [vmem:[#allocation2 + $0x40] sm:$0xff] %vm700, %v692
      %710 = vst.msk [vmem:[#allocation2 + $0x48] sm:$0xff] %vm700, %v693
      %711 = vst.msk [vmem:[#allocation2 + $0x50] sm:$0xff] %vm700, %v694
      %712 = vst.msk [vmem:[#allocation2 + $0x58] sm:$0xff] %vm700, %v695
      %713 = vst.msk [vmem:[#allocation2 + $0x60] sm:$0xff] %vm700, %v696
      %714 = vst.msk [vmem:[#allocation2 + $0x68] sm:$0xff] %vm700, %v697
      %715 = vst.msk [vmem:[#allocation2 + $0x70] sm:$0xff] %vm700, %v698
      %716 = vst.msk [vmem:[#allocation2 + $0x78] sm:$0xff] %vm700, %v699
      // Predicated region
      $region45: #{generative_step.13} parent=39 // pred_check
        %p717 = pneg %p325
      $region46: #{generative_step.13} parent=39 // pred_check_branch
        %719 = sbr.rel (%p717) target = $region48
      $region47: #{generative_step.13} parent=39 // pred_region
        %v720 = vld [vmem:[%s311] sm:$0xff]
        %v721 = vld [vmem:[%s311 + $0x8] sm:$0xff]
        %v722 = vld [vmem:[%s311 + $0x10] sm:$0xff]
        %v723 = vld [vmem:[%s311 + $0x18] sm:$0xff]
        %v724 = vld [vmem:[%s311 + $0x20] sm:$0xff]
        %v725 = vld [vmem:[%s311 + $0x28] sm:$0xff]
        %v726 = vld [vmem:[%s311 + $0x30] sm:$0xff]
        %v727 = vld [vmem:[%s311 + $0x38] sm:$0xff]
        %v728 = vld [vmem:[%s311 + $0x40] sm:$0xff]
        %v729 = vld [vmem:[%s311 + $0x48] sm:$0xff]
        %v730 = vld [vmem:[%s311 + $0x50] sm:$0xff]
        %v731 = vld [vmem:[%s311 + $0x58] sm:$0xff]
        %v732 = vld [vmem:[%s311 + $0x60] sm:$0xff]
        %v733 = vld [vmem:[%s311 + $0x68] sm:$0xff]
        %v734 = vld [vmem:[%s311 + $0x70] sm:$0xff]
        %v735 = vld [vmem:[%s311 + $0x78] sm:$0xff]
        %v736 = vld [vmem:[#allocation2] sm:$0xff]
        %v737 = vld [vmem:[#allocation2 + $0x8] sm:$0xff]
        %v738 = vld [vmem:[#allocation2 + $0x10] sm:$0xff]
        %v739 = vld [vmem:[#allocation2 + $0x18] sm:$0xff]
        %v740 = vld [vmem:[#allocation2 + $0x20] sm:$0xff]
        %v741 = vld [vmem:[#allocation2 + $0x28] sm:$0xff]
        %v742 = vld [vmem:[#allocation2 + $0x30] sm:$0xff]
        %v743 = vld [vmem:[#allocation2 + $0x38] sm:$0xff]
        %v744 = vld [vmem:[#allocation2 + $0x40] sm:$0xff]
        %v745 = vld [vmem:[#allocation2 + $0x48] sm:$0xff]
        %v746 = vld [vmem:[#allocation2 + $0x50] sm:$0xff]
        %v747 = vld [vmem:[#allocation2 + $0x58] sm:$0xff]
        %v748 = vld [vmem:[#allocation2 + $0x60] sm:$0xff]
        %v749 = vld [vmem:[#allocation2 + $0x68] sm:$0xff]
        %v750 = vld [vmem:[#allocation2 + $0x70] sm:$0xff]
        %v751 = vld [vmem:[#allocation2 + $0x78] sm:$0xff]
        %768 = vrot.lane.b32.xlu0 %v736, 32
        %v769 = vpop.permute.xlu0 %768
        %770 = vrot.lane.b32.xlu0 %v737, 32
        %v771 = vpop.permute.xlu0 %770
        %772 = vrot.lane.b32.xlu0 %v738, 32
        %v773 = vpop.permute.xlu0 %772
        %774 = vrot.lane.b32.xlu0 %v739, 32
        %v775 = vpop.permute.xlu0 %774
        %776 = vrot.lane.b32.xlu0 %v740, 32
        %v777 = vpop.permute.xlu0 %776
        %778 = vrot.lane.b32.xlu0 %v741, 32
        %v779 = vpop.permute.xlu0 %778
        %780 = vrot.lane.b32.xlu0 %v742, 32
        %v781 = vpop.permute.xlu0 %780
        %782 = vrot.lane.b32.xlu0 %v743, 32
        %v783 = vpop.permute.xlu0 %782
        %784 = vrot.lane.b32.xlu0 %v744, 32
        %v785 = vpop.permute.xlu0 %784
        %786 = vrot.lane.b32.xlu0 %v745, 32
        %v787 = vpop.permute.xlu0 %786
        %788 = vrot.lane.b32.xlu0 %v746, 32
        %v789 = vpop.permute.xlu0 %788
        %790 = vrot.lane.b32.xlu0 %v747, 32
        %v791 = vpop.permute.xlu0 %790
        %792 = vrot.lane.b32.xlu0 %v748, 32
        %v793 = vpop.permute.xlu0 %792
        %794 = vrot.lane.b32.xlu0 %v749, 32
        %v795 = vpop.permute.xlu0 %794
        %796 = vrot.lane.b32.xlu0 %v750, 32
        %v797 = vpop.permute.xlu0 %796
        %798 = vrot.lane.b32.xlu0 %v751, 32
        %v799 = vpop.permute.xlu0 %798
        %v816 = vadd.f32 %v720, %v769
        %v817 = vadd.f32 %v721, %v771
        %v818 = vadd.f32 %v722, %v773
        %v819 = vadd.f32 %v723, %v775
        %v820 = vadd.f32 %v724, %v777
        %v821 = vadd.f32 %v725, %v779
        %v822 = vadd.f32 %v726, %v781
        %v823 = vadd.f32 %v727, %v783
        %v824 = vadd.f32 %v728, %v785
        %v825 = vadd.f32 %v729, %v787
        %v826 = vadd.f32 %v730, %v789
        %v827 = vadd.f32 %v731, %v791
        %v828 = vadd.f32 %v732, %v793
        %v829 = vadd.f32 %v733, %v795
        %v830 = vadd.f32 %v734, %v797
        %v831 = vadd.f32 %v735, %v799
        %v832 = vld [vmem:[%s2] sm:$0x1]
        %v834 = vperm.slane %v832, 0
        %835 = vrot.lane.b32.xlu0 %v834, 32
        %v836 = vpop.permute.xlu0 %835
        %v838 = vadd.f32 %v816, %v836
        %v839 = vadd.f32 %v817, %v836
        %v840 = vadd.f32 %v818, %v836
        %v841 = vadd.f32 %v819, %v836
        %v842 = vadd.f32 %v820, %v836
        %v843 = vadd.f32 %v821, %v836
        %v844 = vadd.f32 %v822, %v836
        %v845 = vadd.f32 %v823, %v836
        %v846 = vadd.f32 %v824, %v836
        %v847 = vadd.f32 %v825, %v836
        %v848 = vadd.f32 %v826, %v836
        %v849 = vadd.f32 %v827, %v836
        %v850 = vadd.f32 %v828, %v836
        %v851 = vadd.f32 %v829, %v836
        %v852 = vadd.f32 %v830, %v836
        %v853 = vadd.f32 %v831, %v836
        %v854 = vtanh.pop %v838
        %v855 = vtanh.pop %v839
        %v856 = vtanh.pop %v840
        %v857 = vtanh.pop %v841
        %v858 = vtanh.pop %v842
        %v859 = vtanh.pop %v843
        %v860 = vtanh.pop %v844
        %v861 = vtanh.pop %v845
        %v862 = vtanh.pop %v846
        %v863 = vtanh.pop %v847
        %v864 = vtanh.pop %v848
        %v865 = vtanh.pop %v849
        %v866 = vtanh.pop %v850
        %v867 = vtanh.pop %v851
        %v868 = vtanh.pop %v852
        %v869 = vtanh.pop %v853
        %v870 = vld [vmem:[%s317] sm:$0xff]
        %v871 = vld [vmem:[%s317 + $0x8] sm:$0xff]
        %v872 = vld [vmem:[%s317 + $0x10] sm:$0xff]
        %v873 = vld [vmem:[%s317 + $0x18] sm:$0xff]
        %v874 = vld [vmem:[%s317 + $0x20] sm:$0xff]
        %v875 = vld [vmem:[%s317 + $0x28] sm:$0xff]
        %v876 = vld [vmem:[%s317 + $0x30] sm:$0xff]
        %v877 = vld [vmem:[%s317 + $0x38] sm:$0xff]
        %v878 = vld [vmem:[%s317 + $0x40] sm:$0xff]
        %v879 = vld [vmem:[%s317 + $0x48] sm:$0xff]
        %v880 = vld [vmem:[%s317 + $0x50] sm:$0xff]
        %v881 = vld [vmem:[%s317 + $0x58] sm:$0xff]
        %v882 = vld [vmem:[%s317 + $0x60] sm:$0xff]
        %v883 = vld [vmem:[%s317 + $0x68] sm:$0xff]
        %v884 = vld [vmem:[%s317 + $0x70] sm:$0xff]
        %v885 = vld [vmem:[%s317 + $0x78] sm:$0xff]
        %v886 = vmul.f32 %v720, %v870
        %v887 = vmul.f32 %v721, %v871
        %v888 = vmul.f32 %v722, %v872
        %v889 = vmul.f32 %v723, %v873
        %v890 = vmul.f32 %v724, %v874
        %v891 = vmul.f32 %v725, %v875
        %v892 = vmul.f32 %v726, %v876
        %v893 = vmul.f32 %v727, %v877
        %v894 = vmul.f32 %v728, %v878
        %v895 = vmul.f32 %v729, %v879
        %v896 = vmul.f32 %v730, %v880
        %v897 = vmul.f32 %v731, %v881
        %v898 = vmul.f32 %v732, %v882
        %v899 = vmul.f32 %v733, %v883
        %v900 = vmul.f32 %v734, %v884
        %v901 = vmul.f32 %v735, %v885
        %v902 = vsub.f32 1.0, %v720
        %v903 = vsub.f32 1.0, %v721
        %v904 = vsub.f32 1.0, %v722
        %v905 = vsub.f32 1.0, %v723
        %v906 = vsub.f32 1.0, %v724
        %v907 = vsub.f32 1.0, %v725
        %v908 = vsub.f32 1.0, %v726
        %v909 = vsub.f32 1.0, %v727
        %v910 = vsub.f32 1.0, %v728
        %v911 = vsub.f32 1.0, %v729
        %v912 = vsub.f32 1.0, %v730
        %v913 = vsub.f32 1.0, %v731
        %v914 = vsub.f32 1.0, %v732
        %v915 = vsub.f32 1.0, %v733
        %v916 = vsub.f32 1.0, %v734
        %v917 = vsub.f32 1.0, %v735
        %934 = vrot.lane.b32.xlu0 %v854, 96
        %v935 = vpop.permute.xlu0 %934
        %936 = vrot.lane.b32.xlu0 %v855, 96
        %v937 = vpop.permute.xlu0 %936
        %938 = vrot.lane.b32.xlu0 %v856, 96
        %v939 = vpop.permute.xlu0 %938
        %940 = vrot.lane.b32.xlu0 %v857, 96
        %v941 = vpop.permute.xlu0 %940
        %942 = vrot.lane.b32.xlu0 %v858, 96
        %v943 = vpop.permute.xlu0 %942
        %944 = vrot.lane.b32.xlu0 %v859, 96
        %v945 = vpop.permute.xlu0 %944
        %946 = vrot.lane.b32.xlu0 %v860, 96
        %v947 = vpop.permute.xlu0 %946
        %948 = vrot.lane.b32.xlu0 %v861, 96
        %v949 = vpop.permute.xlu0 %948
        %950 = vrot.lane.b32.xlu0 %v862, 96
        %v951 = vpop.permute.xlu0 %950
        %952 = vrot.lane.b32.xlu0 %v863, 96
        %v953 = vpop.permute.xlu0 %952
        %954 = vrot.lane.b32.xlu0 %v864, 96
        %v955 = vpop.permute.xlu0 %954
        %956 = vrot.lane.b32.xlu0 %v865, 96
        %v957 = vpop.permute.xlu0 %956
        %958 = vrot.lane.b32.xlu0 %v866, 96
        %v959 = vpop.permute.xlu0 %958
        %960 = vrot.lane.b32.xlu0 %v867, 96
        %v961 = vpop.permute.xlu0 %960
        %962 = vrot.lane.b32.xlu0 %v868, 96
        %v963 = vpop.permute.xlu0 %962
        %964 = vrot.lane.b32.xlu0 %v869, 96
        %v965 = vpop.permute.xlu0 %964
        %v982 = vmul.f32 %v902, %v935
        %v983 = vmul.f32 %v903, %v937
        %v984 = vmul.f32 %v904, %v939
        %v985 = vmul.f32 %v905, %v941
        %v986 = vmul.f32 %v906, %v943
        %v987 = vmul.f32 %v907, %v945
        %v988 = vmul.f32 %v908, %v947
        %v989 = vmul.f32 %v909, %v949
        %v990 = vmul.f32 %v910, %v951
        %v991 = vmul.f32 %v911, %v953
        %v992 = vmul.f32 %v912, %v955
        %v993 = vmul.f32 %v913, %v957
        %v994 = vmul.f32 %v914, %v959
        %v995 = vmul.f32 %v915, %v961
        %v996 = vmul.f32 %v916, %v963
        %v997 = vmul.f32 %v917, %v965
        %v998 = vadd.f32 %v886, %v982
        %v999 = vadd.f32 %v887, %v983
        %v1000 = vadd.f32 %v888, %v984
        %v1001 = vadd.f32 %v889, %v985
        %v1002 = vadd.f32 %v890, %v986
        %v1003 = vadd.f32 %v891, %v987
        %v1004 = vadd.f32 %v892, %v988
        %v1005 = vadd.f32 %v893, %v989
        %v1006 = vadd.f32 %v894, %v990
        %v1007 = vadd.f32 %v895, %v991
        %v1008 = vadd.f32 %v896, %v992
        %v1009 = vadd.f32 %v897, %v993
        %v1010 = vadd.f32 %v898, %v994
        %v1011 = vadd.f32 %v899, %v995
        %v1012 = vadd.f32 %v900, %v996
        %v1013 = vadd.f32 %v901, %v997
        %1014 = vst.msk [vmem:[%s323] sm:$0xff] %vm700, %v998
        %1015 = vst.msk [vmem:[%s323 + $0x8] sm:$0xff] %vm700, %v999
        %1016 = vst.msk [vmem:[%s323 + $0x10] sm:$0xff] %vm700, %v1000
        %1017 = vst.msk [vmem:[%s323 + $0x18] sm:$0xff] %vm700, %v1001
        %1018 = vst.msk [vmem:[%s323 + $0x20] sm:$0xff] %vm700, %v1002
        %1019 = vst.msk [vmem:[%s323 + $0x28] sm:$0xff] %vm700, %v1003
        %1020 = vst.msk [vmem:[%s323 + $0x30] sm:$0xff] %vm700, %v1004
        %1021 = vst.msk [vmem:[%s323 + $0x38] sm:$0xff] %vm700, %v1005
        %1022 = vst.msk [vmem:[%s323 + $0x40] sm:$0xff] %vm700, %v1006
        %1023 = vst.msk [vmem:[%s323 + $0x48] sm:$0xff] %vm700, %v1007
        %1024 = vst.msk [vmem:[%s323 + $0x50] sm:$0xff] %vm700, %v1008
        %1025 = vst.msk [vmem:[%s323 + $0x58] sm:$0xff] %vm700, %v1009
        %1026 = vst.msk [vmem:[%s323 + $0x60] sm:$0xff] %vm700, %v1010
        %1027 = vst.msk [vmem:[%s323 + $0x68] sm:$0xff] %vm700, %v1011
        %1028 = vst.msk [vmem:[%s323 + $0x70] sm:$0xff] %vm700, %v1012
        %1029 = vst.msk [vmem:[%s323 + $0x78] sm:$0xff] %vm700, %v1013
      $region48: #{generative_step.13} parent=39 // pred_fallthru
        _
      %s1030 = smul.u32 16, %s20
      %p1031 = scmp.lt.s32.totalorder %s1030, 31
      %s1032 = scalar_select %p1031, %s1030, 31
      %s1033 = smul.addr %s1032, 8
      %s1034 = scalar_lea.vmem %s5, %s1033
      // Predicated region
      $region49: #{generative_step.13} parent=39 // pred_check
        %p1035 = pneg %p173
      $region50: #{generative_step.13} parent=39 // pred_check_branch
        %1037 = sbr.rel (%p1035) target = $region52
      $region51: #{generative_step.13} parent=39 // pred_region
        %s1038 = smul.u32 16, %s20
      $region52: #{generative_step.13} parent=39 // pred_fallthru
        _
    $region40: #{generative_step.13} parent=5 // pred_fallthru
      _
    %p1039 = scmp.le.s32.totalorder 2, %s11
    // Predicated region
    $region53: #{generative_step.13} parent=5 // pred_check
      %p1040 = pneg %p1039
    $region54: #{generative_step.13} parent=5 // pred_check_branch
      %1042 = sbr.rel (%p1040) target = $region56
    $region55: #{generative_step.13} parent=5 // pred_region
      %s1043 = ssub.s32 %s11, 2
      // Predicated region
      $region57: #{generative_step.13} parent=55 // pred_check
        %p1044 = pneg %p179
      $region58: #{generative_step.13} parent=55 // pred_check_branch
        %1046 = sbr.rel (%p1044) target = $region60
      $region59: #{generative_step.13} parent=55 // pred_region
        %s1047 = smul.u32 16, %s22
        %p1048 = scmp.lt.s32.totalorder %s1047, 31
        %s1049 = scalar_select %p1048, %s1047, 31
        %s1050 = smul.addr %s1049, 8
        %s1051 = scalar_lea.vmem %s5, %s1050
      $region60: #{generative_step.13} parent=55 // pred_fallthru
        _
    $region56: #{generative_step.13} parent=5 // pred_fallthru
      _
  $region6: #{generative_step.13} parent=0 // loop_footer
    %s15 = sadd.s32 1, %s11
  $region7: #{generative_step.13} parent=0 // loop_footer_branch
    %10 = sbr.rel target = $region3
  $region8: #{generative_step.13} parent=0 // loop_exit
    _

</llo_original>
